<compile_context>
chip_gen: v7x
topology: tpu7x:2x2x1
jax: 0.10.0
libtpu: 0.0.40
codegen_flags: <defaults>
</compile_context>

<pallas_src>
import jax
import jax.numpy as jnp
from jax import lax
from jax.experimental import pallas as pl
from jax.experimental.pallas import tpu as pltpu

HIDDEN = 1024
FC_HIDDEN = 512
BN_EPS = 1e-5
LANE = 128
SUBLANE = 8

TM_DEFAULT = 256            # node (output-row) tile
TK_DEFAULT = 512            # contraction (neighbor) tile
VMEM_LIMIT = 48 * 1024 * 1024   # <= 64 MiB physical on v7x, leaves DMA headroom


def _round_up(x, m):
    return (x + m - 1) // m * m


# ---------------------------------------------------------------------------
# GraphConv kernel:  out = (A@h) @ W_rel + h @ W_root + b   (+ BN partial stats)
# grid = (num_m, num_k); K innermost reduction with resident VMEM accumulator.
# ---------------------------------------------------------------------------
def _make_gconv_kernel(n_valid, tm, num_k, fuse_input_bn):
    def kernel(*refs):
        if fuse_input_bn:
            (a_ref, hk_ref, hm_ref, wrel_ref, wroot_ref, b_ref,
             scale_ref, shift_ref, hout_ref, stats_ref, acc_ref) = refs
        else:
            (a_ref, hk_ref, hm_ref, wrel_ref, wroot_ref, b_ref,
             hout_ref, stats_ref, acc_ref) = refs

        # program_id must stay OUTSIDE pl.when bodies (interpret-mode safety).
        m = pl.program_id(0)
        k = pl.program_id(1)
        row_ids = m * tm + lax.broadcasted_iota(jnp.int32, (tm, 1), 0)
        row_valid = row_ids < n_valid

        @pl.when(k == 0)
        def _init():
            acc_ref[...] = jnp.zeros_like(acc_ref)

        # Neighbor rows for this K tile, with the previous layer's BN+ReLU
        # fused into the load (stats were computed globally in a prior pass).
        hk = hk_ref[...]
        if fuse_input_bn:
            hk = jnp.maximum(hk.astype(jnp.float32) * scale_ref[...]
                             + shift_ref[...], 0.0).astype(jnp.bfloat16)

        # Weighted neighbor aggregation on the MXU (bf16 in, f32 accumulate).
        acc_ref[...] += jnp.dot(a_ref[...], hk,
                                preferred_element_type=jnp.float32)

        @pl.when(k == num_k - 1)
        def _finalize():
            hm = hm_ref[...]
            if fuse_input_bn:
                hm = jnp.maximum(hm.astype(jnp.float32) * scale_ref[...]
                                 + shift_ref[...], 0.0).astype(jnp.bfloat16)
            else:
                hm = hm.astype(jnp.bfloat16)
            agg = acc_ref[...].astype(jnp.bfloat16)

            out = (jnp.dot(agg, wrel_ref[...],
                           preferred_element_type=jnp.float32)
                   + jnp.dot(hm, wroot_ref[...],
                             preferred_element_type=jnp.float32)
                   + b_ref[...])
            hout_ref[...] = out.astype(hout_ref.dtype)

            # Per-tile BN partial statistics (mask out node-padding rows).
            masked = jnp.where(row_valid, out, 0.0)
            s = jnp.sum(masked, axis=0, keepdims=True)
            ss = jnp.sum(masked * masked, axis=0, keepdims=True)
            stats_ref[...] = jnp.concatenate([s, ss], axis=0)

    return kernel


def _graph_conv_layer(a, h, w_rel, w_root, bias, scale=None, shift=None, *,
                      n_valid, tm, tk):
    n_pad = a.shape[0]
    cin = h.shape[1]
    cout = w_rel.shape[1]
    num_m = n_pad // tm
    num_k = n_pad // tk

    kernel = _make_gconv_kernel(n_valid, tm, num_k, scale is not None)

    in_specs = [
        pl.BlockSpec((tm, tk), lambda m, k: (m, k)),       # A tile (streamed)
        pl.BlockSpec((tk, cin), lambda m, k: (k, 0)),      # H rows (aggregation)
        pl.BlockSpec((tm, cin), lambda m, k: (m, 0)),      # H rows (root term)
        pl.BlockSpec((cin, cout), lambda m, k: (0, 0)),    # W_rel (resident)
        pl.BlockSpec((cin, cout), lambda m, k: (0, 0)),    # W_root (resident)
        pl.BlockSpec((1, cout), lambda m, k: (0, 0)),      # bias (resident)
    ]
    args = [a, h, h, w_rel, w_root, bias]
    if scale is not None:
        in_specs += [pl.BlockSpec((1, cin), lambda m, k: (0, 0)),
                     pl.BlockSpec((1, cin), lambda m, k: (0, 0))]
        args += [scale, shift]

    out_shape = (jax.ShapeDtypeStruct((n_pad, cout), jnp.bfloat16),
                 jax.ShapeDtypeStruct((2 * num_m, cout), jnp.float32))
    out_specs = (pl.BlockSpec((tm, cout), lambda m, k: (m, 0)),
                 pl.BlockSpec((2, cout), lambda m, k: (m, 0)))

    return pl.pallas_call(
        kernel,
        grid=(num_m, num_k),
        in_specs=in_specs,
        out_specs=out_specs,
        out_shape=out_shape,
        scratch_shapes=[pltpu.VMEM((tm, cin), jnp.float32)],
        compiler_params=pltpu.CompilerParams(
            dimension_semantics=("parallel", "arbitrary"),
            vmem_limit_bytes=VMEM_LIMIT),
    )(*args)


def _bn_scale_shift(stats, gamma, beta, n_valid):
    """Tiny global reduction of per-tile partials -> affine BN apply params."""
    st = stats.reshape(-1, 2, stats.shape[-1])
    s = jnp.sum(st[:, 0, :], axis=0)
    ss = jnp.sum(st[:, 1, :], axis=0)
    mu = s / n_valid
    var = jnp.maximum(ss / n_valid - mu * mu, 0.0)
    scale = gamma.reshape(-1) * lax.rsqrt(var + BN_EPS)
    shift = beta.reshape(-1) - mu * scale
    return (scale.reshape(1, -1).astype(jnp.float32),
            shift.reshape(1, -1).astype(jnp.float32))


# ---------------------------------------------------------------------------
# Head kernel: BN2+ReLU -> fc(1024,512)+ReLU -> (dropout=identity) -> fc1
# ---------------------------------------------------------------------------
def _head_kernel(h_ref, scale_ref, shift_ref, wfc_ref, bfc_ref,
                 wfc1_ref, bfc1_ref, o_ref):
    h = jnp.maximum(h_ref[...].astype(jnp.float32) * scale_ref[...]
                    + shift_ref[...], 0.0).astype(jnp.bfloat16)
    t = jnp.maximum(jnp.dot(h, wfc_ref[...],
                            preferred_element_type=jnp.float32) + bfc_ref[...],
                    0.0)
    # TODO(synk): nn.Dropout(0.2) is stochastic; treated as identity (eval mode).
    t = t.astype(jnp.bfloat16)
    o_ref[...] = (jnp.dot(t, wfc1_ref[...],
                          preferred_element_type=jnp.float32)
                  + bfc1_ref[...]).astype(o_ref.dtype)


def _head_layer(h2_pre, scale2, shift2, wfc, bfc, wfc1_pad, bfc1_pad, *, tm):
    n_pad, hidden = h2_pre.shape
    fc_hidden = wfc.shape[1]
    out_pad_c = wfc1_pad.shape[1]
    num_m = n_pad // tm
    return pl.pallas_call(
        _head_kernel,
        grid=(num_m,),
        in_specs=[
            pl.BlockSpec((tm, hidden), lambda m: (m, 0)),
            pl.BlockSpec((1, hidden), lambda m: (0, 0)),
            pl.BlockSpec((1, hidden), lambda m: (0, 0)),
            pl.BlockSpec((hidden, fc_hidden), lambda m: (0, 0)),
            pl.BlockSpec((1, fc_hidden), lambda m: (0, 0)),
            pl.BlockSpec((fc_hidden, out_pad_c), lambda m: (0, 0)),
            pl.BlockSpec((1, out_pad_c), lambda m: (0, 0)),
        ],
        out_specs=pl.BlockSpec((tm, out_pad_c), lambda m: (m, 0)),
        out_shape=jax.ShapeDtypeStruct((n_pad, out_pad_c), jnp.float32),
        compiler_params=pltpu.CompilerParams(
            dimension_semantics=("parallel",),
            vmem_limit_bytes=VMEM_LIMIT),
    )(h2_pre, scale2, shift2, wfc, bfc, wfc1_pad, bfc1_pad)


# ---------------------------------------------------------------------------
# Full forward
# ---------------------------------------------------------------------------
def hogcn_forward(x, edge_index, edge_weight, params):
    """x: (N, feature) f32; edge_index: (2, E) int32; edge_weight: (E,) f32."""
    n, feature = x.shape
    out_channel = params["wfc1"].shape[1]
    hidden = params["wfc"].shape[0]
    fc_hidden = params["wfc"].shape[1]

    # ---- tile sizes & node-dim padding (adaptive so small graphs stay small)
    if n <= TK_DEFAULT:
        tm = tk = n_pad = _round_up(n, SUBLANE)
    else:
        tm, tk = TM_DEFAULT, TK_DEFAULT
        n_pad = _round_up(n, tk)
    feat_pad = _round_up(feature, LANE)

    # ---- glue: densify graph, pad node/feature dims, cast MXU operands -----
    # TODO(synk): replace dense A with sparse gather for large sparse graphs.
    a = (jnp.zeros((n, n), jnp.float32)
         .at[edge_index[1], edge_index[0]].add(edge_weight.astype(jnp.float32)))
    a_pad = jnp.pad(a, ((0, n_pad - n), (0, n_pad - n))).astype(jnp.bfloat16)
    x_pad = (jnp.zeros((n_pad, feat_pad), jnp.float32)
             .at[:n, :feature].set(x)).astype(jnp.bfloat16)

    w1_rel = (jnp.zeros((feat_pad, hidden), jnp.float32)
              .at[:feature].set(params["w1_rel"])).astype(jnp.bfloat16)
    w1_root = (jnp.zeros((feat_pad, hidden), jnp.float32)
               .at[:feature].set(params["w1_root"])).astype(jnp.bfloat16)
    w2_rel = params["w2_rel"].astype(jnp.bfloat16)
    w2_root = params["w2_root"].astype(jnp.bfloat16)
    wfc = params["wfc"].astype(jnp.bfloat16)
    out_pad_c = _round_up(out_channel, LANE)
    wfc1_pad = (jnp.zeros((fc_hidden, out_pad_c), jnp.float32)
                .at[:, :out_channel].set(params["wfc1"])).astype(jnp.bfloat16)
    bfc1_pad = (jnp.zeros((1, out_pad_c), jnp.float32)
                .at[:, :out_channel].set(params["bfc1"]))

    # ---- layer 1: GraphConv(feature, 1024) ----------------------------------
    h1_pre, st1 = _graph_conv_layer(a_pad, x_pad, w1_rel, w1_root, params["b1"],
                                    n_valid=n, tm=tm, tk=tk)
    scale1, shift1 = _bn_scale_shift(st1, params["g1"], params["beta1"], n)

    # ---- layer 2: GraphConv(1024, 1024), BN1+ReLU fused into input loads ----
    h2_pre, st2 = _graph_conv_layer(a_pad, h1_pre, w2_rel, w2_root, params["b2"],
                                    scale1, shift1, n_valid=n, tm=tm, tk=tk)
    scale2, shift2 = _bn_scale_shift(st2, params["g2"], params["beta2"], n)

    # ---- head: BN2+ReLU + fc+ReLU + fc1 (lane-dense padded output) ----------
    out = _head_layer(h2_pre, scale2, shift2, wfc, params["bfc"],
                      wfc1_pad, bfc1_pad, tm=tm)
    return out[:n, :out_channel]


# ---------------------------------------------------------------------------
# Pure-JAX reference mirroring the kernel's numerics (bf16 MXU, f32 accum/BN)
# ---------------------------------------------------------------------------
def hogcn_reference(x, edge_index, edge_weight, params):
    n = x.shape[0]
    a = (jnp.zeros((n, n), jnp.float32)
         .at[edge_index[1], edge_index[0]].add(edge_weight.astype(jnp.float32)))
    ab = a.astype(jnp.bfloat16)

    def gconv(h_b, w_rel, w_root, b):
        agg = jnp.dot(ab, h_b, preferred_element_type=jnp.float32
                      ).astype(jnp.bfloat16)
        return (jnp.dot(agg, w_rel.astype(jnp.bfloat16),
                        preferred_element_type=jnp.float32)
                + jnp.dot(h_b, w_root.astype(jnp.bfloat16),
                          preferred_element_type=jnp.float32) + b)

    def bn_relu(pre, gamma, beta):
        mu = jnp.mean(pre, axis=0)
        var = jnp.maximum(jnp.mean(pre * pre, axis=0) - mu * mu, 0.0)
        scale = gamma.reshape(-1) * lax.rsqrt(var + BN_EPS)
        shift = beta.reshape(-1) - mu * scale
        return jnp.maximum(pre.astype(jnp.bfloat16).astype(jnp.float32) * scale
                           + shift, 0.0).astype(jnp.bfloat16)

    xb = x.astype(jnp.bfloat16)
    h1 = gconv(xb, params["w1_rel"], params["w1_root"], params["b1"])
    h1r = bn_relu(h1, params["g1"], params["beta1"])
    h2 = gconv(h1r, params["w2_rel"], params["w2_root"], params["b2"])
    h2r = bn_relu(h2, params["g2"], params["beta2"])
    t = jnp.maximum(jnp.dot(h2r, params["wfc"].astype(jnp.bfloat16),
                            preferred_element_type=jnp.float32)
                    + params["bfc"], 0.0).astype(jnp.bfloat16)
    return (jnp.dot(t, params["wfc1"].astype(jnp.bfloat16),
                    preferred_element_type=jnp.float32) + params["bfc1"])


def init_params(key, feature, out_channel):
    """Deterministic synthetic parameters (shapes match HoGCN.__init__)."""
    ks = jax.random.split(key, 6)

    def lin(k, fan_in, fan_out):
        # stored pre-transposed: (in, out)
        return (jax.random.normal(k, (fan_in, fan_out), jnp.float32)
                / jnp.sqrt(jnp.float32(fan_in)))

    return dict(
        w1_rel=lin(ks[0], feature, HIDDEN),
        w1_root=lin(ks[1], feature, HIDDEN),
        b1=jnp.full((1, HIDDEN), 0.01, jnp.float32),
        g1=jnp.ones((1, HIDDEN), jnp.float32),
        beta1=jnp.zeros((1, HIDDEN), jnp.float32),
        w2_rel=lin(ks[2], HIDDEN, HIDDEN),
        w2_root=lin(ks[3], HIDDEN, HIDDEN),
        b2=jnp.full((1, HIDDEN), 0.01, jnp.float32),
        g2=jnp.ones((1, HIDDEN), jnp.float32),
        beta2=jnp.zeros((1, HIDDEN), jnp.float32),
        wfc=lin(ks[4], HIDDEN, FC_HIDDEN),
        bfc=jnp.full((1, FC_HIDDEN), 0.01, jnp.float32),
        wfc1=lin(ks[5], FC_HIDDEN, out_channel),
        bfc1=jnp.zeros((1, out_channel), jnp.float32),
    )


if __name__ == "__main__":
    key = jax.random.PRNGKey(0)
    k_x, k_w, k_p = jax.random.split(key, 3)

    N, FEATURE, OUT = 8, 16, 8

    # data.x
    x = jax.random.normal(k_x, (N, FEATURE), jnp.float32)
    # data.edge_index: bidirectional ring graph, (2, 2N)
    src = jnp.arange(N, dtype=jnp.int32)
    dst = (src + 1) % N
    edge_index = jnp.stack([jnp.concatenate([src, dst]),
                            jnp.concatenate([dst, src])], axis=0)
    # data.edge_attr
    edge_weight = jax.random.uniform(k_w, (2 * N,), jnp.float32, 0.1, 1.0)

    params = init_params(k_p, FEATURE, OUT)

    fwd = jax.jit(hogcn_forward)
    out = jax.block_until_ready(fwd(x, edge_index, edge_weight, params))
    assert out.shape == (N, OUT), out.shape
    assert bool(jnp.all(jnp.isfinite(out)))

    ref = jax.block_until_ready(hogcn_reference(x, edge_index, edge_weight, params))
    max_diff = float(jnp.max(jnp.abs(out - ref)))
    assert jnp.allclose(out, ref, rtol=5e-2, atol=5e-2), max_diff

    print("KERNEL_OK")
</pallas_src>

<mosaic_0001>
module attributes {stable_mosaic.version = 11 : i64} {
  func.func private @main(%arg0: i32) attributes {dimension_semantics = [#tpu.dimension_semantics<core_parallel>], iteration_bounds = array<i64: 2>, tpu.core_type = #tpu.core_type<sc_scalar_subcore>, window_params = []} {
    return
  }
}

module attributes {stable_mosaic.version = 11 : i64} {
  func.func private @main(%arg0: i32) attributes {dimension_semantics = [#tpu.dimension_semantics<core_parallel>], iteration_bounds = array<i64: 2>, tpu.core_type = #tpu.core_type<sc_scalar_subcore>, window_params = []} {
    return
  }
}

module attributes {stable_mosaic.version = 11 : i64} {
  func.func @kernel(%arg0: i32, %arg1: i32, %arg2: memref<8x8xbf16, #tpu.memory_space<vmem>>, %arg3: memref<8x128xbf16, #tpu.memory_space<vmem>>, %arg4: memref<8x128xbf16, #tpu.memory_space<vmem>>, %arg5: memref<128x1024xbf16, #tpu.memory_space<vmem>>, %arg6: memref<128x1024xbf16, #tpu.memory_space<vmem>>, %arg7: memref<1x1024xf32, #tpu.memory_space<vmem>>, %arg8: memref<8x1024xbf16, #tpu.memory_space<vmem>>, %arg9: memref<2x1024xf32, #tpu.memory_space<vmem>>, %arg10: memref<8x128xf32, #tpu.memory_space<vmem>>) attributes {dimension_semantics = [#tpu.dimension_semantics<parallel>, #tpu.dimension_semantics<arbitrary>], iteration_bounds = array<i64: 1, 1>, scalar_prefetch = 0 : i64, scratch_operands = 1 : i64, tpu.core_type = #tpu.core_type<tc>, window_params = [{transform_indices = @transform_0, window_bounds = array<i64: 8, 8>}, {transform_indices = @transform_1, window_bounds = array<i64: 8, 128>}, {transform_indices = @transform_2, window_bounds = array<i64: 8, 128>}, {pipeline_mode = #tpu.pipeline_mode<synchronous>, transform_indices = @transform_3, window_bounds = array<i64: 128, 1024>}, {pipeline_mode = #tpu.pipeline_mode<synchronous>, transform_indices = @transform_4, window_bounds = array<i64: 128, 1024>}, {pipeline_mode = #tpu.pipeline_mode<synchronous>, transform_indices = @transform_5, window_bounds = array<i64: 1, 1024>}, {transform_indices = @transform_6, window_bounds = array<i64: 8, 1024>}, {transform_indices = @transform_7, window_bounds = array<i64: 2, 1024>}]} {
    %c8_i32 = arith.constant 8 : i32
    %0 = arith.muli %arg0, %c8_i32 : i32
    %1 = tpu.iota {dimensions = array<i32: 0>} : vector<8x1xi32>
    %2 = vector.broadcast %0 : i32 to vector<8x1xi32>
    %3 = arith.addi %2, %1 : vector<8x1xi32>
    %c8_i32_0 = arith.constant 8 : i32
    %4 = vector.broadcast %c8_i32_0 : i32 to vector<8x1xi32>
    %5 = arith.cmpi slt, %3, %4 : vector<8x1xi32>
    %c0_i32 = arith.constant 0 : i32
    %6 = arith.cmpi eq, %arg1, %c0_i32 : i32
    %7 = arith.extui %6 : i1 to i32
    %c0_i32_1 = arith.constant 0 : i32
    %8 = arith.cmpi ne, %7, %c0_i32_1 : i32
    scf.if %8 {
      %cst_11 = arith.constant 0.000000e+00 : f32
      %18 = vector.broadcast %cst_11 : f32 to vector<8x128xf32>
      %c0_12 = arith.constant 0 : index
      %c0_13 = arith.constant 0 : index
      %19 = vector.load %arg10[%c0_12, %c0_13] : memref<8x128xf32, #tpu.memory_space<vmem>>, vector<8x128xf32>
      tpu.vector_store %arg10[%c0_12, %c0_13], %18 {strides = array<i32>} : memref<8x128xf32, #tpu.memory_space<vmem>>, vector<8x128xf32>,
    } else {
    }
    %c0 = arith.constant 0 : index
    %c0_2 = arith.constant 0 : index
    %9 = vector.load %arg3[%c0, %c0_2] : memref<8x128xbf16, #tpu.memory_space<vmem>>, vector<8x128xbf16>
    %c0_3 = arith.constant 0 : index
    %c0_4 = arith.constant 0 : index
    %10 = vector.load %arg10[%c0_3, %c0_4] : memref<8x128xf32, #tpu.memory_space<vmem>>, vector<8x128xf32>
    %c0_5 = arith.constant 0 : index
    %c0_6 = arith.constant 0 : index
    %11 = vector.load %arg2[%c0_5, %c0_6] : memref<8x8xbf16, #tpu.memory_space<vmem>>, vector<8x8xbf16>
    %cst = arith.constant dense<0.000000e+00> : vector<8x128xf32>
    %12 = tpu.matmul %11, %9, %cst {dimension_numbers = #tpu.dot_dimension_numbers<[1], [0], [0], [1], [0, 0, 1, 1], [], []>} : vector<8x8xbf16>, vector<8x128xbf16>, vector<8x128xf32> -> vector<8x128xf32>
    %13 = arith.addf %10, %12 : vector<8x128xf32>
    %c0_7 = arith.constant 0 : index
    %c0_8 = arith.constant 0 : index
    %14 = vector.load %arg10[%c0_7, %c0_8] : memref<8x128xf32, #tpu.memory_space<vmem>>, vector<8x128xf32>
    tpu.vector_store %arg10[%c0_7, %c0_8], %13 {strides = array<i32>} : memref<8x128xf32, #tpu.memory_space<vmem>>, vector<8x128xf32>,
    %c0_i32_9 = arith.constant 0 : i32
    %15 = arith.cmpi eq, %arg1, %c0_i32_9 : i32
    %16 = arith.extui %15 : i1 to i32
    %c0_i32_10 = arith.constant 0 : i32
    %17 = arith.cmpi ne, %16, %c0_i32_10 : i32
    scf.if %17 {
      %c0_11 = arith.constant 0 : index
      %c0_12 = arith.constant 0 : index
      %18 = vector.load %arg4[%c0_11, %c0_12] : memref<8x128xbf16, #tpu.memory_space<vmem>>, vector<8x128xbf16>
      %c0_13 = arith.constant 0 : index
      %c0_14 = arith.constant 0 : index
      %19 = vector.load %arg10[%c0_13, %c0_14] : memref<8x128xf32, #tpu.memory_space<vmem>>, vector<8x128xf32>
      %20 = arith.truncf %19 : vector<8x128xf32> to vector<8x128xbf16>
      %c0_15 = arith.constant 0 : index
      %c0_16 = arith.constant 0 : index
      %21 = vector.load %arg5[%c0_15, %c0_16] : memref<128x1024xbf16, #tpu.memory_space<vmem>>, vector<128x1024xbf16>
      %cst_17 = arith.constant dense<0.000000e+00> : vector<8x1024xf32>
      %22 = tpu.matmul %20, %21, %cst_17 {dimension_numbers = #tpu.dot_dimension_numbers<[1], [0], [0], [1], [0, 0, 1, 1], [], []>} : vector<8x128xbf16>, vector<128x1024xbf16>, vector<8x1024xf32> -> vector<8x1024xf32>
      %c0_18 = arith.constant 0 : index
      %c0_19 = arith.constant 0 : index
      %23 = vector.load %arg6[%c0_18, %c0_19] : memref<128x1024xbf16, #tpu.memory_space<vmem>>, vector<128x1024xbf16>
      %cst_20 = arith.constant dense<0.000000e+00> : vector<8x1024xf32>
      %24 = tpu.matmul %18, %23, %cst_20 {dimension_numbers = #tpu.dot_dimension_numbers<[1], [0], [0], [1], [0, 0, 1, 1], [], []>} : vector<8x128xbf16>, vector<128x1024xbf16>, vector<8x1024xf32> -> vector<8x1024xf32>
      %25 = arith.addf %22, %24 : vector<8x1024xf32>
      %c0_21 = arith.constant 0 : index
      %c0_22 = arith.constant 0 : index
      %26 = vector.load %arg7[%c0_21, %c0_22] : memref<1x1024xf32, #tpu.memory_space<vmem>>, vector<1x1024xf32>
      %27 = vector.broadcast %26 : vector<1x1024xf32> to vector<8x1024xf32>
      %28 = arith.addf %25, %27 : vector<8x1024xf32>
      %29 = arith.truncf %28 : vector<8x1024xf32> to vector<8x1024xbf16>
      %c0_23 = arith.constant 0 : index
      %c0_24 = arith.constant 0 : index
      %30 = vector.load %arg8[%c0_23, %c0_24] : memref<8x1024xbf16, #tpu.memory_space<vmem>>, vector<8x1024xbf16>
      tpu.vector_store %arg8[%c0_23, %c0_24], %29 {strides = array<i32>} : memref<8x1024xbf16, #tpu.memory_space<vmem>>, vector<8x1024xbf16>,
      %cst_25 = arith.constant 0.000000e+00 : f32
      %31 = vector.shape_cast %5 : vector<8x1xi1> to vector<8x1xi1>
      %32 = vector.broadcast %31 : vector<8x1xi1> to vector<8x1024xi1>
      %33 = vector.broadcast %cst_25 : f32 to vector<8x1024xf32>
      %34 = arith.select %32, %28, %33 : vector<8x1024xi1>, vector<8x1024xf32>
      %cst_26 = arith.constant dense<0.000000e+00> : vector<1024xf32>
      %35 = vector.multi_reduction <add>, %34, %cst_26 [0] : vector<8x1024xf32> to vector<1024xf32>
      %36 = vector.shape_cast %35 : vector<1024xf32> to vector<1x1024xf32>
      %37 = arith.mulf %34, %34 : vector<8x1024xf32>
      %cst_27 = arith.constant dense<0.000000e+00> : vector<1024xf32>
      %38 = vector.multi_reduction <add>, %37, %cst_27 [0] : vector<8x1024xf32> to vector<1024xf32>
      %39 = vector.shape_cast %38 : vector<1024xf32> to vector<1x1024xf32>
      %40 = tpu.concatenate %36, %39 in 0 : vector<1x1024xf32>, vector<1x1024xf32> -> vector<2x1024xf32>
      %c0_28 = arith.constant 0 : index
      %c0_29 = arith.constant 0 : index
      %41 = vector.load %arg9[%c0_28, %c0_29] : memref<2x1024xf32, #tpu.memory_space<vmem>>, vector<2x1024xf32>
      tpu.vector_store %arg9[%c0_28, %c0_29], %40 {strides = array<i32>} : memref<2x1024xf32, #tpu.memory_space<vmem>>, vector<2x1024xf32>,
    } else {
    }
    return
  }
  func.func @transform_0(%arg0: i32, %arg1: i32) -> (i32, i32) {
    %c0_i32 = arith.constant 0 : i32
    return %arg0, %arg1 : i32, i32
  }
  func.func @transform_1(%arg0: i32, %arg1: i32) -> (i32, i32) {
    %c0_i32 = arith.constant 0 : i32
    %c0_i32_0 = arith.constant 0 : i32
    return %arg1, %c0_i32 : i32, i32
  }
  func.func @transform_2(%arg0: i32, %arg1: i32) -> (i32, i32) {
    %c0_i32 = arith.constant 0 : i32
    %c0_i32_0 = arith.constant 0 : i32
    return %arg0, %c0_i32 : i32, i32
  }
  func.func @transform_3(%arg0: i32, %arg1: i32) -> (i32, i32) {
    %c0_i32 = arith.constant 0 : i32
    %c0_i32_0 = arith.constant 0 : i32
    %c0_i32_1 = arith.constant 0 : i32
    return %c0_i32, %c0_i32_0 : i32, i32
  }
  func.func @transform_4(%arg0: i32, %arg1: i32) -> (i32, i32) {
    %c0_i32 = arith.constant 0 : i32
    %c0_i32_0 = arith.constant 0 : i32
    %c0_i32_1 = arith.constant 0 : i32
    return %c0_i32, %c0_i32_0 : i32, i32
  }
  func.func @transform_5(%arg0: i32, %arg1: i32) -> (i32, i32) {
    %c0_i32 = arith.constant 0 : i32
    %c0_i32_0 = arith.constant 0 : i32
    %c0_i32_1 = arith.constant 0 : i32
    return %c0_i32, %c0_i32_0 : i32, i32
  }
  func.func @transform_6(%arg0: i32, %arg1: i32) -> (i32, i32) {
    %c0_i32 = arith.constant 0 : i32
    %c0_i32_0 = arith.constant 0 : i32
    return %arg0, %c0_i32 : i32, i32
  }
  func.func @transform_7(%arg0: i32, %arg1: i32) -> (i32, i32) {
    %c0_i32 = arith.constant 0 : i32
    %c0_i32_0 = arith.constant 0 : i32
    return %arg0, %c0_i32 : i32, i32
  }
}

module attributes {stable_mosaic.version = 11 : i64} {
  func.func @kernel(%arg0: i32, %arg1: i32, %arg2: memref<8x8xbf16, #tpu.memory_space<vmem>>, %arg3: memref<8x1024xbf16, #tpu.memory_space<vmem>>, %arg4: memref<8x1024xbf16, #tpu.memory_space<vmem>>, %arg5: memref<1024x1024xbf16, #tpu.memory_space<vmem>>, %arg6: memref<1024x1024xbf16, #tpu.memory_space<vmem>>, %arg7: memref<1x1024xf32, #tpu.memory_space<vmem>>, %arg8: memref<1x1024xf32, #tpu.memory_space<vmem>>, %arg9: memref<1x1024xf32, #tpu.memory_space<vmem>>, %arg10: memref<8x1024xbf16, #tpu.memory_space<vmem>>, %arg11: memref<2x1024xf32, #tpu.memory_space<vmem>>, %arg12: memref<8x1024xf32, #tpu.memory_space<vmem>>) attributes {dimension_semantics = [#tpu.dimension_semantics<parallel>, #tpu.dimension_semantics<arbitrary>], iteration_bounds = array<i64: 1, 1>, scalar_prefetch = 0 : i64, scratch_operands = 1 : i64, tpu.core_type = #tpu.core_type<tc>, window_params = [{transform_indices = @transform_0, window_bounds = array<i64: 8, 8>}, {transform_indices = @transform_1, window_bounds = array<i64: 8, 1024>}, {transform_indices = @transform_2, window_bounds = array<i64: 8, 1024>}, {pipeline_mode = #tpu.pipeline_mode<synchronous>, transform_indices = @transform_3, window_bounds = array<i64: 1024, 1024>}, {pipeline_mode = #tpu.pipeline_mode<synchronous>, transform_indices = @transform_4, window_bounds = array<i64: 1024, 1024>}, {pipeline_mode = #tpu.pipeline_mode<synchronous>, transform_indices = @transform_5, window_bounds = array<i64: 1, 1024>}, {pipeline_mode = #tpu.pipeline_mode<synchronous>, transform_indices = @transform_6, window_bounds = array<i64: 1, 1024>}, {pipeline_mode = #tpu.pipeline_mode<synchronous>, transform_indices = @transform_7, window_bounds = array<i64: 1, 1024>}, {transform_indices = @transform_8, window_bounds = array<i64: 8, 1024>}, {transform_indices = @transform_9, window_bounds = array<i64: 2, 1024>}]} {
    %c8_i32 = arith.constant 8 : i32
    %0 = arith.muli %arg0, %c8_i32 : i32
    %1 = tpu.iota {dimensions = array<i32: 0>} : vector<8x1xi32>
    %2 = vector.broadcast %0 : i32 to vector<8x1xi32>
    %3 = arith.addi %2, %1 : vector<8x1xi32>
    %c8_i32_0 = arith.constant 8 : i32
    %4 = vector.broadcast %c8_i32_0 : i32 to vector<8x1xi32>
    %5 = arith.cmpi slt, %3, %4 : vector<8x1xi32>
    %c0_i32 = arith.constant 0 : i32
    %6 = arith.cmpi eq, %arg1, %c0_i32 : i32
    %7 = arith.extui %6 : i1 to i32
    %c0_i32_1 = arith.constant 0 : i32
    %8 = arith.cmpi ne, %7, %c0_i32_1 : i32
    scf.if %8 {
      %cst_16 = arith.constant 0.000000e+00 : f32
      %28 = vector.broadcast %cst_16 : f32 to vector<8x1024xf32>
      %c0_17 = arith.constant 0 : index
      %c0_18 = arith.constant 0 : index
      %29 = vector.load %arg12[%c0_17, %c0_18] : memref<8x1024xf32, #tpu.memory_space<vmem>>, vector<8x1024xf32>
      tpu.vector_store %arg12[%c0_17, %c0_18], %28 {strides = array<i32>} : memref<8x1024xf32, #tpu.memory_space<vmem>>, vector<8x1024xf32>,
    } else {
    }
    %c0 = arith.constant 0 : index
    %c0_2 = arith.constant 0 : index
    %9 = vector.load %arg3[%c0, %c0_2] : memref<8x1024xbf16, #tpu.memory_space<vmem>>, vector<8x1024xbf16>
    %10 = arith.extf %9 : vector<8x1024xbf16> to vector<8x1024xf32>
    %c0_3 = arith.constant 0 : index
    %c0_4 = arith.constant 0 : index
    %11 = vector.load %arg8[%c0_3, %c0_4] : memref<1x1024xf32, #tpu.memory_space<vmem>>, vector<1x1024xf32>
    %12 = vector.broadcast %11 : vector<1x1024xf32> to vector<8x1024xf32>
    %13 = arith.mulf %10, %12 : vector<8x1024xf32>
    %c0_5 = arith.constant 0 : index
    %c0_6 = arith.constant 0 : index
    %14 = vector.load %arg9[%c0_5, %c0_6] : memref<1x1024xf32, #tpu.memory_space<vmem>>, vector<1x1024xf32>
    %15 = vector.broadcast %14 : vector<1x1024xf32> to vector<8x1024xf32>
    %16 = arith.addf %13, %15 : vector<8x1024xf32>
    %cst = arith.constant 0.000000e+00 : f32
    %17 = vector.broadcast %cst : f32 to vector<8x1024xf32>
    %18 = arith.maximumf %16, %17 : vector<8x1024xf32>
    %19 = arith.truncf %18 : vector<8x1024xf32> to vector<8x1024xbf16>
    %c0_7 = arith.constant 0 : index
    %c0_8 = arith.constant 0 : index
    %20 = vector.load %arg12[%c0_7, %c0_8] : memref<8x1024xf32, #tpu.memory_space<vmem>>, vector<8x1024xf32>
    %c0_9 = arith.constant 0 : index
    %c0_10 = arith.constant 0 : index
    %21 = vector.load %arg2[%c0_9, %c0_10] : memref<8x8xbf16, #tpu.memory_space<vmem>>, vector<8x8xbf16>
    %cst_11 = arith.constant dense<0.000000e+00> : vector<8x1024xf32>
    %22 = tpu.matmul %21, %19, %cst_11 {dimension_numbers = #tpu.dot_dimension_numbers<[1], [0], [0], [1], [0, 0, 1, 1], [], []>} : vector<8x8xbf16>, vector<8x1024xbf16>, vector<8x1024xf32> -> vector<8x1024xf32>
    %23 = arith.addf %20, %22 : vector<8x1024xf32>
    %c0_12 = arith.constant 0 : index
    %c0_13 = arith.constant 0 : index
    %24 = vector.load %arg12[%c0_12, %c0_13] : memref<8x1024xf32, #tpu.memory_space<vmem>>, vector<8x1024xf32>
    tpu.vector_store %arg12[%c0_12, %c0_13], %23 {strides = array<i32>} : memref<8x1024xf32, #tpu.memory_space<vmem>>, vector<8x1024xf32>,
    %c0_i32_14 = arith.constant 0 : i32
    %25 = arith.cmpi eq, %arg1, %c0_i32_14 : i32
    %26 = arith.extui %25 : i1 to i32
    %c0_i32_15 = arith.constant 0 : i32
    %27 = arith.cmpi ne, %26, %c0_i32_15 : i32
    scf.if %27 {
      %c0_16 = arith.constant 0 : index
      %c0_17 = arith.constant 0 : index
      %28 = vector.load %arg4[%c0_16, %c0_17] : memref<8x1024xbf16, #tpu.memory_space<vmem>>, vector<8x1024xbf16>
      %29 = arith.extf %28 : vector<8x1024xbf16> to vector<8x1024xf32>
      %c0_18 = arith.constant 0 : index
      %c0_19 = arith.constant 0 : index
      %30 = vector.load %arg8[%c0_18, %c0_19] : memref<1x1024xf32, #tpu.memory_space<vmem>>, vector<1x1024xf32>
      %31 = vector.broadcast %30 : vector<1x1024xf32> to vector<8x1024xf32>
      %32 = arith.mulf %29, %31 : vector<8x1024xf32>
      %c0_20 = arith.constant 0 : index
      %c0_21 = arith.constant 0 : index
      %33 = vector.load %arg9[%c0_20, %c0_21] : memref<1x1024xf32, #tpu.memory_space<vmem>>, vector<1x1024xf32>
      %34 = vector.broadcast %33 : vector<1x1024xf32> to vector<8x1024xf32>
      %35 = arith.addf %32, %34 : vector<8x1024xf32>
      %cst_22 = arith.constant 0.000000e+00 : f32
      %36 = vector.broadcast %cst_22 : f32 to vector<8x1024xf32>
      %37 = arith.maximumf %35, %36 : vector<8x1024xf32>
      %38 = arith.truncf %37 : vector<8x1024xf32> to vector<8x1024xbf16>
      %c0_23 = arith.constant 0 : index
      %c0_24 = arith.constant 0 : index
      %39 = vector.load %arg12[%c0_23, %c0_24] : memref<8x1024xf32, #tpu.memory_space<vmem>>, vector<8x1024xf32>
      %40 = arith.truncf %39 : vector<8x1024xf32> to vector<8x1024xbf16>
      %c0_25 = arith.constant 0 : index
      %c0_26 = arith.constant 0 : index
      %41 = vector.load %arg5[%c0_25, %c0_26] : memref<1024x1024xbf16, #tpu.memory_space<vmem>>, vector<1024x1024xbf16>
      %cst_27 = arith.constant dense<0.000000e+00> : vector<8x1024xf32>
      %42 = tpu.matmul %40, %41, %cst_27 {dimension_numbers = #tpu.dot_dimension_numbers<[1], [0], [0], [1], [0, 0, 1, 1], [], []>} : vector<8x1024xbf16>, vector<1024x1024xbf16>, vector<8x1024xf32> -> vector<8x1024xf32>
      %c0_28 = arith.constant 0 : index
      %c0_29 = arith.constant 0 : index
      %43 = vector.load %arg6[%c0_28, %c0_29] : memref<1024x1024xbf16, #tpu.memory_space<vmem>>, vector<1024x1024xbf16>
      %cst_30 = arith.constant dense<0.000000e+00> : vector<8x1024xf32>
      %44 = tpu.matmul %38, %43, %cst_30 {dimension_numbers = #tpu.dot_dimension_numbers<[1], [0], [0], [1], [0, 0, 1, 1], [], []>} : vector<8x1024xbf16>, vector<1024x1024xbf16>, vector<8x1024xf32> -> vector<8x1024xf32>
      %45 = arith.addf %42, %44 : vector<8x1024xf32>
      %c0_31 = arith.constant 0 : index
      %c0_32 = arith.constant 0 : index
      %46 = vector.load %arg7[%c0_31, %c0_32] : memref<1x1024xf32, #tpu.memory_space<vmem>>, vector<1x1024xf32>
      %47 = vector.broadcast %46 : vector<1x1024xf32> to vector<8x1024xf32>
      %48 = arith.addf %45, %47 : vector<8x1024xf32>
      %49 = arith.truncf %48 : vector<8x1024xf32> to vector<8x1024xbf16>
      %c0_33 = arith.constant 0 : index
      %c0_34 = arith.constant 0 : index
      %50 = vector.load %arg10[%c0_33, %c0_34] : memref<8x1024xbf16, #tpu.memory_space<vmem>>, vector<8x1024xbf16>
      tpu.vector_store %arg10[%c0_33, %c0_34], %49 {strides = array<i32>} : memref<8x1024xbf16, #tpu.memory_space<vmem>>, vector<8x1024xbf16>,
      %cst_35 = arith.constant 0.000000e+00 : f32
      %51 = vector.shape_cast %5 : vector<8x1xi1> to vector<8x1xi1>
      %52 = vector.broadcast %51 : vector<8x1xi1> to vector<8x1024xi1>
      %53 = vector.broadcast %cst_35 : f32 to vector<8x1024xf32>
      %54 = arith.select %52, %48, %53 : vector<8x1024xi1>, vector<8x1024xf32>
      %cst_36 = arith.constant dense<0.000000e+00> : vector<1024xf32>
      %55 = vector.multi_reduction <add>, %54, %cst_36 [0] : vector<8x1024xf32> to vector<1024xf32>
      %56 = vector.shape_cast %55 : vector<1024xf32> to vector<1x1024xf32>
      %57 = arith.mulf %54, %54 : vector<8x1024xf32>
      %cst_37 = arith.constant dense<0.000000e+00> : vector<1024xf32>
      %58 = vector.multi_reduction <add>, %57, %cst_37 [0] : vector<8x1024xf32> to vector<1024xf32>
      %59 = vector.shape_cast %58 : vector<1024xf32> to vector<1x1024xf32>
      %60 = tpu.concatenate %56, %59 in 0 : vector<1x1024xf32>, vector<1x1024xf32> -> vector<2x1024xf32>
      %c0_38 = arith.constant 0 : index
      %c0_39 = arith.constant 0 : index
      %61 = vector.load %arg11[%c0_38, %c0_39] : memref<2x1024xf32, #tpu.memory_space<vmem>>, vector<2x1024xf32>
      tpu.vector_store %arg11[%c0_38, %c0_39], %60 {strides = array<i32>} : memref<2x1024xf32, #tpu.memory_space<vmem>>, vector<2x1024xf32>,
    } else {
    }
    return
  }
  func.func @transform_0(%arg0: i32, %arg1: i32) -> (i32, i32) {
    %c0_i32 = arith.constant 0 : i32
    return %arg0, %arg1 : i32, i32
  }
  func.func @transform_1(%arg0: i32, %arg1: i32) -> (i32, i32) {
    %c0_i32 = arith.constant 0 : i32
    %c0_i32_0 = arith.constant 0 : i32
    return %arg1, %c0_i32 : i32, i32
  }
  func.func @transform_2(%arg0: i32, %arg1: i32) -> (i32, i32) {
    %c0_i32 = arith.constant 0 : i32
    %c0_i32_0 = arith.constant 0 : i32
    return %arg0, %c0_i32 : i32, i32
  }
  func.func @transform_3(%arg0: i32, %arg1: i32) -> (i32, i32) {
    %c0_i32 = arith.constant 0 : i32
    %c0_i32_0 = arith.constant 0 : i32
    %c0_i32_1 = arith.constant 0 : i32
    return %c0_i32, %c0_i32_0 : i32, i32
  }
  func.func @transform_4(%arg0: i32, %arg1: i32) -> (i32, i32) {
    %c0_i32 = arith.constant 0 : i32
    %c0_i32_0 = arith.constant 0 : i32
    %c0_i32_1 = arith.constant 0 : i32
    return %c0_i32, %c0_i32_0 : i32, i32
  }
  func.func @transform_5(%arg0: i32, %arg1: i32) -> (i32, i32) {
    %c0_i32 = arith.constant 0 : i32
    %c0_i32_0 = arith.constant 0 : i32
    %c0_i32_1 = arith.constant 0 : i32
    return %c0_i32, %c0_i32_0 : i32, i32
  }
  func.func @transform_6(%arg0: i32, %arg1: i32) -> (i32, i32) {
    %c0_i32 = arith.constant 0 : i32
    %c0_i32_0 = arith.constant 0 : i32
    %c0_i32_1 = arith.constant 0 : i32
    return %c0_i32, %c0_i32_0 : i32, i32
  }
  func.func @transform_7(%arg0: i32, %arg1: i32) -> (i32, i32) {
    %c0_i32 = arith.constant 0 : i32
    %c0_i32_0 = arith.constant 0 : i32
    %c0_i32_1 = arith.constant 0 : i32
    return %c0_i32, %c0_i32_0 : i32, i32
  }
  func.func @transform_8(%arg0: i32, %arg1: i32) -> (i32, i32) {
    %c0_i32 = arith.constant 0 : i32
    %c0_i32_0 = arith.constant 0 : i32
    return %arg0, %c0_i32 : i32, i32
  }
  func.func @transform_9(%arg0: i32, %arg1: i32) -> (i32, i32) {
    %c0_i32 = arith.constant 0 : i32
    %c0_i32_0 = arith.constant 0 : i32
    return %arg0, %c0_i32 : i32, i32
  }
}

module attributes {stable_mosaic.version = 11 : i64} {
  func.func @_head_kernel(%arg0: i32, %arg1: memref<8x1024xbf16, #tpu.memory_space<vmem>>, %arg2: memref<1x1024xf32, #tpu.memory_space<vmem>>, %arg3: memref<1x1024xf32, #tpu.memory_space<vmem>>, %arg4: memref<1024x512xbf16, #tpu.memory_space<vmem>>, %arg5: memref<1x512xf32, #tpu.memory_space<vmem>>, %arg6: memref<512x128xbf16, #tpu.memory_space<vmem>>, %arg7: memref<1x128xf32, #tpu.memory_space<vmem>>, %arg8: memref<8x128xf32, #tpu.memory_space<vmem>>) attributes {dimension_semantics = [#tpu.dimension_semantics<parallel>], iteration_bounds = array<i64: 1>, scalar_prefetch = 0 : i64, scratch_operands = 0 : i64, tpu.core_type = #tpu.core_type<tc>, window_params = [{transform_indices = @transform_0, window_bounds = array<i64: 8, 1024>}, {pipeline_mode = #tpu.pipeline_mode<synchronous>, transform_indices = @transform_1, window_bounds = array<i64: 1, 1024>}, {pipeline_mode = #tpu.pipeline_mode<synchronous>, transform_indices = @transform_2, window_bounds = array<i64: 1, 1024>}, {pipeline_mode = #tpu.pipeline_mode<synchronous>, transform_indices = @transform_3, window_bounds = array<i64: 1024, 512>}, {pipeline_mode = #tpu.pipeline_mode<synchronous>, transform_indices = @transform_4, window_bounds = array<i64: 1, 512>}, {pipeline_mode = #tpu.pipeline_mode<synchronous>, transform_indices = @transform_5, window_bounds = array<i64: 512, 128>}, {pipeline_mode = #tpu.pipeline_mode<synchronous>, transform_indices = @transform_6, window_bounds = array<i64: 1, 128>}, {transform_indices = @transform_7, window_bounds = array<i64: 8, 128>}]} {
    %c0 = arith.constant 0 : index
    %c0_0 = arith.constant 0 : index
    %0 = vector.load %arg1[%c0, %c0_0] : memref<8x1024xbf16, #tpu.memory_space<vmem>>, vector<8x1024xbf16>
    %1 = arith.extf %0 : vector<8x1024xbf16> to vector<8x1024xf32>
    %c0_1 = arith.constant 0 : index
    %c0_2 = arith.constant 0 : index
    %2 = vector.load %arg2[%c0_1, %c0_2] : memref<1x1024xf32, #tpu.memory_space<vmem>>, vector<1x1024xf32>
    %3 = vector.broadcast %2 : vector<1x1024xf32> to vector<8x1024xf32>
    %4 = arith.mulf %1, %3 : vector<8x1024xf32>
    %c0_3 = arith.constant 0 : index
    %c0_4 = arith.constant 0 : index
    %5 = vector.load %arg3[%c0_3, %c0_4] : memref<1x1024xf32, #tpu.memory_space<vmem>>, vector<1x1024xf32>
    %6 = vector.broadcast %5 : vector<1x1024xf32> to vector<8x1024xf32>
    %7 = arith.addf %4, %6 : vector<8x1024xf32>
    %cst = arith.constant 0.000000e+00 : f32
    %8 = vector.broadcast %cst : f32 to vector<8x1024xf32>
    %9 = arith.maximumf %7, %8 : vector<8x1024xf32>
    %10 = arith.truncf %9 : vector<8x1024xf32> to vector<8x1024xbf16>
    %c0_5 = arith.constant 0 : index
    %c0_6 = arith.constant 0 : index
    %11 = vector.load %arg4[%c0_5, %c0_6] : memref<1024x512xbf16, #tpu.memory_space<vmem>>, vector<1024x512xbf16>
    %cst_7 = arith.constant dense<0.000000e+00> : vector<8x512xf32>
    %12 = tpu.matmul %10, %11, %cst_7 {dimension_numbers = #tpu.dot_dimension_numbers<[1], [0], [0], [1], [0, 0, 1, 1], [], []>} : vector<8x1024xbf16>, vector<1024x512xbf16>, vector<8x512xf32> -> vector<8x512xf32>
    %c0_8 = arith.constant 0 : index
    %c0_9 = arith.constant 0 : index
    %13 = vector.load %arg5[%c0_8, %c0_9] : memref<1x512xf32, #tpu.memory_space<vmem>>, vector<1x512xf32>
    %14 = vector.broadcast %13 : vector<1x512xf32> to vector<8x512xf32>
    %15 = arith.addf %12, %14 : vector<8x512xf32>
    %cst_10 = arith.constant 0.000000e+00 : f32
    %16 = vector.broadcast %cst_10 : f32 to vector<8x512xf32>
    %17 = arith.maximumf %15, %16 : vector<8x512xf32>
    %18 = arith.truncf %17 : vector<8x512xf32> to vector<8x512xbf16>
    %c0_11 = arith.constant 0 : index
    %c0_12 = arith.constant 0 : index
    %19 = vector.load %arg6[%c0_11, %c0_12] : memref<512x128xbf16, #tpu.memory_space<vmem>>, vector<512x128xbf16>
    %cst_13 = arith.constant dense<0.000000e+00> : vector<8x128xf32>
    %20 = tpu.matmul %18, %19, %cst_13 {dimension_numbers = #tpu.dot_dimension_numbers<[1], [0], [0], [1], [0, 0, 1, 1], [], []>} : vector<8x512xbf16>, vector<512x128xbf16>, vector<8x128xf32> -> vector<8x128xf32>
    %c0_14 = arith.constant 0 : index
    %c0_15 = arith.constant 0 : index
    %21 = vector.load %arg7[%c0_14, %c0_15] : memref<1x128xf32, #tpu.memory_space<vmem>>, vector<1x128xf32>
    %22 = vector.broadcast %21 : vector<1x128xf32> to vector<8x128xf32>
    %23 = arith.addf %20, %22 : vector<8x128xf32>
    %c0_16 = arith.constant 0 : index
    %c0_17 = arith.constant 0 : index
    %24 = vector.load %arg8[%c0_16, %c0_17] : memref<8x128xf32, #tpu.memory_space<vmem>>, vector<8x128xf32>
    tpu.vector_store %arg8[%c0_16, %c0_17], %23 {strides = array<i32>} : memref<8x128xf32, #tpu.memory_space<vmem>>, vector<8x128xf32>,
    return
  }
  func.func @transform_0(%arg0: i32) -> (i32, i32) {
    %c0_i32 = arith.constant 0 : i32
    %c0_i32_0 = arith.constant 0 : i32
    return %arg0, %c0_i32 : i32, i32
  }
  func.func @transform_1(%arg0: i32) -> (i32, i32) {
    %c0_i32 = arith.constant 0 : i32
    %c0_i32_0 = arith.constant 0 : i32
    %c0_i32_1 = arith.constant 0 : i32
    return %c0_i32, %c0_i32_0 : i32, i32
  }
  func.func @transform_2(%arg0: i32) -> (i32, i32) {
    %c0_i32 = arith.constant 0 : i32
    %c0_i32_0 = arith.constant 0 : i32
    %c0_i32_1 = arith.constant 0 : i32
    return %c0_i32, %c0_i32_0 : i32, i32
  }
  func.func @transform_3(%arg0: i32) -> (i32, i32) {
    %c0_i32 = arith.constant 0 : i32
    %c0_i32_0 = arith.constant 0 : i32
    %c0_i32_1 = arith.constant 0 : i32
    return %c0_i32, %c0_i32_0 : i32, i32
  }
  func.func @transform_4(%arg0: i32) -> (i32, i32) {
    %c0_i32 = arith.constant 0 : i32
    %c0_i32_0 = arith.constant 0 : i32
    %c0_i32_1 = arith.constant 0 : i32
    return %c0_i32, %c0_i32_0 : i32, i32
  }
  func.func @transform_5(%arg0: i32) -> (i32, i32) {
    %c0_i32 = arith.constant 0 : i32
    %c0_i32_0 = arith.constant 0 : i32
    %c0_i32_1 = arith.constant 0 : i32
    return %c0_i32, %c0_i32_0 : i32, i32
  }
  func.func @transform_6(%arg0: i32) -> (i32, i32) {
    %c0_i32 = arith.constant 0 : i32
    %c0_i32_0 = arith.constant 0 : i32
    %c0_i32_1 = arith.constant 0 : i32
    return %c0_i32, %c0_i32_0 : i32, i32
  }
  func.func @transform_7(%arg0: i32) -> (i32, i32) {
    %c0_i32 = arith.constant 0 : i32
    %c0_i32_0 = arith.constant 0 : i32
    return %arg0, %c0_i32 : i32, i32
  }
}

</mosaic_0001>

<llo_original>
// kernel: hogcn_forward.3
$region0: #{hogcn_forward.3}
  #allocation0 [shape = 'u32[]', space=smem, size = 0x4, offset = 0x4, fixed_abs, tag = 'smem constant byte address 0x4 - core index']
  #allocation1 [shape = 'u32[144,128]{1,0:T(1,128)}', space=vmem, size = 0x12000, scoped, tag = 'internal scratch']
  #allocation2 [shape = 'f32[8,128]{1,0:T(8,128)}', space=vmem, size = 0x1000, scoped, tag = 'scratch operand']
  %s0 = inlined_call_operand.vmem [shape: bf16[8,8], index: 0, kind: input, shape index: {}]
  %s1 = inlined_call_operand.vmem [shape: bf16[8,128], index: 1, kind: input, shape index: {}, may-alias: {1,2}]
  %s2 = inlined_call_operand.vmem [shape: bf16[8,128], index: 2, kind: input, shape index: {}, may-alias: {1,2}]
  %s3 = inlined_call_operand.vmem [shape: bf16[128,1024], index: 3, kind: input, shape index: {}]
  %s4 = inlined_call_operand.vmem [shape: bf16[128,1024], index: 4, kind: input, shape index: {}]
  %s5 = inlined_call_operand.vmem [shape: f32[1,1024], index: 5, kind: input, shape index: {}]
  %s6 = inlined_call_operand.vmem [shape: bf16[8,1024], index: 6, kind: output, shape index: {0}]
  %s7 = inlined_call_operand.vmem [shape: f32[2,1024], index: 7, kind: output, shape index: {1}]
  %8 = xla_tuple %s6, %s7
  %s9 = sld [smem:[#allocation0]]
  $region50: #{hogcn_forward.3} parent=0
    _
  %s11 = ssub.s32 1, %s9
  %s12 = scalar_select 0, %s11, %s9
  // Predicated region
  $region2: #{hogcn_forward.3} parent=0 // pred_check
    _
  $region3: #{hogcn_forward.3} parent=0 // pred_check_branch
    %14 = sbr.rel (0) target = $region5
  $region4: #{hogcn_forward.3} parent=0 // pred_region
    _
  $region5: #{hogcn_forward.3} parent=0 // pred_fallthru
    _
  // Predicated region
  $region6: #{hogcn_forward.3} parent=0 // pred_check
    _
  $region7: #{hogcn_forward.3} parent=0 // pred_check_branch
    %16 = sbr.rel (0) target = $region9
  $region8: #{hogcn_forward.3} parent=0 // pred_region
    _
  $region9: #{hogcn_forward.3} parent=0 // pred_fallthru
    _
  // Predicated region
  $region10: #{hogcn_forward.3} parent=0 // pred_check
    _
  $region11: #{hogcn_forward.3} parent=0 // pred_check_branch
    %18 = sbr.rel (0) target = $region13
  $region12: #{hogcn_forward.3} parent=0 // pred_region
    _
  $region13: #{hogcn_forward.3} parent=0 // pred_fallthru
    _
  // Predicated region
  $region14: #{hogcn_forward.3} parent=0 // pred_check
    _
  $region15: #{hogcn_forward.3} parent=0 // pred_check_branch
    %20 = sbr.rel (0) target = $region17
  $region16: #{hogcn_forward.3} parent=0 // pred_region
    _
  $region17: #{hogcn_forward.3} parent=0 // pred_fallthru
    _
  // Predicated region
  $region18: #{hogcn_forward.3} parent=0 // pred_check
    _
  $region19: #{hogcn_forward.3} parent=0 // pred_check_branch
    %22 = sbr.rel (0) target = $region21
  $region20: #{hogcn_forward.3} parent=0 // pred_region
    _
  $region21: #{hogcn_forward.3} parent=0 // pred_fallthru
    _
  // Predicated region
  $region22: #{hogcn_forward.3} parent=0 // pred_check
    _
  $region23: #{hogcn_forward.3} parent=0 // pred_check_branch
    %24 = sbr.rel (0) target = $region25
  $region24: #{hogcn_forward.3} parent=0 // pred_region
    _
  $region25: #{hogcn_forward.3} parent=0 // pred_fallthru
    _
  %s26 = smul.u32 0, 8
  %v27 = vlaneseq
  %v28 = vshrl.u32 %v27, 7
  %v29 = vstv %s26
  %v30 = vadd.s32 %v29, %v28
  %vm31 = vcmp.lt.s32.totalorder %v30, 8
  %p32 = scmp.eq.s32.totalorder 0, 0
  // Predicated region
  $region26: #{hogcn_forward.3} parent=0 // pred_check
    %p33 = pneg %p32
  $region27: #{hogcn_forward.3} parent=0 // pred_check_branch
    %35 = sbr.rel (%p33) target = $region29
  $region28: #{hogcn_forward.3} parent=0 // pred_region
    %36 = vst [vmem:[#allocation2] sm:$0xff] 0.0
  $region29: #{hogcn_forward.3} parent=0 // pred_fallthru
    _
  %v37 = vld [vmem:[%s1] sm:$0xf]
  %v38 = vld [vmem:[#allocation2] sm:$0xff]
  %v39 = vld [vmem:[%s0] sm:$0xf]
  %vm40 = vcmask 64512
  %v42 = vsel %vm40, %v39, 0
  %vm44 = vcmask 1043456
  %v46 = vsel %vm44, %v37, 0
  %48 = vmatprep.subr.bf16.mxu0 0
  %49 = vmatpush1.bf16.msra.mxu0 %v46
  %50 = vmatprep.subr.bf16.mxu0 0
  %51 = vmatpush1.bf16.msra.mxu0 0
  %52 = vmatprep.subr.bf16.mxu0 0
  %53 = vmatpush1.bf16.msra.mxu0 0
  %54 = vmatprep.subr.bf16.mxu0 0
  %55 = vmatpush1.bf16.msra.mxu0 0
  %56 = vmatprep.subr.bf16.mxu0 0
  %57 = vmatpush1.bf16.msra.mxu0 0
  %58 = vmatprep.subr.bf16.mxu0 0
  %59 = vmatpush1.bf16.msra.mxu0 0
  %60 = vmatprep.subr.bf16.mxu0 0
  %61 = vmatpush1.bf16.msra.mxu0 0
  %62 = vmatprep.subr.bf16.mxu0 0
  %63 = vmatpush1.bf16.msra.mxu0 0
  %64 = vmatprep.subr.bf16.mxu0 0
  %65 = vmatpush1.bf16.msra.mxu0 0
  %66 = vmatprep.subr.bf16.mxu0 0
  %67 = vmatpush1.bf16.msra.mxu0 0
  %68 = vmatprep.subr.bf16.mxu0 0
  %69 = vmatpush1.bf16.msra.mxu0 0
  %70 = vmatprep.subr.bf16.mxu0 0
  %71 = vmatpush1.bf16.msra.mxu0 0
  %72 = vmatprep.subr.bf16.mxu0 0
  %73 = vmatpush1.bf16.msra.mxu0 0
  %74 = vmatprep.subr.bf16.mxu0 0
  %75 = vmatpush1.bf16.msra.mxu0 0
  %76 = vmatprep.subr.bf16.mxu0 0
  %77 = vmatpush1.bf16.msra.mxu0 0
  %78 = vmatprep.subr.bf16.mxu0 0
  %79 = vmatpush1.bf16.msra.mxu0 0
  %80 = vmatprep.mubr.bf16.mxu0 0
  %81 = vmatmul.mubr.bf16.gmra.mrb[0].mxu0 %v42
  %v82 = vpop.f32.mrb[0].mxu0
  %v83 = vadd.f32 0.0, %v82
  %v84 = vpop.f32.mrb[0].mxu0
  %v85 = vpop.f32.mrb[0].mxu0
  %v86 = vpop.f32.mrb[0].mxu0
  %87 = vdwg.mxu0
  %v88 = vadd.f32 %v38, %v83
  %89 = vst [vmem:[#allocation2] sm:$0xff] %v88
  // Predicated region
  $region30: #{hogcn_forward.3} parent=0 // pred_check
    %p90 = pneg %p32
  $region31: #{hogcn_forward.3} parent=0 // pred_check_branch
    %92 = sbr.rel (%p90) target = $region33
  $region32: #{hogcn_forward.3} parent=0 // pred_region
    %v93 = vld [vmem:[%s2] sm:$0xf]
    %v94 = vld [vmem:[#allocation2] sm:$0xff]
    %v95 = vpack.c.bf16 %v94, %v94
    %v96 = vld [vmem:[%s3] sm:$0xff]
    %v97 = vld [vmem:[%s3 + $0x8] sm:$0xff]
    %v98 = vld [vmem:[%s3 + $0x10] sm:$0xff]
    %v99 = vld [vmem:[%s3 + $0x18] sm:$0xff]
    %v100 = vld [vmem:[%s3 + $0x20] sm:$0xff]
    %v101 = vld [vmem:[%s3 + $0x28] sm:$0xff]
    %v102 = vld [vmem:[%s3 + $0x30] sm:$0xff]
    %v103 = vld [vmem:[%s3 + $0x38] sm:$0xff]
    %v104 = vld [vmem:[%s3 + $0x40] sm:$0xff]
    %v105 = vld [vmem:[%s3 + $0x48] sm:$0xff]
    %v106 = vld [vmem:[%s3 + $0x50] sm:$0xff]
    %v107 = vld [vmem:[%s3 + $0x58] sm:$0xff]
    %v108 = vld [vmem:[%s3 + $0x60] sm:$0xff]
    %v109 = vld [vmem:[%s3 + $0x68] sm:$0xff]
    %v110 = vld [vmem:[%s3 + $0x70] sm:$0xff]
    %v111 = vld [vmem:[%s3 + $0x78] sm:$0xff]
    %v112 = vld [vmem:[%s3 + $0x80] sm:$0xff]
    %v113 = vld [vmem:[%s3 + $0x88] sm:$0xff]
    %v114 = vld [vmem:[%s3 + $0x90] sm:$0xff]
    %v115 = vld [vmem:[%s3 + $0x98] sm:$0xff]
    %v116 = vld [vmem:[%s3 + $0xa0] sm:$0xff]
    %v117 = vld [vmem:[%s3 + $0xa8] sm:$0xff]
    %v118 = vld [vmem:[%s3 + $0xb0] sm:$0xff]
    %v119 = vld [vmem:[%s3 + $0xb8] sm:$0xff]
    %v120 = vld [vmem:[%s3 + $0xc0] sm:$0xff]
    %v121 = vld [vmem:[%s3 + $0xc8] sm:$0xff]
    %v122 = vld [vmem:[%s3 + $0xd0] sm:$0xff]
    %v123 = vld [vmem:[%s3 + $0xd8] sm:$0xff]
    %v124 = vld [vmem:[%s3 + $0xe0] sm:$0xff]
    %v125 = vld [vmem:[%s3 + $0xe8] sm:$0xff]
    %v126 = vld [vmem:[%s3 + $0xf0] sm:$0xff]
    %v127 = vld [vmem:[%s3 + $0xf8] sm:$0xff]
    %v128 = vld [vmem:[%s3 + $0x100] sm:$0xff]
    %v129 = vld [vmem:[%s3 + $0x108] sm:$0xff]
    %v130 = vld [vmem:[%s3 + $0x110] sm:$0xff]
    %v131 = vld [vmem:[%s3 + $0x118] sm:$0xff]
    %v132 = vld [vmem:[%s3 + $0x120] sm:$0xff]
    %v133 = vld [vmem:[%s3 + $0x128] sm:$0xff]
    %v134 = vld [vmem:[%s3 + $0x130] sm:$0xff]
    %v135 = vld [vmem:[%s3 + $0x138] sm:$0xff]
    %v136 = vld [vmem:[%s3 + $0x140] sm:$0xff]
    %v137 = vld [vmem:[%s3 + $0x148] sm:$0xff]
    %v138 = vld [vmem:[%s3 + $0x150] sm:$0xff]
    %v139 = vld [vmem:[%s3 + $0x158] sm:$0xff]
    %v140 = vld [vmem:[%s3 + $0x160] sm:$0xff]
    %v141 = vld [vmem:[%s3 + $0x168] sm:$0xff]
    %v142 = vld [vmem:[%s3 + $0x170] sm:$0xff]
    %v143 = vld [vmem:[%s3 + $0x178] sm:$0xff]
    %v144 = vld [vmem:[%s3 + $0x180] sm:$0xff]
    %v145 = vld [vmem:[%s3 + $0x188] sm:$0xff]
    %v146 = vld [vmem:[%s3 + $0x190] sm:$0xff]
    %v147 = vld [vmem:[%s3 + $0x198] sm:$0xff]
    %v148 = vld [vmem:[%s3 + $0x1a0] sm:$0xff]
    %v149 = vld [vmem:[%s3 + $0x1a8] sm:$0xff]
    %v150 = vld [vmem:[%s3 + $0x1b0] sm:$0xff]
    %v151 = vld [vmem:[%s3 + $0x1b8] sm:$0xff]
    %v152 = vld [vmem:[%s3 + $0x1c0] sm:$0xff]
    %v153 = vld [vmem:[%s3 + $0x1c8] sm:$0xff]
    %v154 = vld [vmem:[%s3 + $0x1d0] sm:$0xff]
    %v155 = vld [vmem:[%s3 + $0x1d8] sm:$0xff]
    %v156 = vld [vmem:[%s3 + $0x1e0] sm:$0xff]
    %v157 = vld [vmem:[%s3 + $0x1e8] sm:$0xff]
    %v158 = vld [vmem:[%s3 + $0x1f0] sm:$0xff]
    %v159 = vld [vmem:[%s3 + $0x1f8] sm:$0xff]
    %v160 = vld [vmem:[%s4] sm:$0xff]
    %v161 = vld [vmem:[%s4 + $0x8] sm:$0xff]
    %v162 = vld [vmem:[%s4 + $0x10] sm:$0xff]
    %v163 = vld [vmem:[%s4 + $0x18] sm:$0xff]
    %v164 = vld [vmem:[%s4 + $0x20] sm:$0xff]
    %v165 = vld [vmem:[%s4 + $0x28] sm:$0xff]
    %v166 = vld [vmem:[%s4 + $0x30] sm:$0xff]
    %v167 = vld [vmem:[%s4 + $0x38] sm:$0xff]
    %v168 = vld [vmem:[%s4 + $0x40] sm:$0xff]
    %v169 = vld [vmem:[%s4 + $0x48] sm:$0xff]
    %v170 = vld [vmem:[%s4 + $0x50] sm:$0xff]
    %v171 = vld [vmem:[%s4 + $0x58] sm:$0xff]
    %v172 = vld [vmem:[%s4 + $0x60] sm:$0xff]
    %v173 = vld [vmem:[%s4 + $0x68] sm:$0xff]
    %v174 = vld [vmem:[%s4 + $0x70] sm:$0xff]
    %v175 = vld [vmem:[%s4 + $0x78] sm:$0xff]
    %v176 = vld [vmem:[%s4 + $0x80] sm:$0xff]
    %v177 = vld [vmem:[%s4 + $0x88] sm:$0xff]
    %v178 = vld [vmem:[%s4 + $0x90] sm:$0xff]
    %v179 = vld [vmem:[%s4 + $0x98] sm:$0xff]
    %v180 = vld [vmem:[%s4 + $0xa0] sm:$0xff]
    %v181 = vld [vmem:[%s4 + $0xa8] sm:$0xff]
    %v182 = vld [vmem:[%s4 + $0xb0] sm:$0xff]
    %v183 = vld [vmem:[%s4 + $0xb8] sm:$0xff]
    %v184 = vld [vmem:[%s4 + $0xc0] sm:$0xff]
    %v185 = vld [vmem:[%s4 + $0xc8] sm:$0xff]
    %v186 = vld [vmem:[%s4 + $0xd0] sm:$0xff]
    %v187 = vld [vmem:[%s4 + $0xd8] sm:$0xff]
    %v188 = vld [vmem:[%s4 + $0xe0] sm:$0xff]
    %v189 = vld [vmem:[%s4 + $0xe8] sm:$0xff]
    %v190 = vld [vmem:[%s4 + $0xf0] sm:$0xff]
    %v191 = vld [vmem:[%s4 + $0xf8] sm:$0xff]
    %v192 = vld [vmem:[%s4 + $0x100] sm:$0xff]
    %v193 = vld [vmem:[%s4 + $0x108] sm:$0xff]
    %v194 = vld [vmem:[%s4 + $0x110] sm:$0xff]
    %v195 = vld [vmem:[%s4 + $0x118] sm:$0xff]
    %v196 = vld [vmem:[%s4 + $0x120] sm:$0xff]
    %v197 = vld [vmem:[%s4 + $0x128] sm:$0xff]
    %v198 = vld [vmem:[%s4 + $0x130] sm:$0xff]
    %v199 = vld [vmem:[%s4 + $0x138] sm:$0xff]
    %v200 = vld [vmem:[%s4 + $0x140] sm:$0xff]
    %v201 = vld [vmem:[%s4 + $0x148] sm:$0xff]
    %v202 = vld [vmem:[%s4 + $0x150] sm:$0xff]
    %v203 = vld [vmem:[%s4 + $0x158] sm:$0xff]
    %v204 = vld [vmem:[%s4 + $0x160] sm:$0xff]
    %v205 = vld [vmem:[%s4 + $0x168] sm:$0xff]
    %v206 = vld [vmem:[%s4 + $0x170] sm:$0xff]
    %v207 = vld [vmem:[%s4 + $0x178] sm:$0xff]
    %v208 = vld [vmem:[%s4 + $0x180] sm:$0xff]
    %v209 = vld [vmem:[%s4 + $0x188] sm:$0xff]
    %v210 = vld [vmem:[%s4 + $0x190] sm:$0xff]
    %v211 = vld [vmem:[%s4 + $0x198] sm:$0xff]
    %v212 = vld [vmem:[%s4 + $0x1a0] sm:$0xff]
    %v213 = vld [vmem:[%s4 + $0x1a8] sm:$0xff]
    %v214 = vld [vmem:[%s4 + $0x1b0] sm:$0xff]
    %v215 = vld [vmem:[%s4 + $0x1b8] sm:$0xff]
    %v216 = vld [vmem:[%s4 + $0x1c0] sm:$0xff]
    %v217 = vld [vmem:[%s4 + $0x1c8] sm:$0xff]
    %v218 = vld [vmem:[%s4 + $0x1d0] sm:$0xff]
    %v219 = vld [vmem:[%s4 + $0x1d8] sm:$0xff]
    %v220 = vld [vmem:[%s4 + $0x1e0] sm:$0xff]
    %v221 = vld [vmem:[%s4 + $0x1e8] sm:$0xff]
    %v222 = vld [vmem:[%s4 + $0x1f0] sm:$0xff]
    %v223 = vld [vmem:[%s4 + $0x1f8] sm:$0xff]
    %v288 = vunpack.c.l.b16 %v160
    %v289 = vunpack.c.h.b16 %v160
    %v290 = vunpack.c.l.b16 %v161
    %v291 = vunpack.c.h.b16 %v161
    %v292 = vunpack.c.l.b16 %v162
    %v293 = vunpack.c.h.b16 %v162
    %v294 = vunpack.c.l.b16 %v163
    %v295 = vunpack.c.h.b16 %v163
    %v296 = vunpack.c.l.b16 %v164
    %v297 = vunpack.c.h.b16 %v164
    %v298 = vunpack.c.l.b16 %v165
    %v299 = vunpack.c.h.b16 %v165
    %v300 = vunpack.c.l.b16 %v166
    %v301 = vunpack.c.h.b16 %v166
    %v302 = vunpack.c.l.b16 %v167
    %v303 = vunpack.c.h.b16 %v167
    %v304 = vunpack.c.l.b16 %v168
    %v305 = vunpack.c.h.b16 %v168
    %v306 = vunpack.c.l.b16 %v169
    %v307 = vunpack.c.h.b16 %v169
    %v308 = vunpack.c.l.b16 %v170
    %v309 = vunpack.c.h.b16 %v170
    %v310 = vunpack.c.l.b16 %v171
    %v311 = vunpack.c.h.b16 %v171
    %v312 = vunpack.c.l.b16 %v172
    %v313 = vunpack.c.h.b16 %v172
    %v314 = vunpack.c.l.b16 %v173
    %v315 = vunpack.c.h.b16 %v173
    %v316 = vunpack.c.l.b16 %v174
    %v317 = vunpack.c.h.b16 %v174
    %v318 = vunpack.c.l.b16 %v175
    %v319 = vunpack.c.h.b16 %v175
    %v320 = vunpack.c.l.b16 %v176
    %v321 = vunpack.c.h.b16 %v176
    %v322 = vunpack.c.l.b16 %v177
    %v323 = vunpack.c.h.b16 %v177
    %v324 = vunpack.c.l.b16 %v178
    %v325 = vunpack.c.h.b16 %v178
    %v326 = vunpack.c.l.b16 %v179
    %v327 = vunpack.c.h.b16 %v179
    %v328 = vunpack.c.l.b16 %v180
    %v329 = vunpack.c.h.b16 %v180
    %v330 = vunpack.c.l.b16 %v181
    %v331 = vunpack.c.h.b16 %v181
    %v332 = vunpack.c.l.b16 %v182
    %v333 = vunpack.c.h.b16 %v182
    %v334 = vunpack.c.l.b16 %v183
    %v335 = vunpack.c.h.b16 %v183
    %v336 = vunpack.c.l.b16 %v184
    %v337 = vunpack.c.h.b16 %v184
    %v338 = vunpack.c.l.b16 %v185
    %v339 = vunpack.c.h.b16 %v185
    %v340 = vunpack.c.l.b16 %v186
    %v341 = vunpack.c.h.b16 %v186
    %v342 = vunpack.c.l.b16 %v187
    %v343 = vunpack.c.h.b16 %v187
    %v344 = vunpack.c.l.b16 %v188
    %v345 = vunpack.c.h.b16 %v188
    %v346 = vunpack.c.l.b16 %v189
    %v347 = vunpack.c.h.b16 %v189
    %v348 = vunpack.c.l.b16 %v190
    %v349 = vunpack.c.h.b16 %v190
    %v350 = vunpack.c.l.b16 %v191
    %v351 = vunpack.c.h.b16 %v191
    %v352 = vunpack.c.l.b16 %v192
    %v353 = vunpack.c.h.b16 %v192
    %v354 = vunpack.c.l.b16 %v193
    %v355 = vunpack.c.h.b16 %v193
    %v356 = vunpack.c.l.b16 %v194
    %v357 = vunpack.c.h.b16 %v194
    %v358 = vunpack.c.l.b16 %v195
    %v359 = vunpack.c.h.b16 %v195
    %v360 = vunpack.c.l.b16 %v196
    %v361 = vunpack.c.h.b16 %v196
    %v362 = vunpack.c.l.b16 %v197
    %v363 = vunpack.c.h.b16 %v197
    %v364 = vunpack.c.l.b16 %v198
    %v365 = vunpack.c.h.b16 %v198
    %v366 = vunpack.c.l.b16 %v199
    %v367 = vunpack.c.h.b16 %v199
    %v368 = vunpack.c.l.b16 %v200
    %v369 = vunpack.c.h.b16 %v200
    %v370 = vunpack.c.l.b16 %v201
    %v371 = vunpack.c.h.b16 %v201
    %v372 = vunpack.c.l.b16 %v202
    %v373 = vunpack.c.h.b16 %v202
    %v374 = vunpack.c.l.b16 %v203
    %v375 = vunpack.c.h.b16 %v203
    %v376 = vunpack.c.l.b16 %v204
    %v377 = vunpack.c.h.b16 %v204
    %v378 = vunpack.c.l.b16 %v205
    %v379 = vunpack.c.h.b16 %v205
    %v380 = vunpack.c.l.b16 %v206
    %v381 = vunpack.c.h.b16 %v206
    %v382 = vunpack.c.l.b16 %v207
    %v383 = vunpack.c.h.b16 %v207
    %v384 = vunpack.c.l.b16 %v208
    %v385 = vunpack.c.h.b16 %v208
    %v386 = vunpack.c.l.b16 %v209
    %v387 = vunpack.c.h.b16 %v209
    %v388 = vunpack.c.l.b16 %v210
    %v389 = vunpack.c.h.b16 %v210
    %v390 = vunpack.c.l.b16 %v211
    %v391 = vunpack.c.h.b16 %v211
    %v392 = vunpack.c.l.b16 %v212
    %v393 = vunpack.c.h.b16 %v212
    %v394 = vunpack.c.l.b16 %v213
    %v395 = vunpack.c.h.b16 %v213
    %v396 = vunpack.c.l.b16 %v214
    %v397 = vunpack.c.h.b16 %v214
    %v398 = vunpack.c.l.b16 %v215
    %v399 = vunpack.c.h.b16 %v215
    %v400 = vunpack.c.l.b16 %v216
    %v401 = vunpack.c.h.b16 %v216
    %v402 = vunpack.c.l.b16 %v217
    %v403 = vunpack.c.h.b16 %v217
    %v404 = vunpack.c.l.b16 %v218
    %v405 = vunpack.c.h.b16 %v218
    %v406 = vunpack.c.l.b16 %v219
    %v407 = vunpack.c.h.b16 %v219
    %v408 = vunpack.c.l.b16 %v220
    %v409 = vunpack.c.h.b16 %v220
    %v410 = vunpack.c.l.b16 %v221
    %v411 = vunpack.c.h.b16 %v221
    %v412 = vunpack.c.l.b16 %v222
    %v413 = vunpack.c.h.b16 %v222
    %v414 = vunpack.c.l.b16 %v223
    %v415 = vunpack.c.h.b16 %v223
    %v416 = vpack.c.b16 %v296, %v288
    %v417 = vpack.c.b16 %v297, %v289
    %v418 = vpack.c.b16 %v298, %v290
    %v419 = vpack.c.b16 %v299, %v291
    %v420 = vpack.c.b16 %v300, %v292
    %v421 = vpack.c.b16 %v301, %v293
    %v422 = vpack.c.b16 %v302, %v294
    %v423 = vpack.c.b16 %v303, %v295
    %v424 = vpack.c.b16 %v312, %v304
    %v425 = vpack.c.b16 %v313, %v305
    %v426 = vpack.c.b16 %v314, %v306
    %v427 = vpack.c.b16 %v315, %v307
    %v428 = vpack.c.b16 %v316, %v308
    %v429 = vpack.c.b16 %v317, %v309
    %v430 = vpack.c.b16 %v318, %v310
    %v431 = vpack.c.b16 %v319, %v311
    %v432 = vpack.c.b16 %v328, %v320
    %v433 = vpack.c.b16 %v329, %v321
    %v434 = vpack.c.b16 %v330, %v322
    %v435 = vpack.c.b16 %v331, %v323
    %v436 = vpack.c.b16 %v332, %v324
    %v437 = vpack.c.b16 %v333, %v325
    %v438 = vpack.c.b16 %v334, %v326
    %v439 = vpack.c.b16 %v335, %v327
    %v440 = vpack.c.b16 %v344, %v336
    %v441 = vpack.c.b16 %v345, %v337
    %v442 = vpack.c.b16 %v346, %v338
    %v443 = vpack.c.b16 %v347, %v339
    %v444 = vpack.c.b16 %v348, %v340
    %v445 = vpack.c.b16 %v349, %v341
    %v446 = vpack.c.b16 %v350, %v342
    %v447 = vpack.c.b16 %v351, %v343
    %v448 = vpack.c.b16 %v360, %v352
    %v449 = vpack.c.b16 %v361, %v353
    %v450 = vpack.c.b16 %v362, %v354
    %v451 = vpack.c.b16 %v363, %v355
    %v452 = vpack.c.b16 %v364, %v356
    %v453 = vpack.c.b16 %v365, %v357
    %v454 = vpack.c.b16 %v366, %v358
    %v455 = vpack.c.b16 %v367, %v359
    %v456 = vpack.c.b16 %v376, %v368
    %v457 = vpack.c.b16 %v377, %v369
    %v458 = vpack.c.b16 %v378, %v370
    %v459 = vpack.c.b16 %v379, %v371
    %v460 = vpack.c.b16 %v380, %v372
    %v461 = vpack.c.b16 %v381, %v373
    %v462 = vpack.c.b16 %v382, %v374
    %v463 = vpack.c.b16 %v383, %v375
    %v464 = vpack.c.b16 %v392, %v384
    %v465 = vpack.c.b16 %v393, %v385
    %v466 = vpack.c.b16 %v394, %v386
    %v467 = vpack.c.b16 %v395, %v387
    %v468 = vpack.c.b16 %v396, %v388
    %v469 = vpack.c.b16 %v397, %v389
    %v470 = vpack.c.b16 %v398, %v390
    %v471 = vpack.c.b16 %v399, %v391
    %v472 = vpack.c.b16 %v408, %v400
    %v473 = vpack.c.b16 %v409, %v401
    %v474 = vpack.c.b16 %v410, %v402
    %v475 = vpack.c.b16 %v411, %v403
    %v476 = vpack.c.b16 %v412, %v404
    %v477 = vpack.c.b16 %v413, %v405
    %v478 = vpack.c.b16 %v414, %v406
    %v479 = vpack.c.b16 %v415, %v407
    %544 = vmatprep.subr.bf16.mxu0 %v417
    %545 = vmatpush1.bf16.msra.mxu0 %v416
    %546 = vmatprep.subr.bf16.mxu0 %v425
    %547 = vmatpush1.bf16.msra.mxu0 %v424
    %548 = vmatprep.subr.bf16.mxu0 %v433
    %549 = vmatpush1.bf16.msra.mxu0 %v432
    %550 = vmatprep.subr.bf16.mxu0 %v441
    %551 = vmatpush1.bf16.msra.mxu0 %v440
    %552 = vmatprep.subr.bf16.mxu0 %v449
    %553 = vmatpush1.bf16.msra.mxu0 %v448
    %554 = vmatprep.subr.bf16.mxu0 %v457
    %555 = vmatpush1.bf16.msra.mxu0 %v456
    %556 = vmatprep.subr.bf16.mxu0 %v465
    %557 = vmatpush1.bf16.msra.mxu0 %v464
    %558 = vmatprep.subr.bf16.mxu0 %v473
    %559 = vmatpush1.bf16.msra.mxu0 %v472
    %560 = vmatprep.subr.bf16.mxu0 0
    %561 = vmatpush1.bf16.msra.mxu0 0
    %562 = vmatprep.subr.bf16.mxu0 0
    %563 = vmatpush1.bf16.msra.mxu0 0
    %564 = vmatprep.subr.bf16.mxu0 0
    %565 = vmatpush1.bf16.msra.mxu0 0
    %566 = vmatprep.subr.bf16.mxu0 0
    %567 = vmatpush1.bf16.msra.mxu0 0
    %568 = vmatprep.subr.bf16.mxu0 0
    %569 = vmatpush1.bf16.msra.mxu0 0
    %570 = vmatprep.subr.bf16.mxu0 0
    %571 = vmatpush1.bf16.msra.mxu0 0
    %572 = vmatprep.subr.bf16.mxu0 0
    %573 = vmatpush1.bf16.msra.mxu0 0
    %574 = vmatprep.subr.bf16.mxu0 0
    %575 = vmatpush1.bf16.msra.mxu0 0
    %576 = vmatprep.mubr.bf16.mxu0 0
    %577 = vmatmul.mubr.bf16.gmra.mrb[0].mxu0 %v93
    %v578 = vpop.f32.mrb[0].mxu0
    %v579 = vadd.f32 0.0, %v578
    %v580 = vpop.f32.mrb[0].mxu0
    %v581 = vadd.f32 0.0, %v580
    %v582 = vpop.f32.mrb[0].mxu0
    %v583 = vpop.f32.mrb[0].mxu0
    %584 = vdwg.mxu0
    %585 = vmatprep.subr.bf16.mxu0 %v419
    %586 = vmatpush1.bf16.msra.mxu0 %v418
    %587 = vmatprep.subr.bf16.mxu0 %v427
    %588 = vmatpush1.bf16.msra.mxu0 %v426
    %589 = vmatprep.subr.bf16.mxu0 %v435
    %590 = vmatpush1.bf16.msra.mxu0 %v434
    %591 = vmatprep.subr.bf16.mxu0 %v443
    %592 = vmatpush1.bf16.msra.mxu0 %v442
    %593 = vmatprep.subr.bf16.mxu0 %v451
    %594 = vmatpush1.bf16.msra.mxu0 %v450
    %595 = vmatprep.subr.bf16.mxu0 %v459
    %596 = vmatpush1.bf16.msra.mxu0 %v458
    %597 = vmatprep.subr.bf16.mxu0 %v467
    %598 = vmatpush1.bf16.msra.mxu0 %v466
    %599 = vmatprep.subr.bf16.mxu0 %v475
    %600 = vmatpush1.bf16.msra.mxu0 %v474
    %601 = vmatprep.subr.bf16.mxu0 0
    %602 = vmatpush1.bf16.msra.mxu0 0
    %603 = vmatprep.subr.bf16.mxu0 0
    %604 = vmatpush1.bf16.msra.mxu0 0
    %605 = vmatprep.subr.bf16.mxu0 0
    %606 = vmatpush1.bf16.msra.mxu0 0
    %607 = vmatprep.subr.bf16.mxu0 0
    %608 = vmatpush1.bf16.msra.mxu0 0
    %609 = vmatprep.subr.bf16.mxu0 0
    %610 = vmatpush1.bf16.msra.mxu0 0
    %611 = vmatprep.subr.bf16.mxu0 0
    %612 = vmatpush1.bf16.msra.mxu0 0
    %613 = vmatprep.subr.bf16.mxu0 0
    %614 = vmatpush1.bf16.msra.mxu0 0
    %615 = vmatprep.subr.bf16.mxu0 0
    %616 = vmatpush1.bf16.msra.mxu0 0
    %617 = vmatprep.mubr.bf16.mxu0 0
    %618 = vmatmul.mubr.bf16.gmra.mrb[0].mxu0 %v93
    %v619 = vpop.f32.mrb[0].mxu0
    %v620 = vadd.f32 0.0, %v619
    %v621 = vpop.f32.mrb[0].mxu0
    %v622 = vadd.f32 0.0, %v621
    %v623 = vpop.f32.mrb[0].mxu0
    %v624 = vpop.f32.mrb[0].mxu0
    %625 = vdwg.mxu0
    %626 = vmatprep.subr.bf16.mxu0 %v421
    %627 = vmatpush1.bf16.msra.mxu0 %v420
    %628 = vmatprep.subr.bf16.mxu0 %v429
    %629 = vmatpush1.bf16.msra.mxu0 %v428
    %630 = vmatprep.subr.bf16.mxu0 %v437
    %631 = vmatpush1.bf16.msra.mxu0 %v436
    %632 = vmatprep.subr.bf16.mxu0 %v445
    %633 = vmatpush1.bf16.msra.mxu0 %v444
    %634 = vmatprep.subr.bf16.mxu0 %v453
    %635 = vmatpush1.bf16.msra.mxu0 %v452
    %636 = vmatprep.subr.bf16.mxu0 %v461
    %637 = vmatpush1.bf16.msra.mxu0 %v460
    %638 = vmatprep.subr.bf16.mxu0 %v469
    %639 = vmatpush1.bf16.msra.mxu0 %v468
    %640 = vmatprep.subr.bf16.mxu0 %v477
    %641 = vmatpush1.bf16.msra.mxu0 %v476
    %642 = vmatprep.subr.bf16.mxu0 0
    %643 = vmatpush1.bf16.msra.mxu0 0
    %644 = vmatprep.subr.bf16.mxu0 0
    %645 = vmatpush1.bf16.msra.mxu0 0
    %646 = vmatprep.subr.bf16.mxu0 0
    %647 = vmatpush1.bf16.msra.mxu0 0
    %648 = vmatprep.subr.bf16.mxu0 0
    %649 = vmatpush1.bf16.msra.mxu0 0
    %650 = vmatprep.subr.bf16.mxu0 0
    %651 = vmatpush1.bf16.msra.mxu0 0
    %652 = vmatprep.subr.bf16.mxu0 0
    %653 = vmatpush1.bf16.msra.mxu0 0
    %654 = vmatprep.subr.bf16.mxu0 0
    %655 = vmatpush1.bf16.msra.mxu0 0
    %656 = vmatprep.subr.bf16.mxu0 0
    %657 = vmatpush1.bf16.msra.mxu0 0
    %658 = vmatprep.mubr.bf16.mxu0 0
    %659 = vmatmul.mubr.bf16.gmra.mrb[0].mxu0 %v93
    %v660 = vpop.f32.mrb[0].mxu0
    %v661 = vadd.f32 0.0, %v660
    %v662 = vpop.f32.mrb[0].mxu0
    %v663 = vadd.f32 0.0, %v662
    %v664 = vpop.f32.mrb[0].mxu0
    %v665 = vpop.f32.mrb[0].mxu0
    %666 = vdwg.mxu0
    %667 = vmatprep.subr.bf16.mxu0 %v423
    %668 = vmatpush1.bf16.msra.mxu0 %v422
    %669 = vmatprep.subr.bf16.mxu0 %v431
    %670 = vmatpush1.bf16.msra.mxu0 %v430
    %671 = vmatprep.subr.bf16.mxu0 %v439
    %672 = vmatpush1.bf16.msra.mxu0 %v438
    %673 = vmatprep.subr.bf16.mxu0 %v447
    %674 = vmatpush1.bf16.msra.mxu0 %v446
    %675 = vmatprep.subr.bf16.mxu0 %v455
    %676 = vmatpush1.bf16.msra.mxu0 %v454
    %677 = vmatprep.subr.bf16.mxu0 %v463
    %678 = vmatpush1.bf16.msra.mxu0 %v462
    %679 = vmatprep.subr.bf16.mxu0 %v471
    %680 = vmatpush1.bf16.msra.mxu0 %v470
    %681 = vmatprep.subr.bf16.mxu0 %v479
    %682 = vmatpush1.bf16.msra.mxu0 %v478
    %683 = vmatprep.subr.bf16.mxu0 0
    %684 = vmatpush1.bf16.msra.mxu0 0
    %685 = vmatprep.subr.bf16.mxu0 0
    %686 = vmatpush1.bf16.msra.mxu0 0
    %687 = vmatprep.subr.bf16.mxu0 0
    %688 = vmatpush1.bf16.msra.mxu0 0
    %689 = vmatprep.subr.bf16.mxu0 0
    %690 = vmatpush1.bf16.msra.mxu0 0
    %691 = vmatprep.subr.bf16.mxu0 0
    %692 = vmatpush1.bf16.msra.mxu0 0
    %693 = vmatprep.subr.bf16.mxu0 0
    %694 = vmatpush1.bf16.msra.mxu0 0
    %695 = vmatprep.subr.bf16.mxu0 0
    %696 = vmatpush1.bf16.msra.mxu0 0
    %697 = vmatprep.subr.bf16.mxu0 0
    %698 = vmatpush1.bf16.msra.mxu0 0
    %699 = vmatprep.mubr.bf16.mxu0 0
    %700 = vmatmul.mubr.bf16.gmra.mrb[0].mxu0 %v93
    %v701 = vpop.f32.mrb[0].mxu0
    %v702 = vadd.f32 0.0, %v701
    %v703 = vpop.f32.mrb[0].mxu0
    %v704 = vadd.f32 0.0, %v703
    %v705 = vpop.f32.mrb[0].mxu0
    %v706 = vpop.f32.mrb[0].mxu0
    %707 = vdwg.mxu0
    %v772 = vunpack.c.l.b16 %v96
    %v773 = vunpack.c.h.b16 %v96
    %v774 = vunpack.c.l.b16 %v97
    %v775 = vunpack.c.h.b16 %v97
    %v776 = vunpack.c.l.b16 %v98
    %v777 = vunpack.c.h.b16 %v98
    %v778 = vunpack.c.l.b16 %v99
    %v779 = vunpack.c.h.b16 %v99
    %v780 = vunpack.c.l.b16 %v100
    %v781 = vunpack.c.h.b16 %v100
    %v782 = vunpack.c.l.b16 %v101
    %v783 = vunpack.c.h.b16 %v101
    %v784 = vunpack.c.l.b16 %v102
    %v785 = vunpack.c.h.b16 %v102
    %v786 = vunpack.c.l.b16 %v103
    %v787 = vunpack.c.h.b16 %v103
    %v788 = vunpack.c.l.b16 %v104
    %v789 = vunpack.c.h.b16 %v104
    %v790 = vunpack.c.l.b16 %v105
    %v791 = vunpack.c.h.b16 %v105
    %v792 = vunpack.c.l.b16 %v106
    %v793 = vunpack.c.h.b16 %v106
    %v794 = vunpack.c.l.b16 %v107
    %v795 = vunpack.c.h.b16 %v107
    %v796 = vunpack.c.l.b16 %v108
    %v797 = vunpack.c.h.b16 %v108
    %v798 = vunpack.c.l.b16 %v109
    %v799 = vunpack.c.h.b16 %v109
    %v800 = vunpack.c.l.b16 %v110
    %v801 = vunpack.c.h.b16 %v110
    %v802 = vunpack.c.l.b16 %v111
    %v803 = vunpack.c.h.b16 %v111
    %v804 = vunpack.c.l.b16 %v112
    %v805 = vunpack.c.h.b16 %v112
    %v806 = vunpack.c.l.b16 %v113
    %v807 = vunpack.c.h.b16 %v113
    %v808 = vunpack.c.l.b16 %v114
    %v809 = vunpack.c.h.b16 %v114
    %v810 = vunpack.c.l.b16 %v115
    %v811 = vunpack.c.h.b16 %v115
    %v812 = vunpack.c.l.b16 %v116
    %v813 = vunpack.c.h.b16 %v116
    %v814 = vunpack.c.l.b16 %v117
    %v815 = vunpack.c.h.b16 %v117
    %v816 = vunpack.c.l.b16 %v118
    %v817 = vunpack.c.h.b16 %v118
    %v818 = vunpack.c.l.b16 %v119
    %v819 = vunpack.c.h.b16 %v119
    %v820 = vunpack.c.l.b16 %v120
    %v821 = vunpack.c.h.b16 %v120
    %v822 = vunpack.c.l.b16 %v121
    %v823 = vunpack.c.h.b16 %v121
    %v824 = vunpack.c.l.b16 %v122
    %v825 = vunpack.c.h.b16 %v122
    %v826 = vunpack.c.l.b16 %v123
    %v827 = vunpack.c.h.b16 %v123
    %v828 = vunpack.c.l.b16 %v124
    %v829 = vunpack.c.h.b16 %v124
    %v830 = vunpack.c.l.b16 %v125
    %v831 = vunpack.c.h.b16 %v125
    %v832 = vunpack.c.l.b16 %v126
    %v833 = vunpack.c.h.b16 %v126
    %v834 = vunpack.c.l.b16 %v127
    %v835 = vunpack.c.h.b16 %v127
    %v836 = vunpack.c.l.b16 %v128
    %v837 = vunpack.c.h.b16 %v128
    %v838 = vunpack.c.l.b16 %v129
    %v839 = vunpack.c.h.b16 %v129
    %v840 = vunpack.c.l.b16 %v130
    %v841 = vunpack.c.h.b16 %v130
    %v842 = vunpack.c.l.b16 %v131
    %v843 = vunpack.c.h.b16 %v131
    %v844 = vunpack.c.l.b16 %v132
    %v845 = vunpack.c.h.b16 %v132
    %v846 = vunpack.c.l.b16 %v133
    %v847 = vunpack.c.h.b16 %v133
    %v848 = vunpack.c.l.b16 %v134
    %v849 = vunpack.c.h.b16 %v134
    %v850 = vunpack.c.l.b16 %v135
    %v851 = vunpack.c.h.b16 %v135
    %v852 = vunpack.c.l.b16 %v136
    %v853 = vunpack.c.h.b16 %v136
    %v854 = vunpack.c.l.b16 %v137
    %v855 = vunpack.c.h.b16 %v137
    %v856 = vunpack.c.l.b16 %v138
    %v857 = vunpack.c.h.b16 %v138
    %v858 = vunpack.c.l.b16 %v139
    %v859 = vunpack.c.h.b16 %v139
    %v860 = vunpack.c.l.b16 %v140
    %v861 = vunpack.c.h.b16 %v140
    %v862 = vunpack.c.l.b16 %v141
    %v863 = vunpack.c.h.b16 %v141
    %v864 = vunpack.c.l.b16 %v142
    %v865 = vunpack.c.h.b16 %v142
    %v866 = vunpack.c.l.b16 %v143
    %v867 = vunpack.c.h.b16 %v143
    %v868 = vunpack.c.l.b16 %v144
    %v869 = vunpack.c.h.b16 %v144
    %v870 = vunpack.c.l.b16 %v145
    %v871 = vunpack.c.h.b16 %v145
    %v872 = vunpack.c.l.b16 %v146
    %v873 = vunpack.c.h.b16 %v146
    %v874 = vunpack.c.l.b16 %v147
    %v875 = vunpack.c.h.b16 %v147
    %v876 = vunpack.c.l.b16 %v148
    %v877 = vunpack.c.h.b16 %v148
    %v878 = vunpack.c.l.b16 %v149
    %v879 = vunpack.c.h.b16 %v149
    %v880 = vunpack.c.l.b16 %v150
    %v881 = vunpack.c.h.b16 %v150
    %v882 = vunpack.c.l.b16 %v151
    %v883 = vunpack.c.h.b16 %v151
    %v884 = vunpack.c.l.b16 %v152
    %v885 = vunpack.c.h.b16 %v152
    %v886 = vunpack.c.l.b16 %v153
    %v887 = vunpack.c.h.b16 %v153
    %v888 = vunpack.c.l.b16 %v154
    %v889 = vunpack.c.h.b16 %v154
    %v890 = vunpack.c.l.b16 %v155
    %v891 = vunpack.c.h.b16 %v155
    %v892 = vunpack.c.l.b16 %v156
    %v893 = vunpack.c.h.b16 %v156
    %v894 = vunpack.c.l.b16 %v157
    %v895 = vunpack.c.h.b16 %v157
    %v896 = vunpack.c.l.b16 %v158
    %v897 = vunpack.c.h.b16 %v158
    %v898 = vunpack.c.l.b16 %v159
    %v899 = vunpack.c.h.b16 %v159
    %v900 = vpack.c.b16 %v780, %v772
    %v901 = vpack.c.b16 %v781, %v773
    %v902 = vpack.c.b16 %v782, %v774
    %v903 = vpack.c.b16 %v783, %v775
    %v904 = vpack.c.b16 %v784, %v776
    %v905 = vpack.c.b16 %v785, %v777
    %v906 = vpack.c.b16 %v786, %v778
    %v907 = vpack.c.b16 %v787, %v779
    %v908 = vpack.c.b16 %v796, %v788
    %v909 = vpack.c.b16 %v797, %v789
    %v910 = vpack.c.b16 %v798, %v790
    %v911 = vpack.c.b16 %v799, %v791
    %v912 = vpack.c.b16 %v800, %v792
    %v913 = vpack.c.b16 %v801, %v793
    %v914 = vpack.c.b16 %v802, %v794
    %v915 = vpack.c.b16 %v803, %v795
    %v916 = vpack.c.b16 %v812, %v804
    %v917 = vpack.c.b16 %v813, %v805
    %v918 = vpack.c.b16 %v814, %v806
    %v919 = vpack.c.b16 %v815, %v807
    %v920 = vpack.c.b16 %v816, %v808
    %v921 = vpack.c.b16 %v817, %v809
    %v922 = vpack.c.b16 %v818, %v810
    %v923 = vpack.c.b16 %v819, %v811
    %v924 = vpack.c.b16 %v828, %v820
    %v925 = vpack.c.b16 %v829, %v821
    %v926 = vpack.c.b16 %v830, %v822
    %v927 = vpack.c.b16 %v831, %v823
    %v928 = vpack.c.b16 %v832, %v824
    %v929 = vpack.c.b16 %v833, %v825
    %v930 = vpack.c.b16 %v834, %v826
    %v931 = vpack.c.b16 %v835, %v827
    %v932 = vpack.c.b16 %v844, %v836
    %v933 = vpack.c.b16 %v845, %v837
    %v934 = vpack.c.b16 %v846, %v838
    %v935 = vpack.c.b16 %v847, %v839
    %v936 = vpack.c.b16 %v848, %v840
    %v937 = vpack.c.b16 %v849, %v841
    %v938 = vpack.c.b16 %v850, %v842
    %v939 = vpack.c.b16 %v851, %v843
    %v940 = vpack.c.b16 %v860, %v852
    %v941 = vpack.c.b16 %v861, %v853
    %v942 = vpack.c.b16 %v862, %v854
    %v943 = vpack.c.b16 %v863, %v855
    %v944 = vpack.c.b16 %v864, %v856
    %v945 = vpack.c.b16 %v865, %v857
    %v946 = vpack.c.b16 %v866, %v858
    %v947 = vpack.c.b16 %v867, %v859
    %v948 = vpack.c.b16 %v876, %v868
    %v949 = vpack.c.b16 %v877, %v869
    %v950 = vpack.c.b16 %v878, %v870
    %v951 = vpack.c.b16 %v879, %v871
    %v952 = vpack.c.b16 %v880, %v872
    %v953 = vpack.c.b16 %v881, %v873
    %v954 = vpack.c.b16 %v882, %v874
    %v955 = vpack.c.b16 %v883, %v875
    %v956 = vpack.c.b16 %v892, %v884
    %v957 = vpack.c.b16 %v893, %v885
    %v958 = vpack.c.b16 %v894, %v886
    %v959 = vpack.c.b16 %v895, %v887
    %v960 = vpack.c.b16 %v896, %v888
    %v961 = vpack.c.b16 %v897, %v889
    %v962 = vpack.c.b16 %v898, %v890
    %v963 = vpack.c.b16 %v899, %v891
    %1028 = vmatprep.subr.bf16.mxu0 %v901
    %1029 = vmatpush1.bf16.msra.mxu0 %v900
    %1030 = vmatprep.subr.bf16.mxu0 %v909
    %1031 = vmatpush1.bf16.msra.mxu0 %v908
    %1032 = vmatprep.subr.bf16.mxu0 %v917
    %1033 = vmatpush1.bf16.msra.mxu0 %v916
    %1034 = vmatprep.subr.bf16.mxu0 %v925
    %1035 = vmatpush1.bf16.msra.mxu0 %v924
    %1036 = vmatprep.subr.bf16.mxu0 %v933
    %1037 = vmatpush1.bf16.msra.mxu0 %v932
    %1038 = vmatprep.subr.bf16.mxu0 %v941
    %1039 = vmatpush1.bf16.msra.mxu0 %v940
    %1040 = vmatprep.subr.bf16.mxu0 %v949
    %1041 = vmatpush1.bf16.msra.mxu0 %v948
    %1042 = vmatprep.subr.bf16.mxu0 %v957
    %1043 = vmatpush1.bf16.msra.mxu0 %v956
    %1044 = vmatprep.subr.bf16.mxu0 0
    %1045 = vmatpush1.bf16.msra.mxu0 0
    %1046 = vmatprep.subr.bf16.mxu0 0
    %1047 = vmatpush1.bf16.msra.mxu0 0
    %1048 = vmatprep.subr.bf16.mxu0 0
    %1049 = vmatpush1.bf16.msra.mxu0 0
    %1050 = vmatprep.subr.bf16.mxu0 0
    %1051 = vmatpush1.bf16.msra.mxu0 0
    %1052 = vmatprep.subr.bf16.mxu0 0
    %1053 = vmatpush1.bf16.msra.mxu0 0
    %1054 = vmatprep.subr.bf16.mxu0 0
    %1055 = vmatpush1.bf16.msra.mxu0 0
    %1056 = vmatprep.subr.bf16.mxu0 0
    %1057 = vmatpush1.bf16.msra.mxu0 0
    %1058 = vmatprep.subr.bf16.mxu0 0
    %1059 = vmatpush1.bf16.msra.mxu0 0
    %1060 = vmatprep.mubr.bf16.mxu0 0
    %1061 = vmatmul.mubr.bf16.gmra.mrb[0].mxu0 %v95
    %v1062 = vpop.f32.mrb[0].mxu0
    %v1063 = vadd.f32 %v579, %v1062
    %v1064 = vpop.f32.mrb[0].mxu0
    %v1065 = vadd.f32 %v581, %v1064
    %v1066 = vpop.f32.mrb[0].mxu0
    %v1067 = vpop.f32.mrb[0].mxu0
    %1068 = vdwg.mxu0
    %1069 = vmatprep.subr.bf16.mxu0 %v903
    %1070 = vmatpush1.bf16.msra.mxu0 %v902
    %1071 = vmatprep.subr.bf16.mxu0 %v911
    %1072 = vmatpush1.bf16.msra.mxu0 %v910
    %1073 = vmatprep.subr.bf16.mxu0 %v919
    %1074 = vmatpush1.bf16.msra.mxu0 %v918
    %1075 = vmatprep.subr.bf16.mxu0 %v927
    %1076 = vmatpush1.bf16.msra.mxu0 %v926
    %1077 = vmatprep.subr.bf16.mxu0 %v935
    %1078 = vmatpush1.bf16.msra.mxu0 %v934
    %1079 = vmatprep.subr.bf16.mxu0 %v943
    %1080 = vmatpush1.bf16.msra.mxu0 %v942
    %1081 = vmatprep.subr.bf16.mxu0 %v951
    %1082 = vmatpush1.bf16.msra.mxu0 %v950
    %1083 = vmatprep.subr.bf16.mxu0 %v959
    %1084 = vmatpush1.bf16.msra.mxu0 %v958
    %1085 = vmatprep.subr.bf16.mxu0 0
    %1086 = vmatpush1.bf16.msra.mxu0 0
    %1087 = vmatprep.subr.bf16.mxu0 0
    %1088 = vmatpush1.bf16.msra.mxu0 0
    %1089 = vmatprep.subr.bf16.mxu0 0
    %1090 = vmatpush1.bf16.msra.mxu0 0
    %1091 = vmatprep.subr.bf16.mxu0 0
    %1092 = vmatpush1.bf16.msra.mxu0 0
    %1093 = vmatprep.subr.bf16.mxu0 0
    %1094 = vmatpush1.bf16.msra.mxu0 0
    %1095 = vmatprep.subr.bf16.mxu0 0
    %1096 = vmatpush1.bf16.msra.mxu0 0
    %1097 = vmatprep.subr.bf16.mxu0 0
    %1098 = vmatpush1.bf16.msra.mxu0 0
    %1099 = vmatprep.subr.bf16.mxu0 0
    %1100 = vmatpush1.bf16.msra.mxu0 0
    %1101 = vmatprep.mubr.bf16.mxu0 0
    %1102 = vmatmul.mubr.bf16.gmra.mrb[0].mxu0 %v95
    %v1103 = vpop.f32.mrb[0].mxu0
    %v1104 = vadd.f32 %v620, %v1103
    %v1105 = vpop.f32.mrb[0].mxu0
    %v1106 = vadd.f32 %v622, %v1105
    %v1107 = vpop.f32.mrb[0].mxu0
    %v1108 = vpop.f32.mrb[0].mxu0
    %1109 = vdwg.mxu0
    %1110 = vmatprep.subr.bf16.mxu0 %v905
    %1111 = vmatpush1.bf16.msra.mxu0 %v904
    %1112 = vmatprep.subr.bf16.mxu0 %v913
    %1113 = vmatpush1.bf16.msra.mxu0 %v912
    %1114 = vmatprep.subr.bf16.mxu0 %v921
    %1115 = vmatpush1.bf16.msra.mxu0 %v920
    %1116 = vmatprep.subr.bf16.mxu0 %v929
    %1117 = vmatpush1.bf16.msra.mxu0 %v928
    %1118 = vmatprep.subr.bf16.mxu0 %v937
    %1119 = vmatpush1.bf16.msra.mxu0 %v936
    %1120 = vmatprep.subr.bf16.mxu0 %v945
    %1121 = vmatpush1.bf16.msra.mxu0 %v944
    %1122 = vmatprep.subr.bf16.mxu0 %v953
    %1123 = vmatpush1.bf16.msra.mxu0 %v952
    %1124 = vmatprep.subr.bf16.mxu0 %v961
    %1125 = vmatpush1.bf16.msra.mxu0 %v960
    %1126 = vmatprep.subr.bf16.mxu0 0
    %1127 = vmatpush1.bf16.msra.mxu0 0
    %1128 = vmatprep.subr.bf16.mxu0 0
    %1129 = vmatpush1.bf16.msra.mxu0 0
    %1130 = vmatprep.subr.bf16.mxu0 0
    %1131 = vmatpush1.bf16.msra.mxu0 0
    %1132 = vmatprep.subr.bf16.mxu0 0
    %1133 = vmatpush1.bf16.msra.mxu0 0
    %1134 = vmatprep.subr.bf16.mxu0 0
    %1135 = vmatpush1.bf16.msra.mxu0 0
    %1136 = vmatprep.subr.bf16.mxu0 0
    %1137 = vmatpush1.bf16.msra.mxu0 0
    %1138 = vmatprep.subr.bf16.mxu0 0
    %1139 = vmatpush1.bf16.msra.mxu0 0
    %1140 = vmatprep.subr.bf16.mxu0 0
    %1141 = vmatpush1.bf16.msra.mxu0 0
    %1142 = vmatprep.mubr.bf16.mxu0 0
    %1143 = vmatmul.mubr.bf16.gmra.mrb[0].mxu0 %v95
    %v1144 = vpop.f32.mrb[0].mxu0
    %v1145 = vadd.f32 %v661, %v1144
    %v1146 = vpop.f32.mrb[0].mxu0
    %v1147 = vadd.f32 %v663, %v1146
    %v1148 = vpop.f32.mrb[0].mxu0
    %v1149 = vpop.f32.mrb[0].mxu0
    %1150 = vdwg.mxu0
    %1151 = vmatprep.subr.bf16.mxu0 %v907
    %1152 = vmatpush1.bf16.msra.mxu0 %v906
    %1153 = vmatprep.subr.bf16.mxu0 %v915
    %1154 = vmatpush1.bf16.msra.mxu0 %v914
    %1155 = vmatprep.subr.bf16.mxu0 %v923
    %1156 = vmatpush1.bf16.msra.mxu0 %v922
    %1157 = vmatprep.subr.bf16.mxu0 %v931
    %1158 = vmatpush1.bf16.msra.mxu0 %v930
    %1159 = vmatprep.subr.bf16.mxu0 %v939
    %1160 = vmatpush1.bf16.msra.mxu0 %v938
    %1161 = vmatprep.subr.bf16.mxu0 %v947
    %1162 = vmatpush1.bf16.msra.mxu0 %v946
    %1163 = vmatprep.subr.bf16.mxu0 %v955
    %1164 = vmatpush1.bf16.msra.mxu0 %v954
    %1165 = vmatprep.subr.bf16.mxu0 %v963
    %1166 = vmatpush1.bf16.msra.mxu0 %v962
    %1167 = vmatprep.subr.bf16.mxu0 0
    %1168 = vmatpush1.bf16.msra.mxu0 0
    %1169 = vmatprep.subr.bf16.mxu0 0
    %1170 = vmatpush1.bf16.msra.mxu0 0
    %1171 = vmatprep.subr.bf16.mxu0 0
    %1172 = vmatpush1.bf16.msra.mxu0 0
    %1173 = vmatprep.subr.bf16.mxu0 0
    %1174 = vmatpush1.bf16.msra.mxu0 0
    %1175 = vmatprep.subr.bf16.mxu0 0
    %1176 = vmatpush1.bf16.msra.mxu0 0
    %1177 = vmatprep.subr.bf16.mxu0 0
    %1178 = vmatpush1.bf16.msra.mxu0 0
    %1179 = vmatprep.subr.bf16.mxu0 0
    %1180 = vmatpush1.bf16.msra.mxu0 0
    %1181 = vmatprep.subr.bf16.mxu0 0
    %1182 = vmatpush1.bf16.msra.mxu0 0
    %1183 = vmatprep.mubr.bf16.mxu0 0
    %1184 = vmatmul.mubr.bf16.gmra.mrb[0].mxu0 %v95
    %v1185 = vpop.f32.mrb[0].mxu0
    %v1186 = vadd.f32 %v702, %v1185
    %v1187 = vpop.f32.mrb[0].mxu0
    %v1188 = vadd.f32 %v704, %v1187
    %v1189 = vpop.f32.mrb[0].mxu0
    %v1190 = vpop.f32.mrb[0].mxu0
    %1191 = vdwg.mxu0
    %v1192 = vld [vmem:[%s5] sm:$0xff]
    %v1194 = vlaneseq
    %v1195 = vshrl.u32 %v1194, 7
    %v1196 = vsub.s32 0, %v1195
    %v1197 = vrot.slane %v1192, %v1196
    %v1198 = vlaneseq
    %v1199 = vshrl.u32 %v1198, 7
    %v1200 = vsub.s32 1, %v1199
    %v1201 = vrot.slane %v1192, %v1200
    %v1202 = vlaneseq
    %v1203 = vshrl.u32 %v1202, 7
    %v1204 = vsub.s32 2, %v1203
    %v1205 = vrot.slane %v1192, %v1204
    %v1206 = vlaneseq
    %v1207 = vshrl.u32 %v1206, 7
    %v1208 = vsub.s32 3, %v1207
    %v1209 = vrot.slane %v1192, %v1208
    %v1210 = vlaneseq
    %v1211 = vshrl.u32 %v1210, 7
    %v1212 = vsub.s32 4, %v1211
    %v1213 = vrot.slane %v1192, %v1212
    %v1214 = vlaneseq
    %v1215 = vshrl.u32 %v1214, 7
    %v1216 = vsub.s32 5, %v1215
    %v1217 = vrot.slane %v1192, %v1216
    %v1218 = vlaneseq
    %v1219 = vshrl.u32 %v1218, 7
    %v1220 = vsub.s32 6, %v1219
    %v1221 = vrot.slane %v1192, %v1220
    %v1222 = vlaneseq
    %v1223 = vshrl.u32 %v1222, 7
    %v1224 = vsub.s32 7, %v1223
    %v1225 = vrot.slane %v1192, %v1224
    %v1234 = vadd.f32 %v1063, %v1197
    %v1235 = vadd.f32 %v1065, %v1201
    %v1236 = vadd.f32 %v1104, %v1205
    %v1237 = vadd.f32 %v1106, %v1209
    %v1238 = vadd.f32 %v1145, %v1213
    %v1239 = vadd.f32 %v1147, %v1217
    %v1240 = vadd.f32 %v1186, %v1221
    %v1241 = vadd.f32 %v1188, %v1225
    %v1242 = vpack.c.bf16 %v1234, %v1234
    %v1243 = vpack.c.bf16 %v1235, %v1235
    %v1244 = vpack.c.bf16 %v1236, %v1236
    %v1245 = vpack.c.bf16 %v1237, %v1237
    %v1246 = vpack.c.bf16 %v1238, %v1238
    %v1247 = vpack.c.bf16 %v1239, %v1239
    %v1248 = vpack.c.bf16 %v1240, %v1240
    %v1249 = vpack.c.bf16 %v1241, %v1241
    %v1258 = vunpack.c.l.b16 %v1242
    %v1259 = vunpack.c.l.b16 %v1243
    %v1260 = vunpack.c.l.b16 %v1244
    %v1261 = vunpack.c.l.b16 %v1245
    %v1262 = vunpack.c.l.b16 %v1246
    %v1263 = vunpack.c.l.b16 %v1247
    %v1264 = vunpack.c.l.b16 %v1248
    %v1265 = vunpack.c.l.b16 %v1249
    %v1266 = vpack.c.b16 %v1259, %v1258
    %v1267 = vpack.c.b16 %v1261, %v1260
    %v1268 = vpack.c.b16 %v1263, %v1262
    %v1269 = vpack.c.b16 %v1265, %v1264
    %1274 = vst [vmem:[%s6] sm:$0xff] %v1266
    %1275 = vst [vmem:[%s6 + $0x8] sm:$0xff] %v1267
    %1276 = vst [vmem:[%s6 + $0x10] sm:$0xff] %v1268
    %1277 = vst [vmem:[%s6 + $0x18] sm:$0xff] %v1269
    %v1278 = vsel %vm31, 1, 0
    %vm1279 = vcmp.eq.s32.totalorder %v1278, 1
    %v1280 = vsel %vm1279, %v1234, 0.0
    %v1281 = vsel %vm1279, %v1235, 0.0
    %v1282 = vsel %vm1279, %v1236, 0.0
    %v1283 = vsel %vm1279, %v1237, 0.0
    %v1284 = vsel %vm1279, %v1238, 0.0
    %v1285 = vsel %vm1279, %v1239, 0.0
    %v1286 = vsel %vm1279, %v1240, 0.0
    %v1287 = vsel %vm1279, %v1241, 0.0
    %v1288 = vrot.slane %v1280, 4
    %v1289 = vadd.f32 %v1280, %v1288
    %v1290 = vrot.slane %v1289, 2
    %v1291 = vadd.f32 %v1289, %v1290
    %v1292 = vrot.slane %v1291, 1
    %v1293 = vadd.f32 %v1291, %v1292
    %v1294 = vrot.slane %v1281, 4
    %v1295 = vadd.f32 %v1281, %v1294
    %v1296 = vrot.slane %v1295, 2
    %v1297 = vadd.f32 %v1295, %v1296
    %v1298 = vrot.slane %v1297, 1
    %v1299 = vadd.f32 %v1297, %v1298
    %v1300 = vrot.slane %v1282, 4
    %v1301 = vadd.f32 %v1282, %v1300
    %v1302 = vrot.slane %v1301, 2
    %v1303 = vadd.f32 %v1301, %v1302
    %v1304 = vrot.slane %v1303, 1
    %v1305 = vadd.f32 %v1303, %v1304
    %v1306 = vrot.slane %v1283, 4
    %v1307 = vadd.f32 %v1283, %v1306
    %v1308 = vrot.slane %v1307, 2
    %v1309 = vadd.f32 %v1307, %v1308
    %v1310 = vrot.slane %v1309, 1
    %v1311 = vadd.f32 %v1309, %v1310
    %v1312 = vrot.slane %v1284, 4
    %v1313 = vadd.f32 %v1284, %v1312
    %v1314 = vrot.slane %v1313, 2
    %v1315 = vadd.f32 %v1313, %v1314
    %v1316 = vrot.slane %v1315, 1
    %v1317 = vadd.f32 %v1315, %v1316
    %v1318 = vrot.slane %v1285, 4
    %v1319 = vadd.f32 %v1285, %v1318
    %v1320 = vrot.slane %v1319, 2
    %v1321 = vadd.f32 %v1319, %v1320
    %v1322 = vrot.slane %v1321, 1
    %v1323 = vadd.f32 %v1321, %v1322
    %v1324 = vrot.slane %v1286, 4
    %v1325 = vadd.f32 %v1286, %v1324
    %v1326 = vrot.slane %v1325, 2
    %v1327 = vadd.f32 %v1325, %v1326
    %v1328 = vrot.slane %v1327, 1
    %v1329 = vadd.f32 %v1327, %v1328
    %v1330 = vrot.slane %v1287, 4
    %v1331 = vadd.f32 %v1287, %v1330
    %v1332 = vrot.slane %v1331, 2
    %v1333 = vadd.f32 %v1331, %v1332
    %v1334 = vrot.slane %v1333, 1
    %v1335 = vadd.f32 %v1333, %v1334
    %v1336 = vmul.f32 %v1280, %v1280
    %v1337 = vmul.f32 %v1281, %v1281
    %v1338 = vmul.f32 %v1282, %v1282
    %v1339 = vmul.f32 %v1283, %v1283
    %v1340 = vmul.f32 %v1284, %v1284
    %v1341 = vmul.f32 %v1285, %v1285
    %v1342 = vmul.f32 %v1286, %v1286
    %v1343 = vmul.f32 %v1287, %v1287
    %v1344 = vrot.slane %v1336, 4
    %v1345 = vadd.f32 %v1336, %v1344
    %v1346 = vrot.slane %v1345, 2
    %v1347 = vadd.f32 %v1345, %v1346
    %v1348 = vrot.slane %v1347, 1
    %v1349 = vadd.f32 %v1347, %v1348
    %v1350 = vrot.slane %v1337, 4
    %v1351 = vadd.f32 %v1337, %v1350
    %v1352 = vrot.slane %v1351, 2
    %v1353 = vadd.f32 %v1351, %v1352
    %v1354 = vrot.slane %v1353, 1
    %v1355 = vadd.f32 %v1353, %v1354
    %v1356 = vrot.slane %v1338, 4
    %v1357 = vadd.f32 %v1338, %v1356
    %v1358 = vrot.slane %v1357, 2
    %v1359 = vadd.f32 %v1357, %v1358
    %v1360 = vrot.slane %v1359, 1
    %v1361 = vadd.f32 %v1359, %v1360
    %v1362 = vrot.slane %v1339, 4
    %v1363 = vadd.f32 %v1339, %v1362
    %v1364 = vrot.slane %v1363, 2
    %v1365 = vadd.f32 %v1363, %v1364
    %v1366 = vrot.slane %v1365, 1
    %v1367 = vadd.f32 %v1365, %v1366
    %v1368 = vrot.slane %v1340, 4
    %v1369 = vadd.f32 %v1340, %v1368
    %v1370 = vrot.slane %v1369, 2
    %v1371 = vadd.f32 %v1369, %v1370
    %v1372 = vrot.slane %v1371, 1
    %v1373 = vadd.f32 %v1371, %v1372
    %v1374 = vrot.slane %v1341, 4
    %v1375 = vadd.f32 %v1341, %v1374
    %v1376 = vrot.slane %v1375, 2
    %v1377 = vadd.f32 %v1375, %v1376
    %v1378 = vrot.slane %v1377, 1
    %v1379 = vadd.f32 %v1377, %v1378
    %v1380 = vrot.slane %v1342, 4
    %v1381 = vadd.f32 %v1342, %v1380
    %v1382 = vrot.slane %v1381, 2
    %v1383 = vadd.f32 %v1381, %v1382
    %v1384 = vrot.slane %v1383, 1
    %v1385 = vadd.f32 %v1383, %v1384
    %v1386 = vrot.slane %v1343, 4
    %v1387 = vadd.f32 %v1343, %v1386
    %v1388 = vrot.slane %v1387, 2
    %v1389 = vadd.f32 %v1387, %v1388
    %v1390 = vrot.slane %v1389, 1
    %v1391 = vadd.f32 %v1389, %v1390
    %vm1392 = vcmask 1040384
    %v1393 = vsel %vm1392, %v1293, %v1349
    %v1394 = vsel %vm1392, %v1299, %v1355
    %v1395 = vsel %vm1392, %v1305, %v1361
    %v1396 = vsel %vm1392, %v1311, %v1367
    %v1397 = vsel %vm1392, %v1317, %v1373
    %v1398 = vsel %vm1392, %v1323, %v1379
    %v1399 = vsel %vm1392, %v1329, %v1385
    %v1400 = vsel %vm1392, %v1335, %v1391
    %v1409 = vcombine.low %v1393, %v1394
    %v1410 = vcombine.low %v1395, %v1396
    %v1412 = vunpack.c.l.s4 1983009808
    %v1413 = vunpack.c.0.s8 %v1412
    %v1414 = vlaneseq
    %v1415 = vshrl.u32 %v1414, 7
    %v1416 = vsub.s32 %v1413, %v1415
    %v1417 = vrot.slane %v1409, %v1416
    %v1419 = vunpack.c.l.s4 1983009808
    %v1420 = vunpack.c.0.s8 %v1419
    %v1421 = vlaneseq
    %v1422 = vshrl.u32 %v1421, 7
    %v1423 = vsub.s32 %v1420, %v1422
    %v1424 = vrot.slane %v1410, %v1423
    %v1425 = vcombine.low %v1417, %v1424
    %v1426 = vcombine.low %v1397, %v1398
    %v1427 = vcombine.low %v1399, %v1400
    %v1429 = vunpack.c.l.s4 1983009808
    %v1430 = vunpack.c.0.s8 %v1429
    %v1431 = vlaneseq
    %v1432 = vshrl.u32 %v1431, 7
    %v1433 = vsub.s32 %v1430, %v1432
    %v1434 = vrot.slane %v1426, %v1433
    %v1436 = vunpack.c.l.s4 1983009808
    %v1437 = vunpack.c.0.s8 %v1436
    %v1438 = vlaneseq
    %v1439 = vshrl.u32 %v1438, 7
    %v1440 = vsub.s32 %v1437, %v1439
    %v1441 = vrot.slane %v1427, %v1440
    %v1442 = vcombine.low %v1434, %v1441
    %1445 = vst [vmem:[%s7] sm:$0xff] %v1425
    %1446 = vst [vmem:[%s7 + $0x8] sm:$0xff] %v1442
  $region33: #{hogcn_forward.3} parent=0 // pred_fallthru
    _
  // Predicated region
  $region34: #{hogcn_forward.3} parent=0 // pred_check
    _
  $region35: #{hogcn_forward.3} parent=0 // pred_check_branch
    %1448 = sbr.rel (0) target = $region37
  $region36: #{hogcn_forward.3} parent=0 // pred_region
    _
  $region37: #{hogcn_forward.3} parent=0 // pred_fallthru
    _
  // Predicated region
  $region38: #{hogcn_forward.3} parent=0 // pred_check
    _
  $region39: #{hogcn_forward.3} parent=0 // pred_check_branch
    %1450 = sbr.rel (0) target = $region41
  $region40: #{hogcn_forward.3} parent=0 // pred_region
    _
  $region41: #{hogcn_forward.3} parent=0 // pred_fallthru
    _
  // Predicated region
  $region42: #{hogcn_forward.3} parent=0 // pred_check
    _
  $region43: #{hogcn_forward.3} parent=0 // pred_check_branch
    %1452 = sbr.rel (0) target = $region45
  $region44: #{hogcn_forward.3} parent=0 // pred_region
    _
  $region45: #{hogcn_forward.3} parent=0 // pred_fallthru
    _
  // Predicated region
  $region46: #{hogcn_forward.3} parent=0 // pred_check
    _
  $region47: #{hogcn_forward.3} parent=0 // pred_check_branch
    %1454 = sbr.rel (0) target = $region49
  $region48: #{hogcn_forward.3} parent=0 // pred_region
    _
  $region49: #{hogcn_forward.3} parent=0 // pred_fallthru
    _

// kernel: hogcn_forward.5
$region0: #{hogcn_forward.5}
  #allocation0 [shape = 'u32[]', space=smem, size = 0x4, offset = 0x4, fixed_abs, tag = 'smem constant byte address 0x4 - core index']
  #allocation1 [shape = 'u32[144,128]{1,0:T(1,128)}', space=vmem, size = 0x12000, scoped, tag = 'internal scratch']
  %s0 = inlined_call_operand.vmem [shape: bf16[8,1024], index: 0, kind: input, shape index: {}]
  %s1 = inlined_call_operand.vmem [shape: f32[1,1024], index: 1, kind: input, shape index: {}]
  %s2 = inlined_call_operand.vmem [shape: f32[1,1024], index: 2, kind: input, shape index: {}]
  %s3 = inlined_call_operand.vmem [shape: bf16[1024,512], index: 3, kind: input, shape index: {}]
  %s4 = inlined_call_operand.vmem [shape: f32[1,512], index: 4, kind: input, shape index: {}]
  %s5 = inlined_call_operand.vmem [shape: bf16[512,128], index: 5, kind: input, shape index: {}]
  %s6 = inlined_call_operand.vmem [shape: f32[1,128], index: 6, kind: input, shape index: {}]
  %s7 = inlined_call_operand.hbm [shape: f32[8,128], index: 7, kind: output, shape index: {}]
  %s8 = sld [smem:[#allocation0]]
  $region38: #{hogcn_forward.5} parent=0
    _
  %s10 = ssub.s32 1, %s8
  %s11 = scalar_select 0, %s10, %s8
  $region1: #{hogcn_forward.5} parent=0
    #allocation2 [shape = 'u8[4096]{0}', space=vmem, size = 0x1000, scoped, tag = 'output window, operand 0, single buffered']
    #allocation3 [shape = 's32[1]{0}', space=sflag, size = 0x4, scoped, tag = 'scoped memory for hogcn_forward.5']
    %12 = vsyncpa [#allocation3], 0
    // Predicated region
    $region2: #{hogcn_forward.5} parent=1 // pred_check
      _
    $region3: #{hogcn_forward.5} parent=1 // pred_check_branch
      %14 = sbr.rel (0) target = $region5
    $region4: #{hogcn_forward.5} parent=1 // pred_region
      _
    $region5: #{hogcn_forward.5} parent=1 // pred_fallthru
      _
    // Predicated region
    $region6: #{hogcn_forward.5} parent=1 // pred_check
      _
    $region7: #{hogcn_forward.5} parent=1 // pred_check_branch
      %16 = sbr.rel (0) target = $region9
    $region8: #{hogcn_forward.5} parent=1 // pred_region
      _
    $region9: #{hogcn_forward.5} parent=1 // pred_fallthru
      _
    // Predicated region
    $region10: #{hogcn_forward.5} parent=1 // pred_check
      _
    $region11: #{hogcn_forward.5} parent=1 // pred_check_branch
      %18 = sbr.rel (0) target = $region13
    $region12: #{hogcn_forward.5} parent=1 // pred_region
      _
    $region13: #{hogcn_forward.5} parent=1 // pred_fallthru
      _
    // Predicated region
    $region14: #{hogcn_forward.5} parent=1 // pred_check
      _
    $region15: #{hogcn_forward.5} parent=1 // pred_check_branch
      %20 = sbr.rel (0) target = $region17
    $region16: #{hogcn_forward.5} parent=1 // pred_region
      _
    $region17: #{hogcn_forward.5} parent=1 // pred_fallthru
      _
    // Predicated region
    $region18: #{hogcn_forward.5} parent=1 // pred_check
      _
    $region19: #{hogcn_forward.5} parent=1 // pred_check_branch
      %22 = sbr.rel (0) target = $region21
    $region20: #{hogcn_forward.5} parent=1 // pred_region
      _
    $region21: #{hogcn_forward.5} parent=1 // pred_fallthru
      _
    // Predicated region
    $region22: #{hogcn_forward.5} parent=1 // pred_check
      _
    $region23: #{hogcn_forward.5} parent=1 // pred_check_branch
      %24 = sbr.rel (0) target = $region25
    $region24: #{hogcn_forward.5} parent=1 // pred_region
      _
    $region25: #{hogcn_forward.5} parent=1 // pred_fallthru
      _
    // Predicated region
    $region26: #{hogcn_forward.5} parent=1 // pred_check
      _
    $region27: #{hogcn_forward.5} parent=1 // pred_check_branch
      %26 = sbr.rel (0) target = $region29
    $region28: #{hogcn_forward.5} parent=1 // pred_region
      _
    $region29: #{hogcn_forward.5} parent=1 // pred_fallthru
      _
    %v28 = vld [vmem:[%s0] sm:$0xff]
    %v29 = vld [vmem:[%s0 + $0x8] sm:$0xff]
    %v30 = vld [vmem:[%s0 + $0x10] sm:$0xff]
    %v31 = vld [vmem:[%s0 + $0x18] sm:$0xff]
    %v32 = vunpack.c.l.bf16 %v28
    %v33 = vunpack.c.h.bf16 %v28
    %v34 = vunpack.c.l.bf16 %v29
    %v35 = vunpack.c.h.bf16 %v29
    %v36 = vunpack.c.l.bf16 %v30
    %v37 = vunpack.c.h.bf16 %v30
    %v38 = vunpack.c.l.bf16 %v31
    %v39 = vunpack.c.h.bf16 %v31
    %v40 = vld [vmem:[%s1] sm:$0xff]
    %v42 = vlaneseq
    %v43 = vshrl.u32 %v42, 7
    %v44 = vsub.s32 0, %v43
    %v45 = vrot.slane %v40, %v44
    %v46 = vlaneseq
    %v47 = vshrl.u32 %v46, 7
    %v48 = vsub.s32 1, %v47
    %v49 = vrot.slane %v40, %v48
    %v50 = vlaneseq
    %v51 = vshrl.u32 %v50, 7
    %v52 = vsub.s32 2, %v51
    %v53 = vrot.slane %v40, %v52
    %v54 = vlaneseq
    %v55 = vshrl.u32 %v54, 7
    %v56 = vsub.s32 3, %v55
    %v57 = vrot.slane %v40, %v56
    %v58 = vlaneseq
    %v59 = vshrl.u32 %v58, 7
    %v60 = vsub.s32 4, %v59
    %v61 = vrot.slane %v40, %v60
    %v62 = vlaneseq
    %v63 = vshrl.u32 %v62, 7
    %v64 = vsub.s32 5, %v63
    %v65 = vrot.slane %v40, %v64
    %v66 = vlaneseq
    %v67 = vshrl.u32 %v66, 7
    %v68 = vsub.s32 6, %v67
    %v69 = vrot.slane %v40, %v68
    %v70 = vlaneseq
    %v71 = vshrl.u32 %v70, 7
    %v72 = vsub.s32 7, %v71
    %v73 = vrot.slane %v40, %v72
    %v82 = vmul.f32 %v32, %v45
    %v83 = vmul.f32 %v33, %v49
    %v84 = vmul.f32 %v34, %v53
    %v85 = vmul.f32 %v35, %v57
    %v86 = vmul.f32 %v36, %v61
    %v87 = vmul.f32 %v37, %v65
    %v88 = vmul.f32 %v38, %v69
    %v89 = vmul.f32 %v39, %v73
    %v90 = vld [vmem:[%s2] sm:$0xff]
    %v92 = vlaneseq
    %v93 = vshrl.u32 %v92, 7
    %v94 = vsub.s32 0, %v93
    %v95 = vrot.slane %v90, %v94
    %v96 = vlaneseq
    %v97 = vshrl.u32 %v96, 7
    %v98 = vsub.s32 1, %v97
    %v99 = vrot.slane %v90, %v98
    %v100 = vlaneseq
    %v101 = vshrl.u32 %v100, 7
    %v102 = vsub.s32 2, %v101
    %v103 = vrot.slane %v90, %v102
    %v104 = vlaneseq
    %v105 = vshrl.u32 %v104, 7
    %v106 = vsub.s32 3, %v105
    %v107 = vrot.slane %v90, %v106
    %v108 = vlaneseq
    %v109 = vshrl.u32 %v108, 7
    %v110 = vsub.s32 4, %v109
    %v111 = vrot.slane %v90, %v110
    %v112 = vlaneseq
    %v113 = vshrl.u32 %v112, 7
    %v114 = vsub.s32 5, %v113
    %v115 = vrot.slane %v90, %v114
    %v116 = vlaneseq
    %v117 = vshrl.u32 %v116, 7
    %v118 = vsub.s32 6, %v117
    %v119 = vrot.slane %v90, %v118
    %v120 = vlaneseq
    %v121 = vshrl.u32 %v120, 7
    %v122 = vsub.s32 7, %v121
    %v123 = vrot.slane %v90, %v122
    %v132 = vadd.f32 %v82, %v95
    %v133 = vadd.f32 %v83, %v99
    %v134 = vadd.f32 %v84, %v103
    %v135 = vadd.f32 %v85, %v107
    %v136 = vadd.f32 %v86, %v111
    %v137 = vadd.f32 %v87, %v115
    %v138 = vadd.f32 %v88, %v119
    %v139 = vadd.f32 %v89, %v123
    %v140 = vmax.f32 %v132, 0.0
    %v141 = vmax.f32 %v133, 0.0
    %v142 = vmax.f32 %v134, 0.0
    %v143 = vmax.f32 %v135, 0.0
    %v144 = vmax.f32 %v136, 0.0
    %v145 = vmax.f32 %v137, 0.0
    %v146 = vmax.f32 %v138, 0.0
    %v147 = vmax.f32 %v139, 0.0
    %v148 = vpack.c.bf16 %v140, %v140
    %v149 = vpack.c.bf16 %v141, %v141
    %v150 = vpack.c.bf16 %v142, %v142
    %v151 = vpack.c.bf16 %v143, %v143
    %v152 = vpack.c.bf16 %v144, %v144
    %v153 = vpack.c.bf16 %v145, %v145
    %v154 = vpack.c.bf16 %v146, %v146
    %v155 = vpack.c.bf16 %v147, %v147
    %v156 = vld [vmem:[%s3] sm:$0xff]
    %v157 = vld [vmem:[%s3 + $0x8] sm:$0xff]
    %v158 = vld [vmem:[%s3 + $0x10] sm:$0xff]
    %v159 = vld [vmem:[%s3 + $0x18] sm:$0xff]
    %v160 = vld [vmem:[%s3 + $0x20] sm:$0xff]
    %v161 = vld [vmem:[%s3 + $0x28] sm:$0xff]
    %v162 = vld [vmem:[%s3 + $0x30] sm:$0xff]
    %v163 = vld [vmem:[%s3 + $0x38] sm:$0xff]
    %v164 = vld [vmem:[%s3 + $0x40] sm:$0xff]
    %v165 = vld [vmem:[%s3 + $0x48] sm:$0xff]
    %v166 = vld [vmem:[%s3 + $0x50] sm:$0xff]
    %v167 = vld [vmem:[%s3 + $0x58] sm:$0xff]
    %v168 = vld [vmem:[%s3 + $0x60] sm:$0xff]
    %v169 = vld [vmem:[%s3 + $0x68] sm:$0xff]
    %v170 = vld [vmem:[%s3 + $0x70] sm:$0xff]
    %v171 = vld [vmem:[%s3 + $0x78] sm:$0xff]
    %v172 = vld [vmem:[%s3 + $0x80] sm:$0xff]
    %v173 = vld [vmem:[%s3 + $0x88] sm:$0xff]
    %v174 = vld [vmem:[%s3 + $0x90] sm:$0xff]
    %v175 = vld [vmem:[%s3 + $0x98] sm:$0xff]
    %v176 = vld [vmem:[%s3 + $0xa0] sm:$0xff]
    %v177 = vld [vmem:[%s3 + $0xa8] sm:$0xff]
    %v178 = vld [vmem:[%s3 + $0xb0] sm:$0xff]
    %v179 = vld [vmem:[%s3 + $0xb8] sm:$0xff]
    %v180 = vld [vmem:[%s3 + $0xc0] sm:$0xff]
    %v181 = vld [vmem:[%s3 + $0xc8] sm:$0xff]
    %v182 = vld [vmem:[%s3 + $0xd0] sm:$0xff]
    %v183 = vld [vmem:[%s3 + $0xd8] sm:$0xff]
    %v184 = vld [vmem:[%s3 + $0xe0] sm:$0xff]
    %v185 = vld [vmem:[%s3 + $0xe8] sm:$0xff]
    %v186 = vld [vmem:[%s3 + $0xf0] sm:$0xff]
    %v187 = vld [vmem:[%s3 + $0xf8] sm:$0xff]
    %v188 = vld [vmem:[%s3 + $0x100] sm:$0xff]
    %v189 = vld [vmem:[%s3 + $0x108] sm:$0xff]
    %v190 = vld [vmem:[%s3 + $0x110] sm:$0xff]
    %v191 = vld [vmem:[%s3 + $0x118] sm:$0xff]
    %v192 = vld [vmem:[%s3 + $0x120] sm:$0xff]
    %v193 = vld [vmem:[%s3 + $0x128] sm:$0xff]
    %v194 = vld [vmem:[%s3 + $0x130] sm:$0xff]
    %v195 = vld [vmem:[%s3 + $0x138] sm:$0xff]
    %v196 = vld [vmem:[%s3 + $0x140] sm:$0xff]
    %v197 = vld [vmem:[%s3 + $0x148] sm:$0xff]
    %v198 = vld [vmem:[%s3 + $0x150] sm:$0xff]
    %v199 = vld [vmem:[%s3 + $0x158] sm:$0xff]
    %v200 = vld [vmem:[%s3 + $0x160] sm:$0xff]
    %v201 = vld [vmem:[%s3 + $0x168] sm:$0xff]
    %v202 = vld [vmem:[%s3 + $0x170] sm:$0xff]
    %v203 = vld [vmem:[%s3 + $0x178] sm:$0xff]
    %v204 = vld [vmem:[%s3 + $0x180] sm:$0xff]
    %v205 = vld [vmem:[%s3 + $0x188] sm:$0xff]
    %v206 = vld [vmem:[%s3 + $0x190] sm:$0xff]
    %v207 = vld [vmem:[%s3 + $0x198] sm:$0xff]
    %v208 = vld [vmem:[%s3 + $0x1a0] sm:$0xff]
    %v209 = vld [vmem:[%s3 + $0x1a8] sm:$0xff]
    %v210 = vld [vmem:[%s3 + $0x1b0] sm:$0xff]
    %v211 = vld [vmem:[%s3 + $0x1b8] sm:$0xff]
    %v212 = vld [vmem:[%s3 + $0x1c0] sm:$0xff]
    %v213 = vld [vmem:[%s3 + $0x1c8] sm:$0xff]
    %v214 = vld [vmem:[%s3 + $0x1d0] sm:$0xff]
    %v215 = vld [vmem:[%s3 + $0x1d8] sm:$0xff]
    %v216 = vld [vmem:[%s3 + $0x1e0] sm:$0xff]
    %v217 = vld [vmem:[%s3 + $0x1e8] sm:$0xff]
    %v218 = vld [vmem:[%s3 + $0x1f0] sm:$0xff]
    %v219 = vld [vmem:[%s3 + $0x1f8] sm:$0xff]
    %v220 = vld [vmem:[%s3 + $0x200] sm:$0xff]
    %v221 = vld [vmem:[%s3 + $0x208] sm:$0xff]
    %v222 = vld [vmem:[%s3 + $0x210] sm:$0xff]
    %v223 = vld [vmem:[%s3 + $0x218] sm:$0xff]
    %v224 = vld [vmem:[%s3 + $0x220] sm:$0xff]
    %v225 = vld [vmem:[%s3 + $0x228] sm:$0xff]
    %v226 = vld [vmem:[%s3 + $0x230] sm:$0xff]
    %v227 = vld [vmem:[%s3 + $0x238] sm:$0xff]
    %v228 = vld [vmem:[%s3 + $0x240] sm:$0xff]
    %v229 = vld [vmem:[%s3 + $0x248] sm:$0xff]
    %v230 = vld [vmem:[%s3 + $0x250] sm:$0xff]
    %v231 = vld [vmem:[%s3 + $0x258] sm:$0xff]
    %v232 = vld [vmem:[%s3 + $0x260] sm:$0xff]
    %v233 = vld [vmem:[%s3 + $0x268] sm:$0xff]
    %v234 = vld [vmem:[%s3 + $0x270] sm:$0xff]
    %v235 = vld [vmem:[%s3 + $0x278] sm:$0xff]
    %v236 = vld [vmem:[%s3 + $0x280] sm:$0xff]
    %v237 = vld [vmem:[%s3 + $0x288] sm:$0xff]
    %v238 = vld [vmem:[%s3 + $0x290] sm:$0xff]
    %v239 = vld [vmem:[%s3 + $0x298] sm:$0xff]
    %v240 = vld [vmem:[%s3 + $0x2a0] sm:$0xff]
    %v241 = vld [vmem:[%s3 + $0x2a8] sm:$0xff]
    %v242 = vld [vmem:[%s3 + $0x2b0] sm:$0xff]
    %v243 = vld [vmem:[%s3 + $0x2b8] sm:$0xff]
    %v244 = vld [vmem:[%s3 + $0x2c0] sm:$0xff]
    %v245 = vld [vmem:[%s3 + $0x2c8] sm:$0xff]
    %v246 = vld [vmem:[%s3 + $0x2d0] sm:$0xff]
    %v247 = vld [vmem:[%s3 + $0x2d8] sm:$0xff]
    %v248 = vld [vmem:[%s3 + $0x2e0] sm:$0xff]
    %v249 = vld [vmem:[%s3 + $0x2e8] sm:$0xff]
    %v250 = vld [vmem:[%s3 + $0x2f0] sm:$0xff]
    %v251 = vld [vmem:[%s3 + $0x2f8] sm:$0xff]
    %v252 = vld [vmem:[%s3 + $0x300] sm:$0xff]
    %v253 = vld [vmem:[%s3 + $0x308] sm:$0xff]
    %v254 = vld [vmem:[%s3 + $0x310] sm:$0xff]
    %v255 = vld [vmem:[%s3 + $0x318] sm:$0xff]
    %v256 = vld [vmem:[%s3 + $0x320] sm:$0xff]
    %v257 = vld [vmem:[%s3 + $0x328] sm:$0xff]
    %v258 = vld [vmem:[%s3 + $0x330] sm:$0xff]
    %v259 = vld [vmem:[%s3 + $0x338] sm:$0xff]
    %v260 = vld [vmem:[%s3 + $0x340] sm:$0xff]
    %v261 = vld [vmem:[%s3 + $0x348] sm:$0xff]
    %v262 = vld [vmem:[%s3 + $0x350] sm:$0xff]
    %v263 = vld [vmem:[%s3 + $0x358] sm:$0xff]
    %v264 = vld [vmem:[%s3 + $0x360] sm:$0xff]
    %v265 = vld [vmem:[%s3 + $0x368] sm:$0xff]
    %v266 = vld [vmem:[%s3 + $0x370] sm:$0xff]
    %v267 = vld [vmem:[%s3 + $0x378] sm:$0xff]
    %v268 = vld [vmem:[%s3 + $0x380] sm:$0xff]
    %v269 = vld [vmem:[%s3 + $0x388] sm:$0xff]
    %v270 = vld [vmem:[%s3 + $0x390] sm:$0xff]
    %v271 = vld [vmem:[%s3 + $0x398] sm:$0xff]
    %v272 = vld [vmem:[%s3 + $0x3a0] sm:$0xff]
    %v273 = vld [vmem:[%s3 + $0x3a8] sm:$0xff]
    %v274 = vld [vmem:[%s3 + $0x3b0] sm:$0xff]
    %v275 = vld [vmem:[%s3 + $0x3b8] sm:$0xff]
    %v276 = vld [vmem:[%s3 + $0x3c0] sm:$0xff]
    %v277 = vld [vmem:[%s3 + $0x3c8] sm:$0xff]
    %v278 = vld [vmem:[%s3 + $0x3d0] sm:$0xff]
    %v279 = vld [vmem:[%s3 + $0x3d8] sm:$0xff]
    %v280 = vld [vmem:[%s3 + $0x3e0] sm:$0xff]
    %v281 = vld [vmem:[%s3 + $0x3e8] sm:$0xff]
    %v282 = vld [vmem:[%s3 + $0x3f0] sm:$0xff]
    %v283 = vld [vmem:[%s3 + $0x3f8] sm:$0xff]
    %v284 = vld [vmem:[%s3 + $0x400] sm:$0xff]
    %v285 = vld [vmem:[%s3 + $0x408] sm:$0xff]
    %v286 = vld [vmem:[%s3 + $0x410] sm:$0xff]
    %v287 = vld [vmem:[%s3 + $0x418] sm:$0xff]
    %v288 = vld [vmem:[%s3 + $0x420] sm:$0xff]
    %v289 = vld [vmem:[%s3 + $0x428] sm:$0xff]
    %v290 = vld [vmem:[%s3 + $0x430] sm:$0xff]
    %v291 = vld [vmem:[%s3 + $0x438] sm:$0xff]
    %v292 = vld [vmem:[%s3 + $0x440] sm:$0xff]
    %v293 = vld [vmem:[%s3 + $0x448] sm:$0xff]
    %v294 = vld [vmem:[%s3 + $0x450] sm:$0xff]
    %v295 = vld [vmem:[%s3 + $0x458] sm:$0xff]
    %v296 = vld [vmem:[%s3 + $0x460] sm:$0xff]
    %v297 = vld [vmem:[%s3 + $0x468] sm:$0xff]
    %v298 = vld [vmem:[%s3 + $0x470] sm:$0xff]
    %v299 = vld [vmem:[%s3 + $0x478] sm:$0xff]
    %v300 = vld [vmem:[%s3 + $0x480] sm:$0xff]
    %v301 = vld [vmem:[%s3 + $0x488] sm:$0xff]
    %v302 = vld [vmem:[%s3 + $0x490] sm:$0xff]
    %v303 = vld [vmem:[%s3 + $0x498] sm:$0xff]
    %v304 = vld [vmem:[%s3 + $0x4a0] sm:$0xff]
    %v305 = vld [vmem:[%s3 + $0x4a8] sm:$0xff]
    %v306 = vld [vmem:[%s3 + $0x4b0] sm:$0xff]
    %v307 = vld [vmem:[%s3 + $0x4b8] sm:$0xff]
    %v308 = vld [vmem:[%s3 + $0x4c0] sm:$0xff]
    %v309 = vld [vmem:[%s3 + $0x4c8] sm:$0xff]
    %v310 = vld [vmem:[%s3 + $0x4d0] sm:$0xff]
    %v311 = vld [vmem:[%s3 + $0x4d8] sm:$0xff]
    %v312 = vld [vmem:[%s3 + $0x4e0] sm:$0xff]
    %v313 = vld [vmem:[%s3 + $0x4e8] sm:$0xff]
    %v314 = vld [vmem:[%s3 + $0x4f0] sm:$0xff]
    %v315 = vld [vmem:[%s3 + $0x4f8] sm:$0xff]
    %v316 = vld [vmem:[%s3 + $0x500] sm:$0xff]
    %v317 = vld [vmem:[%s3 + $0x508] sm:$0xff]
    %v318 = vld [vmem:[%s3 + $0x510] sm:$0xff]
    %v319 = vld [vmem:[%s3 + $0x518] sm:$0xff]
    %v320 = vld [vmem:[%s3 + $0x520] sm:$0xff]
    %v321 = vld [vmem:[%s3 + $0x528] sm:$0xff]
    %v322 = vld [vmem:[%s3 + $0x530] sm:$0xff]
    %v323 = vld [vmem:[%s3 + $0x538] sm:$0xff]
    %v324 = vld [vmem:[%s3 + $0x540] sm:$0xff]
    %v325 = vld [vmem:[%s3 + $0x548] sm:$0xff]
    %v326 = vld [vmem:[%s3 + $0x550] sm:$0xff]
    %v327 = vld [vmem:[%s3 + $0x558] sm:$0xff]
    %v328 = vld [vmem:[%s3 + $0x560] sm:$0xff]
    %v329 = vld [vmem:[%s3 + $0x568] sm:$0xff]
    %v330 = vld [vmem:[%s3 + $0x570] sm:$0xff]
    %v331 = vld [vmem:[%s3 + $0x578] sm:$0xff]
    %v332 = vld [vmem:[%s3 + $0x580] sm:$0xff]
    %v333 = vld [vmem:[%s3 + $0x588] sm:$0xff]
    %v334 = vld [vmem:[%s3 + $0x590] sm:$0xff]
    %v335 = vld [vmem:[%s3 + $0x598] sm:$0xff]
    %v336 = vld [vmem:[%s3 + $0x5a0] sm:$0xff]
    %v337 = vld [vmem:[%s3 + $0x5a8] sm:$0xff]
    %v338 = vld [vmem:[%s3 + $0x5b0] sm:$0xff]
    %v339 = vld [vmem:[%s3 + $0x5b8] sm:$0xff]
    %v340 = vld [vmem:[%s3 + $0x5c0] sm:$0xff]
    %v341 = vld [vmem:[%s3 + $0x5c8] sm:$0xff]
    %v342 = vld [vmem:[%s3 + $0x5d0] sm:$0xff]
    %v343 = vld [vmem:[%s3 + $0x5d8] sm:$0xff]
    %v344 = vld [vmem:[%s3 + $0x5e0] sm:$0xff]
    %v345 = vld [vmem:[%s3 + $0x5e8] sm:$0xff]
    %v346 = vld [vmem:[%s3 + $0x5f0] sm:$0xff]
    %v347 = vld [vmem:[%s3 + $0x5f8] sm:$0xff]
    %v348 = vld [vmem:[%s3 + $0x600] sm:$0xff]
    %v349 = vld [vmem:[%s3 + $0x608] sm:$0xff]
    %v350 = vld [vmem:[%s3 + $0x610] sm:$0xff]
    %v351 = vld [vmem:[%s3 + $0x618] sm:$0xff]
    %v352 = vld [vmem:[%s3 + $0x620] sm:$0xff]
    %v353 = vld [vmem:[%s3 + $0x628] sm:$0xff]
    %v354 = vld [vmem:[%s3 + $0x630] sm:$0xff]
    %v355 = vld [vmem:[%s3 + $0x638] sm:$0xff]
    %v356 = vld [vmem:[%s3 + $0x640] sm:$0xff]
    %v357 = vld [vmem:[%s3 + $0x648] sm:$0xff]
    %v358 = vld [vmem:[%s3 + $0x650] sm:$0xff]
    %v359 = vld [vmem:[%s3 + $0x658] sm:$0xff]
    %v360 = vld [vmem:[%s3 + $0x660] sm:$0xff]
    %v361 = vld [vmem:[%s3 + $0x668] sm:$0xff]
    %v362 = vld [vmem:[%s3 + $0x670] sm:$0xff]
    %v363 = vld [vmem:[%s3 + $0x678] sm:$0xff]
    %v364 = vld [vmem:[%s3 + $0x680] sm:$0xff]
    %v365 = vld [vmem:[%s3 + $0x688] sm:$0xff]
    %v366 = vld [vmem:[%s3 + $0x690] sm:$0xff]
    %v367 = vld [vmem:[%s3 + $0x698] sm:$0xff]
    %v368 = vld [vmem:[%s3 + $0x6a0] sm:$0xff]
    %v369 = vld [vmem:[%s3 + $0x6a8] sm:$0xff]
    %v370 = vld [vmem:[%s3 + $0x6b0] sm:$0xff]
    %v371 = vld [vmem:[%s3 + $0x6b8] sm:$0xff]
    %v372 = vld [vmem:[%s3 + $0x6c0] sm:$0xff]
    %v373 = vld [vmem:[%s3 + $0x6c8] sm:$0xff]
    %v374 = vld [vmem:[%s3 + $0x6d0] sm:$0xff]
    %v375 = vld [vmem:[%s3 + $0x6d8] sm:$0xff]
    %v376 = vld [vmem:[%s3 + $0x6e0] sm:$0xff]
    %v377 = vld [vmem:[%s3 + $0x6e8] sm:$0xff]
    %v378 = vld [vmem:[%s3 + $0x6f0] sm:$0xff]
    %v379 = vld [vmem:[%s3 + $0x6f8] sm:$0xff]
    %v380 = vld [vmem:[%s3 + $0x700] sm:$0xff]
    %v381 = vld [vmem:[%s3 + $0x708] sm:$0xff]
    %v382 = vld [vmem:[%s3 + $0x710] sm:$0xff]
    %v383 = vld [vmem:[%s3 + $0x718] sm:$0xff]
    %v384 = vld [vmem:[%s3 + $0x720] sm:$0xff]
    %v385 = vld [vmem:[%s3 + $0x728] sm:$0xff]
    %v386 = vld [vmem:[%s3 + $0x730] sm:$0xff]
    %v387 = vld [vmem:[%s3 + $0x738] sm:$0xff]
    %v388 = vld [vmem:[%s3 + $0x740] sm:$0xff]
    %v389 = vld [vmem:[%s3 + $0x748] sm:$0xff]
    %v390 = vld [vmem:[%s3 + $0x750] sm:$0xff]
    %v391 = vld [vmem:[%s3 + $0x758] sm:$0xff]
    %v392 = vld [vmem:[%s3 + $0x760] sm:$0xff]
    %v393 = vld [vmem:[%s3 + $0x768] sm:$0xff]
    %v394 = vld [vmem:[%s3 + $0x770] sm:$0xff]
    %v395 = vld [vmem:[%s3 + $0x778] sm:$0xff]
    %v396 = vld [vmem:[%s3 + $0x780] sm:$0xff]
    %v397 = vld [vmem:[%s3 + $0x788] sm:$0xff]
    %v398 = vld [vmem:[%s3 + $0x790] sm:$0xff]
    %v399 = vld [vmem:[%s3 + $0x798] sm:$0xff]
    %v400 = vld [vmem:[%s3 + $0x7a0] sm:$0xff]
    %v401 = vld [vmem:[%s3 + $0x7a8] sm:$0xff]
    %v402 = vld [vmem:[%s3 + $0x7b0] sm:$0xff]
    %v403 = vld [vmem:[%s3 + $0x7b8] sm:$0xff]
    %v404 = vld [vmem:[%s3 + $0x7c0] sm:$0xff]
    %v405 = vld [vmem:[%s3 + $0x7c8] sm:$0xff]
    %v406 = vld [vmem:[%s3 + $0x7d0] sm:$0xff]
    %v407 = vld [vmem:[%s3 + $0x7d8] sm:$0xff]
    %v408 = vld [vmem:[%s3 + $0x7e0] sm:$0xff]
    %v409 = vld [vmem:[%s3 + $0x7e8] sm:$0xff]
    %v410 = vld [vmem:[%s3 + $0x7f0] sm:$0xff]
    %v411 = vld [vmem:[%s3 + $0x7f8] sm:$0xff]
    %v412 = vld [vmem:[%s4] sm:$0xf]
    %v414 = vlaneseq
    %v415 = vshrl.u32 %v414, 7
    %v416 = vsub.s32 0, %v415
    %v417 = vrot.slane %v412, %v416
    %v418 = vlaneseq
    %v419 = vshrl.u32 %v418, 7
    %v420 = vsub.s32 1, %v419
    %v421 = vrot.slane %v412, %v420
    %v422 = vlaneseq
    %v423 = vshrl.u32 %v422, 7
    %v424 = vsub.s32 2, %v423
    %v425 = vrot.slane %v412, %v424
    %v426 = vlaneseq
    %v427 = vshrl.u32 %v426, 7
    %v428 = vsub.s32 3, %v427
    %v429 = vrot.slane %v412, %v428
    %v690 = vunpack.c.l.b16 %v156
    %v691 = vunpack.c.h.b16 %v156
    %v692 = vunpack.c.l.b16 %v157
    %v693 = vunpack.c.h.b16 %v157
    %v694 = vunpack.c.l.b16 %v158
    %v695 = vunpack.c.h.b16 %v158
    %v696 = vunpack.c.l.b16 %v159
    %v697 = vunpack.c.h.b16 %v159
    %v698 = vunpack.c.l.b16 %v160
    %v699 = vunpack.c.h.b16 %v160
    %v700 = vunpack.c.l.b16 %v161
    %v701 = vunpack.c.h.b16 %v161
    %v702 = vunpack.c.l.b16 %v162
    %v703 = vunpack.c.h.b16 %v162
    %v704 = vunpack.c.l.b16 %v163
    %v705 = vunpack.c.h.b16 %v163
    %v706 = vunpack.c.l.b16 %v164
    %v707 = vunpack.c.h.b16 %v164
    %v708 = vunpack.c.l.b16 %v165
    %v709 = vunpack.c.h.b16 %v165
    %v710 = vunpack.c.l.b16 %v166
    %v711 = vunpack.c.h.b16 %v166
    %v712 = vunpack.c.l.b16 %v167
    %v713 = vunpack.c.h.b16 %v167
    %v714 = vunpack.c.l.b16 %v168
    %v715 = vunpack.c.h.b16 %v168
    %v716 = vunpack.c.l.b16 %v169
    %v717 = vunpack.c.h.b16 %v169
    %v718 = vunpack.c.l.b16 %v170
    %v719 = vunpack.c.h.b16 %v170
    %v720 = vunpack.c.l.b16 %v171
    %v721 = vunpack.c.h.b16 %v171
    %v722 = vunpack.c.l.b16 %v172
    %v723 = vunpack.c.h.b16 %v172
    %v724 = vunpack.c.l.b16 %v173
    %v725 = vunpack.c.h.b16 %v173
    %v726 = vunpack.c.l.b16 %v174
    %v727 = vunpack.c.h.b16 %v174
    %v728 = vunpack.c.l.b16 %v175
    %v729 = vunpack.c.h.b16 %v175
    %v730 = vunpack.c.l.b16 %v176
    %v731 = vunpack.c.h.b16 %v176
    %v732 = vunpack.c.l.b16 %v177
    %v733 = vunpack.c.h.b16 %v177
    %v734 = vunpack.c.l.b16 %v178
    %v735 = vunpack.c.h.b16 %v178
    %v736 = vunpack.c.l.b16 %v179
    %v737 = vunpack.c.h.b16 %v179
    %v738 = vunpack.c.l.b16 %v180
    %v739 = vunpack.c.h.b16 %v180
    %v740 = vunpack.c.l.b16 %v181
    %v741 = vunpack.c.h.b16 %v181
    %v742 = vunpack.c.l.b16 %v182
    %v743 = vunpack.c.h.b16 %v182
    %v744 = vunpack.c.l.b16 %v183
    %v745 = vunpack.c.h.b16 %v183
    %v746 = vunpack.c.l.b16 %v184
    %v747 = vunpack.c.h.b16 %v184
    %v748 = vunpack.c.l.b16 %v185
    %v749 = vunpack.c.h.b16 %v185
    %v750 = vunpack.c.l.b16 %v186
    %v751 = vunpack.c.h.b16 %v186
    %v752 = vunpack.c.l.b16 %v187
    %v753 = vunpack.c.h.b16 %v187
    %v754 = vunpack.c.l.b16 %v188
    %v755 = vunpack.c.h.b16 %v188
    %v756 = vunpack.c.l.b16 %v189
    %v757 = vunpack.c.h.b16 %v189
    %v758 = vunpack.c.l.b16 %v190
    %v759 = vunpack.c.h.b16 %v190
    %v760 = vunpack.c.l.b16 %v191
    %v761 = vunpack.c.h.b16 %v191
    %v762 = vunpack.c.l.b16 %v192
    %v763 = vunpack.c.h.b16 %v192
    %v764 = vunpack.c.l.b16 %v193
    %v765 = vunpack.c.h.b16 %v193
    %v766 = vunpack.c.l.b16 %v194
    %v767 = vunpack.c.h.b16 %v194
    %v768 = vunpack.c.l.b16 %v195
    %v769 = vunpack.c.h.b16 %v195
    %v770 = vunpack.c.l.b16 %v196
    %v771 = vunpack.c.h.b16 %v196
    %v772 = vunpack.c.l.b16 %v197
    %v773 = vunpack.c.h.b16 %v197
    %v774 = vunpack.c.l.b16 %v198
    %v775 = vunpack.c.h.b16 %v198
    %v776 = vunpack.c.l.b16 %v199
    %v777 = vunpack.c.h.b16 %v199
    %v778 = vunpack.c.l.b16 %v200
    %v779 = vunpack.c.h.b16 %v200
    %v780 = vunpack.c.l.b16 %v201
    %v781 = vunpack.c.h.b16 %v201
    %v782 = vunpack.c.l.b16 %v202
    %v783 = vunpack.c.h.b16 %v202
    %v784 = vunpack.c.l.b16 %v203
    %v785 = vunpack.c.h.b16 %v203
    %v786 = vunpack.c.l.b16 %v204
    %v787 = vunpack.c.h.b16 %v204
    %v788 = vunpack.c.l.b16 %v205
    %v789 = vunpack.c.h.b16 %v205
    %v790 = vunpack.c.l.b16 %v206
    %v791 = vunpack.c.h.b16 %v206
    %v792 = vunpack.c.l.b16 %v207
    %v793 = vunpack.c.h.b16 %v207
    %v794 = vunpack.c.l.b16 %v208
    %v795 = vunpack.c.h.b16 %v208
    %v796 = vunpack.c.l.b16 %v209
    %v797 = vunpack.c.h.b16 %v209
    %v798 = vunpack.c.l.b16 %v210
    %v799 = vunpack.c.h.b16 %v210
    %v800 = vunpack.c.l.b16 %v211
    %v801 = vunpack.c.h.b16 %v211
    %v802 = vunpack.c.l.b16 %v212
    %v803 = vunpack.c.h.b16 %v212
    %v804 = vunpack.c.l.b16 %v213
    %v805 = vunpack.c.h.b16 %v213
    %v806 = vunpack.c.l.b16 %v214
    %v807 = vunpack.c.h.b16 %v214
    %v808 = vunpack.c.l.b16 %v215
    %v809 = vunpack.c.h.b16 %v215
    %v810 = vunpack.c.l.b16 %v216
    %v811 = vunpack.c.h.b16 %v216
    %v812 = vunpack.c.l.b16 %v217
    %v813 = vunpack.c.h.b16 %v217
    %v814 = vunpack.c.l.b16 %v218
    %v815 = vunpack.c.h.b16 %v218
    %v816 = vunpack.c.l.b16 %v219
    %v817 = vunpack.c.h.b16 %v219
    %v818 = vunpack.c.l.b16 %v220
    %v819 = vunpack.c.h.b16 %v220
    %v820 = vunpack.c.l.b16 %v221
    %v821 = vunpack.c.h.b16 %v221
    %v822 = vunpack.c.l.b16 %v222
    %v823 = vunpack.c.h.b16 %v222
    %v824 = vunpack.c.l.b16 %v223
    %v825 = vunpack.c.h.b16 %v223
    %v826 = vunpack.c.l.b16 %v224
    %v827 = vunpack.c.h.b16 %v224
    %v828 = vunpack.c.l.b16 %v225
    %v829 = vunpack.c.h.b16 %v225
    %v830 = vunpack.c.l.b16 %v226
    %v831 = vunpack.c.h.b16 %v226
    %v832 = vunpack.c.l.b16 %v227
    %v833 = vunpack.c.h.b16 %v227
    %v834 = vunpack.c.l.b16 %v228
    %v835 = vunpack.c.h.b16 %v228
    %v836 = vunpack.c.l.b16 %v229
    %v837 = vunpack.c.h.b16 %v229
    %v838 = vunpack.c.l.b16 %v230
    %v839 = vunpack.c.h.b16 %v230
    %v840 = vunpack.c.l.b16 %v231
    %v841 = vunpack.c.h.b16 %v231
    %v842 = vunpack.c.l.b16 %v232
    %v843 = vunpack.c.h.b16 %v232
    %v844 = vunpack.c.l.b16 %v233
    %v845 = vunpack.c.h.b16 %v233
    %v846 = vunpack.c.l.b16 %v234
    %v847 = vunpack.c.h.b16 %v234
    %v848 = vunpack.c.l.b16 %v235
    %v849 = vunpack.c.h.b16 %v235
    %v850 = vunpack.c.l.b16 %v236
    %v851 = vunpack.c.h.b16 %v236
    %v852 = vunpack.c.l.b16 %v237
    %v853 = vunpack.c.h.b16 %v237
    %v854 = vunpack.c.l.b16 %v238
    %v855 = vunpack.c.h.b16 %v238
    %v856 = vunpack.c.l.b16 %v239
    %v857 = vunpack.c.h.b16 %v239
    %v858 = vunpack.c.l.b16 %v240
    %v859 = vunpack.c.h.b16 %v240
    %v860 = vunpack.c.l.b16 %v241
    %v861 = vunpack.c.h.b16 %v241
    %v862 = vunpack.c.l.b16 %v242
    %v863 = vunpack.c.h.b16 %v242
    %v864 = vunpack.c.l.b16 %v243
    %v865 = vunpack.c.h.b16 %v243
    %v866 = vunpack.c.l.b16 %v244
    %v867 = vunpack.c.h.b16 %v244
    %v868 = vunpack.c.l.b16 %v245
    %v869 = vunpack.c.h.b16 %v245
    %v870 = vunpack.c.l.b16 %v246
    %v871 = vunpack.c.h.b16 %v246
    %v872 = vunpack.c.l.b16 %v247
    %v873 = vunpack.c.h.b16 %v247
    %v874 = vunpack.c.l.b16 %v248
    %v875 = vunpack.c.h.b16 %v248
    %v876 = vunpack.c.l.b16 %v249
    %v877 = vunpack.c.h.b16 %v249
    %v878 = vunpack.c.l.b16 %v250
    %v879 = vunpack.c.h.b16 %v250
    %v880 = vunpack.c.l.b16 %v251
    %v881 = vunpack.c.h.b16 %v251
    %v882 = vunpack.c.l.b16 %v252
    %v883 = vunpack.c.h.b16 %v252
    %v884 = vunpack.c.l.b16 %v253
    %v885 = vunpack.c.h.b16 %v253
    %v886 = vunpack.c.l.b16 %v254
    %v887 = vunpack.c.h.b16 %v254
    %v888 = vunpack.c.l.b16 %v255
    %v889 = vunpack.c.h.b16 %v255
    %v890 = vunpack.c.l.b16 %v256
    %v891 = vunpack.c.h.b16 %v256
    %v892 = vunpack.c.l.b16 %v257
    %v893 = vunpack.c.h.b16 %v257
    %v894 = vunpack.c.l.b16 %v258
    %v895 = vunpack.c.h.b16 %v258
    %v896 = vunpack.c.l.b16 %v259
    %v897 = vunpack.c.h.b16 %v259
    %v898 = vunpack.c.l.b16 %v260
    %v899 = vunpack.c.h.b16 %v260
    %v900 = vunpack.c.l.b16 %v261
    %v901 = vunpack.c.h.b16 %v261
    %v902 = vunpack.c.l.b16 %v262
    %v903 = vunpack.c.h.b16 %v262
    %v904 = vunpack.c.l.b16 %v263
    %v905 = vunpack.c.h.b16 %v263
    %v906 = vunpack.c.l.b16 %v264
    %v907 = vunpack.c.h.b16 %v264
    %v908 = vunpack.c.l.b16 %v265
    %v909 = vunpack.c.h.b16 %v265
    %v910 = vunpack.c.l.b16 %v266
    %v911 = vunpack.c.h.b16 %v266
    %v912 = vunpack.c.l.b16 %v267
    %v913 = vunpack.c.h.b16 %v267
    %v914 = vunpack.c.l.b16 %v268
    %v915 = vunpack.c.h.b16 %v268
    %v916 = vunpack.c.l.b16 %v269
    %v917 = vunpack.c.h.b16 %v269
    %v918 = vunpack.c.l.b16 %v270
    %v919 = vunpack.c.h.b16 %v270
    %v920 = vunpack.c.l.b16 %v271
    %v921 = vunpack.c.h.b16 %v271
    %v922 = vunpack.c.l.b16 %v272
    %v923 = vunpack.c.h.b16 %v272
    %v924 = vunpack.c.l.b16 %v273
    %v925 = vunpack.c.h.b16 %v273
    %v926 = vunpack.c.l.b16 %v274
    %v927 = vunpack.c.h.b16 %v274
    %v928 = vunpack.c.l.b16 %v275
    %v929 = vunpack.c.h.b16 %v275
    %v930 = vunpack.c.l.b16 %v276
    %v931 = vunpack.c.h.b16 %v276
    %v932 = vunpack.c.l.b16 %v277
    %v933 = vunpack.c.h.b16 %v277
    %v934 = vunpack.c.l.b16 %v278
    %v935 = vunpack.c.h.b16 %v278
    %v936 = vunpack.c.l.b16 %v279
    %v937 = vunpack.c.h.b16 %v279
    %v938 = vunpack.c.l.b16 %v280
    %v939 = vunpack.c.h.b16 %v280
    %v940 = vunpack.c.l.b16 %v281
    %v941 = vunpack.c.h.b16 %v281
    %v942 = vunpack.c.l.b16 %v282
    %v943 = vunpack.c.h.b16 %v282
    %v944 = vunpack.c.l.b16 %v283
    %v945 = vunpack.c.h.b16 %v283
    %v946 = vunpack.c.l.b16 %v284
    %v947 = vunpack.c.h.b16 %v284
    %v948 = vunpack.c.l.b16 %v285
    %v949 = vunpack.c.h.b16 %v285
    %v950 = vunpack.c.l.b16 %v286
    %v951 = vunpack.c.h.b16 %v286
    %v952 = vunpack.c.l.b16 %v287
    %v953 = vunpack.c.h.b16 %v287
    %v954 = vunpack.c.l.b16 %v288
    %v955 = vunpack.c.h.b16 %v288
    %v956 = vunpack.c.l.b16 %v289
    %v957 = vunpack.c.h.b16 %v289
    %v958 = vunpack.c.l.b16 %v290
    %v959 = vunpack.c.h.b16 %v290
    %v960 = vunpack.c.l.b16 %v291
    %v961 = vunpack.c.h.b16 %v291
    %v962 = vunpack.c.l.b16 %v292
    %v963 = vunpack.c.h.b16 %v292
    %v964 = vunpack.c.l.b16 %v293
    %v965 = vunpack.c.h.b16 %v293
    %v966 = vunpack.c.l.b16 %v294
    %v967 = vunpack.c.h.b16 %v294
    %v968 = vunpack.c.l.b16 %v295
    %v969 = vunpack.c.h.b16 %v295
    %v970 = vunpack.c.l.b16 %v296
    %v971 = vunpack.c.h.b16 %v296
    %v972 = vunpack.c.l.b16 %v297
    %v973 = vunpack.c.h.b16 %v297
    %v974 = vunpack.c.l.b16 %v298
    %v975 = vunpack.c.h.b16 %v298
    %v976 = vunpack.c.l.b16 %v299
    %v977 = vunpack.c.h.b16 %v299
    %v978 = vunpack.c.l.b16 %v300
    %v979 = vunpack.c.h.b16 %v300
    %v980 = vunpack.c.l.b16 %v301
    %v981 = vunpack.c.h.b16 %v301
    %v982 = vunpack.c.l.b16 %v302
    %v983 = vunpack.c.h.b16 %v302
    %v984 = vunpack.c.l.b16 %v303
    %v985 = vunpack.c.h.b16 %v303
    %v986 = vunpack.c.l.b16 %v304
    %v987 = vunpack.c.h.b16 %v304
    %v988 = vunpack.c.l.b16 %v305
    %v989 = vunpack.c.h.b16 %v305
    %v990 = vunpack.c.l.b16 %v306
    %v991 = vunpack.c.h.b16 %v306
    %v992 = vunpack.c.l.b16 %v307
    %v993 = vunpack.c.h.b16 %v307
    %v994 = vunpack.c.l.b16 %v308
    %v995 = vunpack.c.h.b16 %v308
    %v996 = vunpack.c.l.b16 %v309
    %v997 = vunpack.c.h.b16 %v309
    %v998 = vunpack.c.l.b16 %v310
    %v999 = vunpack.c.h.b16 %v310
    %v1000 = vunpack.c.l.b16 %v311
    %v1001 = vunpack.c.h.b16 %v311
    %v1002 = vunpack.c.l.b16 %v312
    %v1003 = vunpack.c.h.b16 %v312
    %v1004 = vunpack.c.l.b16 %v313
    %v1005 = vunpack.c.h.b16 %v313
    %v1006 = vunpack.c.l.b16 %v314
    %v1007 = vunpack.c.h.b16 %v314
    %v1008 = vunpack.c.l.b16 %v315
    %v1009 = vunpack.c.h.b16 %v315
    %v1010 = vunpack.c.l.b16 %v316
    %v1011 = vunpack.c.h.b16 %v316
    %v1012 = vunpack.c.l.b16 %v317
    %v1013 = vunpack.c.h.b16 %v317
    %v1014 = vunpack.c.l.b16 %v318
    %v1015 = vunpack.c.h.b16 %v318
    %v1016 = vunpack.c.l.b16 %v319
    %v1017 = vunpack.c.h.b16 %v319
    %v1018 = vunpack.c.l.b16 %v320
    %v1019 = vunpack.c.h.b16 %v320
    %v1020 = vunpack.c.l.b16 %v321
    %v1021 = vunpack.c.h.b16 %v321
    %v1022 = vunpack.c.l.b16 %v322
    %v1023 = vunpack.c.h.b16 %v322
    %v1024 = vunpack.c.l.b16 %v323
    %v1025 = vunpack.c.h.b16 %v323
    %v1026 = vunpack.c.l.b16 %v324
    %v1027 = vunpack.c.h.b16 %v324
    %v1028 = vunpack.c.l.b16 %v325
    %v1029 = vunpack.c.h.b16 %v325
    %v1030 = vunpack.c.l.b16 %v326
    %v1031 = vunpack.c.h.b16 %v326
    %v1032 = vunpack.c.l.b16 %v327
    %v1033 = vunpack.c.h.b16 %v327
    %v1034 = vunpack.c.l.b16 %v328
    %v1035 = vunpack.c.h.b16 %v328
    %v1036 = vunpack.c.l.b16 %v329
    %v1037 = vunpack.c.h.b16 %v329
    %v1038 = vunpack.c.l.b16 %v330
    %v1039 = vunpack.c.h.b16 %v330
    %v1040 = vunpack.c.l.b16 %v331
    %v1041 = vunpack.c.h.b16 %v331
    %v1042 = vunpack.c.l.b16 %v332
    %v1043 = vunpack.c.h.b16 %v332
    %v1044 = vunpack.c.l.b16 %v333
    %v1045 = vunpack.c.h.b16 %v333
    %v1046 = vunpack.c.l.b16 %v334
    %v1047 = vunpack.c.h.b16 %v334
    %v1048 = vunpack.c.l.b16 %v335
    %v1049 = vunpack.c.h.b16 %v335
    %v1050 = vunpack.c.l.b16 %v336
    %v1051 = vunpack.c.h.b16 %v336
    %v1052 = vunpack.c.l.b16 %v337
    %v1053 = vunpack.c.h.b16 %v337
    %v1054 = vunpack.c.l.b16 %v338
    %v1055 = vunpack.c.h.b16 %v338
    %v1056 = vunpack.c.l.b16 %v339
    %v1057 = vunpack.c.h.b16 %v339
    %v1058 = vunpack.c.l.b16 %v340
    %v1059 = vunpack.c.h.b16 %v340
    %v1060 = vunpack.c.l.b16 %v341
    %v1061 = vunpack.c.h.b16 %v341
    %v1062 = vunpack.c.l.b16 %v342
    %v1063 = vunpack.c.h.b16 %v342
    %v1064 = vunpack.c.l.b16 %v343
    %v1065 = vunpack.c.h.b16 %v343
    %v1066 = vunpack.c.l.b16 %v344
    %v1067 = vunpack.c.h.b16 %v344
    %v1068 = vunpack.c.l.b16 %v345
    %v1069 = vunpack.c.h.b16 %v345
    %v1070 = vunpack.c.l.b16 %v346
    %v1071 = vunpack.c.h.b16 %v346
    %v1072 = vunpack.c.l.b16 %v347
    %v1073 = vunpack.c.h.b16 %v347
    %v1074 = vunpack.c.l.b16 %v348
    %v1075 = vunpack.c.h.b16 %v348
    %v1076 = vunpack.c.l.b16 %v349
    %v1077 = vunpack.c.h.b16 %v349
    %v1078 = vunpack.c.l.b16 %v350
    %v1079 = vunpack.c.h.b16 %v350
    %v1080 = vunpack.c.l.b16 %v351
    %v1081 = vunpack.c.h.b16 %v351
    %v1082 = vunpack.c.l.b16 %v352
    %v1083 = vunpack.c.h.b16 %v352
    %v1084 = vunpack.c.l.b16 %v353
    %v1085 = vunpack.c.h.b16 %v353
    %v1086 = vunpack.c.l.b16 %v354
    %v1087 = vunpack.c.h.b16 %v354
    %v1088 = vunpack.c.l.b16 %v355
    %v1089 = vunpack.c.h.b16 %v355
    %v1090 = vunpack.c.l.b16 %v356
    %v1091 = vunpack.c.h.b16 %v356
    %v1092 = vunpack.c.l.b16 %v357
    %v1093 = vunpack.c.h.b16 %v357
    %v1094 = vunpack.c.l.b16 %v358
    %v1095 = vunpack.c.h.b16 %v358
    %v1096 = vunpack.c.l.b16 %v359
    %v1097 = vunpack.c.h.b16 %v359
    %v1098 = vunpack.c.l.b16 %v360
    %v1099 = vunpack.c.h.b16 %v360
    %v1100 = vunpack.c.l.b16 %v361
    %v1101 = vunpack.c.h.b16 %v361
    %v1102 = vunpack.c.l.b16 %v362
    %v1103 = vunpack.c.h.b16 %v362
    %v1104 = vunpack.c.l.b16 %v363
    %v1105 = vunpack.c.h.b16 %v363
    %v1106 = vunpack.c.l.b16 %v364
    %v1107 = vunpack.c.h.b16 %v364
    %v1108 = vunpack.c.l.b16 %v365
    %v1109 = vunpack.c.h.b16 %v365
    %v1110 = vunpack.c.l.b16 %v366
    %v1111 = vunpack.c.h.b16 %v366
    %v1112 = vunpack.c.l.b16 %v367
    %v1113 = vunpack.c.h.b16 %v367
    %v1114 = vunpack.c.l.b16 %v368
    %v1115 = vunpack.c.h.b16 %v368
    %v1116 = vunpack.c.l.b16 %v369
    %v1117 = vunpack.c.h.b16 %v369
    %v1118 = vunpack.c.l.b16 %v370
    %v1119 = vunpack.c.h.b16 %v370
    %v1120 = vunpack.c.l.b16 %v371
    %v1121 = vunpack.c.h.b16 %v371
    %v1122 = vunpack.c.l.b16 %v372
    %v1123 = vunpack.c.h.b16 %v372
    %v1124 = vunpack.c.l.b16 %v373
    %v1125 = vunpack.c.h.b16 %v373
    %v1126 = vunpack.c.l.b16 %v374
    %v1127 = vunpack.c.h.b16 %v374
    %v1128 = vunpack.c.l.b16 %v375
    %v1129 = vunpack.c.h.b16 %v375
    %v1130 = vunpack.c.l.b16 %v376
    %v1131 = vunpack.c.h.b16 %v376
    %v1132 = vunpack.c.l.b16 %v377
    %v1133 = vunpack.c.h.b16 %v377
    %v1134 = vunpack.c.l.b16 %v378
    %v1135 = vunpack.c.h.b16 %v378
    %v1136 = vunpack.c.l.b16 %v379
    %v1137 = vunpack.c.h.b16 %v379
    %v1138 = vunpack.c.l.b16 %v380
    %v1139 = vunpack.c.h.b16 %v380
    %v1140 = vunpack.c.l.b16 %v381
    %v1141 = vunpack.c.h.b16 %v381
    %v1142 = vunpack.c.l.b16 %v382
    %v1143 = vunpack.c.h.b16 %v382
    %v1144 = vunpack.c.l.b16 %v383
    %v1145 = vunpack.c.h.b16 %v383
    %v1146 = vunpack.c.l.b16 %v384
    %v1147 = vunpack.c.h.b16 %v384
    %v1148 = vunpack.c.l.b16 %v385
    %v1149 = vunpack.c.h.b16 %v385
    %v1150 = vunpack.c.l.b16 %v386
    %v1151 = vunpack.c.h.b16 %v386
    %v1152 = vunpack.c.l.b16 %v387
    %v1153 = vunpack.c.h.b16 %v387
    %v1154 = vunpack.c.l.b16 %v388
    %v1155 = vunpack.c.h.b16 %v388
    %v1156 = vunpack.c.l.b16 %v389
    %v1157 = vunpack.c.h.b16 %v389
    %v1158 = vunpack.c.l.b16 %v390
    %v1159 = vunpack.c.h.b16 %v390
    %v1160 = vunpack.c.l.b16 %v391
    %v1161 = vunpack.c.h.b16 %v391
    %v1162 = vunpack.c.l.b16 %v392
    %v1163 = vunpack.c.h.b16 %v392
    %v1164 = vunpack.c.l.b16 %v393
    %v1165 = vunpack.c.h.b16 %v393
    %v1166 = vunpack.c.l.b16 %v394
    %v1167 = vunpack.c.h.b16 %v394
    %v1168 = vunpack.c.l.b16 %v395
    %v1169 = vunpack.c.h.b16 %v395
    %v1170 = vunpack.c.l.b16 %v396
    %v1171 = vunpack.c.h.b16 %v396
    %v1172 = vunpack.c.l.b16 %v397
    %v1173 = vunpack.c.h.b16 %v397
    %v1174 = vunpack.c.l.b16 %v398
    %v1175 = vunpack.c.h.b16 %v398
    %v1176 = vunpack.c.l.b16 %v399
    %v1177 = vunpack.c.h.b16 %v399
    %v1178 = vunpack.c.l.b16 %v400
    %v1179 = vunpack.c.h.b16 %v400
    %v1180 = vunpack.c.l.b16 %v401
    %v1181 = vunpack.c.h.b16 %v401
    %v1182 = vunpack.c.l.b16 %v402
    %v1183 = vunpack.c.h.b16 %v402
    %v1184 = vunpack.c.l.b16 %v403
    %v1185 = vunpack.c.h.b16 %v403
    %v1186 = vunpack.c.l.b16 %v404
    %v1187 = vunpack.c.h.b16 %v404
    %v1188 = vunpack.c.l.b16 %v405
    %v1189 = vunpack.c.h.b16 %v405
    %v1190 = vunpack.c.l.b16 %v406
    %v1191 = vunpack.c.h.b16 %v406
    %v1192 = vunpack.c.l.b16 %v407
    %v1193 = vunpack.c.h.b16 %v407
    %v1194 = vunpack.c.l.b16 %v408
    %v1195 = vunpack.c.h.b16 %v408
    %v1196 = vunpack.c.l.b16 %v409
    %v1197 = vunpack.c.h.b16 %v409
    %v1198 = vunpack.c.l.b16 %v410
    %v1199 = vunpack.c.h.b16 %v410
    %v1200 = vunpack.c.l.b16 %v411
    %v1201 = vunpack.c.h.b16 %v411
    %v1202 = vpack.c.b16 %v694, %v690
    %v1203 = vpack.c.b16 %v695, %v691
    %v1204 = vpack.c.b16 %v696, %v692
    %v1205 = vpack.c.b16 %v697, %v693
    %v1206 = vpack.c.b16 %v702, %v698
    %v1207 = vpack.c.b16 %v703, %v699
    %v1208 = vpack.c.b16 %v704, %v700
    %v1209 = vpack.c.b16 %v705, %v701
    %v1210 = vpack.c.b16 %v710, %v706
    %v1211 = vpack.c.b16 %v711, %v707
    %v1212 = vpack.c.b16 %v712, %v708
    %v1213 = vpack.c.b16 %v713, %v709
    %v1214 = vpack.c.b16 %v718, %v714
    %v1215 = vpack.c.b16 %v719, %v715
    %v1216 = vpack.c.b16 %v720, %v716
    %v1217 = vpack.c.b16 %v721, %v717
    %v1218 = vpack.c.b16 %v726, %v722
    %v1219 = vpack.c.b16 %v727, %v723
    %v1220 = vpack.c.b16 %v728, %v724
    %v1221 = vpack.c.b16 %v729, %v725
    %v1222 = vpack.c.b16 %v734, %v730
    %v1223 = vpack.c.b16 %v735, %v731
    %v1224 = vpack.c.b16 %v736, %v732
    %v1225 = vpack.c.b16 %v737, %v733
    %v1226 = vpack.c.b16 %v742, %v738
    %v1227 = vpack.c.b16 %v743, %v739
    %v1228 = vpack.c.b16 %v744, %v740
    %v1229 = vpack.c.b16 %v745, %v741
    %v1230 = vpack.c.b16 %v750, %v746
    %v1231 = vpack.c.b16 %v751, %v747
    %v1232 = vpack.c.b16 %v752, %v748
    %v1233 = vpack.c.b16 %v753, %v749
    %v1234 = vpack.c.b16 %v758, %v754
    %v1235 = vpack.c.b16 %v759, %v755
    %v1236 = vpack.c.b16 %v760, %v756
    %v1237 = vpack.c.b16 %v761, %v757
    %v1238 = vpack.c.b16 %v766, %v762
    %v1239 = vpack.c.b16 %v767, %v763
    %v1240 = vpack.c.b16 %v768, %v764
    %v1241 = vpack.c.b16 %v769, %v765
    %v1242 = vpack.c.b16 %v774, %v770
    %v1243 = vpack.c.b16 %v775, %v771
    %v1244 = vpack.c.b16 %v776, %v772
    %v1245 = vpack.c.b16 %v777, %v773
    %v1246 = vpack.c.b16 %v782, %v778
    %v1247 = vpack.c.b16 %v783, %v779
    %v1248 = vpack.c.b16 %v784, %v780
    %v1249 = vpack.c.b16 %v785, %v781
    %v1250 = vpack.c.b16 %v790, %v786
    %v1251 = vpack.c.b16 %v791, %v787
    %v1252 = vpack.c.b16 %v792, %v788
    %v1253 = vpack.c.b16 %v793, %v789
    %v1254 = vpack.c.b16 %v798, %v794
    %v1255 = vpack.c.b16 %v799, %v795
    %v1256 = vpack.c.b16 %v800, %v796
    %v1257 = vpack.c.b16 %v801, %v797
    %v1258 = vpack.c.b16 %v806, %v802
    %v1259 = vpack.c.b16 %v807, %v803
    %v1260 = vpack.c.b16 %v808, %v804
    %v1261 = vpack.c.b16 %v809, %v805
    %v1262 = vpack.c.b16 %v814, %v810
    %v1263 = vpack.c.b16 %v815, %v811
    %v1264 = vpack.c.b16 %v816, %v812
    %v1265 = vpack.c.b16 %v817, %v813
    %v1266 = vpack.c.b16 %v822, %v818
    %v1267 = vpack.c.b16 %v823, %v819
    %v1268 = vpack.c.b16 %v824, %v820
    %v1269 = vpack.c.b16 %v825, %v821
    %v1270 = vpack.c.b16 %v830, %v826
    %v1271 = vpack.c.b16 %v831, %v827
    %v1272 = vpack.c.b16 %v832, %v828
    %v1273 = vpack.c.b16 %v833, %v829
    %v1274 = vpack.c.b16 %v838, %v834
    %v1275 = vpack.c.b16 %v839, %v835
    %v1276 = vpack.c.b16 %v840, %v836
    %v1277 = vpack.c.b16 %v841, %v837
    %v1278 = vpack.c.b16 %v846, %v842
    %v1279 = vpack.c.b16 %v847, %v843
    %v1280 = vpack.c.b16 %v848, %v844
    %v1281 = vpack.c.b16 %v849, %v845
    %v1282 = vpack.c.b16 %v854, %v850
    %v1283 = vpack.c.b16 %v855, %v851
    %v1284 = vpack.c.b16 %v856, %v852
    %v1285 = vpack.c.b16 %v857, %v853
    %v1286 = vpack.c.b16 %v862, %v858
    %v1287 = vpack.c.b16 %v863, %v859
    %v1288 = vpack.c.b16 %v864, %v860
    %v1289 = vpack.c.b16 %v865, %v861
    %v1290 = vpack.c.b16 %v870, %v866
    %v1291 = vpack.c.b16 %v871, %v867
    %v1292 = vpack.c.b16 %v872, %v868
    %v1293 = vpack.c.b16 %v873, %v869
    %v1294 = vpack.c.b16 %v878, %v874
    %v1295 = vpack.c.b16 %v879, %v875
    %v1296 = vpack.c.b16 %v880, %v876
    %v1297 = vpack.c.b16 %v881, %v877
    %v1298 = vpack.c.b16 %v886, %v882
    %v1299 = vpack.c.b16 %v887, %v883
    %v1300 = vpack.c.b16 %v888, %v884
    %v1301 = vpack.c.b16 %v889, %v885
    %v1302 = vpack.c.b16 %v894, %v890
    %v1303 = vpack.c.b16 %v895, %v891
    %v1304 = vpack.c.b16 %v896, %v892
    %v1305 = vpack.c.b16 %v897, %v893
    %v1306 = vpack.c.b16 %v902, %v898
    %v1307 = vpack.c.b16 %v903, %v899
    %v1308 = vpack.c.b16 %v904, %v900
    %v1309 = vpack.c.b16 %v905, %v901
    %v1310 = vpack.c.b16 %v910, %v906
    %v1311 = vpack.c.b16 %v911, %v907
    %v1312 = vpack.c.b16 %v912, %v908
    %v1313 = vpack.c.b16 %v913, %v909
    %v1314 = vpack.c.b16 %v918, %v914
    %v1315 = vpack.c.b16 %v919, %v915
    %v1316 = vpack.c.b16 %v920, %v916
    %v1317 = vpack.c.b16 %v921, %v917
    %v1318 = vpack.c.b16 %v926, %v922
    %v1319 = vpack.c.b16 %v927, %v923
    %v1320 = vpack.c.b16 %v928, %v924
    %v1321 = vpack.c.b16 %v929, %v925
    %v1322 = vpack.c.b16 %v934, %v930
    %v1323 = vpack.c.b16 %v935, %v931
    %v1324 = vpack.c.b16 %v936, %v932
    %v1325 = vpack.c.b16 %v937, %v933
    %v1326 = vpack.c.b16 %v942, %v938
    %v1327 = vpack.c.b16 %v943, %v939
    %v1328 = vpack.c.b16 %v944, %v940
    %v1329 = vpack.c.b16 %v945, %v941
    %v1330 = vpack.c.b16 %v950, %v946
    %v1331 = vpack.c.b16 %v951, %v947
    %v1332 = vpack.c.b16 %v952, %v948
    %v1333 = vpack.c.b16 %v953, %v949
    %v1334 = vpack.c.b16 %v958, %v954
    %v1335 = vpack.c.b16 %v959, %v955
    %v1336 = vpack.c.b16 %v960, %v956
    %v1337 = vpack.c.b16 %v961, %v957
    %v1338 = vpack.c.b16 %v966, %v962
    %v1339 = vpack.c.b16 %v967, %v963
    %v1340 = vpack.c.b16 %v968, %v964
    %v1341 = vpack.c.b16 %v969, %v965
    %v1342 = vpack.c.b16 %v974, %v970
    %v1343 = vpack.c.b16 %v975, %v971
    %v1344 = vpack.c.b16 %v976, %v972
    %v1345 = vpack.c.b16 %v977, %v973
    %v1346 = vpack.c.b16 %v982, %v978
    %v1347 = vpack.c.b16 %v983, %v979
    %v1348 = vpack.c.b16 %v984, %v980
    %v1349 = vpack.c.b16 %v985, %v981
    %v1350 = vpack.c.b16 %v990, %v986
    %v1351 = vpack.c.b16 %v991, %v987
    %v1352 = vpack.c.b16 %v992, %v988
    %v1353 = vpack.c.b16 %v993, %v989
    %v1354 = vpack.c.b16 %v998, %v994
    %v1355 = vpack.c.b16 %v999, %v995
    %v1356 = vpack.c.b16 %v1000, %v996
    %v1357 = vpack.c.b16 %v1001, %v997
    %v1358 = vpack.c.b16 %v1006, %v1002
    %v1359 = vpack.c.b16 %v1007, %v1003
    %v1360 = vpack.c.b16 %v1008, %v1004
    %v1361 = vpack.c.b16 %v1009, %v1005
    %v1362 = vpack.c.b16 %v1014, %v1010
    %v1363 = vpack.c.b16 %v1015, %v1011
    %v1364 = vpack.c.b16 %v1016, %v1012
    %v1365 = vpack.c.b16 %v1017, %v1013
    %v1366 = vpack.c.b16 %v1022, %v1018
    %v1367 = vpack.c.b16 %v1023, %v1019
    %v1368 = vpack.c.b16 %v1024, %v1020
    %v1369 = vpack.c.b16 %v1025, %v1021
    %v1370 = vpack.c.b16 %v1030, %v1026
    %v1371 = vpack.c.b16 %v1031, %v1027
    %v1372 = vpack.c.b16 %v1032, %v1028
    %v1373 = vpack.c.b16 %v1033, %v1029
    %v1374 = vpack.c.b16 %v1038, %v1034
    %v1375 = vpack.c.b16 %v1039, %v1035
    %v1376 = vpack.c.b16 %v1040, %v1036
    %v1377 = vpack.c.b16 %v1041, %v1037
    %v1378 = vpack.c.b16 %v1046, %v1042
    %v1379 = vpack.c.b16 %v1047, %v1043
    %v1380 = vpack.c.b16 %v1048, %v1044
    %v1381 = vpack.c.b16 %v1049, %v1045
    %v1382 = vpack.c.b16 %v1054, %v1050
    %v1383 = vpack.c.b16 %v1055, %v1051
    %v1384 = vpack.c.b16 %v1056, %v1052
    %v1385 = vpack.c.b16 %v1057, %v1053
    %v1386 = vpack.c.b16 %v1062, %v1058
    %v1387 = vpack.c.b16 %v1063, %v1059
    %v1388 = vpack.c.b16 %v1064, %v1060
    %v1389 = vpack.c.b16 %v1065, %v1061
    %v1390 = vpack.c.b16 %v1070, %v1066
    %v1391 = vpack.c.b16 %v1071, %v1067
    %v1392 = vpack.c.b16 %v1072, %v1068
    %v1393 = vpack.c.b16 %v1073, %v1069
    %v1394 = vpack.c.b16 %v1078, %v1074
    %v1395 = vpack.c.b16 %v1079, %v1075
    %v1396 = vpack.c.b16 %v1080, %v1076
    %v1397 = vpack.c.b16 %v1081, %v1077
    %v1398 = vpack.c.b16 %v1086, %v1082
    %v1399 = vpack.c.b16 %v1087, %v1083
    %v1400 = vpack.c.b16 %v1088, %v1084
    %v1401 = vpack.c.b16 %v1089, %v1085
    %v1402 = vpack.c.b16 %v1094, %v1090
    %v1403 = vpack.c.b16 %v1095, %v1091
    %v1404 = vpack.c.b16 %v1096, %v1092
    %v1405 = vpack.c.b16 %v1097, %v1093
    %v1406 = vpack.c.b16 %v1102, %v1098
    %v1407 = vpack.c.b16 %v1103, %v1099
    %v1408 = vpack.c.b16 %v1104, %v1100
    %v1409 = vpack.c.b16 %v1105, %v1101
    %v1410 = vpack.c.b16 %v1110, %v1106
    %v1411 = vpack.c.b16 %v1111, %v1107
    %v1412 = vpack.c.b16 %v1112, %v1108
    %v1413 = vpack.c.b16 %v1113, %v1109
    %v1414 = vpack.c.b16 %v1118, %v1114
    %v1415 = vpack.c.b16 %v1119, %v1115
    %v1416 = vpack.c.b16 %v1120, %v1116
    %v1417 = vpack.c.b16 %v1121, %v1117
    %v1418 = vpack.c.b16 %v1126, %v1122
    %v1419 = vpack.c.b16 %v1127, %v1123
    %v1420 = vpack.c.b16 %v1128, %v1124
    %v1421 = vpack.c.b16 %v1129, %v1125
    %v1422 = vpack.c.b16 %v1134, %v1130
    %v1423 = vpack.c.b16 %v1135, %v1131
    %v1424 = vpack.c.b16 %v1136, %v1132
    %v1425 = vpack.c.b16 %v1137, %v1133
    %v1426 = vpack.c.b16 %v1142, %v1138
    %v1427 = vpack.c.b16 %v1143, %v1139
    %v1428 = vpack.c.b16 %v1144, %v1140
    %v1429 = vpack.c.b16 %v1145, %v1141
    %v1430 = vpack.c.b16 %v1150, %v1146
    %v1431 = vpack.c.b16 %v1151, %v1147
    %v1432 = vpack.c.b16 %v1152, %v1148
    %v1433 = vpack.c.b16 %v1153, %v1149
    %v1434 = vpack.c.b16 %v1158, %v1154
    %v1435 = vpack.c.b16 %v1159, %v1155
    %v1436 = vpack.c.b16 %v1160, %v1156
    %v1437 = vpack.c.b16 %v1161, %v1157
    %v1438 = vpack.c.b16 %v1166, %v1162
    %v1439 = vpack.c.b16 %v1167, %v1163
    %v1440 = vpack.c.b16 %v1168, %v1164
    %v1441 = vpack.c.b16 %v1169, %v1165
    %v1442 = vpack.c.b16 %v1174, %v1170
    %v1443 = vpack.c.b16 %v1175, %v1171
    %v1444 = vpack.c.b16 %v1176, %v1172
    %v1445 = vpack.c.b16 %v1177, %v1173
    %v1446 = vpack.c.b16 %v1182, %v1178
    %v1447 = vpack.c.b16 %v1183, %v1179
    %v1448 = vpack.c.b16 %v1184, %v1180
    %v1449 = vpack.c.b16 %v1185, %v1181
    %v1450 = vpack.c.b16 %v1190, %v1186
    %v1451 = vpack.c.b16 %v1191, %v1187
    %v1452 = vpack.c.b16 %v1192, %v1188
    %v1453 = vpack.c.b16 %v1193, %v1189
    %v1454 = vpack.c.b16 %v1198, %v1194
    %v1455 = vpack.c.b16 %v1199, %v1195
    %v1456 = vpack.c.b16 %v1200, %v1196
    %v1457 = vpack.c.b16 %v1201, %v1197
    %1714 = vmatprep.subr.bf16.mxu0 %v1203
    %1715 = vmatpush1.bf16.msra.mxu0 %v1202
    %1716 = vmatprep.subr.bf16.mxu0 %v1207
    %1717 = vmatpush1.bf16.msra.mxu0 %v1206
    %1718 = vmatprep.subr.bf16.mxu0 %v1211
    %1719 = vmatpush1.bf16.msra.mxu0 %v1210
    %1720 = vmatprep.subr.bf16.mxu0 %v1215
    %1721 = vmatpush1.bf16.msra.mxu0 %v1214
    %1722 = vmatprep.subr.bf16.mxu0 %v1219
    %1723 = vmatpush1.bf16.msra.mxu0 %v1218
    %1724 = vmatprep.subr.bf16.mxu0 %v1223
    %1725 = vmatpush1.bf16.msra.mxu0 %v1222
    %1726 = vmatprep.subr.bf16.mxu0 %v1227
    %1727 = vmatpush1.bf16.msra.mxu0 %v1226
    %1728 = vmatprep.subr.bf16.mxu0 %v1231
    %1729 = vmatpush1.bf16.msra.mxu0 %v1230
    %1730 = vmatprep.subr.bf16.mxu0 %v1235
    %1731 = vmatpush1.bf16.msra.mxu0 %v1234
    %1732 = vmatprep.subr.bf16.mxu0 %v1239
    %1733 = vmatpush1.bf16.msra.mxu0 %v1238
    %1734 = vmatprep.subr.bf16.mxu0 %v1243
    %1735 = vmatpush1.bf16.msra.mxu0 %v1242
    %1736 = vmatprep.subr.bf16.mxu0 %v1247
    %1737 = vmatpush1.bf16.msra.mxu0 %v1246
    %1738 = vmatprep.subr.bf16.mxu0 %v1251
    %1739 = vmatpush1.bf16.msra.mxu0 %v1250
    %1740 = vmatprep.subr.bf16.mxu0 %v1255
    %1741 = vmatpush1.bf16.msra.mxu0 %v1254
    %1742 = vmatprep.subr.bf16.mxu0 %v1259
    %1743 = vmatpush1.bf16.msra.mxu0 %v1258
    %1744 = vmatprep.subr.bf16.mxu0 %v1263
    %1745 = vmatpush1.bf16.msra.mxu0 %v1262
    %1746 = vmatprep.mubr.bf16.mxu0 %v149
    %1747 = vmatmul.mubr.bf16.gmra.mrb[0].mxu0 %v148
    %v1748 = vpop.f32.mrb[0].mxu0
    %v1749 = vadd.f32 %v417, %v1748
    %v1750 = vpop.f32.mrb[0].mxu0
    %v1751 = vadd.f32 %v421, %v1750
    %v1752 = vpop.f32.mrb[0].mxu0
    %v1753 = vpop.f32.mrb[0].mxu0
    %1754 = vdwg.mxu0
    %1755 = vmatprep.subr.bf16.mxu0 %v1267
    %1756 = vmatpush1.bf16.msra.mxu0 %v1266
    %1757 = vmatprep.subr.bf16.mxu0 %v1271
    %1758 = vmatpush1.bf16.msra.mxu0 %v1270
    %1759 = vmatprep.subr.bf16.mxu0 %v1275
    %1760 = vmatpush1.bf16.msra.mxu0 %v1274
    %1761 = vmatprep.subr.bf16.mxu0 %v1279
    %1762 = vmatpush1.bf16.msra.mxu0 %v1278
    %1763 = vmatprep.subr.bf16.mxu0 %v1283
    %1764 = vmatpush1.bf16.msra.mxu0 %v1282
    %1765 = vmatprep.subr.bf16.mxu0 %v1287
    %1766 = vmatpush1.bf16.msra.mxu0 %v1286
    %1767 = vmatprep.subr.bf16.mxu0 %v1291
    %1768 = vmatpush1.bf16.msra.mxu0 %v1290
    %1769 = vmatprep.subr.bf16.mxu0 %v1295
    %1770 = vmatpush1.bf16.msra.mxu0 %v1294
    %1771 = vmatprep.subr.bf16.mxu0 %v1299
    %1772 = vmatpush1.bf16.msra.mxu0 %v1298
    %1773 = vmatprep.subr.bf16.mxu0 %v1303
    %1774 = vmatpush1.bf16.msra.mxu0 %v1302
    %1775 = vmatprep.subr.bf16.mxu0 %v1307
    %1776 = vmatpush1.bf16.msra.mxu0 %v1306
    %1777 = vmatprep.subr.bf16.mxu0 %v1311
    %1778 = vmatpush1.bf16.msra.mxu0 %v1310
    %1779 = vmatprep.subr.bf16.mxu0 %v1315
    %1780 = vmatpush1.bf16.msra.mxu0 %v1314
    %1781 = vmatprep.subr.bf16.mxu0 %v1319
    %1782 = vmatpush1.bf16.msra.mxu0 %v1318
    %1783 = vmatprep.subr.bf16.mxu0 %v1323
    %1784 = vmatpush1.bf16.msra.mxu0 %v1322
    %1785 = vmatprep.subr.bf16.mxu0 %v1327
    %1786 = vmatpush1.bf16.msra.mxu0 %v1326
    %1787 = vmatprep.mubr.bf16.mxu0 %v151
    %1788 = vmatmul.mubr.bf16.gmra.mrb[0].mxu0 %v150
    %v1789 = vpop.f32.mrb[0].mxu0
    %v1790 = vadd.f32 %v1749, %v1789
    %v1791 = vpop.f32.mrb[0].mxu0
    %v1792 = vadd.f32 %v1751, %v1791
    %v1793 = vpop.f32.mrb[0].mxu0
    %v1794 = vpop.f32.mrb[0].mxu0
    %1795 = vdwg.mxu0
    %1796 = vmatprep.subr.bf16.mxu0 %v1331
    %1797 = vmatpush1.bf16.msra.mxu0 %v1330
    %1798 = vmatprep.subr.bf16.mxu0 %v1335
    %1799 = vmatpush1.bf16.msra.mxu0 %v1334
    %1800 = vmatprep.subr.bf16.mxu0 %v1339
    %1801 = vmatpush1.bf16.msra.mxu0 %v1338
    %1802 = vmatprep.subr.bf16.mxu0 %v1343
    %1803 = vmatpush1.bf16.msra.mxu0 %v1342
    %1804 = vmatprep.subr.bf16.mxu0 %v1347
    %1805 = vmatpush1.bf16.msra.mxu0 %v1346
    %1806 = vmatprep.subr.bf16.mxu0 %v1351
    %1807 = vmatpush1.bf16.msra.mxu0 %v1350
    %1808 = vmatprep.subr.bf16.mxu0 %v1355
    %1809 = vmatpush1.bf16.msra.mxu0 %v1354
    %1810 = vmatprep.subr.bf16.mxu0 %v1359
    %1811 = vmatpush1.bf16.msra.mxu0 %v1358
    %1812 = vmatprep.subr.bf16.mxu0 %v1363
    %1813 = vmatpush1.bf16.msra.mxu0 %v1362
    %1814 = vmatprep.subr.bf16.mxu0 %v1367
    %1815 = vmatpush1.bf16.msra.mxu0 %v1366
    %1816 = vmatprep.subr.bf16.mxu0 %v1371
    %1817 = vmatpush1.bf16.msra.mxu0 %v1370
    %1818 = vmatprep.subr.bf16.mxu0 %v1375
    %1819 = vmatpush1.bf16.msra.mxu0 %v1374
    %1820 = vmatprep.subr.bf16.mxu0 %v1379
    %1821 = vmatpush1.bf16.msra.mxu0 %v1378
    %1822 = vmatprep.subr.bf16.mxu0 %v1383
    %1823 = vmatpush1.bf16.msra.mxu0 %v1382
    %1824 = vmatprep.subr.bf16.mxu0 %v1387
    %1825 = vmatpush1.bf16.msra.mxu0 %v1386
    %1826 = vmatprep.subr.bf16.mxu0 %v1391
    %1827 = vmatpush1.bf16.msra.mxu0 %v1390
    %1828 = vmatprep.mubr.bf16.mxu0 %v153
    %1829 = vmatmul.mubr.bf16.gmra.mrb[0].mxu0 %v152
    %v1830 = vpop.f32.mrb[0].mxu0
    %v1831 = vadd.f32 %v1790, %v1830
    %v1832 = vpop.f32.mrb[0].mxu0
    %v1833 = vadd.f32 %v1792, %v1832
    %v1834 = vpop.f32.mrb[0].mxu0
    %v1835 = vpop.f32.mrb[0].mxu0
    %1836 = vdwg.mxu0
    %1837 = vmatprep.subr.bf16.mxu0 %v1395
    %1838 = vmatpush1.bf16.msra.mxu0 %v1394
    %1839 = vmatprep.subr.bf16.mxu0 %v1399
    %1840 = vmatpush1.bf16.msra.mxu0 %v1398
    %1841 = vmatprep.subr.bf16.mxu0 %v1403
    %1842 = vmatpush1.bf16.msra.mxu0 %v1402
    %1843 = vmatprep.subr.bf16.mxu0 %v1407
    %1844 = vmatpush1.bf16.msra.mxu0 %v1406
    %1845 = vmatprep.subr.bf16.mxu0 %v1411
    %1846 = vmatpush1.bf16.msra.mxu0 %v1410
    %1847 = vmatprep.subr.bf16.mxu0 %v1415
    %1848 = vmatpush1.bf16.msra.mxu0 %v1414
    %1849 = vmatprep.subr.bf16.mxu0 %v1419
    %1850 = vmatpush1.bf16.msra.mxu0 %v1418
    %1851 = vmatprep.subr.bf16.mxu0 %v1423
    %1852 = vmatpush1.bf16.msra.mxu0 %v1422
    %1853 = vmatprep.subr.bf16.mxu0 %v1427
    %1854 = vmatpush1.bf16.msra.mxu0 %v1426
    %1855 = vmatprep.subr.bf16.mxu0 %v1431
    %1856 = vmatpush1.bf16.msra.mxu0 %v1430
    %1857 = vmatprep.subr.bf16.mxu0 %v1435
    %1858 = vmatpush1.bf16.msra.mxu0 %v1434
    %1859 = vmatprep.subr.bf16.mxu0 %v1439
    %1860 = vmatpush1.bf16.msra.mxu0 %v1438
    %1861 = vmatprep.subr.bf16.mxu0 %v1443
    %1862 = vmatpush1.bf16.msra.mxu0 %v1442
    %1863 = vmatprep.subr.bf16.mxu0 %v1447
    %1864 = vmatpush1.bf16.msra.mxu0 %v1446
    %1865 = vmatprep.subr.bf16.mxu0 %v1451
    %1866 = vmatpush1.bf16.msra.mxu0 %v1450
    %1867 = vmatprep.subr.bf16.mxu0 %v1455
    %1868 = vmatpush1.bf16.msra.mxu0 %v1454
    %1869 = vmatprep.mubr.bf16.mxu0 %v155
    %1870 = vmatmul.mubr.bf16.gmra.mrb[0].mxu0 %v154
    %v1871 = vpop.f32.mrb[0].mxu0
    %v1872 = vadd.f32 %v1831, %v1871
    %v1873 = vpop.f32.mrb[0].mxu0
    %v1874 = vadd.f32 %v1833, %v1873
    %v1875 = vpop.f32.mrb[0].mxu0
    %v1876 = vpop.f32.mrb[0].mxu0
    %1877 = vdwg.mxu0
    %1878 = vmatprep.subr.bf16.mxu0 %v1205
    %1879 = vmatpush1.bf16.msra.mxu0 %v1204
    %1880 = vmatprep.subr.bf16.mxu0 %v1209
    %1881 = vmatpush1.bf16.msra.mxu0 %v1208
    %1882 = vmatprep.subr.bf16.mxu0 %v1213
    %1883 = vmatpush1.bf16.msra.mxu0 %v1212
    %1884 = vmatprep.subr.bf16.mxu0 %v1217
    %1885 = vmatpush1.bf16.msra.mxu0 %v1216
    %1886 = vmatprep.subr.bf16.mxu0 %v1221
    %1887 = vmatpush1.bf16.msra.mxu0 %v1220
    %1888 = vmatprep.subr.bf16.mxu0 %v1225
    %1889 = vmatpush1.bf16.msra.mxu0 %v1224
    %1890 = vmatprep.subr.bf16.mxu0 %v1229
    %1891 = vmatpush1.bf16.msra.mxu0 %v1228
    %1892 = vmatprep.subr.bf16.mxu0 %v1233
    %1893 = vmatpush1.bf16.msra.mxu0 %v1232
    %1894 = vmatprep.subr.bf16.mxu0 %v1237
    %1895 = vmatpush1.bf16.msra.mxu0 %v1236
    %1896 = vmatprep.subr.bf16.mxu0 %v1241
    %1897 = vmatpush1.bf16.msra.mxu0 %v1240
    %1898 = vmatprep.subr.bf16.mxu0 %v1245
    %1899 = vmatpush1.bf16.msra.mxu0 %v1244
    %1900 = vmatprep.subr.bf16.mxu0 %v1249
    %1901 = vmatpush1.bf16.msra.mxu0 %v1248
    %1902 = vmatprep.subr.bf16.mxu0 %v1253
    %1903 = vmatpush1.bf16.msra.mxu0 %v1252
    %1904 = vmatprep.subr.bf16.mxu0 %v1257
    %1905 = vmatpush1.bf16.msra.mxu0 %v1256
    %1906 = vmatprep.subr.bf16.mxu0 %v1261
    %1907 = vmatpush1.bf16.msra.mxu0 %v1260
    %1908 = vmatprep.subr.bf16.mxu0 %v1265
    %1909 = vmatpush1.bf16.msra.mxu0 %v1264
    %1910 = vmatprep.mubr.bf16.mxu0 %v149
    %1911 = vmatmul.mubr.bf16.gmra.mrb[0].mxu0 %v148
    %v1912 = vpop.f32.mrb[0].mxu0
    %v1913 = vadd.f32 %v425, %v1912
    %v1914 = vpop.f32.mrb[0].mxu0
    %v1915 = vadd.f32 %v429, %v1914
    %v1916 = vpop.f32.mrb[0].mxu0
    %v1917 = vpop.f32.mrb[0].mxu0
    %1918 = vdwg.mxu0
    %1919 = vmatprep.subr.bf16.mxu0 %v1269
    %1920 = vmatpush1.bf16.msra.mxu0 %v1268
    %1921 = vmatprep.subr.bf16.mxu0 %v1273
    %1922 = vmatpush1.bf16.msra.mxu0 %v1272
    %1923 = vmatprep.subr.bf16.mxu0 %v1277
    %1924 = vmatpush1.bf16.msra.mxu0 %v1276
    %1925 = vmatprep.subr.bf16.mxu0 %v1281
    %1926 = vmatpush1.bf16.msra.mxu0 %v1280
    %1927 = vmatprep.subr.bf16.mxu0 %v1285
    %1928 = vmatpush1.bf16.msra.mxu0 %v1284
    %1929 = vmatprep.subr.bf16.mxu0 %v1289
    %1930 = vmatpush1.bf16.msra.mxu0 %v1288
    %1931 = vmatprep.subr.bf16.mxu0 %v1293
    %1932 = vmatpush1.bf16.msra.mxu0 %v1292
    %1933 = vmatprep.subr.bf16.mxu0 %v1297
    %1934 = vmatpush1.bf16.msra.mxu0 %v1296
    %1935 = vmatprep.subr.bf16.mxu0 %v1301
    %1936 = vmatpush1.bf16.msra.mxu0 %v1300
    %1937 = vmatprep.subr.bf16.mxu0 %v1305
    %1938 = vmatpush1.bf16.msra.mxu0 %v1304
    %1939 = vmatprep.subr.bf16.mxu0 %v1309
    %1940 = vmatpush1.bf16.msra.mxu0 %v1308
    %1941 = vmatprep.subr.bf16.mxu0 %v1313
    %1942 = vmatpush1.bf16.msra.mxu0 %v1312
    %1943 = vmatprep.subr.bf16.mxu0 %v1317
    %1944 = vmatpush1.bf16.msra.mxu0 %v1316
    %1945 = vmatprep.subr.bf16.mxu0 %v1321
    %1946 = vmatpush1.bf16.msra.mxu0 %v1320
    %1947 = vmatprep.subr.bf16.mxu0 %v1325
    %1948 = vmatpush1.bf16.msra.mxu0 %v1324
    %1949 = vmatprep.subr.bf16.mxu0 %v1329
    %1950 = vmatpush1.bf16.msra.mxu0 %v1328
    %1951 = vmatprep.mubr.bf16.mxu0 %v151
    %1952 = vmatmul.mubr.bf16.gmra.mrb[0].mxu0 %v150
    %v1953 = vpop.f32.mrb[0].mxu0
    %v1954 = vadd.f32 %v1913, %v1953
    %v1955 = vpop.f32.mrb[0].mxu0
    %v1956 = vadd.f32 %v1915, %v1955
    %v1957 = vpop.f32.mrb[0].mxu0
    %v1958 = vpop.f32.mrb[0].mxu0
    %1959 = vdwg.mxu0
    %1960 = vmatprep.subr.bf16.mxu0 %v1333
    %1961 = vmatpush1.bf16.msra.mxu0 %v1332
    %1962 = vmatprep.subr.bf16.mxu0 %v1337
    %1963 = vmatpush1.bf16.msra.mxu0 %v1336
    %1964 = vmatprep.subr.bf16.mxu0 %v1341
    %1965 = vmatpush1.bf16.msra.mxu0 %v1340
    %1966 = vmatprep.subr.bf16.mxu0 %v1345
    %1967 = vmatpush1.bf16.msra.mxu0 %v1344
    %1968 = vmatprep.subr.bf16.mxu0 %v1349
    %1969 = vmatpush1.bf16.msra.mxu0 %v1348
    %1970 = vmatprep.subr.bf16.mxu0 %v1353
    %1971 = vmatpush1.bf16.msra.mxu0 %v1352
    %1972 = vmatprep.subr.bf16.mxu0 %v1357
    %1973 = vmatpush1.bf16.msra.mxu0 %v1356
    %1974 = vmatprep.subr.bf16.mxu0 %v1361
    %1975 = vmatpush1.bf16.msra.mxu0 %v1360
    %1976 = vmatprep.subr.bf16.mxu0 %v1365
    %1977 = vmatpush1.bf16.msra.mxu0 %v1364
    %1978 = vmatprep.subr.bf16.mxu0 %v1369
    %1979 = vmatpush1.bf16.msra.mxu0 %v1368
    %1980 = vmatprep.subr.bf16.mxu0 %v1373
    %1981 = vmatpush1.bf16.msra.mxu0 %v1372
    %1982 = vmatprep.subr.bf16.mxu0 %v1377
    %1983 = vmatpush1.bf16.msra.mxu0 %v1376
    %1984 = vmatprep.subr.bf16.mxu0 %v1381
    %1985 = vmatpush1.bf16.msra.mxu0 %v1380
    %1986 = vmatprep.subr.bf16.mxu0 %v1385
    %1987 = vmatpush1.bf16.msra.mxu0 %v1384
    %1988 = vmatprep.subr.bf16.mxu0 %v1389
    %1989 = vmatpush1.bf16.msra.mxu0 %v1388
    %1990 = vmatprep.subr.bf16.mxu0 %v1393
    %1991 = vmatpush1.bf16.msra.mxu0 %v1392
    %1992 = vmatprep.mubr.bf16.mxu0 %v153
    %1993 = vmatmul.mubr.bf16.gmra.mrb[0].mxu0 %v152
    %v1994 = vpop.f32.mrb[0].mxu0
    %v1995 = vadd.f32 %v1954, %v1994
    %v1996 = vpop.f32.mrb[0].mxu0
    %v1997 = vadd.f32 %v1956, %v1996
    %v1998 = vpop.f32.mrb[0].mxu0
    %v1999 = vpop.f32.mrb[0].mxu0
    %2000 = vdwg.mxu0
    %2001 = vmatprep.subr.bf16.mxu0 %v1397
    %2002 = vmatpush1.bf16.msra.mxu0 %v1396
    %2003 = vmatprep.subr.bf16.mxu0 %v1401
    %2004 = vmatpush1.bf16.msra.mxu0 %v1400
    %2005 = vmatprep.subr.bf16.mxu0 %v1405
    %2006 = vmatpush1.bf16.msra.mxu0 %v1404
    %2007 = vmatprep.subr.bf16.mxu0 %v1409
    %2008 = vmatpush1.bf16.msra.mxu0 %v1408
    %2009 = vmatprep.subr.bf16.mxu0 %v1413
    %2010 = vmatpush1.bf16.msra.mxu0 %v1412
    %2011 = vmatprep.subr.bf16.mxu0 %v1417
    %2012 = vmatpush1.bf16.msra.mxu0 %v1416
    %2013 = vmatprep.subr.bf16.mxu0 %v1421
    %2014 = vmatpush1.bf16.msra.mxu0 %v1420
    %2015 = vmatprep.subr.bf16.mxu0 %v1425
    %2016 = vmatpush1.bf16.msra.mxu0 %v1424
    %2017 = vmatprep.subr.bf16.mxu0 %v1429
    %2018 = vmatpush1.bf16.msra.mxu0 %v1428
    %2019 = vmatprep.subr.bf16.mxu0 %v1433
    %2020 = vmatpush1.bf16.msra.mxu0 %v1432
    %2021 = vmatprep.subr.bf16.mxu0 %v1437
    %2022 = vmatpush1.bf16.msra.mxu0 %v1436
    %2023 = vmatprep.subr.bf16.mxu0 %v1441
    %2024 = vmatpush1.bf16.msra.mxu0 %v1440
    %2025 = vmatprep.subr.bf16.mxu0 %v1445
    %2026 = vmatpush1.bf16.msra.mxu0 %v1444
    %2027 = vmatprep.subr.bf16.mxu0 %v1449
    %2028 = vmatpush1.bf16.msra.mxu0 %v1448
    %2029 = vmatprep.subr.bf16.mxu0 %v1453
    %2030 = vmatpush1.bf16.msra.mxu0 %v1452
    %2031 = vmatprep.subr.bf16.mxu0 %v1457
    %2032 = vmatpush1.bf16.msra.mxu0 %v1456
    %2033 = vmatprep.mubr.bf16.mxu0 %v155
    %2034 = vmatmul.mubr.bf16.gmra.mrb[0].mxu0 %v154
    %v2035 = vpop.f32.mrb[0].mxu0
    %v2036 = vadd.f32 %v1995, %v2035
    %v2037 = vpop.f32.mrb[0].mxu0
    %v2038 = vadd.f32 %v1997, %v2037
    %v2039 = vpop.f32.mrb[0].mxu0
    %v2040 = vpop.f32.mrb[0].mxu0
    %2041 = vdwg.mxu0
    %v2042 = vmax.f32 %v1872, 0.0
    %v2043 = vmax.f32 %v1874, 0.0
    %v2044 = vmax.f32 %v2036, 0.0
    %v2045 = vmax.f32 %v2038, 0.0
    %v2046 = vpack.c.bf16 %v2042, %v2042
    %v2047 = vpack.c.bf16 %v2043, %v2043
    %v2048 = vpack.c.bf16 %v2044, %v2044
    %v2049 = vpack.c.bf16 %v2045, %v2045
    %v2050 = vld [vmem:[%s5] sm:$0xf]
    %v2051 = vld [vmem:[%s5 + $0x4] sm:$0xf]
    %v2052 = vld [vmem:[%s5 + $0x8] sm:$0xf]
    %v2053 = vld [vmem:[%s5 + $0xc] sm:$0xf]
    %v2054 = vld [vmem:[%s5 + $0x10] sm:$0xf]
    %v2055 = vld [vmem:[%s5 + $0x14] sm:$0xf]
    %v2056 = vld [vmem:[%s5 + $0x18] sm:$0xf]
    %v2057 = vld [vmem:[%s5 + $0x1c] sm:$0xf]
    %v2058 = vld [vmem:[%s5 + $0x20] sm:$0xf]
    %v2059 = vld [vmem:[%s5 + $0x24] sm:$0xf]
    %v2060 = vld [vmem:[%s5 + $0x28] sm:$0xf]
    %v2061 = vld [vmem:[%s5 + $0x2c] sm:$0xf]
    %v2062 = vld [vmem:[%s5 + $0x30] sm:$0xf]
    %v2063 = vld [vmem:[%s5 + $0x34] sm:$0xf]
    %v2064 = vld [vmem:[%s5 + $0x38] sm:$0xf]
    %v2065 = vld [vmem:[%s5 + $0x3c] sm:$0xf]
    %v2066 = vld [vmem:[%s5 + $0x40] sm:$0xf]
    %v2067 = vld [vmem:[%s5 + $0x44] sm:$0xf]
    %v2068 = vld [vmem:[%s5 + $0x48] sm:$0xf]
    %v2069 = vld [vmem:[%s5 + $0x4c] sm:$0xf]
    %v2070 = vld [vmem:[%s5 + $0x50] sm:$0xf]
    %v2071 = vld [vmem:[%s5 + $0x54] sm:$0xf]
    %v2072 = vld [vmem:[%s5 + $0x58] sm:$0xf]
    %v2073 = vld [vmem:[%s5 + $0x5c] sm:$0xf]
    %v2074 = vld [vmem:[%s5 + $0x60] sm:$0xf]
    %v2075 = vld [vmem:[%s5 + $0x64] sm:$0xf]
    %v2076 = vld [vmem:[%s5 + $0x68] sm:$0xf]
    %v2077 = vld [vmem:[%s5 + $0x6c] sm:$0xf]
    %v2078 = vld [vmem:[%s5 + $0x70] sm:$0xf]
    %v2079 = vld [vmem:[%s5 + $0x74] sm:$0xf]
    %v2080 = vld [vmem:[%s5 + $0x78] sm:$0xf]
    %v2081 = vld [vmem:[%s5 + $0x7c] sm:$0xf]
    %v2082 = vld [vmem:[%s5 + $0x80] sm:$0xf]
    %v2083 = vld [vmem:[%s5 + $0x84] sm:$0xf]
    %v2084 = vld [vmem:[%s5 + $0x88] sm:$0xf]
    %v2085 = vld [vmem:[%s5 + $0x8c] sm:$0xf]
    %v2086 = vld [vmem:[%s5 + $0x90] sm:$0xf]
    %v2087 = vld [vmem:[%s5 + $0x94] sm:$0xf]
    %v2088 = vld [vmem:[%s5 + $0x98] sm:$0xf]
    %v2089 = vld [vmem:[%s5 + $0x9c] sm:$0xf]
    %v2090 = vld [vmem:[%s5 + $0xa0] sm:$0xf]
    %v2091 = vld [vmem:[%s5 + $0xa4] sm:$0xf]
    %v2092 = vld [vmem:[%s5 + $0xa8] sm:$0xf]
    %v2093 = vld [vmem:[%s5 + $0xac] sm:$0xf]
    %v2094 = vld [vmem:[%s5 + $0xb0] sm:$0xf]
    %v2095 = vld [vmem:[%s5 + $0xb4] sm:$0xf]
    %v2096 = vld [vmem:[%s5 + $0xb8] sm:$0xf]
    %v2097 = vld [vmem:[%s5 + $0xbc] sm:$0xf]
    %v2098 = vld [vmem:[%s5 + $0xc0] sm:$0xf]
    %v2099 = vld [vmem:[%s5 + $0xc4] sm:$0xf]
    %v2100 = vld [vmem:[%s5 + $0xc8] sm:$0xf]
    %v2101 = vld [vmem:[%s5 + $0xcc] sm:$0xf]
    %v2102 = vld [vmem:[%s5 + $0xd0] sm:$0xf]
    %v2103 = vld [vmem:[%s5 + $0xd4] sm:$0xf]
    %v2104 = vld [vmem:[%s5 + $0xd8] sm:$0xf]
    %v2105 = vld [vmem:[%s5 + $0xdc] sm:$0xf]
    %v2106 = vld [vmem:[%s5 + $0xe0] sm:$0xf]
    %v2107 = vld [vmem:[%s5 + $0xe4] sm:$0xf]
    %v2108 = vld [vmem:[%s5 + $0xe8] sm:$0xf]
    %v2109 = vld [vmem:[%s5 + $0xec] sm:$0xf]
    %v2110 = vld [vmem:[%s5 + $0xf0] sm:$0xf]
    %v2111 = vld [vmem:[%s5 + $0xf4] sm:$0xf]
    %v2112 = vld [vmem:[%s5 + $0xf8] sm:$0xf]
    %v2113 = vld [vmem:[%s5 + $0xfc] sm:$0xf]
    %v2114 = vld [vmem:[%s6] sm:$0x1]
    %v2116 = vlaneseq
    %v2117 = vshrl.u32 %v2116, 7
    %v2118 = vsub.s32 0, %v2117
    %v2119 = vrot.slane %v2114, %v2118
    %v2185 = vunpack.c.l.b16 %v2050
    %v2186 = vunpack.c.l.b16 %v2051
    %v2187 = vunpack.c.l.b16 %v2052
    %v2188 = vunpack.c.l.b16 %v2053
    %v2189 = vunpack.c.l.b16 %v2054
    %v2190 = vunpack.c.l.b16 %v2055
    %v2191 = vunpack.c.l.b16 %v2056
    %v2192 = vunpack.c.l.b16 %v2057
    %v2193 = vunpack.c.l.b16 %v2058
    %v2194 = vunpack.c.l.b16 %v2059
    %v2195 = vunpack.c.l.b16 %v2060
    %v2196 = vunpack.c.l.b16 %v2061
    %v2197 = vunpack.c.l.b16 %v2062
    %v2198 = vunpack.c.l.b16 %v2063
    %v2199 = vunpack.c.l.b16 %v2064
    %v2200 = vunpack.c.l.b16 %v2065
    %v2201 = vunpack.c.l.b16 %v2066
    %v2202 = vunpack.c.l.b16 %v2067
    %v2203 = vunpack.c.l.b16 %v2068
    %v2204 = vunpack.c.l.b16 %v2069
    %v2205 = vunpack.c.l.b16 %v2070
    %v2206 = vunpack.c.l.b16 %v2071
    %v2207 = vunpack.c.l.b16 %v2072
    %v2208 = vunpack.c.l.b16 %v2073
    %v2209 = vunpack.c.l.b16 %v2074
    %v2210 = vunpack.c.l.b16 %v2075
    %v2211 = vunpack.c.l.b16 %v2076
    %v2212 = vunpack.c.l.b16 %v2077
    %v2213 = vunpack.c.l.b16 %v2078
    %v2214 = vunpack.c.l.b16 %v2079
    %v2215 = vunpack.c.l.b16 %v2080
    %v2216 = vunpack.c.l.b16 %v2081
    %v2217 = vunpack.c.l.b16 %v2082
    %v2218 = vunpack.c.l.b16 %v2083
    %v2219 = vunpack.c.l.b16 %v2084
    %v2220 = vunpack.c.l.b16 %v2085
    %v2221 = vunpack.c.l.b16 %v2086
    %v2222 = vunpack.c.l.b16 %v2087
    %v2223 = vunpack.c.l.b16 %v2088
    %v2224 = vunpack.c.l.b16 %v2089
    %v2225 = vunpack.c.l.b16 %v2090
    %v2226 = vunpack.c.l.b16 %v2091
    %v2227 = vunpack.c.l.b16 %v2092
    %v2228 = vunpack.c.l.b16 %v2093
    %v2229 = vunpack.c.l.b16 %v2094
    %v2230 = vunpack.c.l.b16 %v2095
    %v2231 = vunpack.c.l.b16 %v2096
    %v2232 = vunpack.c.l.b16 %v2097
    %v2233 = vunpack.c.l.b16 %v2098
    %v2234 = vunpack.c.l.b16 %v2099
    %v2235 = vunpack.c.l.b16 %v2100
    %v2236 = vunpack.c.l.b16 %v2101
    %v2237 = vunpack.c.l.b16 %v2102
    %v2238 = vunpack.c.l.b16 %v2103
    %v2239 = vunpack.c.l.b16 %v2104
    %v2240 = vunpack.c.l.b16 %v2105
    %v2241 = vunpack.c.l.b16 %v2106
    %v2242 = vunpack.c.l.b16 %v2107
    %v2243 = vunpack.c.l.b16 %v2108
    %v2244 = vunpack.c.l.b16 %v2109
    %v2245 = vunpack.c.l.b16 %v2110
    %v2246 = vunpack.c.l.b16 %v2111
    %v2247 = vunpack.c.l.b16 %v2112
    %v2248 = vunpack.c.l.b16 %v2113
    %v2249 = vpack.c.b16 %v2186, %v2185
    %v2250 = vpack.c.b16 %v2188, %v2187
    %v2251 = vpack.c.b16 %v2190, %v2189
    %v2252 = vpack.c.b16 %v2192, %v2191
    %v2253 = vpack.c.b16 %v2194, %v2193
    %v2254 = vpack.c.b16 %v2196, %v2195
    %v2255 = vpack.c.b16 %v2198, %v2197
    %v2256 = vpack.c.b16 %v2200, %v2199
    %v2257 = vpack.c.b16 %v2202, %v2201
    %v2258 = vpack.c.b16 %v2204, %v2203
    %v2259 = vpack.c.b16 %v2206, %v2205
    %v2260 = vpack.c.b16 %v2208, %v2207
    %v2261 = vpack.c.b16 %v2210, %v2209
    %v2262 = vpack.c.b16 %v2212, %v2211
    %v2263 = vpack.c.b16 %v2214, %v2213
    %v2264 = vpack.c.b16 %v2216, %v2215
    %v2265 = vpack.c.b16 %v2218, %v2217
    %v2266 = vpack.c.b16 %v2220, %v2219
    %v2267 = vpack.c.b16 %v2222, %v2221
    %v2268 = vpack.c.b16 %v2224, %v2223
    %v2269 = vpack.c.b16 %v2226, %v2225
    %v2270 = vpack.c.b16 %v2228, %v2227
    %v2271 = vpack.c.b16 %v2230, %v2229
    %v2272 = vpack.c.b16 %v2232, %v2231
    %v2273 = vpack.c.b16 %v2234, %v2233
    %v2274 = vpack.c.b16 %v2236, %v2235
    %v2275 = vpack.c.b16 %v2238, %v2237
    %v2276 = vpack.c.b16 %v2240, %v2239
    %v2277 = vpack.c.b16 %v2242, %v2241
    %v2278 = vpack.c.b16 %v2244, %v2243
    %v2279 = vpack.c.b16 %v2246, %v2245
    %v2280 = vpack.c.b16 %v2248, %v2247
    %2313 = vmatprep.subr.bf16.mxu0 0
    %2314 = vmatpush1.bf16.msra.mxu0 %v2249
    %2315 = vmatprep.subr.bf16.mxu0 0
    %2316 = vmatpush1.bf16.msra.mxu0 %v2250
    %2317 = vmatprep.subr.bf16.mxu0 0
    %2318 = vmatpush1.bf16.msra.mxu0 %v2251
    %2319 = vmatprep.subr.bf16.mxu0 0
    %2320 = vmatpush1.bf16.msra.mxu0 %v2252
    %2321 = vmatprep.subr.bf16.mxu0 0
    %2322 = vmatpush1.bf16.msra.mxu0 %v2253
    %2323 = vmatprep.subr.bf16.mxu0 0
    %2324 = vmatpush1.bf16.msra.mxu0 %v2254
    %2325 = vmatprep.subr.bf16.mxu0 0
    %2326 = vmatpush1.bf16.msra.mxu0 %v2255
    %2327 = vmatprep.subr.bf16.mxu0 0
    %2328 = vmatpush1.bf16.msra.mxu0 %v2256
    %2329 = vmatprep.subr.bf16.mxu0 0
    %2330 = vmatpush1.bf16.msra.mxu0 %v2257
    %2331 = vmatprep.subr.bf16.mxu0 0
    %2332 = vmatpush1.bf16.msra.mxu0 %v2258
    %2333 = vmatprep.subr.bf16.mxu0 0
    %2334 = vmatpush1.bf16.msra.mxu0 %v2259
    %2335 = vmatprep.subr.bf16.mxu0 0
    %2336 = vmatpush1.bf16.msra.mxu0 %v2260
    %2337 = vmatprep.subr.bf16.mxu0 0
    %2338 = vmatpush1.bf16.msra.mxu0 %v2261
    %2339 = vmatprep.subr.bf16.mxu0 0
    %2340 = vmatpush1.bf16.msra.mxu0 %v2262
    %2341 = vmatprep.subr.bf16.mxu0 0
    %2342 = vmatpush1.bf16.msra.mxu0 %v2263
    %2343 = vmatprep.subr.bf16.mxu0 0
    %2344 = vmatpush1.bf16.msra.mxu0 %v2264
    %2345 = vmatprep.mubr.bf16.mxu0 %v2047
    %2346 = vmatmul.mubr.bf16.gmra.mrb[0].mxu0 %v2046
    %v2347 = vpop.f32.mrb[0].mxu0
    %v2348 = vadd.f32 %v2119, %v2347
    %v2349 = vpop.f32.mrb[0].mxu0
    %v2350 = vpop.f32.mrb[0].mxu0
    %v2351 = vpop.f32.mrb[0].mxu0
    %2352 = vdwg.mxu0
    %2353 = vmatprep.subr.bf16.mxu0 0
    %2354 = vmatpush1.bf16.msra.mxu0 %v2265
    %2355 = vmatprep.subr.bf16.mxu0 0
    %2356 = vmatpush1.bf16.msra.mxu0 %v2266
    %2357 = vmatprep.subr.bf16.mxu0 0
    %2358 = vmatpush1.bf16.msra.mxu0 %v2267
    %2359 = vmatprep.subr.bf16.mxu0 0
    %2360 = vmatpush1.bf16.msra.mxu0 %v2268
    %2361 = vmatprep.subr.bf16.mxu0 0
    %2362 = vmatpush1.bf16.msra.mxu0 %v2269
    %2363 = vmatprep.subr.bf16.mxu0 0
    %2364 = vmatpush1.bf16.msra.mxu0 %v2270
    %2365 = vmatprep.subr.bf16.mxu0 0
    %2366 = vmatpush1.bf16.msra.mxu0 %v2271
    %2367 = vmatprep.subr.bf16.mxu0 0
    %2368 = vmatpush1.bf16.msra.mxu0 %v2272
    %2369 = vmatprep.subr.bf16.mxu0 0
    %2370 = vmatpush1.bf16.msra.mxu0 %v2273
    %2371 = vmatprep.subr.bf16.mxu0 0
    %2372 = vmatpush1.bf16.msra.mxu0 %v2274
    %2373 = vmatprep.subr.bf16.mxu0 0
    %2374 = vmatpush1.bf16.msra.mxu0 %v2275
    %2375 = vmatprep.subr.bf16.mxu0 0
    %2376 = vmatpush1.bf16.msra.mxu0 %v2276
    %2377 = vmatprep.subr.bf16.mxu0 0
    %2378 = vmatpush1.bf16.msra.mxu0 %v2277
    %2379 = vmatprep.subr.bf16.mxu0 0
    %2380 = vmatpush1.bf16.msra.mxu0 %v2278
    %2381 = vmatprep.subr.bf16.mxu0 0
    %2382 = vmatpush1.bf16.msra.mxu0 %v2279
    %2383 = vmatprep.subr.bf16.mxu0 0
    %2384 = vmatpush1.bf16.msra.mxu0 %v2280
    %2385 = vmatprep.mubr.bf16.mxu0 %v2049
    %2386 = vmatmul.mubr.bf16.gmra.mrb[0].mxu0 %v2048
    %v2387 = vpop.f32.mrb[0].mxu0
    %v2388 = vadd.f32 %v2348, %v2387
    %v2389 = vpop.f32.mrb[0].mxu0
    %v2390 = vpop.f32.mrb[0].mxu0
    %v2391 = vpop.f32.mrb[0].mxu0
    %2392 = vdwg.mxu0
    %2393 = vst [vmem:[#allocation2] sm:$0xff] %v2388
    // Predicated region
    $region30: #{hogcn_forward.5} parent=1 // pred_check
      _
    $region31: #{hogcn_forward.5} parent=1 // pred_check_branch
      %2395 = sbr.rel (0) target = $region33
    $region32: #{hogcn_forward.5} parent=1 // pred_region
      %s2397 = ssub.s32 128, 128
      %2398 = vsyncadd [#allocation3], %s2397
      %s2400 = sshll.u32 [#allocation2], 4
      %s2401 = int_to_ptr.vmem [resolvable:$true] %s2400
      %2403 = dma.vmem_to_hbm [thread:$0]  %s2401, 128, %s7, [#allocation3]
    $region33: #{hogcn_forward.5} parent=1 // pred_fallthru
      _
    // Predicated region
    $region34: #{hogcn_forward.5} parent=1 // pred_check
      _
    $region35: #{hogcn_forward.5} parent=1 // pred_check_branch
      %2405 = sbr.rel (0) target = $region37
    $region36: #{hogcn_forward.5} parent=1 // pred_region
      %2406 = dma.done [#allocation3], 128
    $region37: #{hogcn_forward.5} parent=1 // pred_fallthru
      _
    %2407 = vsyncpa [#allocation3], 1

// kernel: hogcn_forward.4
$region0: #{hogcn_forward.4}
  #allocation0 [shape = 'u32[]', space=smem, size = 0x4, offset = 0x4, fixed_abs, tag = 'smem constant byte address 0x4 - core index']
  #allocation1 [shape = 'u32[144,128]{1,0:T(1,128)}', space=vmem, size = 0x12000, scoped, tag = 'internal scratch']
  #allocation2 [shape = 'f32[8,1024]{1,0:T(8,128)}', space=vmem, size = 0x8000, scoped, tag = 'scratch operand']
  %s0 = inlined_call_operand.vmem [shape: bf16[8,8], index: 0, kind: input, shape index: {}]
  %s1 = inlined_call_operand.vmem [shape: bf16[8,1024], index: 1, kind: input, shape index: {}, may-alias: {1,2}]
  %s2 = inlined_call_operand.vmem [shape: bf16[8,1024], index: 2, kind: input, shape index: {}, may-alias: {1,2}]
  %s3 = inlined_call_operand.vmem [shape: bf16[1024,1024], index: 3, kind: input, shape index: {}]
  %s4 = inlined_call_operand.vmem [shape: bf16[1024,1024], index: 4, kind: input, shape index: {}]
  %s5 = inlined_call_operand.vmem [shape: f32[1,1024], index: 5, kind: input, shape index: {}]
  %s6 = inlined_call_operand.vmem [shape: f32[1,1024], index: 6, kind: input, shape index: {}]
  %s7 = inlined_call_operand.vmem [shape: f32[1,1024], index: 7, kind: input, shape index: {}]
  %s8 = inlined_call_operand.vmem [shape: bf16[8,1024], index: 8, kind: output, shape index: {0}]
  %s9 = inlined_call_operand.vmem [shape: f32[2,1024], index: 9, kind: output, shape index: {1}]
  %10 = xla_tuple %s8, %s9
  %s11 = sld [smem:[#allocation0]]
  $region58: #{hogcn_forward.4} parent=0
    _
  %s13 = ssub.s32 1, %s11
  %s14 = scalar_select 0, %s13, %s11
  // Predicated region
  $region2: #{hogcn_forward.4} parent=0 // pred_check
    _
  $region3: #{hogcn_forward.4} parent=0 // pred_check_branch
    %16 = sbr.rel (0) target = $region5
  $region4: #{hogcn_forward.4} parent=0 // pred_region
    _
  $region5: #{hogcn_forward.4} parent=0 // pred_fallthru
    _
  // Predicated region
  $region6: #{hogcn_forward.4} parent=0 // pred_check
    _
  $region7: #{hogcn_forward.4} parent=0 // pred_check_branch
    %18 = sbr.rel (0) target = $region9
  $region8: #{hogcn_forward.4} parent=0 // pred_region
    _
  $region9: #{hogcn_forward.4} parent=0 // pred_fallthru
    _
  // Predicated region
  $region10: #{hogcn_forward.4} parent=0 // pred_check
    _
  $region11: #{hogcn_forward.4} parent=0 // pred_check_branch
    %20 = sbr.rel (0) target = $region13
  $region12: #{hogcn_forward.4} parent=0 // pred_region
    _
  $region13: #{hogcn_forward.4} parent=0 // pred_fallthru
    _
  // Predicated region
  $region14: #{hogcn_forward.4} parent=0 // pred_check
    _
  $region15: #{hogcn_forward.4} parent=0 // pred_check_branch
    %22 = sbr.rel (0) target = $region17
  $region16: #{hogcn_forward.4} parent=0 // pred_region
    _
  $region17: #{hogcn_forward.4} parent=0 // pred_fallthru
    _
  // Predicated region
  $region18: #{hogcn_forward.4} parent=0 // pred_check
    _
  $region19: #{hogcn_forward.4} parent=0 // pred_check_branch
    %24 = sbr.rel (0) target = $region21
  $region20: #{hogcn_forward.4} parent=0 // pred_region
    _
  $region21: #{hogcn_forward.4} parent=0 // pred_fallthru
    _
  // Predicated region
  $region22: #{hogcn_forward.4} parent=0 // pred_check
    _
  $region23: #{hogcn_forward.4} parent=0 // pred_check_branch
    %26 = sbr.rel (0) target = $region25
  $region24: #{hogcn_forward.4} parent=0 // pred_region
    _
  $region25: #{hogcn_forward.4} parent=0 // pred_fallthru
    _
  // Predicated region
  $region26: #{hogcn_forward.4} parent=0 // pred_check
    _
  $region27: #{hogcn_forward.4} parent=0 // pred_check_branch
    %28 = sbr.rel (0) target = $region29
  $region28: #{hogcn_forward.4} parent=0 // pred_region
    _
  $region29: #{hogcn_forward.4} parent=0 // pred_fallthru
    _
  // Predicated region
  $region30: #{hogcn_forward.4} parent=0 // pred_check
    _
  $region31: #{hogcn_forward.4} parent=0 // pred_check_branch
    %30 = sbr.rel (0) target = $region33
  $region32: #{hogcn_forward.4} parent=0 // pred_region
    _
  $region33: #{hogcn_forward.4} parent=0 // pred_fallthru
    _
  %s32 = smul.u32 0, 8
  %v33 = vlaneseq
  %v34 = vshrl.u32 %v33, 7
  %v35 = vstv %s32
  %v36 = vadd.s32 %v35, %v34
  %vm37 = vcmp.lt.s32.totalorder %v36, 8
  %p38 = scmp.eq.s32.totalorder 0, 0
  // Predicated region
  $region34: #{hogcn_forward.4} parent=0 // pred_check
    %p39 = pneg %p38
  $region35: #{hogcn_forward.4} parent=0 // pred_check_branch
    %41 = sbr.rel (%p39) target = $region37
  $region36: #{hogcn_forward.4} parent=0 // pred_region
    %42 = vst [vmem:[#allocation2] sm:$0xff] 0.0
    %43 = vst [vmem:[#allocation2 + $0x8] sm:$0xff] 0.0
    %44 = vst [vmem:[#allocation2 + $0x10] sm:$0xff] 0.0
    %45 = vst [vmem:[#allocation2 + $0x18] sm:$0xff] 0.0
    %46 = vst [vmem:[#allocation2 + $0x20] sm:$0xff] 0.0
    %47 = vst [vmem:[#allocation2 + $0x28] sm:$0xff] 0.0
    %48 = vst [vmem:[#allocation2 + $0x30] sm:$0xff] 0.0
    %49 = vst [vmem:[#allocation2 + $0x38] sm:$0xff] 0.0
  $region37: #{hogcn_forward.4} parent=0 // pred_fallthru
    _
  %v50 = vld [vmem:[%s1] sm:$0xff]
  %v51 = vld [vmem:[%s1 + $0x8] sm:$0xff]
  %v52 = vld [vmem:[%s1 + $0x10] sm:$0xff]
  %v53 = vld [vmem:[%s1 + $0x18] sm:$0xff]
  %v54 = vunpack.c.l.bf16 %v50
  %v55 = vunpack.c.h.bf16 %v50
  %v56 = vunpack.c.l.bf16 %v51
  %v57 = vunpack.c.h.bf16 %v51
  %v58 = vunpack.c.l.bf16 %v52
  %v59 = vunpack.c.h.bf16 %v52
  %v60 = vunpack.c.l.bf16 %v53
  %v61 = vunpack.c.h.bf16 %v53
  %v62 = vld [vmem:[%s6] sm:$0xff]
  %v64 = vlaneseq
  %v65 = vshrl.u32 %v64, 7
  %v66 = vsub.s32 0, %v65
  %v67 = vrot.slane %v62, %v66
  %v68 = vlaneseq
  %v69 = vshrl.u32 %v68, 7
  %v70 = vsub.s32 1, %v69
  %v71 = vrot.slane %v62, %v70
  %v72 = vlaneseq
  %v73 = vshrl.u32 %v72, 7
  %v74 = vsub.s32 2, %v73
  %v75 = vrot.slane %v62, %v74
  %v76 = vlaneseq
  %v77 = vshrl.u32 %v76, 7
  %v78 = vsub.s32 3, %v77
  %v79 = vrot.slane %v62, %v78
  %v80 = vlaneseq
  %v81 = vshrl.u32 %v80, 7
  %v82 = vsub.s32 4, %v81
  %v83 = vrot.slane %v62, %v82
  %v84 = vlaneseq
  %v85 = vshrl.u32 %v84, 7
  %v86 = vsub.s32 5, %v85
  %v87 = vrot.slane %v62, %v86
  %v88 = vlaneseq
  %v89 = vshrl.u32 %v88, 7
  %v90 = vsub.s32 6, %v89
  %v91 = vrot.slane %v62, %v90
  %v92 = vlaneseq
  %v93 = vshrl.u32 %v92, 7
  %v94 = vsub.s32 7, %v93
  %v95 = vrot.slane %v62, %v94
  %v104 = vmul.f32 %v54, %v67
  %v105 = vmul.f32 %v55, %v71
  %v106 = vmul.f32 %v56, %v75
  %v107 = vmul.f32 %v57, %v79
  %v108 = vmul.f32 %v58, %v83
  %v109 = vmul.f32 %v59, %v87
  %v110 = vmul.f32 %v60, %v91
  %v111 = vmul.f32 %v61, %v95
  %v112 = vld [vmem:[%s7] sm:$0xff]
  %v114 = vlaneseq
  %v115 = vshrl.u32 %v114, 7
  %v116 = vsub.s32 0, %v115
  %v117 = vrot.slane %v112, %v116
  %v118 = vlaneseq
  %v119 = vshrl.u32 %v118, 7
  %v120 = vsub.s32 1, %v119
  %v121 = vrot.slane %v112, %v120
  %v122 = vlaneseq
  %v123 = vshrl.u32 %v122, 7
  %v124 = vsub.s32 2, %v123
  %v125 = vrot.slane %v112, %v124
  %v126 = vlaneseq
  %v127 = vshrl.u32 %v126, 7
  %v128 = vsub.s32 3, %v127
  %v129 = vrot.slane %v112, %v128
  %v130 = vlaneseq
  %v131 = vshrl.u32 %v130, 7
  %v132 = vsub.s32 4, %v131
  %v133 = vrot.slane %v112, %v132
  %v134 = vlaneseq
  %v135 = vshrl.u32 %v134, 7
  %v136 = vsub.s32 5, %v135
  %v137 = vrot.slane %v112, %v136
  %v138 = vlaneseq
  %v139 = vshrl.u32 %v138, 7
  %v140 = vsub.s32 6, %v139
  %v141 = vrot.slane %v112, %v140
  %v142 = vlaneseq
  %v143 = vshrl.u32 %v142, 7
  %v144 = vsub.s32 7, %v143
  %v145 = vrot.slane %v112, %v144
  %v154 = vadd.f32 %v104, %v117
  %v155 = vadd.f32 %v105, %v121
  %v156 = vadd.f32 %v106, %v125
  %v157 = vadd.f32 %v107, %v129
  %v158 = vadd.f32 %v108, %v133
  %v159 = vadd.f32 %v109, %v137
  %v160 = vadd.f32 %v110, %v141
  %v161 = vadd.f32 %v111, %v145
  %v162 = vmax.f32 %v154, 0.0
  %v163 = vmax.f32 %v155, 0.0
  %v164 = vmax.f32 %v156, 0.0
  %v165 = vmax.f32 %v157, 0.0
  %v166 = vmax.f32 %v158, 0.0
  %v167 = vmax.f32 %v159, 0.0
  %v168 = vmax.f32 %v160, 0.0
  %v169 = vmax.f32 %v161, 0.0
  %v170 = vpack.c.bf16 %v162, %v162
  %v171 = vpack.c.bf16 %v163, %v163
  %v172 = vpack.c.bf16 %v164, %v164
  %v173 = vpack.c.bf16 %v165, %v165
  %v174 = vpack.c.bf16 %v166, %v166
  %v175 = vpack.c.bf16 %v167, %v167
  %v176 = vpack.c.bf16 %v168, %v168
  %v177 = vpack.c.bf16 %v169, %v169
  %v178 = vld [vmem:[#allocation2] sm:$0xff]
  %v179 = vld [vmem:[#allocation2 + $0x8] sm:$0xff]
  %v180 = vld [vmem:[#allocation2 + $0x10] sm:$0xff]
  %v181 = vld [vmem:[#allocation2 + $0x18] sm:$0xff]
  %v182 = vld [vmem:[#allocation2 + $0x20] sm:$0xff]
  %v183 = vld [vmem:[#allocation2 + $0x28] sm:$0xff]
  %v184 = vld [vmem:[#allocation2 + $0x30] sm:$0xff]
  %v185 = vld [vmem:[#allocation2 + $0x38] sm:$0xff]
  %v186 = vld [vmem:[%s0] sm:$0xf]
  %vm187 = vcmask 64512
  %v189 = vsel %vm187, %v186, 0
  %vm191 = vcmask 1043456
  %v193 = vsel %vm191, %v170, 0
  %v196 = vsel %vm191, %v171, 0
  %v199 = vsel %vm191, %v172, 0
  %v202 = vsel %vm191, %v173, 0
  %v205 = vsel %vm191, %v174, 0
  %v208 = vsel %vm191, %v175, 0
  %v211 = vsel %vm191, %v176, 0
  %v214 = vsel %vm191, %v177, 0
  %216 = vmatprep.subr.bf16.mxu0 %v196
  %217 = vmatpush1.bf16.msra.mxu0 %v193
  %218 = vmatprep.subr.bf16.mxu0 0
  %219 = vmatpush1.bf16.msra.mxu0 0
  %220 = vmatprep.subr.bf16.mxu0 0
  %221 = vmatpush1.bf16.msra.mxu0 0
  %222 = vmatprep.subr.bf16.mxu0 0
  %223 = vmatpush1.bf16.msra.mxu0 0
  %224 = vmatprep.subr.bf16.mxu0 0
  %225 = vmatpush1.bf16.msra.mxu0 0
  %226 = vmatprep.subr.bf16.mxu0 0
  %227 = vmatpush1.bf16.msra.mxu0 0
  %228 = vmatprep.subr.bf16.mxu0 0
  %229 = vmatpush1.bf16.msra.mxu0 0
  %230 = vmatprep.subr.bf16.mxu0 0
  %231 = vmatpush1.bf16.msra.mxu0 0
  %232 = vmatprep.subr.bf16.mxu0 0
  %233 = vmatpush1.bf16.msra.mxu0 0
  %234 = vmatprep.subr.bf16.mxu0 0
  %235 = vmatpush1.bf16.msra.mxu0 0
  %236 = vmatprep.subr.bf16.mxu0 0
  %237 = vmatpush1.bf16.msra.mxu0 0
  %238 = vmatprep.subr.bf16.mxu0 0
  %239 = vmatpush1.bf16.msra.mxu0 0
  %240 = vmatprep.subr.bf16.mxu0 0
  %241 = vmatpush1.bf16.msra.mxu0 0
  %242 = vmatprep.subr.bf16.mxu0 0
  %243 = vmatpush1.bf16.msra.mxu0 0
  %244 = vmatprep.subr.bf16.mxu0 0
  %245 = vmatpush1.bf16.msra.mxu0 0
  %246 = vmatprep.subr.bf16.mxu0 0
  %247 = vmatpush1.bf16.msra.mxu0 0
  %248 = vmatprep.mubr.bf16.mxu0 0
  %249 = vmatmul.mubr.bf16.gmra.mrb[0].mxu0 %v189
  %v250 = vpop.f32.mrb[0].mxu0
  %v251 = vadd.f32 0.0, %v250
  %v252 = vpop.f32.mrb[0].mxu0
  %v253 = vadd.f32 0.0, %v252
  %v254 = vpop.f32.mrb[0].mxu0
  %v255 = vpop.f32.mrb[0].mxu0
  %256 = vdwg.mxu0
  %257 = vmatprep.subr.bf16.mxu0 %v202
  %258 = vmatpush1.bf16.msra.mxu0 %v199
  %259 = vmatprep.subr.bf16.mxu0 0
  %260 = vmatpush1.bf16.msra.mxu0 0
  %261 = vmatprep.subr.bf16.mxu0 0
  %262 = vmatpush1.bf16.msra.mxu0 0
  %263 = vmatprep.subr.bf16.mxu0 0
  %264 = vmatpush1.bf16.msra.mxu0 0
  %265 = vmatprep.subr.bf16.mxu0 0
  %266 = vmatpush1.bf16.msra.mxu0 0
  %267 = vmatprep.subr.bf16.mxu0 0
  %268 = vmatpush1.bf16.msra.mxu0 0
  %269 = vmatprep.subr.bf16.mxu0 0
  %270 = vmatpush1.bf16.msra.mxu0 0
  %271 = vmatprep.subr.bf16.mxu0 0
  %272 = vmatpush1.bf16.msra.mxu0 0
  %273 = vmatprep.subr.bf16.mxu0 0
  %274 = vmatpush1.bf16.msra.mxu0 0
  %275 = vmatprep.subr.bf16.mxu0 0
  %276 = vmatpush1.bf16.msra.mxu0 0
  %277 = vmatprep.subr.bf16.mxu0 0
  %278 = vmatpush1.bf16.msra.mxu0 0
  %279 = vmatprep.subr.bf16.mxu0 0
  %280 = vmatpush1.bf16.msra.mxu0 0
  %281 = vmatprep.subr.bf16.mxu0 0
  %282 = vmatpush1.bf16.msra.mxu0 0
  %283 = vmatprep.subr.bf16.mxu0 0
  %284 = vmatpush1.bf16.msra.mxu0 0
  %285 = vmatprep.subr.bf16.mxu0 0
  %286 = vmatpush1.bf16.msra.mxu0 0
  %287 = vmatprep.subr.bf16.mxu0 0
  %288 = vmatpush1.bf16.msra.mxu0 0
  %289 = vmatprep.mubr.bf16.mxu0 0
  %290 = vmatmul.mubr.bf16.gmra.mrb[0].mxu0 %v189
  %v291 = vpop.f32.mrb[0].mxu0
  %v292 = vadd.f32 0.0, %v291
  %v293 = vpop.f32.mrb[0].mxu0
  %v294 = vadd.f32 0.0, %v293
  %v295 = vpop.f32.mrb[0].mxu0
  %v296 = vpop.f32.mrb[0].mxu0
  %297 = vdwg.mxu0
  %298 = vmatprep.subr.bf16.mxu0 %v208
  %299 = vmatpush1.bf16.msra.mxu0 %v205
  %300 = vmatprep.subr.bf16.mxu0 0
  %301 = vmatpush1.bf16.msra.mxu0 0
  %302 = vmatprep.subr.bf16.mxu0 0
  %303 = vmatpush1.bf16.msra.mxu0 0
  %304 = vmatprep.subr.bf16.mxu0 0
  %305 = vmatpush1.bf16.msra.mxu0 0
  %306 = vmatprep.subr.bf16.mxu0 0
  %307 = vmatpush1.bf16.msra.mxu0 0
  %308 = vmatprep.subr.bf16.mxu0 0
  %309 = vmatpush1.bf16.msra.mxu0 0
  %310 = vmatprep.subr.bf16.mxu0 0
  %311 = vmatpush1.bf16.msra.mxu0 0
  %312 = vmatprep.subr.bf16.mxu0 0
  %313 = vmatpush1.bf16.msra.mxu0 0
  %314 = vmatprep.subr.bf16.mxu0 0
  %315 = vmatpush1.bf16.msra.mxu0 0
  %316 = vmatprep.subr.bf16.mxu0 0
  %317 = vmatpush1.bf16.msra.mxu0 0
  %318 = vmatprep.subr.bf16.mxu0 0
  %319 = vmatpush1.bf16.msra.mxu0 0
  %320 = vmatprep.subr.bf16.mxu0 0
  %321 = vmatpush1.bf16.msra.mxu0 0
  %322 = vmatprep.subr.bf16.mxu0 0
  %323 = vmatpush1.bf16.msra.mxu0 0
  %324 = vmatprep.subr.bf16.mxu0 0
  %325 = vmatpush1.bf16.msra.mxu0 0
  %326 = vmatprep.subr.bf16.mxu0 0
  %327 = vmatpush1.bf16.msra.mxu0 0
  %328 = vmatprep.subr.bf16.mxu0 0
  %329 = vmatpush1.bf16.msra.mxu0 0
  %330 = vmatprep.mubr.bf16.mxu0 0
  %331 = vmatmul.mubr.bf16.gmra.mrb[0].mxu0 %v189
  %v332 = vpop.f32.mrb[0].mxu0
  %v333 = vadd.f32 0.0, %v332
  %v334 = vpop.f32.mrb[0].mxu0
  %v335 = vadd.f32 0.0, %v334
  %v336 = vpop.f32.mrb[0].mxu0
  %v337 = vpop.f32.mrb[0].mxu0
  %338 = vdwg.mxu0
  %339 = vmatprep.subr.bf16.mxu0 %v214
  %340 = vmatpush1.bf16.msra.mxu0 %v211
  %341 = vmatprep.subr.bf16.mxu0 0
  %342 = vmatpush1.bf16.msra.mxu0 0
  %343 = vmatprep.subr.bf16.mxu0 0
  %344 = vmatpush1.bf16.msra.mxu0 0
  %345 = vmatprep.subr.bf16.mxu0 0
  %346 = vmatpush1.bf16.msra.mxu0 0
  %347 = vmatprep.subr.bf16.mxu0 0
  %348 = vmatpush1.bf16.msra.mxu0 0
  %349 = vmatprep.subr.bf16.mxu0 0
  %350 = vmatpush1.bf16.msra.mxu0 0
  %351 = vmatprep.subr.bf16.mxu0 0
  %352 = vmatpush1.bf16.msra.mxu0 0
  %353 = vmatprep.subr.bf16.mxu0 0
  %354 = vmatpush1.bf16.msra.mxu0 0
  %355 = vmatprep.subr.bf16.mxu0 0
  %356 = vmatpush1.bf16.msra.mxu0 0
  %357 = vmatprep.subr.bf16.mxu0 0
  %358 = vmatpush1.bf16.msra.mxu0 0
  %359 = vmatprep.subr.bf16.mxu0 0
  %360 = vmatpush1.bf16.msra.mxu0 0
  %361 = vmatprep.subr.bf16.mxu0 0
  %362 = vmatpush1.bf16.msra.mxu0 0
  %363 = vmatprep.subr.bf16.mxu0 0
  %364 = vmatpush1.bf16.msra.mxu0 0
  %365 = vmatprep.subr.bf16.mxu0 0
  %366 = vmatpush1.bf16.msra.mxu0 0
  %367 = vmatprep.subr.bf16.mxu0 0
  %368 = vmatpush1.bf16.msra.mxu0 0
  %369 = vmatprep.subr.bf16.mxu0 0
  %370 = vmatpush1.bf16.msra.mxu0 0
  %371 = vmatprep.mubr.bf16.mxu0 0
  %372 = vmatmul.mubr.bf16.gmra.mrb[0].mxu0 %v189
  %v373 = vpop.f32.mrb[0].mxu0
  %v374 = vadd.f32 0.0, %v373
  %v375 = vpop.f32.mrb[0].mxu0
  %v376 = vadd.f32 0.0, %v375
  %v377 = vpop.f32.mrb[0].mxu0
  %v378 = vpop.f32.mrb[0].mxu0
  %379 = vdwg.mxu0
  %v380 = vadd.f32 %v178, %v251
  %v381 = vadd.f32 %v179, %v253
  %v382 = vadd.f32 %v180, %v292
  %v383 = vadd.f32 %v181, %v294
  %v384 = vadd.f32 %v182, %v333
  %v385 = vadd.f32 %v183, %v335
  %v386 = vadd.f32 %v184, %v374
  %v387 = vadd.f32 %v185, %v376
  %388 = vst [vmem:[#allocation2] sm:$0xff] %v380
  %389 = vst [vmem:[#allocation2 + $0x8] sm:$0xff] %v381
  %390 = vst [vmem:[#allocation2 + $0x10] sm:$0xff] %v382
  %391 = vst [vmem:[#allocation2 + $0x18] sm:$0xff] %v383
  %392 = vst [vmem:[#allocation2 + $0x20] sm:$0xff] %v384
  %393 = vst [vmem:[#allocation2 + $0x28] sm:$0xff] %v385
  %394 = vst [vmem:[#allocation2 + $0x30] sm:$0xff] %v386
  %395 = vst [vmem:[#allocation2 + $0x38] sm:$0xff] %v387
  // Predicated region
  $region38: #{hogcn_forward.4} parent=0 // pred_check
    %p396 = pneg %p38
  $region39: #{hogcn_forward.4} parent=0 // pred_check_branch
    %398 = sbr.rel (%p396) target = $region41
  $region40: #{hogcn_forward.4} parent=0 // pred_region
    %v399 = vld [vmem:[%s2] sm:$0xff]
    %v400 = vld [vmem:[%s2 + $0x8] sm:$0xff]
    %v401 = vld [vmem:[%s2 + $0x10] sm:$0xff]
    %v402 = vld [vmem:[%s2 + $0x18] sm:$0xff]
    %v403 = vunpack.c.l.bf16 %v399
    %v404 = vunpack.c.h.bf16 %v399
    %v405 = vunpack.c.l.bf16 %v400
    %v406 = vunpack.c.h.bf16 %v400
    %v407 = vunpack.c.l.bf16 %v401
    %v408 = vunpack.c.h.bf16 %v401
    %v409 = vunpack.c.l.bf16 %v402
    %v410 = vunpack.c.h.bf16 %v402
    %v411 = vld [vmem:[%s6] sm:$0xff]
    %v413 = vlaneseq
    %v414 = vshrl.u32 %v413, 7
    %v415 = vsub.s32 0, %v414
    %v416 = vrot.slane %v411, %v415
    %v417 = vlaneseq
    %v418 = vshrl.u32 %v417, 7
    %v419 = vsub.s32 1, %v418
    %v420 = vrot.slane %v411, %v419
    %v421 = vlaneseq
    %v422 = vshrl.u32 %v421, 7
    %v423 = vsub.s32 2, %v422
    %v424 = vrot.slane %v411, %v423
    %v425 = vlaneseq
    %v426 = vshrl.u32 %v425, 7
    %v427 = vsub.s32 3, %v426
    %v428 = vrot.slane %v411, %v427
    %v429 = vlaneseq
    %v430 = vshrl.u32 %v429, 7
    %v431 = vsub.s32 4, %v430
    %v432 = vrot.slane %v411, %v431
    %v433 = vlaneseq
    %v434 = vshrl.u32 %v433, 7
    %v435 = vsub.s32 5, %v434
    %v436 = vrot.slane %v411, %v435
    %v437 = vlaneseq
    %v438 = vshrl.u32 %v437, 7
    %v439 = vsub.s32 6, %v438
    %v440 = vrot.slane %v411, %v439
    %v441 = vlaneseq
    %v442 = vshrl.u32 %v441, 7
    %v443 = vsub.s32 7, %v442
    %v444 = vrot.slane %v411, %v443
    %v453 = vmul.f32 %v403, %v416
    %v454 = vmul.f32 %v404, %v420
    %v455 = vmul.f32 %v405, %v424
    %v456 = vmul.f32 %v406, %v428
    %v457 = vmul.f32 %v407, %v432
    %v458 = vmul.f32 %v408, %v436
    %v459 = vmul.f32 %v409, %v440
    %v460 = vmul.f32 %v410, %v444
    %v461 = vld [vmem:[%s7] sm:$0xff]
    %v463 = vlaneseq
    %v464 = vshrl.u32 %v463, 7
    %v465 = vsub.s32 0, %v464
    %v466 = vrot.slane %v461, %v465
    %v467 = vlaneseq
    %v468 = vshrl.u32 %v467, 7
    %v469 = vsub.s32 1, %v468
    %v470 = vrot.slane %v461, %v469
    %v471 = vlaneseq
    %v472 = vshrl.u32 %v471, 7
    %v473 = vsub.s32 2, %v472
    %v474 = vrot.slane %v461, %v473
    %v475 = vlaneseq
    %v476 = vshrl.u32 %v475, 7
    %v477 = vsub.s32 3, %v476
    %v478 = vrot.slane %v461, %v477
    %v479 = vlaneseq
    %v480 = vshrl.u32 %v479, 7
    %v481 = vsub.s32 4, %v480
    %v482 = vrot.slane %v461, %v481
    %v483 = vlaneseq
    %v484 = vshrl.u32 %v483, 7
    %v485 = vsub.s32 5, %v484
    %v486 = vrot.slane %v461, %v485
    %v487 = vlaneseq
    %v488 = vshrl.u32 %v487, 7
    %v489 = vsub.s32 6, %v488
    %v490 = vrot.slane %v461, %v489
    %v491 = vlaneseq
    %v492 = vshrl.u32 %v491, 7
    %v493 = vsub.s32 7, %v492
    %v494 = vrot.slane %v461, %v493
    %v503 = vadd.f32 %v453, %v466
    %v504 = vadd.f32 %v454, %v470
    %v505 = vadd.f32 %v455, %v474
    %v506 = vadd.f32 %v456, %v478
    %v507 = vadd.f32 %v457, %v482
    %v508 = vadd.f32 %v458, %v486
    %v509 = vadd.f32 %v459, %v490
    %v510 = vadd.f32 %v460, %v494
    %v511 = vmax.f32 %v503, 0.0
    %v512 = vmax.f32 %v504, 0.0
    %v513 = vmax.f32 %v505, 0.0
    %v514 = vmax.f32 %v506, 0.0
    %v515 = vmax.f32 %v507, 0.0
    %v516 = vmax.f32 %v508, 0.0
    %v517 = vmax.f32 %v509, 0.0
    %v518 = vmax.f32 %v510, 0.0
    %v519 = vpack.c.bf16 %v511, %v511
    %v520 = vpack.c.bf16 %v512, %v512
    %v521 = vpack.c.bf16 %v513, %v513
    %v522 = vpack.c.bf16 %v514, %v514
    %v523 = vpack.c.bf16 %v515, %v515
    %v524 = vpack.c.bf16 %v516, %v516
    %v525 = vpack.c.bf16 %v517, %v517
    %v526 = vpack.c.bf16 %v518, %v518
    %v527 = vld [vmem:[#allocation2] sm:$0xff]
    %v528 = vld [vmem:[#allocation2 + $0x8] sm:$0xff]
    %v529 = vld [vmem:[#allocation2 + $0x10] sm:$0xff]
    %v530 = vld [vmem:[#allocation2 + $0x18] sm:$0xff]
    %v531 = vld [vmem:[#allocation2 + $0x20] sm:$0xff]
    %v532 = vld [vmem:[#allocation2 + $0x28] sm:$0xff]
    %v533 = vld [vmem:[#allocation2 + $0x30] sm:$0xff]
    %v534 = vld [vmem:[#allocation2 + $0x38] sm:$0xff]
    %v535 = vpack.c.bf16 %v527, %v527
    %v536 = vpack.c.bf16 %v528, %v528
    %v537 = vpack.c.bf16 %v529, %v529
    %v538 = vpack.c.bf16 %v530, %v530
    %v539 = vpack.c.bf16 %v531, %v531
    %v540 = vpack.c.bf16 %v532, %v532
    %v541 = vpack.c.bf16 %v533, %v533
    %v542 = vpack.c.bf16 %v534, %v534
    %v543 = vld [vmem:[%s3] sm:$0xff]
    %v544 = vld [vmem:[%s3 + $0x8] sm:$0xff]
    %v545 = vld [vmem:[%s3 + $0x10] sm:$0xff]
    %v546 = vld [vmem:[%s3 + $0x18] sm:$0xff]
    %v547 = vld [vmem:[%s3 + $0x20] sm:$0xff]
    %v548 = vld [vmem:[%s3 + $0x28] sm:$0xff]
    %v549 = vld [vmem:[%s3 + $0x30] sm:$0xff]
    %v550 = vld [vmem:[%s3 + $0x38] sm:$0xff]
    %v551 = vld [vmem:[%s3 + $0x40] sm:$0xff]
    %v552 = vld [vmem:[%s3 + $0x48] sm:$0xff]
    %v553 = vld [vmem:[%s3 + $0x50] sm:$0xff]
    %v554 = vld [vmem:[%s3 + $0x58] sm:$0xff]
    %v555 = vld [vmem:[%s3 + $0x60] sm:$0xff]
    %v556 = vld [vmem:[%s3 + $0x68] sm:$0xff]
    %v557 = vld [vmem:[%s3 + $0x70] sm:$0xff]
    %v558 = vld [vmem:[%s3 + $0x78] sm:$0xff]
    %v559 = vld [vmem:[%s3 + $0x80] sm:$0xff]
    %v560 = vld [vmem:[%s3 + $0x88] sm:$0xff]
    %v561 = vld [vmem:[%s3 + $0x90] sm:$0xff]
    %v562 = vld [vmem:[%s3 + $0x98] sm:$0xff]
    %v563 = vld [vmem:[%s3 + $0xa0] sm:$0xff]
    %v564 = vld [vmem:[%s3 + $0xa8] sm:$0xff]
    %v565 = vld [vmem:[%s3 + $0xb0] sm:$0xff]
    %v566 = vld [vmem:[%s3 + $0xb8] sm:$0xff]
    %v567 = vld [vmem:[%s3 + $0xc0] sm:$0xff]
    %v568 = vld [vmem:[%s3 + $0xc8] sm:$0xff]
    %v569 = vld [vmem:[%s3 + $0xd0] sm:$0xff]
    %v570 = vld [vmem:[%s3 + $0xd8] sm:$0xff]
    %v571 = vld [vmem:[%s3 + $0xe0] sm:$0xff]
    %v572 = vld [vmem:[%s3 + $0xe8] sm:$0xff]
    %v573 = vld [vmem:[%s3 + $0xf0] sm:$0xff]
    %v574 = vld [vmem:[%s3 + $0xf8] sm:$0xff]
    %v575 = vld [vmem:[%s3 + $0x100] sm:$0xff]
    %v576 = vld [vmem:[%s3 + $0x108] sm:$0xff]
    %v577 = vld [vmem:[%s3 + $0x110] sm:$0xff]
    %v578 = vld [vmem:[%s3 + $0x118] sm:$0xff]
    %v579 = vld [vmem:[%s3 + $0x120] sm:$0xff]
    %v580 = vld [vmem:[%s3 + $0x128] sm:$0xff]
    %v581 = vld [vmem:[%s3 + $0x130] sm:$0xff]
    %v582 = vld [vmem:[%s3 + $0x138] sm:$0xff]
    %v583 = vld [vmem:[%s3 + $0x140] sm:$0xff]
    %v584 = vld [vmem:[%s3 + $0x148] sm:$0xff]
    %v585 = vld [vmem:[%s3 + $0x150] sm:$0xff]
    %v586 = vld [vmem:[%s3 + $0x158] sm:$0xff]
    %v587 = vld [vmem:[%s3 + $0x160] sm:$0xff]
    %v588 = vld [vmem:[%s3 + $0x168] sm:$0xff]
    %v589 = vld [vmem:[%s3 + $0x170] sm:$0xff]
    %v590 = vld [vmem:[%s3 + $0x178] sm:$0xff]
    %v591 = vld [vmem:[%s3 + $0x180] sm:$0xff]
    %v592 = vld [vmem:[%s3 + $0x188] sm:$0xff]
    %v593 = vld [vmem:[%s3 + $0x190] sm:$0xff]
    %v594 = vld [vmem:[%s3 + $0x198] sm:$0xff]
    %v595 = vld [vmem:[%s3 + $0x1a0] sm:$0xff]
    %v596 = vld [vmem:[%s3 + $0x1a8] sm:$0xff]
    %v597 = vld [vmem:[%s3 + $0x1b0] sm:$0xff]
    %v598 = vld [vmem:[%s3 + $0x1b8] sm:$0xff]
    %v599 = vld [vmem:[%s3 + $0x1c0] sm:$0xff]
    %v600 = vld [vmem:[%s3 + $0x1c8] sm:$0xff]
    %v601 = vld [vmem:[%s3 + $0x1d0] sm:$0xff]
    %v602 = vld [vmem:[%s3 + $0x1d8] sm:$0xff]
    %v603 = vld [vmem:[%s3 + $0x1e0] sm:$0xff]
    %v604 = vld [vmem:[%s3 + $0x1e8] sm:$0xff]
    %v605 = vld [vmem:[%s3 + $0x1f0] sm:$0xff]
    %v606 = vld [vmem:[%s3 + $0x1f8] sm:$0xff]
    %v607 = vld [vmem:[%s3 + $0x200] sm:$0xff]
    %v608 = vld [vmem:[%s3 + $0x208] sm:$0xff]
    %v609 = vld [vmem:[%s3 + $0x210] sm:$0xff]
    %v610 = vld [vmem:[%s3 + $0x218] sm:$0xff]
    %v611 = vld [vmem:[%s3 + $0x220] sm:$0xff]
    %v612 = vld [vmem:[%s3 + $0x228] sm:$0xff]
    %v613 = vld [vmem:[%s3 + $0x230] sm:$0xff]
    %v614 = vld [vmem:[%s3 + $0x238] sm:$0xff]
    %v615 = vld [vmem:[%s3 + $0x240] sm:$0xff]
    %v616 = vld [vmem:[%s3 + $0x248] sm:$0xff]
    %v617 = vld [vmem:[%s3 + $0x250] sm:$0xff]
    %v618 = vld [vmem:[%s3 + $0x258] sm:$0xff]
    %v619 = vld [vmem:[%s3 + $0x260] sm:$0xff]
    %v620 = vld [vmem:[%s3 + $0x268] sm:$0xff]
    %v621 = vld [vmem:[%s3 + $0x270] sm:$0xff]
    %v622 = vld [vmem:[%s3 + $0x278] sm:$0xff]
    %v623 = vld [vmem:[%s3 + $0x280] sm:$0xff]
    %v624 = vld [vmem:[%s3 + $0x288] sm:$0xff]
    %v625 = vld [vmem:[%s3 + $0x290] sm:$0xff]
    %v626 = vld [vmem:[%s3 + $0x298] sm:$0xff]
    %v627 = vld [vmem:[%s3 + $0x2a0] sm:$0xff]
    %v628 = vld [vmem:[%s3 + $0x2a8] sm:$0xff]
    %v629 = vld [vmem:[%s3 + $0x2b0] sm:$0xff]
    %v630 = vld [vmem:[%s3 + $0x2b8] sm:$0xff]
    %v631 = vld [vmem:[%s3 + $0x2c0] sm:$0xff]
    %v632 = vld [vmem:[%s3 + $0x2c8] sm:$0xff]
    %v633 = vld [vmem:[%s3 + $0x2d0] sm:$0xff]
    %v634 = vld [vmem:[%s3 + $0x2d8] sm:$0xff]
    %v635 = vld [vmem:[%s3 + $0x2e0] sm:$0xff]
    %v636 = vld [vmem:[%s3 + $0x2e8] sm:$0xff]
    %v637 = vld [vmem:[%s3 + $0x2f0] sm:$0xff]
    %v638 = vld [vmem:[%s3 + $0x2f8] sm:$0xff]
    %v639 = vld [vmem:[%s3 + $0x300] sm:$0xff]
    %v640 = vld [vmem:[%s3 + $0x308] sm:$0xff]
    %v641 = vld [vmem:[%s3 + $0x310] sm:$0xff]
    %v642 = vld [vmem:[%s3 + $0x318] sm:$0xff]
    %v643 = vld [vmem:[%s3 + $0x320] sm:$0xff]
    %v644 = vld [vmem:[%s3 + $0x328] sm:$0xff]
    %v645 = vld [vmem:[%s3 + $0x330] sm:$0xff]
    %v646 = vld [vmem:[%s3 + $0x338] sm:$0xff]
    %v647 = vld [vmem:[%s3 + $0x340] sm:$0xff]
    %v648 = vld [vmem:[%s3 + $0x348] sm:$0xff]
    %v649 = vld [vmem:[%s3 + $0x350] sm:$0xff]
    %v650 = vld [vmem:[%s3 + $0x358] sm:$0xff]
    %v651 = vld [vmem:[%s3 + $0x360] sm:$0xff]
    %v652 = vld [vmem:[%s3 + $0x368] sm:$0xff]
    %v653 = vld [vmem:[%s3 + $0x370] sm:$0xff]
    %v654 = vld [vmem:[%s3 + $0x378] sm:$0xff]
    %v655 = vld [vmem:[%s3 + $0x380] sm:$0xff]
    %v656 = vld [vmem:[%s3 + $0x388] sm:$0xff]
    %v657 = vld [vmem:[%s3 + $0x390] sm:$0xff]
    %v658 = vld [vmem:[%s3 + $0x398] sm:$0xff]
    %v659 = vld [vmem:[%s3 + $0x3a0] sm:$0xff]
    %v660 = vld [vmem:[%s3 + $0x3a8] sm:$0xff]
    %v661 = vld [vmem:[%s3 + $0x3b0] sm:$0xff]
    %v662 = vld [vmem:[%s3 + $0x3b8] sm:$0xff]
    %v663 = vld [vmem:[%s3 + $0x3c0] sm:$0xff]
    %v664 = vld [vmem:[%s3 + $0x3c8] sm:$0xff]
    %v665 = vld [vmem:[%s3 + $0x3d0] sm:$0xff]
    %v666 = vld [vmem:[%s3 + $0x3d8] sm:$0xff]
    %v667 = vld [vmem:[%s3 + $0x3e0] sm:$0xff]
    %v668 = vld [vmem:[%s3 + $0x3e8] sm:$0xff]
    %v669 = vld [vmem:[%s3 + $0x3f0] sm:$0xff]
    %v670 = vld [vmem:[%s3 + $0x3f8] sm:$0xff]
    %v671 = vld [vmem:[%s3 + $0x400] sm:$0xff]
    %v672 = vld [vmem:[%s3 + $0x408] sm:$0xff]
    %v673 = vld [vmem:[%s3 + $0x410] sm:$0xff]
    %v674 = vld [vmem:[%s3 + $0x418] sm:$0xff]
    %v675 = vld [vmem:[%s3 + $0x420] sm:$0xff]
    %v676 = vld [vmem:[%s3 + $0x428] sm:$0xff]
    %v677 = vld [vmem:[%s3 + $0x430] sm:$0xff]
    %v678 = vld [vmem:[%s3 + $0x438] sm:$0xff]
    %v679 = vld [vmem:[%s3 + $0x440] sm:$0xff]
    %v680 = vld [vmem:[%s3 + $0x448] sm:$0xff]
    %v681 = vld [vmem:[%s3 + $0x450] sm:$0xff]
    %v682 = vld [vmem:[%s3 + $0x458] sm:$0xff]
    %v683 = vld [vmem:[%s3 + $0x460] sm:$0xff]
    %v684 = vld [vmem:[%s3 + $0x468] sm:$0xff]
    %v685 = vld [vmem:[%s3 + $0x470] sm:$0xff]
    %v686 = vld [vmem:[%s3 + $0x478] sm:$0xff]
    %v687 = vld [vmem:[%s3 + $0x480] sm:$0xff]
    %v688 = vld [vmem:[%s3 + $0x488] sm:$0xff]
    %v689 = vld [vmem:[%s3 + $0x490] sm:$0xff]
    %v690 = vld [vmem:[%s3 + $0x498] sm:$0xff]
    %v691 = vld [vmem:[%s3 + $0x4a0] sm:$0xff]
    %v692 = vld [vmem:[%s3 + $0x4a8] sm:$0xff]
    %v693 = vld [vmem:[%s3 + $0x4b0] sm:$0xff]
    %v694 = vld [vmem:[%s3 + $0x4b8] sm:$0xff]
    %v695 = vld [vmem:[%s3 + $0x4c0] sm:$0xff]
    %v696 = vld [vmem:[%s3 + $0x4c8] sm:$0xff]
    %v697 = vld [vmem:[%s3 + $0x4d0] sm:$0xff]
    %v698 = vld [vmem:[%s3 + $0x4d8] sm:$0xff]
    %v699 = vld [vmem:[%s3 + $0x4e0] sm:$0xff]
    %v700 = vld [vmem:[%s3 + $0x4e8] sm:$0xff]
    %v701 = vld [vmem:[%s3 + $0x4f0] sm:$0xff]
    %v702 = vld [vmem:[%s3 + $0x4f8] sm:$0xff]
    %v703 = vld [vmem:[%s3 + $0x500] sm:$0xff]
    %v704 = vld [vmem:[%s3 + $0x508] sm:$0xff]
    %v705 = vld [vmem:[%s3 + $0x510] sm:$0xff]
    %v706 = vld [vmem:[%s3 + $0x518] sm:$0xff]
    %v707 = vld [vmem:[%s3 + $0x520] sm:$0xff]
    %v708 = vld [vmem:[%s3 + $0x528] sm:$0xff]
    %v709 = vld [vmem:[%s3 + $0x530] sm:$0xff]
    %v710 = vld [vmem:[%s3 + $0x538] sm:$0xff]
    %v711 = vld [vmem:[%s3 + $0x540] sm:$0xff]
    %v712 = vld [vmem:[%s3 + $0x548] sm:$0xff]
    %v713 = vld [vmem:[%s3 + $0x550] sm:$0xff]
    %v714 = vld [vmem:[%s3 + $0x558] sm:$0xff]
    %v715 = vld [vmem:[%s3 + $0x560] sm:$0xff]
    %v716 = vld [vmem:[%s3 + $0x568] sm:$0xff]
    %v717 = vld [vmem:[%s3 + $0x570] sm:$0xff]
    %v718 = vld [vmem:[%s3 + $0x578] sm:$0xff]
    %v719 = vld [vmem:[%s3 + $0x580] sm:$0xff]
    %v720 = vld [vmem:[%s3 + $0x588] sm:$0xff]
    %v721 = vld [vmem:[%s3 + $0x590] sm:$0xff]
    %v722 = vld [vmem:[%s3 + $0x598] sm:$0xff]
    %v723 = vld [vmem:[%s3 + $0x5a0] sm:$0xff]
    %v724 = vld [vmem:[%s3 + $0x5a8] sm:$0xff]
    %v725 = vld [vmem:[%s3 + $0x5b0] sm:$0xff]
    %v726 = vld [vmem:[%s3 + $0x5b8] sm:$0xff]
    %v727 = vld [vmem:[%s3 + $0x5c0] sm:$0xff]
    %v728 = vld [vmem:[%s3 + $0x5c8] sm:$0xff]
    %v729 = vld [vmem:[%s3 + $0x5d0] sm:$0xff]
    %v730 = vld [vmem:[%s3 + $0x5d8] sm:$0xff]
    %v731 = vld [vmem:[%s3 + $0x5e0] sm:$0xff]
    %v732 = vld [vmem:[%s3 + $0x5e8] sm:$0xff]
    %v733 = vld [vmem:[%s3 + $0x5f0] sm:$0xff]
    %v734 = vld [vmem:[%s3 + $0x5f8] sm:$0xff]
    %v735 = vld [vmem:[%s3 + $0x600] sm:$0xff]
    %v736 = vld [vmem:[%s3 + $0x608] sm:$0xff]
    %v737 = vld [vmem:[%s3 + $0x610] sm:$0xff]
    %v738 = vld [vmem:[%s3 + $0x618] sm:$0xff]
    %v739 = vld [vmem:[%s3 + $0x620] sm:$0xff]
    %v740 = vld [vmem:[%s3 + $0x628] sm:$0xff]
    %v741 = vld [vmem:[%s3 + $0x630] sm:$0xff]
    %v742 = vld [vmem:[%s3 + $0x638] sm:$0xff]
    %v743 = vld [vmem:[%s3 + $0x640] sm:$0xff]
    %v744 = vld [vmem:[%s3 + $0x648] sm:$0xff]
    %v745 = vld [vmem:[%s3 + $0x650] sm:$0xff]
    %v746 = vld [vmem:[%s3 + $0x658] sm:$0xff]
    %v747 = vld [vmem:[%s3 + $0x660] sm:$0xff]
    %v748 = vld [vmem:[%s3 + $0x668] sm:$0xff]
    %v749 = vld [vmem:[%s3 + $0x670] sm:$0xff]
    %v750 = vld [vmem:[%s3 + $0x678] sm:$0xff]
    %v751 = vld [vmem:[%s3 + $0x680] sm:$0xff]
    %v752 = vld [vmem:[%s3 + $0x688] sm:$0xff]
    %v753 = vld [vmem:[%s3 + $0x690] sm:$0xff]
    %v754 = vld [vmem:[%s3 + $0x698] sm:$0xff]
    %v755 = vld [vmem:[%s3 + $0x6a0] sm:$0xff]
    %v756 = vld [vmem:[%s3 + $0x6a8] sm:$0xff]
    %v757 = vld [vmem:[%s3 + $0x6b0] sm:$0xff]
    %v758 = vld [vmem:[%s3 + $0x6b8] sm:$0xff]
    %v759 = vld [vmem:[%s3 + $0x6c0] sm:$0xff]
    %v760 = vld [vmem:[%s3 + $0x6c8] sm:$0xff]
    %v761 = vld [vmem:[%s3 + $0x6d0] sm:$0xff]
    %v762 = vld [vmem:[%s3 + $0x6d8] sm:$0xff]
    %v763 = vld [vmem:[%s3 + $0x6e0] sm:$0xff]
    %v764 = vld [vmem:[%s3 + $0x6e8] sm:$0xff]
    %v765 = vld [vmem:[%s3 + $0x6f0] sm:$0xff]
    %v766 = vld [vmem:[%s3 + $0x6f8] sm:$0xff]
    %v767 = vld [vmem:[%s3 + $0x700] sm:$0xff]
    %v768 = vld [vmem:[%s3 + $0x708] sm:$0xff]
    %v769 = vld [vmem:[%s3 + $0x710] sm:$0xff]
    %v770 = vld [vmem:[%s3 + $0x718] sm:$0xff]
    %v771 = vld [vmem:[%s3 + $0x720] sm:$0xff]
    %v772 = vld [vmem:[%s3 + $0x728] sm:$0xff]
    %v773 = vld [vmem:[%s3 + $0x730] sm:$0xff]
    %v774 = vld [vmem:[%s3 + $0x738] sm:$0xff]
    %v775 = vld [vmem:[%s3 + $0x740] sm:$0xff]
    %v776 = vld [vmem:[%s3 + $0x748] sm:$0xff]
    %v777 = vld [vmem:[%s3 + $0x750] sm:$0xff]
    %v778 = vld [vmem:[%s3 + $0x758] sm:$0xff]
    %v779 = vld [vmem:[%s3 + $0x760] sm:$0xff]
    %v780 = vld [vmem:[%s3 + $0x768] sm:$0xff]
    %v781 = vld [vmem:[%s3 + $0x770] sm:$0xff]
    %v782 = vld [vmem:[%s3 + $0x778] sm:$0xff]
    %v783 = vld [vmem:[%s3 + $0x780] sm:$0xff]
    %v784 = vld [vmem:[%s3 + $0x788] sm:$0xff]
    %v785 = vld [vmem:[%s3 + $0x790] sm:$0xff]
    %v786 = vld [vmem:[%s3 + $0x798] sm:$0xff]
    %v787 = vld [vmem:[%s3 + $0x7a0] sm:$0xff]
    %v788 = vld [vmem:[%s3 + $0x7a8] sm:$0xff]
    %v789 = vld [vmem:[%s3 + $0x7b0] sm:$0xff]
    %v790 = vld [vmem:[%s3 + $0x7b8] sm:$0xff]
    %v791 = vld [vmem:[%s3 + $0x7c0] sm:$0xff]
    %v792 = vld [vmem:[%s3 + $0x7c8] sm:$0xff]
    %v793 = vld [vmem:[%s3 + $0x7d0] sm:$0xff]
    %v794 = vld [vmem:[%s3 + $0x7d8] sm:$0xff]
    %v795 = vld [vmem:[%s3 + $0x7e0] sm:$0xff]
    %v796 = vld [vmem:[%s3 + $0x7e8] sm:$0xff]
    %v797 = vld [vmem:[%s3 + $0x7f0] sm:$0xff]
    %v798 = vld [vmem:[%s3 + $0x7f8] sm:$0xff]
    %v799 = vld [vmem:[%s3 + $0x800] sm:$0xff]
    %v800 = vld [vmem:[%s3 + $0x808] sm:$0xff]
    %v801 = vld [vmem:[%s3 + $0x810] sm:$0xff]
    %v802 = vld [vmem:[%s3 + $0x818] sm:$0xff]
    %v803 = vld [vmem:[%s3 + $0x820] sm:$0xff]
    %v804 = vld [vmem:[%s3 + $0x828] sm:$0xff]
    %v805 = vld [vmem:[%s3 + $0x830] sm:$0xff]
    %v806 = vld [vmem:[%s3 + $0x838] sm:$0xff]
    %v807 = vld [vmem:[%s3 + $0x840] sm:$0xff]
    %v808 = vld [vmem:[%s3 + $0x848] sm:$0xff]
    %v809 = vld [vmem:[%s3 + $0x850] sm:$0xff]
    %v810 = vld [vmem:[%s3 + $0x858] sm:$0xff]
    %v811 = vld [vmem:[%s3 + $0x860] sm:$0xff]
    %v812 = vld [vmem:[%s3 + $0x868] sm:$0xff]
    %v813 = vld [vmem:[%s3 + $0x870] sm:$0xff]
    %v814 = vld [vmem:[%s3 + $0x878] sm:$0xff]
    %v815 = vld [vmem:[%s3 + $0x880] sm:$0xff]
    %v816 = vld [vmem:[%s3 + $0x888] sm:$0xff]
    %v817 = vld [vmem:[%s3 + $0x890] sm:$0xff]
    %v818 = vld [vmem:[%s3 + $0x898] sm:$0xff]
    %v819 = vld [vmem:[%s3 + $0x8a0] sm:$0xff]
    %v820 = vld [vmem:[%s3 + $0x8a8] sm:$0xff]
    %v821 = vld [vmem:[%s3 + $0x8b0] sm:$0xff]
    %v822 = vld [vmem:[%s3 + $0x8b8] sm:$0xff]
    %v823 = vld [vmem:[%s3 + $0x8c0] sm:$0xff]
    %v824 = vld [vmem:[%s3 + $0x8c8] sm:$0xff]
    %v825 = vld [vmem:[%s3 + $0x8d0] sm:$0xff]
    %v826 = vld [vmem:[%s3 + $0x8d8] sm:$0xff]
    %v827 = vld [vmem:[%s3 + $0x8e0] sm:$0xff]
    %v828 = vld [vmem:[%s3 + $0x8e8] sm:$0xff]
    %v829 = vld [vmem:[%s3 + $0x8f0] sm:$0xff]
    %v830 = vld [vmem:[%s3 + $0x8f8] sm:$0xff]
    %v831 = vld [vmem:[%s3 + $0x900] sm:$0xff]
    %v832 = vld [vmem:[%s3 + $0x908] sm:$0xff]
    %v833 = vld [vmem:[%s3 + $0x910] sm:$0xff]
    %v834 = vld [vmem:[%s3 + $0x918] sm:$0xff]
    %v835 = vld [vmem:[%s3 + $0x920] sm:$0xff]
    %v836 = vld [vmem:[%s3 + $0x928] sm:$0xff]
    %v837 = vld [vmem:[%s3 + $0x930] sm:$0xff]
    %v838 = vld [vmem:[%s3 + $0x938] sm:$0xff]
    %v839 = vld [vmem:[%s3 + $0x940] sm:$0xff]
    %v840 = vld [vmem:[%s3 + $0x948] sm:$0xff]
    %v841 = vld [vmem:[%s3 + $0x950] sm:$0xff]
    %v842 = vld [vmem:[%s3 + $0x958] sm:$0xff]
    %v843 = vld [vmem:[%s3 + $0x960] sm:$0xff]
    %v844 = vld [vmem:[%s3 + $0x968] sm:$0xff]
    %v845 = vld [vmem:[%s3 + $0x970] sm:$0xff]
    %v846 = vld [vmem:[%s3 + $0x978] sm:$0xff]
    %v847 = vld [vmem:[%s3 + $0x980] sm:$0xff]
    %v848 = vld [vmem:[%s3 + $0x988] sm:$0xff]
    %v849 = vld [vmem:[%s3 + $0x990] sm:$0xff]
    %v850 = vld [vmem:[%s3 + $0x998] sm:$0xff]
    %v851 = vld [vmem:[%s3 + $0x9a0] sm:$0xff]
    %v852 = vld [vmem:[%s3 + $0x9a8] sm:$0xff]
    %v853 = vld [vmem:[%s3 + $0x9b0] sm:$0xff]
    %v854 = vld [vmem:[%s3 + $0x9b8] sm:$0xff]
    %v855 = vld [vmem:[%s3 + $0x9c0] sm:$0xff]
    %v856 = vld [vmem:[%s3 + $0x9c8] sm:$0xff]
    %v857 = vld [vmem:[%s3 + $0x9d0] sm:$0xff]
    %v858 = vld [vmem:[%s3 + $0x9d8] sm:$0xff]
    %v859 = vld [vmem:[%s3 + $0x9e0] sm:$0xff]
    %v860 = vld [vmem:[%s3 + $0x9e8] sm:$0xff]
    %v861 = vld [vmem:[%s3 + $0x9f0] sm:$0xff]
    %v862 = vld [vmem:[%s3 + $0x9f8] sm:$0xff]
    %v863 = vld [vmem:[%s3 + $0xa00] sm:$0xff]
    %v864 = vld [vmem:[%s3 + $0xa08] sm:$0xff]
    %v865 = vld [vmem:[%s3 + $0xa10] sm:$0xff]
    %v866 = vld [vmem:[%s3 + $0xa18] sm:$0xff]
    %v867 = vld [vmem:[%s3 + $0xa20] sm:$0xff]
    %v868 = vld [vmem:[%s3 + $0xa28] sm:$0xff]
    %v869 = vld [vmem:[%s3 + $0xa30] sm:$0xff]
    %v870 = vld [vmem:[%s3 + $0xa38] sm:$0xff]
    %v871 = vld [vmem:[%s3 + $0xa40] sm:$0xff]
    %v872 = vld [vmem:[%s3 + $0xa48] sm:$0xff]
    %v873 = vld [vmem:[%s3 + $0xa50] sm:$0xff]
    %v874 = vld [vmem:[%s3 + $0xa58] sm:$0xff]
    %v875 = vld [vmem:[%s3 + $0xa60] sm:$0xff]
    %v876 = vld [vmem:[%s3 + $0xa68] sm:$0xff]
    %v877 = vld [vmem:[%s3 + $0xa70] sm:$0xff]
    %v878 = vld [vmem:[%s3 + $0xa78] sm:$0xff]
    %v879 = vld [vmem:[%s3 + $0xa80] sm:$0xff]
    %v880 = vld [vmem:[%s3 + $0xa88] sm:$0xff]
    %v881 = vld [vmem:[%s3 + $0xa90] sm:$0xff]
    %v882 = vld [vmem:[%s3 + $0xa98] sm:$0xff]
    %v883 = vld [vmem:[%s3 + $0xaa0] sm:$0xff]
    %v884 = vld [vmem:[%s3 + $0xaa8] sm:$0xff]
    %v885 = vld [vmem:[%s3 + $0xab0] sm:$0xff]
    %v886 = vld [vmem:[%s3 + $0xab8] sm:$0xff]
    %v887 = vld [vmem:[%s3 + $0xac0] sm:$0xff]
    %v888 = vld [vmem:[%s3 + $0xac8] sm:$0xff]
    %v889 = vld [vmem:[%s3 + $0xad0] sm:$0xff]
    %v890 = vld [vmem:[%s3 + $0xad8] sm:$0xff]
    %v891 = vld [vmem:[%s3 + $0xae0] sm:$0xff]
    %v892 = vld [vmem:[%s3 + $0xae8] sm:$0xff]
    %v893 = vld [vmem:[%s3 + $0xaf0] sm:$0xff]
    %v894 = vld [vmem:[%s3 + $0xaf8] sm:$0xff]
    %v895 = vld [vmem:[%s3 + $0xb00] sm:$0xff]
    %v896 = vld [vmem:[%s3 + $0xb08] sm:$0xff]
    %v897 = vld [vmem:[%s3 + $0xb10] sm:$0xff]
    %v898 = vld [vmem:[%s3 + $0xb18] sm:$0xff]
    %v899 = vld [vmem:[%s3 + $0xb20] sm:$0xff]
    %v900 = vld [vmem:[%s3 + $0xb28] sm:$0xff]
    %v901 = vld [vmem:[%s3 + $0xb30] sm:$0xff]
    %v902 = vld [vmem:[%s3 + $0xb38] sm:$0xff]
    %v903 = vld [vmem:[%s3 + $0xb40] sm:$0xff]
    %v904 = vld [vmem:[%s3 + $0xb48] sm:$0xff]
    %v905 = vld [vmem:[%s3 + $0xb50] sm:$0xff]
    %v906 = vld [vmem:[%s3 + $0xb58] sm:$0xff]
    %v907 = vld [vmem:[%s3 + $0xb60] sm:$0xff]
    %v908 = vld [vmem:[%s3 + $0xb68] sm:$0xff]
    %v909 = vld [vmem:[%s3 + $0xb70] sm:$0xff]
    %v910 = vld [vmem:[%s3 + $0xb78] sm:$0xff]
    %v911 = vld [vmem:[%s3 + $0xb80] sm:$0xff]
    %v912 = vld [vmem:[%s3 + $0xb88] sm:$0xff]
    %v913 = vld [vmem:[%s3 + $0xb90] sm:$0xff]
    %v914 = vld [vmem:[%s3 + $0xb98] sm:$0xff]
    %v915 = vld [vmem:[%s3 + $0xba0] sm:$0xff]
    %v916 = vld [vmem:[%s3 + $0xba8] sm:$0xff]
    %v917 = vld [vmem:[%s3 + $0xbb0] sm:$0xff]
    %v918 = vld [vmem:[%s3 + $0xbb8] sm:$0xff]
    %v919 = vld [vmem:[%s3 + $0xbc0] sm:$0xff]
    %v920 = vld [vmem:[%s3 + $0xbc8] sm:$0xff]
    %v921 = vld [vmem:[%s3 + $0xbd0] sm:$0xff]
    %v922 = vld [vmem:[%s3 + $0xbd8] sm:$0xff]
    %v923 = vld [vmem:[%s3 + $0xbe0] sm:$0xff]
    %v924 = vld [vmem:[%s3 + $0xbe8] sm:$0xff]
    %v925 = vld [vmem:[%s3 + $0xbf0] sm:$0xff]
    %v926 = vld [vmem:[%s3 + $0xbf8] sm:$0xff]
    %v927 = vld [vmem:[%s3 + $0xc00] sm:$0xff]
    %v928 = vld [vmem:[%s3 + $0xc08] sm:$0xff]
    %v929 = vld [vmem:[%s3 + $0xc10] sm:$0xff]
    %v930 = vld [vmem:[%s3 + $0xc18] sm:$0xff]
    %v931 = vld [vmem:[%s3 + $0xc20] sm:$0xff]
    %v932 = vld [vmem:[%s3 + $0xc28] sm:$0xff]
    %v933 = vld [vmem:[%s3 + $0xc30] sm:$0xff]
    %v934 = vld [vmem:[%s3 + $0xc38] sm:$0xff]
    %v935 = vld [vmem:[%s3 + $0xc40] sm:$0xff]
    %v936 = vld [vmem:[%s3 + $0xc48] sm:$0xff]
    %v937 = vld [vmem:[%s3 + $0xc50] sm:$0xff]
    %v938 = vld [vmem:[%s3 + $0xc58] sm:$0xff]
    %v939 = vld [vmem:[%s3 + $0xc60] sm:$0xff]
    %v940 = vld [vmem:[%s3 + $0xc68] sm:$0xff]
    %v941 = vld [vmem:[%s3 + $0xc70] sm:$0xff]
    %v942 = vld [vmem:[%s3 + $0xc78] sm:$0xff]
    %v943 = vld [vmem:[%s3 + $0xc80] sm:$0xff]
    %v944 = vld [vmem:[%s3 + $0xc88] sm:$0xff]
    %v945 = vld [vmem:[%s3 + $0xc90] sm:$0xff]
    %v946 = vld [vmem:[%s3 + $0xc98] sm:$0xff]
    %v947 = vld [vmem:[%s3 + $0xca0] sm:$0xff]
    %v948 = vld [vmem:[%s3 + $0xca8] sm:$0xff]
    %v949 = vld [vmem:[%s3 + $0xcb0] sm:$0xff]
    %v950 = vld [vmem:[%s3 + $0xcb8] sm:$0xff]
    %v951 = vld [vmem:[%s3 + $0xcc0] sm:$0xff]
    %v952 = vld [vmem:[%s3 + $0xcc8] sm:$0xff]
    %v953 = vld [vmem:[%s3 + $0xcd0] sm:$0xff]
    %v954 = vld [vmem:[%s3 + $0xcd8] sm:$0xff]
    %v955 = vld [vmem:[%s3 + $0xce0] sm:$0xff]
    %v956 = vld [vmem:[%s3 + $0xce8] sm:$0xff]
    %v957 = vld [vmem:[%s3 + $0xcf0] sm:$0xff]
    %v958 = vld [vmem:[%s3 + $0xcf8] sm:$0xff]
    %v959 = vld [vmem:[%s3 + $0xd00] sm:$0xff]
    %v960 = vld [vmem:[%s3 + $0xd08] sm:$0xff]
    %v961 = vld [vmem:[%s3 + $0xd10] sm:$0xff]
    %v962 = vld [vmem:[%s3 + $0xd18] sm:$0xff]
    %v963 = vld [vmem:[%s3 + $0xd20] sm:$0xff]
    %v964 = vld [vmem:[%s3 + $0xd28] sm:$0xff]
    %v965 = vld [vmem:[%s3 + $0xd30] sm:$0xff]
    %v966 = vld [vmem:[%s3 + $0xd38] sm:$0xff]
    %v967 = vld [vmem:[%s3 + $0xd40] sm:$0xff]
    %v968 = vld [vmem:[%s3 + $0xd48] sm:$0xff]
    %v969 = vld [vmem:[%s3 + $0xd50] sm:$0xff]
    %v970 = vld [vmem:[%s3 + $0xd58] sm:$0xff]
    %v971 = vld [vmem:[%s3 + $0xd60] sm:$0xff]
    %v972 = vld [vmem:[%s3 + $0xd68] sm:$0xff]
    %v973 = vld [vmem:[%s3 + $0xd70] sm:$0xff]
    %v974 = vld [vmem:[%s3 + $0xd78] sm:$0xff]
    %v975 = vld [vmem:[%s3 + $0xd80] sm:$0xff]
    %v976 = vld [vmem:[%s3 + $0xd88] sm:$0xff]
    %v977 = vld [vmem:[%s3 + $0xd90] sm:$0xff]
    %v978 = vld [vmem:[%s3 + $0xd98] sm:$0xff]
    %v979 = vld [vmem:[%s3 + $0xda0] sm:$0xff]
    %v980 = vld [vmem:[%s3 + $0xda8] sm:$0xff]
    %v981 = vld [vmem:[%s3 + $0xdb0] sm:$0xff]
    %v982 = vld [vmem:[%s3 + $0xdb8] sm:$0xff]
    %v983 = vld [vmem:[%s3 + $0xdc0] sm:$0xff]
    %v984 = vld [vmem:[%s3 + $0xdc8] sm:$0xff]
    %v985 = vld [vmem:[%s3 + $0xdd0] sm:$0xff]
    %v986 = vld [vmem:[%s3 + $0xdd8] sm:$0xff]
    %v987 = vld [vmem:[%s3 + $0xde0] sm:$0xff]
    %v988 = vld [vmem:[%s3 + $0xde8] sm:$0xff]
    %v989 = vld [vmem:[%s3 + $0xdf0] sm:$0xff]
    %v990 = vld [vmem:[%s3 + $0xdf8] sm:$0xff]
    %v991 = vld [vmem:[%s3 + $0xe00] sm:$0xff]
    %v992 = vld [vmem:[%s3 + $0xe08] sm:$0xff]
    %v993 = vld [vmem:[%s3 + $0xe10] sm:$0xff]
    %v994 = vld [vmem:[%s3 + $0xe18] sm:$0xff]
    %v995 = vld [vmem:[%s3 + $0xe20] sm:$0xff]
    %v996 = vld [vmem:[%s3 + $0xe28] sm:$0xff]
    %v997 = vld [vmem:[%s3 + $0xe30] sm:$0xff]
    %v998 = vld [vmem:[%s3 + $0xe38] sm:$0xff]
    %v999 = vld [vmem:[%s3 + $0xe40] sm:$0xff]
    %v1000 = vld [vmem:[%s3 + $0xe48] sm:$0xff]
    %v1001 = vld [vmem:[%s3 + $0xe50] sm:$0xff]
    %v1002 = vld [vmem:[%s3 + $0xe58] sm:$0xff]
    %v1003 = vld [vmem:[%s3 + $0xe60] sm:$0xff]
    %v1004 = vld [vmem:[%s3 + $0xe68] sm:$0xff]
    %v1005 = vld [vmem:[%s3 + $0xe70] sm:$0xff]
    %v1006 = vld [vmem:[%s3 + $0xe78] sm:$0xff]
    %v1007 = vld [vmem:[%s3 + $0xe80] sm:$0xff]
    %v1008 = vld [vmem:[%s3 + $0xe88] sm:$0xff]
    %v1009 = vld [vmem:[%s3 + $0xe90] sm:$0xff]
    %v1010 = vld [vmem:[%s3 + $0xe98] sm:$0xff]
    %v1011 = vld [vmem:[%s3 + $0xea0] sm:$0xff]
    %v1012 = vld [vmem:[%s3 + $0xea8] sm:$0xff]
    %v1013 = vld [vmem:[%s3 + $0xeb0] sm:$0xff]
    %v1014 = vld [vmem:[%s3 + $0xeb8] sm:$0xff]
    %v1015 = vld [vmem:[%s3 + $0xec0] sm:$0xff]
    %v1016 = vld [vmem:[%s3 + $0xec8] sm:$0xff]
    %v1017 = vld [vmem:[%s3 + $0xed0] sm:$0xff]
    %v1018 = vld [vmem:[%s3 + $0xed8] sm:$0xff]
    %v1019 = vld [vmem:[%s3 + $0xee0] sm:$0xff]
    %v1020 = vld [vmem:[%s3 + $0xee8] sm:$0xff]
    %v1021 = vld [vmem:[%s3 + $0xef0] sm:$0xff]
    %v1022 = vld [vmem:[%s3 + $0xef8] sm:$0xff]
    %v1023 = vld [vmem:[%s3 + $0xf00] sm:$0xff]
    %v1024 = vld [vmem:[%s3 + $0xf08] sm:$0xff]
    %v1025 = vld [vmem:[%s3 + $0xf10] sm:$0xff]
    %v1026 = vld [vmem:[%s3 + $0xf18] sm:$0xff]
    %v1027 = vld [vmem:[%s3 + $0xf20] sm:$0xff]
    %v1028 = vld [vmem:[%s3 + $0xf28] sm:$0xff]
    %v1029 = vld [vmem:[%s3 + $0xf30] sm:$0xff]
    %v1030 = vld [vmem:[%s3 + $0xf38] sm:$0xff]
    %v1031 = vld [vmem:[%s3 + $0xf40] sm:$0xff]
    %v1032 = vld [vmem:[%s3 + $0xf48] sm:$0xff]
    %v1033 = vld [vmem:[%s3 + $0xf50] sm:$0xff]
    %v1034 = vld [vmem:[%s3 + $0xf58] sm:$0xff]
    %v1035 = vld [vmem:[%s3 + $0xf60] sm:$0xff]
    %v1036 = vld [vmem:[%s3 + $0xf68] sm:$0xff]
    %v1037 = vld [vmem:[%s3 + $0xf70] sm:$0xff]
    %v1038 = vld [vmem:[%s3 + $0xf78] sm:$0xff]
    %v1039 = vld [vmem:[%s3 + $0xf80] sm:$0xff]
    %v1040 = vld [vmem:[%s3 + $0xf88] sm:$0xff]
    %v1041 = vld [vmem:[%s3 + $0xf90] sm:$0xff]
    %v1042 = vld [vmem:[%s3 + $0xf98] sm:$0xff]
    %v1043 = vld [vmem:[%s3 + $0xfa0] sm:$0xff]
    %v1044 = vld [vmem:[%s3 + $0xfa8] sm:$0xff]
    %v1045 = vld [vmem:[%s3 + $0xfb0] sm:$0xff]
    %v1046 = vld [vmem:[%s3 + $0xfb8] sm:$0xff]
    %v1047 = vld [vmem:[%s3 + $0xfc0] sm:$0xff]
    %v1048 = vld [vmem:[%s3 + $0xfc8] sm:$0xff]
    %v1049 = vld [vmem:[%s3 + $0xfd0] sm:$0xff]
    %v1050 = vld [vmem:[%s3 + $0xfd8] sm:$0xff]
    %v1051 = vld [vmem:[%s3 + $0xfe0] sm:$0xff]
    %v1052 = vld [vmem:[%s3 + $0xfe8] sm:$0xff]
    %v1053 = vld [vmem:[%s3 + $0xff0] sm:$0xff]
    %v1054 = vld [vmem:[%s3 + $0xff8] sm:$0xff]
    %v1055 = vld [vmem:[%s4] sm:$0xff]
    %v1056 = vld [vmem:[%s4 + $0x8] sm:$0xff]
    %v1057 = vld [vmem:[%s4 + $0x10] sm:$0xff]
    %v1058 = vld [vmem:[%s4 + $0x18] sm:$0xff]
    %v1059 = vld [vmem:[%s4 + $0x20] sm:$0xff]
    %v1060 = vld [vmem:[%s4 + $0x28] sm:$0xff]
    %v1061 = vld [vmem:[%s4 + $0x30] sm:$0xff]
    %v1062 = vld [vmem:[%s4 + $0x38] sm:$0xff]
    %v1063 = vld [vmem:[%s4 + $0x40] sm:$0xff]
    %v1064 = vld [vmem:[%s4 + $0x48] sm:$0xff]
    %v1065 = vld [vmem:[%s4 + $0x50] sm:$0xff]
    %v1066 = vld [vmem:[%s4 + $0x58] sm:$0xff]
    %v1067 = vld [vmem:[%s4 + $0x60] sm:$0xff]
    %v1068 = vld [vmem:[%s4 + $0x68] sm:$0xff]
    %v1069 = vld [vmem:[%s4 + $0x70] sm:$0xff]
    %v1070 = vld [vmem:[%s4 + $0x78] sm:$0xff]
    %v1071 = vld [vmem:[%s4 + $0x80] sm:$0xff]
    %v1072 = vld [vmem:[%s4 + $0x88] sm:$0xff]
    %v1073 = vld [vmem:[%s4 + $0x90] sm:$0xff]
    %v1074 = vld [vmem:[%s4 + $0x98] sm:$0xff]
    %v1075 = vld [vmem:[%s4 + $0xa0] sm:$0xff]
    %v1076 = vld [vmem:[%s4 + $0xa8] sm:$0xff]
    %v1077 = vld [vmem:[%s4 + $0xb0] sm:$0xff]
    %v1078 = vld [vmem:[%s4 + $0xb8] sm:$0xff]
    %v1079 = vld [vmem:[%s4 + $0xc0] sm:$0xff]
    %v1080 = vld [vmem:[%s4 + $0xc8] sm:$0xff]
    %v1081 = vld [vmem:[%s4 + $0xd0] sm:$0xff]
    %v1082 = vld [vmem:[%s4 + $0xd8] sm:$0xff]
    %v1083 = vld [vmem:[%s4 + $0xe0] sm:$0xff]
    %v1084 = vld [vmem:[%s4 + $0xe8] sm:$0xff]
    %v1085 = vld [vmem:[%s4 + $0xf0] sm:$0xff]
    %v1086 = vld [vmem:[%s4 + $0xf8] sm:$0xff]
    %v1087 = vld [vmem:[%s4 + $0x100] sm:$0xff]
    %v1088 = vld [vmem:[%s4 + $0x108] sm:$0xff]
    %v1089 = vld [vmem:[%s4 + $0x110] sm:$0xff]
    %v1090 = vld [vmem:[%s4 + $0x118] sm:$0xff]
    %v1091 = vld [vmem:[%s4 + $0x120] sm:$0xff]
    %v1092 = vld [vmem:[%s4 + $0x128] sm:$0xff]
    %v1093 = vld [vmem:[%s4 + $0x130] sm:$0xff]
    %v1094 = vld [vmem:[%s4 + $0x138] sm:$0xff]
    %v1095 = vld [vmem:[%s4 + $0x140] sm:$0xff]
    %v1096 = vld [vmem:[%s4 + $0x148] sm:$0xff]
    %v1097 = vld [vmem:[%s4 + $0x150] sm:$0xff]
    %v1098 = vld [vmem:[%s4 + $0x158] sm:$0xff]
    %v1099 = vld [vmem:[%s4 + $0x160] sm:$0xff]
    %v1100 = vld [vmem:[%s4 + $0x168] sm:$0xff]
    %v1101 = vld [vmem:[%s4 + $0x170] sm:$0xff]
    %v1102 = vld [vmem:[%s4 + $0x178] sm:$0xff]
    %v1103 = vld [vmem:[%s4 + $0x180] sm:$0xff]
    %v1104 = vld [vmem:[%s4 + $0x188] sm:$0xff]
    %v1105 = vld [vmem:[%s4 + $0x190] sm:$0xff]
    %v1106 = vld [vmem:[%s4 + $0x198] sm:$0xff]
    %v1107 = vld [vmem:[%s4 + $0x1a0] sm:$0xff]
    %v1108 = vld [vmem:[%s4 + $0x1a8] sm:$0xff]
    %v1109 = vld [vmem:[%s4 + $0x1b0] sm:$0xff]
    %v1110 = vld [vmem:[%s4 + $0x1b8] sm:$0xff]
    %v1111 = vld [vmem:[%s4 + $0x1c0] sm:$0xff]
    %v1112 = vld [vmem:[%s4 + $0x1c8] sm:$0xff]
    %v1113 = vld [vmem:[%s4 + $0x1d0] sm:$0xff]
    %v1114 = vld [vmem:[%s4 + $0x1d8] sm:$0xff]
    %v1115 = vld [vmem:[%s4 + $0x1e0] sm:$0xff]
    %v1116 = vld [vmem:[%s4 + $0x1e8] sm:$0xff]
    %v1117 = vld [vmem:[%s4 + $0x1f0] sm:$0xff]
    %v1118 = vld [vmem:[%s4 + $0x1f8] sm:$0xff]
    %v1119 = vld [vmem:[%s4 + $0x200] sm:$0xff]
    %v1120 = vld [vmem:[%s4 + $0x208] sm:$0xff]
    %v1121 = vld [vmem:[%s4 + $0x210] sm:$0xff]
    %v1122 = vld [vmem:[%s4 + $0x218] sm:$0xff]
    %v1123 = vld [vmem:[%s4 + $0x220] sm:$0xff]
    %v1124 = vld [vmem:[%s4 + $0x228] sm:$0xff]
    %v1125 = vld [vmem:[%s4 + $0x230] sm:$0xff]
    %v1126 = vld [vmem:[%s4 + $0x238] sm:$0xff]
    %v1127 = vld [vmem:[%s4 + $0x240] sm:$0xff]
    %v1128 = vld [vmem:[%s4 + $0x248] sm:$0xff]
    %v1129 = vld [vmem:[%s4 + $0x250] sm:$0xff]
    %v1130 = vld [vmem:[%s4 + $0x258] sm:$0xff]
    %v1131 = vld [vmem:[%s4 + $0x260] sm:$0xff]
    %v1132 = vld [vmem:[%s4 + $0x268] sm:$0xff]
    %v1133 = vld [vmem:[%s4 + $0x270] sm:$0xff]
    %v1134 = vld [vmem:[%s4 + $0x278] sm:$0xff]
    %v1135 = vld [vmem:[%s4 + $0x280] sm:$0xff]
    %v1136 = vld [vmem:[%s4 + $0x288] sm:$0xff]
    %v1137 = vld [vmem:[%s4 + $0x290] sm:$0xff]
    %v1138 = vld [vmem:[%s4 + $0x298] sm:$0xff]
    %v1139 = vld [vmem:[%s4 + $0x2a0] sm:$0xff]
    %v1140 = vld [vmem:[%s4 + $0x2a8] sm:$0xff]
    %v1141 = vld [vmem:[%s4 + $0x2b0] sm:$0xff]
    %v1142 = vld [vmem:[%s4 + $0x2b8] sm:$0xff]
    %v1143 = vld [vmem:[%s4 + $0x2c0] sm:$0xff]
    %v1144 = vld [vmem:[%s4 + $0x2c8] sm:$0xff]
    %v1145 = vld [vmem:[%s4 + $0x2d0] sm:$0xff]
    %v1146 = vld [vmem:[%s4 + $0x2d8] sm:$0xff]
    %v1147 = vld [vmem:[%s4 + $0x2e0] sm:$0xff]
    %v1148 = vld [vmem:[%s4 + $0x2e8] sm:$0xff]
    %v1149 = vld [vmem:[%s4 + $0x2f0] sm:$0xff]
    %v1150 = vld [vmem:[%s4 + $0x2f8] sm:$0xff]
    %v1151 = vld [vmem:[%s4 + $0x300] sm:$0xff]
    %v1152 = vld [vmem:[%s4 + $0x308] sm:$0xff]
    %v1153 = vld [vmem:[%s4 + $0x310] sm:$0xff]
    %v1154 = vld [vmem:[%s4 + $0x318] sm:$0xff]
    %v1155 = vld [vmem:[%s4 + $0x320] sm:$0xff]
    %v1156 = vld [vmem:[%s4 + $0x328] sm:$0xff]
    %v1157 = vld [vmem:[%s4 + $0x330] sm:$0xff]
    %v1158 = vld [vmem:[%s4 + $0x338] sm:$0xff]
    %v1159 = vld [vmem:[%s4 + $0x340] sm:$0xff]
    %v1160 = vld [vmem:[%s4 + $0x348] sm:$0xff]
    %v1161 = vld [vmem:[%s4 + $0x350] sm:$0xff]
    %v1162 = vld [vmem:[%s4 + $0x358] sm:$0xff]
    %v1163 = vld [vmem:[%s4 + $0x360] sm:$0xff]
    %v1164 = vld [vmem:[%s4 + $0x368] sm:$0xff]
    %v1165 = vld [vmem:[%s4 + $0x370] sm:$0xff]
    %v1166 = vld [vmem:[%s4 + $0x378] sm:$0xff]
    %v1167 = vld [vmem:[%s4 + $0x380] sm:$0xff]
    %v1168 = vld [vmem:[%s4 + $0x388] sm:$0xff]
    %v1169 = vld [vmem:[%s4 + $0x390] sm:$0xff]
    %v1170 = vld [vmem:[%s4 + $0x398] sm:$0xff]
    %v1171 = vld [vmem:[%s4 + $0x3a0] sm:$0xff]
    %v1172 = vld [vmem:[%s4 + $0x3a8] sm:$0xff]
    %v1173 = vld [vmem:[%s4 + $0x3b0] sm:$0xff]
    %v1174 = vld [vmem:[%s4 + $0x3b8] sm:$0xff]
    %v1175 = vld [vmem:[%s4 + $0x3c0] sm:$0xff]
    %v1176 = vld [vmem:[%s4 + $0x3c8] sm:$0xff]
    %v1177 = vld [vmem:[%s4 + $0x3d0] sm:$0xff]
    %v1178 = vld [vmem:[%s4 + $0x3d8] sm:$0xff]
    %v1179 = vld [vmem:[%s4 + $0x3e0] sm:$0xff]
    %v1180 = vld [vmem:[%s4 + $0x3e8] sm:$0xff]
    %v1181 = vld [vmem:[%s4 + $0x3f0] sm:$0xff]
    %v1182 = vld [vmem:[%s4 + $0x3f8] sm:$0xff]
    %v1183 = vld [vmem:[%s4 + $0x400] sm:$0xff]
    %v1184 = vld [vmem:[%s4 + $0x408] sm:$0xff]
    %v1185 = vld [vmem:[%s4 + $0x410] sm:$0xff]
    %v1186 = vld [vmem:[%s4 + $0x418] sm:$0xff]
    %v1187 = vld [vmem:[%s4 + $0x420] sm:$0xff]
    %v1188 = vld [vmem:[%s4 + $0x428] sm:$0xff]
    %v1189 = vld [vmem:[%s4 + $0x430] sm:$0xff]
    %v1190 = vld [vmem:[%s4 + $0x438] sm:$0xff]
    %v1191 = vld [vmem:[%s4 + $0x440] sm:$0xff]
    %v1192 = vld [vmem:[%s4 + $0x448] sm:$0xff]
    %v1193 = vld [vmem:[%s4 + $0x450] sm:$0xff]
    %v1194 = vld [vmem:[%s4 + $0x458] sm:$0xff]
    %v1195 = vld [vmem:[%s4 + $0x460] sm:$0xff]
    %v1196 = vld [vmem:[%s4 + $0x468] sm:$0xff]
    %v1197 = vld [vmem:[%s4 + $0x470] sm:$0xff]
    %v1198 = vld [vmem:[%s4 + $0x478] sm:$0xff]
    %v1199 = vld [vmem:[%s4 + $0x480] sm:$0xff]
    %v1200 = vld [vmem:[%s4 + $0x488] sm:$0xff]
    %v1201 = vld [vmem:[%s4 + $0x490] sm:$0xff]
    %v1202 = vld [vmem:[%s4 + $0x498] sm:$0xff]
    %v1203 = vld [vmem:[%s4 + $0x4a0] sm:$0xff]
    %v1204 = vld [vmem:[%s4 + $0x4a8] sm:$0xff]
    %v1205 = vld [vmem:[%s4 + $0x4b0] sm:$0xff]
    %v1206 = vld [vmem:[%s4 + $0x4b8] sm:$0xff]
    %v1207 = vld [vmem:[%s4 + $0x4c0] sm:$0xff]
    %v1208 = vld [vmem:[%s4 + $0x4c8] sm:$0xff]
    %v1209 = vld [vmem:[%s4 + $0x4d0] sm:$0xff]
    %v1210 = vld [vmem:[%s4 + $0x4d8] sm:$0xff]
    %v1211 = vld [vmem:[%s4 + $0x4e0] sm:$0xff]
    %v1212 = vld [vmem:[%s4 + $0x4e8] sm:$0xff]
    %v1213 = vld [vmem:[%s4 + $0x4f0] sm:$0xff]
    %v1214 = vld [vmem:[%s4 + $0x4f8] sm:$0xff]
    %v1215 = vld [vmem:[%s4 + $0x500] sm:$0xff]
    %v1216 = vld [vmem:[%s4 + $0x508] sm:$0xff]
    %v1217 = vld [vmem:[%s4 + $0x510] sm:$0xff]
    %v1218 = vld [vmem:[%s4 + $0x518] sm:$0xff]
    %v1219 = vld [vmem:[%s4 + $0x520] sm:$0xff]
    %v1220 = vld [vmem:[%s4 + $0x528] sm:$0xff]
    %v1221 = vld [vmem:[%s4 + $0x530] sm:$0xff]
    %v1222 = vld [vmem:[%s4 + $0x538] sm:$0xff]
    %v1223 = vld [vmem:[%s4 + $0x540] sm:$0xff]
    %v1224 = vld [vmem:[%s4 + $0x548] sm:$0xff]
    %v1225 = vld [vmem:[%s4 + $0x550] sm:$0xff]
    %v1226 = vld [vmem:[%s4 + $0x558] sm:$0xff]
    %v1227 = vld [vmem:[%s4 + $0x560] sm:$0xff]
    %v1228 = vld [vmem:[%s4 + $0x568] sm:$0xff]
    %v1229 = vld [vmem:[%s4 + $0x570] sm:$0xff]
    %v1230 = vld [vmem:[%s4 + $0x578] sm:$0xff]
    %v1231 = vld [vmem:[%s4 + $0x580] sm:$0xff]
    %v1232 = vld [vmem:[%s4 + $0x588] sm:$0xff]
    %v1233 = vld [vmem:[%s4 + $0x590] sm:$0xff]
    %v1234 = vld [vmem:[%s4 + $0x598] sm:$0xff]
    %v1235 = vld [vmem:[%s4 + $0x5a0] sm:$0xff]
    %v1236 = vld [vmem:[%s4 + $0x5a8] sm:$0xff]
    %v1237 = vld [vmem:[%s4 + $0x5b0] sm:$0xff]
    %v1238 = vld [vmem:[%s4 + $0x5b8] sm:$0xff]
    %v1239 = vld [vmem:[%s4 + $0x5c0] sm:$0xff]
    %v1240 = vld [vmem:[%s4 + $0x5c8] sm:$0xff]
    %v1241 = vld [vmem:[%s4 + $0x5d0] sm:$0xff]
    %v1242 = vld [vmem:[%s4 + $0x5d8] sm:$0xff]
    %v1243 = vld [vmem:[%s4 + $0x5e0] sm:$0xff]
    %v1244 = vld [vmem:[%s4 + $0x5e8] sm:$0xff]
    %v1245 = vld [vmem:[%s4 + $0x5f0] sm:$0xff]
    %v1246 = vld [vmem:[%s4 + $0x5f8] sm:$0xff]
    %v1247 = vld [vmem:[%s4 + $0x600] sm:$0xff]
    %v1248 = vld [vmem:[%s4 + $0x608] sm:$0xff]
    %v1249 = vld [vmem:[%s4 + $0x610] sm:$0xff]
    %v1250 = vld [vmem:[%s4 + $0x618] sm:$0xff]
    %v1251 = vld [vmem:[%s4 + $0x620] sm:$0xff]
    %v1252 = vld [vmem:[%s4 + $0x628] sm:$0xff]
    %v1253 = vld [vmem:[%s4 + $0x630] sm:$0xff]
    %v1254 = vld [vmem:[%s4 + $0x638] sm:$0xff]
    %v1255 = vld [vmem:[%s4 + $0x640] sm:$0xff]
    %v1256 = vld [vmem:[%s4 + $0x648] sm:$0xff]
    %v1257 = vld [vmem:[%s4 + $0x650] sm:$0xff]
    %v1258 = vld [vmem:[%s4 + $0x658] sm:$0xff]
    %v1259 = vld [vmem:[%s4 + $0x660] sm:$0xff]
    %v1260 = vld [vmem:[%s4 + $0x668] sm:$0xff]
    %v1261 = vld [vmem:[%s4 + $0x670] sm:$0xff]
    %v1262 = vld [vmem:[%s4 + $0x678] sm:$0xff]
    %v1263 = vld [vmem:[%s4 + $0x680] sm:$0xff]
    %v1264 = vld [vmem:[%s4 + $0x688] sm:$0xff]
    %v1265 = vld [vmem:[%s4 + $0x690] sm:$0xff]
    %v1266 = vld [vmem:[%s4 + $0x698] sm:$0xff]
    %v1267 = vld [vmem:[%s4 + $0x6a0] sm:$0xff]
    %v1268 = vld [vmem:[%s4 + $0x6a8] sm:$0xff]
    %v1269 = vld [vmem:[%s4 + $0x6b0] sm:$0xff]
    %v1270 = vld [vmem:[%s4 + $0x6b8] sm:$0xff]
    %v1271 = vld [vmem:[%s4 + $0x6c0] sm:$0xff]
    %v1272 = vld [vmem:[%s4 + $0x6c8] sm:$0xff]
    %v1273 = vld [vmem:[%s4 + $0x6d0] sm:$0xff]
    %v1274 = vld [vmem:[%s4 + $0x6d8] sm:$0xff]
    %v1275 = vld [vmem:[%s4 + $0x6e0] sm:$0xff]
    %v1276 = vld [vmem:[%s4 + $0x6e8] sm:$0xff]
    %v1277 = vld [vmem:[%s4 + $0x6f0] sm:$0xff]
    %v1278 = vld [vmem:[%s4 + $0x6f8] sm:$0xff]
    %v1279 = vld [vmem:[%s4 + $0x700] sm:$0xff]
    %v1280 = vld [vmem:[%s4 + $0x708] sm:$0xff]
    %v1281 = vld [vmem:[%s4 + $0x710] sm:$0xff]
    %v1282 = vld [vmem:[%s4 + $0x718] sm:$0xff]
    %v1283 = vld [vmem:[%s4 + $0x720] sm:$0xff]
    %v1284 = vld [vmem:[%s4 + $0x728] sm:$0xff]
    %v1285 = vld [vmem:[%s4 + $0x730] sm:$0xff]
    %v1286 = vld [vmem:[%s4 + $0x738] sm:$0xff]
    %v1287 = vld [vmem:[%s4 + $0x740] sm:$0xff]
    %v1288 = vld [vmem:[%s4 + $0x748] sm:$0xff]
    %v1289 = vld [vmem:[%s4 + $0x750] sm:$0xff]
    %v1290 = vld [vmem:[%s4 + $0x758] sm:$0xff]
    %v1291 = vld [vmem:[%s4 + $0x760] sm:$0xff]
    %v1292 = vld [vmem:[%s4 + $0x768] sm:$0xff]
    %v1293 = vld [vmem:[%s4 + $0x770] sm:$0xff]
    %v1294 = vld [vmem:[%s4 + $0x778] sm:$0xff]
    %v1295 = vld [vmem:[%s4 + $0x780] sm:$0xff]
    %v1296 = vld [vmem:[%s4 + $0x788] sm:$0xff]
    %v1297 = vld [vmem:[%s4 + $0x790] sm:$0xff]
    %v1298 = vld [vmem:[%s4 + $0x798] sm:$0xff]
    %v1299 = vld [vmem:[%s4 + $0x7a0] sm:$0xff]
    %v1300 = vld [vmem:[%s4 + $0x7a8] sm:$0xff]
    %v1301 = vld [vmem:[%s4 + $0x7b0] sm:$0xff]
    %v1302 = vld [vmem:[%s4 + $0x7b8] sm:$0xff]
    %v1303 = vld [vmem:[%s4 + $0x7c0] sm:$0xff]
    %v1304 = vld [vmem:[%s4 + $0x7c8] sm:$0xff]
    %v1305 = vld [vmem:[%s4 + $0x7d0] sm:$0xff]
    %v1306 = vld [vmem:[%s4 + $0x7d8] sm:$0xff]
    %v1307 = vld [vmem:[%s4 + $0x7e0] sm:$0xff]
    %v1308 = vld [vmem:[%s4 + $0x7e8] sm:$0xff]
    %v1309 = vld [vmem:[%s4 + $0x7f0] sm:$0xff]
    %v1310 = vld [vmem:[%s4 + $0x7f8] sm:$0xff]
    %v1311 = vld [vmem:[%s4 + $0x800] sm:$0xff]
    %v1312 = vld [vmem:[%s4 + $0x808] sm:$0xff]
    %v1313 = vld [vmem:[%s4 + $0x810] sm:$0xff]
    %v1314 = vld [vmem:[%s4 + $0x818] sm:$0xff]
    %v1315 = vld [vmem:[%s4 + $0x820] sm:$0xff]
    %v1316 = vld [vmem:[%s4 + $0x828] sm:$0xff]
    %v1317 = vld [vmem:[%s4 + $0x830] sm:$0xff]
    %v1318 = vld [vmem:[%s4 + $0x838] sm:$0xff]
    %v1319 = vld [vmem:[%s4 + $0x840] sm:$0xff]
    %v1320 = vld [vmem:[%s4 + $0x848] sm:$0xff]
    %v1321 = vld [vmem:[%s4 + $0x850] sm:$0xff]
    %v1322 = vld [vmem:[%s4 + $0x858] sm:$0xff]
    %v1323 = vld [vmem:[%s4 + $0x860] sm:$0xff]
    %v1324 = vld [vmem:[%s4 + $0x868] sm:$0xff]
    %v1325 = vld [vmem:[%s4 + $0x870] sm:$0xff]
    %v1326 = vld [vmem:[%s4 + $0x878] sm:$0xff]
    %v1327 = vld [vmem:[%s4 + $0x880] sm:$0xff]
    %v1328 = vld [vmem:[%s4 + $0x888] sm:$0xff]
    %v1329 = vld [vmem:[%s4 + $0x890] sm:$0xff]
    %v1330 = vld [vmem:[%s4 + $0x898] sm:$0xff]
    %v1331 = vld [vmem:[%s4 + $0x8a0] sm:$0xff]
    %v1332 = vld [vmem:[%s4 + $0x8a8] sm:$0xff]
    %v1333 = vld [vmem:[%s4 + $0x8b0] sm:$0xff]
    %v1334 = vld [vmem:[%s4 + $0x8b8] sm:$0xff]
    %v1335 = vld [vmem:[%s4 + $0x8c0] sm:$0xff]
    %v1336 = vld [vmem:[%s4 + $0x8c8] sm:$0xff]
    %v1337 = vld [vmem:[%s4 + $0x8d0] sm:$0xff]
    %v1338 = vld [vmem:[%s4 + $0x8d8] sm:$0xff]
    %v1339 = vld [vmem:[%s4 + $0x8e0] sm:$0xff]
    %v1340 = vld [vmem:[%s4 + $0x8e8] sm:$0xff]
    %v1341 = vld [vmem:[%s4 + $0x8f0] sm:$0xff]
    %v1342 = vld [vmem:[%s4 + $0x8f8] sm:$0xff]
    %v1343 = vld [vmem:[%s4 + $0x900] sm:$0xff]
    %v1344 = vld [vmem:[%s4 + $0x908] sm:$0xff]
    %v1345 = vld [vmem:[%s4 + $0x910] sm:$0xff]
    %v1346 = vld [vmem:[%s4 + $0x918] sm:$0xff]
    %v1347 = vld [vmem:[%s4 + $0x920] sm:$0xff]
    %v1348 = vld [vmem:[%s4 + $0x928] sm:$0xff]
    %v1349 = vld [vmem:[%s4 + $0x930] sm:$0xff]
    %v1350 = vld [vmem:[%s4 + $0x938] sm:$0xff]
    %v1351 = vld [vmem:[%s4 + $0x940] sm:$0xff]
    %v1352 = vld [vmem:[%s4 + $0x948] sm:$0xff]
    %v1353 = vld [vmem:[%s4 + $0x950] sm:$0xff]
    %v1354 = vld [vmem:[%s4 + $0x958] sm:$0xff]
    %v1355 = vld [vmem:[%s4 + $0x960] sm:$0xff]
    %v1356 = vld [vmem:[%s4 + $0x968] sm:$0xff]
    %v1357 = vld [vmem:[%s4 + $0x970] sm:$0xff]
    %v1358 = vld [vmem:[%s4 + $0x978] sm:$0xff]
    %v1359 = vld [vmem:[%s4 + $0x980] sm:$0xff]
    %v1360 = vld [vmem:[%s4 + $0x988] sm:$0xff]
    %v1361 = vld [vmem:[%s4 + $0x990] sm:$0xff]
    %v1362 = vld [vmem:[%s4 + $0x998] sm:$0xff]
    %v1363 = vld [vmem:[%s4 + $0x9a0] sm:$0xff]
    %v1364 = vld [vmem:[%s4 + $0x9a8] sm:$0xff]
    %v1365 = vld [vmem:[%s4 + $0x9b0] sm:$0xff]
    %v1366 = vld [vmem:[%s4 + $0x9b8] sm:$0xff]
    %v1367 = vld [vmem:[%s4 + $0x9c0] sm:$0xff]
    %v1368 = vld [vmem:[%s4 + $0x9c8] sm:$0xff]
    %v1369 = vld [vmem:[%s4 + $0x9d0] sm:$0xff]
    %v1370 = vld [vmem:[%s4 + $0x9d8] sm:$0xff]
    %v1371 = vld [vmem:[%s4 + $0x9e0] sm:$0xff]
    %v1372 = vld [vmem:[%s4 + $0x9e8] sm:$0xff]
    %v1373 = vld [vmem:[%s4 + $0x9f0] sm:$0xff]
    %v1374 = vld [vmem:[%s4 + $0x9f8] sm:$0xff]
    %v1375 = vld [vmem:[%s4 + $0xa00] sm:$0xff]
    %v1376 = vld [vmem:[%s4 + $0xa08] sm:$0xff]
    %v1377 = vld [vmem:[%s4 + $0xa10] sm:$0xff]
    %v1378 = vld [vmem:[%s4 + $0xa18] sm:$0xff]
    %v1379 = vld [vmem:[%s4 + $0xa20] sm:$0xff]
    %v1380 = vld [vmem:[%s4 + $0xa28] sm:$0xff]
    %v1381 = vld [vmem:[%s4 + $0xa30] sm:$0xff]
    %v1382 = vld [vmem:[%s4 + $0xa38] sm:$0xff]
    %v1383 = vld [vmem:[%s4 + $0xa40] sm:$0xff]
    %v1384 = vld [vmem:[%s4 + $0xa48] sm:$0xff]
    %v1385 = vld [vmem:[%s4 + $0xa50] sm:$0xff]
    %v1386 = vld [vmem:[%s4 + $0xa58] sm:$0xff]
    %v1387 = vld [vmem:[%s4 + $0xa60] sm:$0xff]
    %v1388 = vld [vmem:[%s4 + $0xa68] sm:$0xff]
    %v1389 = vld [vmem:[%s4 + $0xa70] sm:$0xff]
    %v1390 = vld [vmem:[%s4 + $0xa78] sm:$0xff]
    %v1391 = vld [vmem:[%s4 + $0xa80] sm:$0xff]
    %v1392 = vld [vmem:[%s4 + $0xa88] sm:$0xff]
    %v1393 = vld [vmem:[%s4 + $0xa90] sm:$0xff]
    %v1394 = vld [vmem:[%s4 + $0xa98] sm:$0xff]
    %v1395 = vld [vmem:[%s4 + $0xaa0] sm:$0xff]
    %v1396 = vld [vmem:[%s4 + $0xaa8] sm:$0xff]
    %v1397 = vld [vmem:[%s4 + $0xab0] sm:$0xff]
    %v1398 = vld [vmem:[%s4 + $0xab8] sm:$0xff]
    %v1399 = vld [vmem:[%s4 + $0xac0] sm:$0xff]
    %v1400 = vld [vmem:[%s4 + $0xac8] sm:$0xff]
    %v1401 = vld [vmem:[%s4 + $0xad0] sm:$0xff]
    %v1402 = vld [vmem:[%s4 + $0xad8] sm:$0xff]
    %v1403 = vld [vmem:[%s4 + $0xae0] sm:$0xff]
    %v1404 = vld [vmem:[%s4 + $0xae8] sm:$0xff]
    %v1405 = vld [vmem:[%s4 + $0xaf0] sm:$0xff]
    %v1406 = vld [vmem:[%s4 + $0xaf8] sm:$0xff]
    %v1407 = vld [vmem:[%s4 + $0xb00] sm:$0xff]
    %v1408 = vld [vmem:[%s4 + $0xb08] sm:$0xff]
    %v1409 = vld [vmem:[%s4 + $0xb10] sm:$0xff]
    %v1410 = vld [vmem:[%s4 + $0xb18] sm:$0xff]
    %v1411 = vld [vmem:[%s4 + $0xb20] sm:$0xff]
    %v1412 = vld [vmem:[%s4 + $0xb28] sm:$0xff]
    %v1413 = vld [vmem:[%s4 + $0xb30] sm:$0xff]
    %v1414 = vld [vmem:[%s4 + $0xb38] sm:$0xff]
    %v1415 = vld [vmem:[%s4 + $0xb40] sm:$0xff]
    %v1416 = vld [vmem:[%s4 + $0xb48] sm:$0xff]
    %v1417 = vld [vmem:[%s4 + $0xb50] sm:$0xff]
    %v1418 = vld [vmem:[%s4 + $0xb58] sm:$0xff]
    %v1419 = vld [vmem:[%s4 + $0xb60] sm:$0xff]
    %v1420 = vld [vmem:[%s4 + $0xb68] sm:$0xff]
    %v1421 = vld [vmem:[%s4 + $0xb70] sm:$0xff]
    %v1422 = vld [vmem:[%s4 + $0xb78] sm:$0xff]
    %v1423 = vld [vmem:[%s4 + $0xb80] sm:$0xff]
    %v1424 = vld [vmem:[%s4 + $0xb88] sm:$0xff]
    %v1425 = vld [vmem:[%s4 + $0xb90] sm:$0xff]
    %v1426 = vld [vmem:[%s4 + $0xb98] sm:$0xff]
    %v1427 = vld [vmem:[%s4 + $0xba0] sm:$0xff]
    %v1428 = vld [vmem:[%s4 + $0xba8] sm:$0xff]
    %v1429 = vld [vmem:[%s4 + $0xbb0] sm:$0xff]
    %v1430 = vld [vmem:[%s4 + $0xbb8] sm:$0xff]
    %v1431 = vld [vmem:[%s4 + $0xbc0] sm:$0xff]
    %v1432 = vld [vmem:[%s4 + $0xbc8] sm:$0xff]
    %v1433 = vld [vmem:[%s4 + $0xbd0] sm:$0xff]
    %v1434 = vld [vmem:[%s4 + $0xbd8] sm:$0xff]
    %v1435 = vld [vmem:[%s4 + $0xbe0] sm:$0xff]
    %v1436 = vld [vmem:[%s4 + $0xbe8] sm:$0xff]
    %v1437 = vld [vmem:[%s4 + $0xbf0] sm:$0xff]
    %v1438 = vld [vmem:[%s4 + $0xbf8] sm:$0xff]
    %v1439 = vld [vmem:[%s4 + $0xc00] sm:$0xff]
    %v1440 = vld [vmem:[%s4 + $0xc08] sm:$0xff]
    %v1441 = vld [vmem:[%s4 + $0xc10] sm:$0xff]
    %v1442 = vld [vmem:[%s4 + $0xc18] sm:$0xff]
    %v1443 = vld [vmem:[%s4 + $0xc20] sm:$0xff]
    %v1444 = vld [vmem:[%s4 + $0xc28] sm:$0xff]
    %v1445 = vld [vmem:[%s4 + $0xc30] sm:$0xff]
    %v1446 = vld [vmem:[%s4 + $0xc38] sm:$0xff]
    %v1447 = vld [vmem:[%s4 + $0xc40] sm:$0xff]
    %v1448 = vld [vmem:[%s4 + $0xc48] sm:$0xff]
    %v1449 = vld [vmem:[%s4 + $0xc50] sm:$0xff]
    %v1450 = vld [vmem:[%s4 + $0xc58] sm:$0xff]
    %v1451 = vld [vmem:[%s4 + $0xc60] sm:$0xff]
    %v1452 = vld [vmem:[%s4 + $0xc68] sm:$0xff]
    %v1453 = vld [vmem:[%s4 + $0xc70] sm:$0xff]
    %v1454 = vld [vmem:[%s4 + $0xc78] sm:$0xff]
    %v1455 = vld [vmem:[%s4 + $0xc80] sm:$0xff]
    %v1456 = vld [vmem:[%s4 + $0xc88] sm:$0xff]
    %v1457 = vld [vmem:[%s4 + $0xc90] sm:$0xff]
    %v1458 = vld [vmem:[%s4 + $0xc98] sm:$0xff]
    %v1459 = vld [vmem:[%s4 + $0xca0] sm:$0xff]
    %v1460 = vld [vmem:[%s4 + $0xca8] sm:$0xff]
    %v1461 = vld [vmem:[%s4 + $0xcb0] sm:$0xff]
    %v1462 = vld [vmem:[%s4 + $0xcb8] sm:$0xff]
    %v1463 = vld [vmem:[%s4 + $0xcc0] sm:$0xff]
    %v1464 = vld [vmem:[%s4 + $0xcc8] sm:$0xff]
    %v1465 = vld [vmem:[%s4 + $0xcd0] sm:$0xff]
    %v1466 = vld [vmem:[%s4 + $0xcd8] sm:$0xff]
    %v1467 = vld [vmem:[%s4 + $0xce0] sm:$0xff]
    %v1468 = vld [vmem:[%s4 + $0xce8] sm:$0xff]
    %v1469 = vld [vmem:[%s4 + $0xcf0] sm:$0xff]
    %v1470 = vld [vmem:[%s4 + $0xcf8] sm:$0xff]
    %v1471 = vld [vmem:[%s4 + $0xd00] sm:$0xff]
    %v1472 = vld [vmem:[%s4 + $0xd08] sm:$0xff]
    %v1473 = vld [vmem:[%s4 + $0xd10] sm:$0xff]
    %v1474 = vld [vmem:[%s4 + $0xd18] sm:$0xff]
    %v1475 = vld [vmem:[%s4 + $0xd20] sm:$0xff]
    %v1476 = vld [vmem:[%s4 + $0xd28] sm:$0xff]
    %v1477 = vld [vmem:[%s4 + $0xd30] sm:$0xff]
    %v1478 = vld [vmem:[%s4 + $0xd38] sm:$0xff]
    %v1479 = vld [vmem:[%s4 + $0xd40] sm:$0xff]
    %v1480 = vld [vmem:[%s4 + $0xd48] sm:$0xff]
    %v1481 = vld [vmem:[%s4 + $0xd50] sm:$0xff]
    %v1482 = vld [vmem:[%s4 + $0xd58] sm:$0xff]
    %v1483 = vld [vmem:[%s4 + $0xd60] sm:$0xff]
    %v1484 = vld [vmem:[%s4 + $0xd68] sm:$0xff]
    %v1485 = vld [vmem:[%s4 + $0xd70] sm:$0xff]
    %v1486 = vld [vmem:[%s4 + $0xd78] sm:$0xff]
    %v1487 = vld [vmem:[%s4 + $0xd80] sm:$0xff]
    %v1488 = vld [vmem:[%s4 + $0xd88] sm:$0xff]
    %v1489 = vld [vmem:[%s4 + $0xd90] sm:$0xff]
    %v1490 = vld [vmem:[%s4 + $0xd98] sm:$0xff]
    %v1491 = vld [vmem:[%s4 + $0xda0] sm:$0xff]
    %v1492 = vld [vmem:[%s4 + $0xda8] sm:$0xff]
    %v1493 = vld [vmem:[%s4 + $0xdb0] sm:$0xff]
    %v1494 = vld [vmem:[%s4 + $0xdb8] sm:$0xff]
    %v1495 = vld [vmem:[%s4 + $0xdc0] sm:$0xff]
    %v1496 = vld [vmem:[%s4 + $0xdc8] sm:$0xff]
    %v1497 = vld [vmem:[%s4 + $0xdd0] sm:$0xff]
    %v1498 = vld [vmem:[%s4 + $0xdd8] sm:$0xff]
    %v1499 = vld [vmem:[%s4 + $0xde0] sm:$0xff]
    %v1500 = vld [vmem:[%s4 + $0xde8] sm:$0xff]
    %v1501 = vld [vmem:[%s4 + $0xdf0] sm:$0xff]
    %v1502 = vld [vmem:[%s4 + $0xdf8] sm:$0xff]
    %v1503 = vld [vmem:[%s4 + $0xe00] sm:$0xff]
    %v1504 = vld [vmem:[%s4 + $0xe08] sm:$0xff]
    %v1505 = vld [vmem:[%s4 + $0xe10] sm:$0xff]
    %v1506 = vld [vmem:[%s4 + $0xe18] sm:$0xff]
    %v1507 = vld [vmem:[%s4 + $0xe20] sm:$0xff]
    %v1508 = vld [vmem:[%s4 + $0xe28] sm:$0xff]
    %v1509 = vld [vmem:[%s4 + $0xe30] sm:$0xff]
    %v1510 = vld [vmem:[%s4 + $0xe38] sm:$0xff]
    %v1511 = vld [vmem:[%s4 + $0xe40] sm:$0xff]
    %v1512 = vld [vmem:[%s4 + $0xe48] sm:$0xff]
    %v1513 = vld [vmem:[%s4 + $0xe50] sm:$0xff]
    %v1514 = vld [vmem:[%s4 + $0xe58] sm:$0xff]
    %v1515 = vld [vmem:[%s4 + $0xe60] sm:$0xff]
    %v1516 = vld [vmem:[%s4 + $0xe68] sm:$0xff]
    %v1517 = vld [vmem:[%s4 + $0xe70] sm:$0xff]
    %v1518 = vld [vmem:[%s4 + $0xe78] sm:$0xff]
    %v1519 = vld [vmem:[%s4 + $0xe80] sm:$0xff]
    %v1520 = vld [vmem:[%s4 + $0xe88] sm:$0xff]
    %v1521 = vld [vmem:[%s4 + $0xe90] sm:$0xff]
    %v1522 = vld [vmem:[%s4 + $0xe98] sm:$0xff]
    %v1523 = vld [vmem:[%s4 + $0xea0] sm:$0xff]
    %v1524 = vld [vmem:[%s4 + $0xea8] sm:$0xff]
    %v1525 = vld [vmem:[%s4 + $0xeb0] sm:$0xff]
    %v1526 = vld [vmem:[%s4 + $0xeb8] sm:$0xff]
    %v1527 = vld [vmem:[%s4 + $0xec0] sm:$0xff]
    %v1528 = vld [vmem:[%s4 + $0xec8] sm:$0xff]
    %v1529 = vld [vmem:[%s4 + $0xed0] sm:$0xff]
    %v1530 = vld [vmem:[%s4 + $0xed8] sm:$0xff]
    %v1531 = vld [vmem:[%s4 + $0xee0] sm:$0xff]
    %v1532 = vld [vmem:[%s4 + $0xee8] sm:$0xff]
    %v1533 = vld [vmem:[%s4 + $0xef0] sm:$0xff]
    %v1534 = vld [vmem:[%s4 + $0xef8] sm:$0xff]
    %v1535 = vld [vmem:[%s4 + $0xf00] sm:$0xff]
    %v1536 = vld [vmem:[%s4 + $0xf08] sm:$0xff]
    %v1537 = vld [vmem:[%s4 + $0xf10] sm:$0xff]
    %v1538 = vld [vmem:[%s4 + $0xf18] sm:$0xff]
    %v1539 = vld [vmem:[%s4 + $0xf20] sm:$0xff]
    %v1540 = vld [vmem:[%s4 + $0xf28] sm:$0xff]
    %v1541 = vld [vmem:[%s4 + $0xf30] sm:$0xff]
    %v1542 = vld [vmem:[%s4 + $0xf38] sm:$0xff]
    %v1543 = vld [vmem:[%s4 + $0xf40] sm:$0xff]
    %v1544 = vld [vmem:[%s4 + $0xf48] sm:$0xff]
    %v1545 = vld [vmem:[%s4 + $0xf50] sm:$0xff]
    %v1546 = vld [vmem:[%s4 + $0xf58] sm:$0xff]
    %v1547 = vld [vmem:[%s4 + $0xf60] sm:$0xff]
    %v1548 = vld [vmem:[%s4 + $0xf68] sm:$0xff]
    %v1549 = vld [vmem:[%s4 + $0xf70] sm:$0xff]
    %v1550 = vld [vmem:[%s4 + $0xf78] sm:$0xff]
    %v1551 = vld [vmem:[%s4 + $0xf80] sm:$0xff]
    %v1552 = vld [vmem:[%s4 + $0xf88] sm:$0xff]
    %v1553 = vld [vmem:[%s4 + $0xf90] sm:$0xff]
    %v1554 = vld [vmem:[%s4 + $0xf98] sm:$0xff]
    %v1555 = vld [vmem:[%s4 + $0xfa0] sm:$0xff]
    %v1556 = vld [vmem:[%s4 + $0xfa8] sm:$0xff]
    %v1557 = vld [vmem:[%s4 + $0xfb0] sm:$0xff]
    %v1558 = vld [vmem:[%s4 + $0xfb8] sm:$0xff]
    %v1559 = vld [vmem:[%s4 + $0xfc0] sm:$0xff]
    %v1560 = vld [vmem:[%s4 + $0xfc8] sm:$0xff]
    %v1561 = vld [vmem:[%s4 + $0xfd0] sm:$0xff]
    %v1562 = vld [vmem:[%s4 + $0xfd8] sm:$0xff]
    %v1563 = vld [vmem:[%s4 + $0xfe0] sm:$0xff]
    %v1564 = vld [vmem:[%s4 + $0xfe8] sm:$0xff]
    %v1565 = vld [vmem:[%s4 + $0xff0] sm:$0xff]
    %v1566 = vld [vmem:[%s4 + $0xff8] sm:$0xff]
    %v2079 = vunpack.c.l.b16 %v1055
    %v2080 = vunpack.c.h.b16 %v1055
    %v2081 = vunpack.c.l.b16 %v1056
    %v2082 = vunpack.c.h.b16 %v1056
    %v2083 = vunpack.c.l.b16 %v1057
    %v2084 = vunpack.c.h.b16 %v1057
    %v2085 = vunpack.c.l.b16 %v1058
    %v2086 = vunpack.c.h.b16 %v1058
    %v2087 = vunpack.c.l.b16 %v1059
    %v2088 = vunpack.c.h.b16 %v1059
    %v2089 = vunpack.c.l.b16 %v1060
    %v2090 = vunpack.c.h.b16 %v1060
    %v2091 = vunpack.c.l.b16 %v1061
    %v2092 = vunpack.c.h.b16 %v1061
    %v2093 = vunpack.c.l.b16 %v1062
    %v2094 = vunpack.c.h.b16 %v1062
    %v2095 = vunpack.c.l.b16 %v1063
    %v2096 = vunpack.c.h.b16 %v1063
    %v2097 = vunpack.c.l.b16 %v1064
    %v2098 = vunpack.c.h.b16 %v1064
    %v2099 = vunpack.c.l.b16 %v1065
    %v2100 = vunpack.c.h.b16 %v1065
    %v2101 = vunpack.c.l.b16 %v1066
    %v2102 = vunpack.c.h.b16 %v1066
    %v2103 = vunpack.c.l.b16 %v1067
    %v2104 = vunpack.c.h.b16 %v1067
    %v2105 = vunpack.c.l.b16 %v1068
    %v2106 = vunpack.c.h.b16 %v1068
    %v2107 = vunpack.c.l.b16 %v1069
    %v2108 = vunpack.c.h.b16 %v1069
    %v2109 = vunpack.c.l.b16 %v1070
    %v2110 = vunpack.c.h.b16 %v1070
    %v2111 = vunpack.c.l.b16 %v1071
    %v2112 = vunpack.c.h.b16 %v1071
    %v2113 = vunpack.c.l.b16 %v1072
    %v2114 = vunpack.c.h.b16 %v1072
    %v2115 = vunpack.c.l.b16 %v1073
    %v2116 = vunpack.c.h.b16 %v1073
    %v2117 = vunpack.c.l.b16 %v1074
    %v2118 = vunpack.c.h.b16 %v1074
    %v2119 = vunpack.c.l.b16 %v1075
    %v2120 = vunpack.c.h.b16 %v1075
    %v2121 = vunpack.c.l.b16 %v1076
    %v2122 = vunpack.c.h.b16 %v1076
    %v2123 = vunpack.c.l.b16 %v1077
    %v2124 = vunpack.c.h.b16 %v1077
    %v2125 = vunpack.c.l.b16 %v1078
    %v2126 = vunpack.c.h.b16 %v1078
    %v2127 = vunpack.c.l.b16 %v1079
    %v2128 = vunpack.c.h.b16 %v1079
    %v2129 = vunpack.c.l.b16 %v1080
    %v2130 = vunpack.c.h.b16 %v1080
    %v2131 = vunpack.c.l.b16 %v1081
    %v2132 = vunpack.c.h.b16 %v1081
    %v2133 = vunpack.c.l.b16 %v1082
    %v2134 = vunpack.c.h.b16 %v1082
    %v2135 = vunpack.c.l.b16 %v1083
    %v2136 = vunpack.c.h.b16 %v1083
    %v2137 = vunpack.c.l.b16 %v1084
    %v2138 = vunpack.c.h.b16 %v1084
    %v2139 = vunpack.c.l.b16 %v1085
    %v2140 = vunpack.c.h.b16 %v1085
    %v2141 = vunpack.c.l.b16 %v1086
    %v2142 = vunpack.c.h.b16 %v1086
    %v2143 = vunpack.c.l.b16 %v1087
    %v2144 = vunpack.c.h.b16 %v1087
    %v2145 = vunpack.c.l.b16 %v1088
    %v2146 = vunpack.c.h.b16 %v1088
    %v2147 = vunpack.c.l.b16 %v1089
    %v2148 = vunpack.c.h.b16 %v1089
    %v2149 = vunpack.c.l.b16 %v1090
    %v2150 = vunpack.c.h.b16 %v1090
    %v2151 = vunpack.c.l.b16 %v1091
    %v2152 = vunpack.c.h.b16 %v1091
    %v2153 = vunpack.c.l.b16 %v1092
    %v2154 = vunpack.c.h.b16 %v1092
    %v2155 = vunpack.c.l.b16 %v1093
    %v2156 = vunpack.c.h.b16 %v1093
    %v2157 = vunpack.c.l.b16 %v1094
    %v2158 = vunpack.c.h.b16 %v1094
    %v2159 = vunpack.c.l.b16 %v1095
    %v2160 = vunpack.c.h.b16 %v1095
    %v2161 = vunpack.c.l.b16 %v1096
    %v2162 = vunpack.c.h.b16 %v1096
    %v2163 = vunpack.c.l.b16 %v1097
    %v2164 = vunpack.c.h.b16 %v1097
    %v2165 = vunpack.c.l.b16 %v1098
    %v2166 = vunpack.c.h.b16 %v1098
    %v2167 = vunpack.c.l.b16 %v1099
    %v2168 = vunpack.c.h.b16 %v1099
    %v2169 = vunpack.c.l.b16 %v1100
    %v2170 = vunpack.c.h.b16 %v1100
    %v2171 = vunpack.c.l.b16 %v1101
    %v2172 = vunpack.c.h.b16 %v1101
    %v2173 = vunpack.c.l.b16 %v1102
    %v2174 = vunpack.c.h.b16 %v1102
    %v2175 = vunpack.c.l.b16 %v1103
    %v2176 = vunpack.c.h.b16 %v1103
    %v2177 = vunpack.c.l.b16 %v1104
    %v2178 = vunpack.c.h.b16 %v1104
    %v2179 = vunpack.c.l.b16 %v1105
    %v2180 = vunpack.c.h.b16 %v1105
    %v2181 = vunpack.c.l.b16 %v1106
    %v2182 = vunpack.c.h.b16 %v1106
    %v2183 = vunpack.c.l.b16 %v1107
    %v2184 = vunpack.c.h.b16 %v1107
    %v2185 = vunpack.c.l.b16 %v1108
    %v2186 = vunpack.c.h.b16 %v1108
    %v2187 = vunpack.c.l.b16 %v1109
    %v2188 = vunpack.c.h.b16 %v1109
    %v2189 = vunpack.c.l.b16 %v1110
    %v2190 = vunpack.c.h.b16 %v1110
    %v2191 = vunpack.c.l.b16 %v1111
    %v2192 = vunpack.c.h.b16 %v1111
    %v2193 = vunpack.c.l.b16 %v1112
    %v2194 = vunpack.c.h.b16 %v1112
    %v2195 = vunpack.c.l.b16 %v1113
    %v2196 = vunpack.c.h.b16 %v1113
    %v2197 = vunpack.c.l.b16 %v1114
    %v2198 = vunpack.c.h.b16 %v1114
    %v2199 = vunpack.c.l.b16 %v1115
    %v2200 = vunpack.c.h.b16 %v1115
    %v2201 = vunpack.c.l.b16 %v1116
    %v2202 = vunpack.c.h.b16 %v1116
    %v2203 = vunpack.c.l.b16 %v1117
    %v2204 = vunpack.c.h.b16 %v1117
    %v2205 = vunpack.c.l.b16 %v1118
    %v2206 = vunpack.c.h.b16 %v1118
    %v2207 = vunpack.c.l.b16 %v1119
    %v2208 = vunpack.c.h.b16 %v1119
    %v2209 = vunpack.c.l.b16 %v1120
    %v2210 = vunpack.c.h.b16 %v1120
    %v2211 = vunpack.c.l.b16 %v1121
    %v2212 = vunpack.c.h.b16 %v1121
    %v2213 = vunpack.c.l.b16 %v1122
    %v2214 = vunpack.c.h.b16 %v1122
    %v2215 = vunpack.c.l.b16 %v1123
    %v2216 = vunpack.c.h.b16 %v1123
    %v2217 = vunpack.c.l.b16 %v1124
    %v2218 = vunpack.c.h.b16 %v1124
    %v2219 = vunpack.c.l.b16 %v1125
    %v2220 = vunpack.c.h.b16 %v1125
    %v2221 = vunpack.c.l.b16 %v1126
    %v2222 = vunpack.c.h.b16 %v1126
    %v2223 = vunpack.c.l.b16 %v1127
    %v2224 = vunpack.c.h.b16 %v1127
    %v2225 = vunpack.c.l.b16 %v1128
    %v2226 = vunpack.c.h.b16 %v1128
    %v2227 = vunpack.c.l.b16 %v1129
    %v2228 = vunpack.c.h.b16 %v1129
    %v2229 = vunpack.c.l.b16 %v1130
    %v2230 = vunpack.c.h.b16 %v1130
    %v2231 = vunpack.c.l.b16 %v1131
    %v2232 = vunpack.c.h.b16 %v1131
    %v2233 = vunpack.c.l.b16 %v1132
    %v2234 = vunpack.c.h.b16 %v1132
    %v2235 = vunpack.c.l.b16 %v1133
    %v2236 = vunpack.c.h.b16 %v1133
    %v2237 = vunpack.c.l.b16 %v1134
    %v2238 = vunpack.c.h.b16 %v1134
    %v2239 = vunpack.c.l.b16 %v1135
    %v2240 = vunpack.c.h.b16 %v1135
    %v2241 = vunpack.c.l.b16 %v1136
    %v2242 = vunpack.c.h.b16 %v1136
    %v2243 = vunpack.c.l.b16 %v1137
    %v2244 = vunpack.c.h.b16 %v1137
    %v2245 = vunpack.c.l.b16 %v1138
    %v2246 = vunpack.c.h.b16 %v1138
    %v2247 = vunpack.c.l.b16 %v1139
    %v2248 = vunpack.c.h.b16 %v1139
    %v2249 = vunpack.c.l.b16 %v1140
    %v2250 = vunpack.c.h.b16 %v1140
    %v2251 = vunpack.c.l.b16 %v1141
    %v2252 = vunpack.c.h.b16 %v1141
    %v2253 = vunpack.c.l.b16 %v1142
    %v2254 = vunpack.c.h.b16 %v1142
    %v2255 = vunpack.c.l.b16 %v1143
    %v2256 = vunpack.c.h.b16 %v1143
    %v2257 = vunpack.c.l.b16 %v1144
    %v2258 = vunpack.c.h.b16 %v1144
    %v2259 = vunpack.c.l.b16 %v1145
    %v2260 = vunpack.c.h.b16 %v1145
    %v2261 = vunpack.c.l.b16 %v1146
    %v2262 = vunpack.c.h.b16 %v1146
    %v2263 = vunpack.c.l.b16 %v1147
    %v2264 = vunpack.c.h.b16 %v1147
    %v2265 = vunpack.c.l.b16 %v1148
    %v2266 = vunpack.c.h.b16 %v1148
    %v2267 = vunpack.c.l.b16 %v1149
    %v2268 = vunpack.c.h.b16 %v1149
    %v2269 = vunpack.c.l.b16 %v1150
    %v2270 = vunpack.c.h.b16 %v1150
    %v2271 = vunpack.c.l.b16 %v1151
    %v2272 = vunpack.c.h.b16 %v1151
    %v2273 = vunpack.c.l.b16 %v1152
    %v2274 = vunpack.c.h.b16 %v1152
    %v2275 = vunpack.c.l.b16 %v1153
    %v2276 = vunpack.c.h.b16 %v1153
    %v2277 = vunpack.c.l.b16 %v1154
    %v2278 = vunpack.c.h.b16 %v1154
    %v2279 = vunpack.c.l.b16 %v1155
    %v2280 = vunpack.c.h.b16 %v1155
    %v2281 = vunpack.c.l.b16 %v1156
    %v2282 = vunpack.c.h.b16 %v1156
    %v2283 = vunpack.c.l.b16 %v1157
    %v2284 = vunpack.c.h.b16 %v1157
    %v2285 = vunpack.c.l.b16 %v1158
    %v2286 = vunpack.c.h.b16 %v1158
    %v2287 = vunpack.c.l.b16 %v1159
    %v2288 = vunpack.c.h.b16 %v1159
    %v2289 = vunpack.c.l.b16 %v1160
    %v2290 = vunpack.c.h.b16 %v1160
    %v2291 = vunpack.c.l.b16 %v1161
    %v2292 = vunpack.c.h.b16 %v1161
    %v2293 = vunpack.c.l.b16 %v1162
    %v2294 = vunpack.c.h.b16 %v1162
    %v2295 = vunpack.c.l.b16 %v1163
    %v2296 = vunpack.c.h.b16 %v1163
    %v2297 = vunpack.c.l.b16 %v1164
    %v2298 = vunpack.c.h.b16 %v1164
    %v2299 = vunpack.c.l.b16 %v1165
    %v2300 = vunpack.c.h.b16 %v1165
    %v2301 = vunpack.c.l.b16 %v1166
    %v2302 = vunpack.c.h.b16 %v1166
    %v2303 = vunpack.c.l.b16 %v1167
    %v2304 = vunpack.c.h.b16 %v1167
    %v2305 = vunpack.c.l.b16 %v1168
    %v2306 = vunpack.c.h.b16 %v1168
    %v2307 = vunpack.c.l.b16 %v1169
    %v2308 = vunpack.c.h.b16 %v1169
    %v2309 = vunpack.c.l.b16 %v1170
    %v2310 = vunpack.c.h.b16 %v1170
    %v2311 = vunpack.c.l.b16 %v1171
    %v2312 = vunpack.c.h.b16 %v1171
    %v2313 = vunpack.c.l.b16 %v1172
    %v2314 = vunpack.c.h.b16 %v1172
    %v2315 = vunpack.c.l.b16 %v1173
    %v2316 = vunpack.c.h.b16 %v1173
    %v2317 = vunpack.c.l.b16 %v1174
    %v2318 = vunpack.c.h.b16 %v1174
    %v2319 = vunpack.c.l.b16 %v1175
    %v2320 = vunpack.c.h.b16 %v1175
    %v2321 = vunpack.c.l.b16 %v1176
    %v2322 = vunpack.c.h.b16 %v1176
    %v2323 = vunpack.c.l.b16 %v1177
    %v2324 = vunpack.c.h.b16 %v1177
    %v2325 = vunpack.c.l.b16 %v1178
    %v2326 = vunpack.c.h.b16 %v1178
    %v2327 = vunpack.c.l.b16 %v1179
    %v2328 = vunpack.c.h.b16 %v1179
    %v2329 = vunpack.c.l.b16 %v1180
    %v2330 = vunpack.c.h.b16 %v1180
    %v2331 = vunpack.c.l.b16 %v1181
    %v2332 = vunpack.c.h.b16 %v1181
    %v2333 = vunpack.c.l.b16 %v1182
    %v2334 = vunpack.c.h.b16 %v1182
    %v2335 = vunpack.c.l.b16 %v1183
    %v2336 = vunpack.c.h.b16 %v1183
    %v2337 = vunpack.c.l.b16 %v1184
    %v2338 = vunpack.c.h.b16 %v1184
    %v2339 = vunpack.c.l.b16 %v1185
    %v2340 = vunpack.c.h.b16 %v1185
    %v2341 = vunpack.c.l.b16 %v1186
    %v2342 = vunpack.c.h.b16 %v1186
    %v2343 = vunpack.c.l.b16 %v1187
    %v2344 = vunpack.c.h.b16 %v1187
    %v2345 = vunpack.c.l.b16 %v1188
    %v2346 = vunpack.c.h.b16 %v1188
    %v2347 = vunpack.c.l.b16 %v1189
    %v2348 = vunpack.c.h.b16 %v1189
    %v2349 = vunpack.c.l.b16 %v1190
    %v2350 = vunpack.c.h.b16 %v1190
    %v2351 = vunpack.c.l.b16 %v1191
    %v2352 = vunpack.c.h.b16 %v1191
    %v2353 = vunpack.c.l.b16 %v1192
    %v2354 = vunpack.c.h.b16 %v1192
    %v2355 = vunpack.c.l.b16 %v1193
    %v2356 = vunpack.c.h.b16 %v1193
    %v2357 = vunpack.c.l.b16 %v1194
    %v2358 = vunpack.c.h.b16 %v1194
    %v2359 = vunpack.c.l.b16 %v1195
    %v2360 = vunpack.c.h.b16 %v1195
    %v2361 = vunpack.c.l.b16 %v1196
    %v2362 = vunpack.c.h.b16 %v1196
    %v2363 = vunpack.c.l.b16 %v1197
    %v2364 = vunpack.c.h.b16 %v1197
    %v2365 = vunpack.c.l.b16 %v1198
    %v2366 = vunpack.c.h.b16 %v1198
    %v2367 = vunpack.c.l.b16 %v1199
    %v2368 = vunpack.c.h.b16 %v1199
    %v2369 = vunpack.c.l.b16 %v1200
    %v2370 = vunpack.c.h.b16 %v1200
    %v2371 = vunpack.c.l.b16 %v1201
    %v2372 = vunpack.c.h.b16 %v1201
    %v2373 = vunpack.c.l.b16 %v1202
    %v2374 = vunpack.c.h.b16 %v1202
    %v2375 = vunpack.c.l.b16 %v1203
    %v2376 = vunpack.c.h.b16 %v1203
    %v2377 = vunpack.c.l.b16 %v1204
    %v2378 = vunpack.c.h.b16 %v1204
    %v2379 = vunpack.c.l.b16 %v1205
    %v2380 = vunpack.c.h.b16 %v1205
    %v2381 = vunpack.c.l.b16 %v1206
    %v2382 = vunpack.c.h.b16 %v1206
    %v2383 = vunpack.c.l.b16 %v1207
    %v2384 = vunpack.c.h.b16 %v1207
    %v2385 = vunpack.c.l.b16 %v1208
    %v2386 = vunpack.c.h.b16 %v1208
    %v2387 = vunpack.c.l.b16 %v1209
    %v2388 = vunpack.c.h.b16 %v1209
    %v2389 = vunpack.c.l.b16 %v1210
    %v2390 = vunpack.c.h.b16 %v1210
    %v2391 = vunpack.c.l.b16 %v1211
    %v2392 = vunpack.c.h.b16 %v1211
    %v2393 = vunpack.c.l.b16 %v1212
    %v2394 = vunpack.c.h.b16 %v1212
    %v2395 = vunpack.c.l.b16 %v1213
    %v2396 = vunpack.c.h.b16 %v1213
    %v2397 = vunpack.c.l.b16 %v1214
    %v2398 = vunpack.c.h.b16 %v1214
    %v2399 = vunpack.c.l.b16 %v1215
    %v2400 = vunpack.c.h.b16 %v1215
    %v2401 = vunpack.c.l.b16 %v1216
    %v2402 = vunpack.c.h.b16 %v1216
    %v2403 = vunpack.c.l.b16 %v1217
    %v2404 = vunpack.c.h.b16 %v1217
    %v2405 = vunpack.c.l.b16 %v1218
    %v2406 = vunpack.c.h.b16 %v1218
    %v2407 = vunpack.c.l.b16 %v1219
    %v2408 = vunpack.c.h.b16 %v1219
    %v2409 = vunpack.c.l.b16 %v1220
    %v2410 = vunpack.c.h.b16 %v1220
    %v2411 = vunpack.c.l.b16 %v1221
    %v2412 = vunpack.c.h.b16 %v1221
    %v2413 = vunpack.c.l.b16 %v1222
    %v2414 = vunpack.c.h.b16 %v1222
    %v2415 = vunpack.c.l.b16 %v1223
    %v2416 = vunpack.c.h.b16 %v1223
    %v2417 = vunpack.c.l.b16 %v1224
    %v2418 = vunpack.c.h.b16 %v1224
    %v2419 = vunpack.c.l.b16 %v1225
    %v2420 = vunpack.c.h.b16 %v1225
    %v2421 = vunpack.c.l.b16 %v1226
    %v2422 = vunpack.c.h.b16 %v1226
    %v2423 = vunpack.c.l.b16 %v1227
    %v2424 = vunpack.c.h.b16 %v1227
    %v2425 = vunpack.c.l.b16 %v1228
    %v2426 = vunpack.c.h.b16 %v1228
    %v2427 = vunpack.c.l.b16 %v1229
    %v2428 = vunpack.c.h.b16 %v1229
    %v2429 = vunpack.c.l.b16 %v1230
    %v2430 = vunpack.c.h.b16 %v1230
    %v2431 = vunpack.c.l.b16 %v1231
    %v2432 = vunpack.c.h.b16 %v1231
    %v2433 = vunpack.c.l.b16 %v1232
    %v2434 = vunpack.c.h.b16 %v1232
    %v2435 = vunpack.c.l.b16 %v1233
    %v2436 = vunpack.c.h.b16 %v1233
    %v2437 = vunpack.c.l.b16 %v1234
    %v2438 = vunpack.c.h.b16 %v1234
    %v2439 = vunpack.c.l.b16 %v1235
    %v2440 = vunpack.c.h.b16 %v1235
    %v2441 = vunpack.c.l.b16 %v1236
    %v2442 = vunpack.c.h.b16 %v1236
    %v2443 = vunpack.c.l.b16 %v1237
    %v2444 = vunpack.c.h.b16 %v1237
    %v2445 = vunpack.c.l.b16 %v1238
    %v2446 = vunpack.c.h.b16 %v1238
    %v2447 = vunpack.c.l.b16 %v1239
    %v2448 = vunpack.c.h.b16 %v1239
    %v2449 = vunpack.c.l.b16 %v1240
    %v2450 = vunpack.c.h.b16 %v1240
    %v2451 = vunpack.c.l.b16 %v1241
    %v2452 = vunpack.c.h.b16 %v1241
    %v2453 = vunpack.c.l.b16 %v1242
    %v2454 = vunpack.c.h.b16 %v1242
    %v2455 = vunpack.c.l.b16 %v1243
    %v2456 = vunpack.c.h.b16 %v1243
    %v2457 = vunpack.c.l.b16 %v1244
    %v2458 = vunpack.c.h.b16 %v1244
    %v2459 = vunpack.c.l.b16 %v1245
    %v2460 = vunpack.c.h.b16 %v1245
    %v2461 = vunpack.c.l.b16 %v1246
    %v2462 = vunpack.c.h.b16 %v1246
    %v2463 = vunpack.c.l.b16 %v1247
    %v2464 = vunpack.c.h.b16 %v1247
    %v2465 = vunpack.c.l.b16 %v1248
    %v2466 = vunpack.c.h.b16 %v1248
    %v2467 = vunpack.c.l.b16 %v1249
    %v2468 = vunpack.c.h.b16 %v1249
    %v2469 = vunpack.c.l.b16 %v1250
    %v2470 = vunpack.c.h.b16 %v1250
    %v2471 = vunpack.c.l.b16 %v1251
    %v2472 = vunpack.c.h.b16 %v1251
    %v2473 = vunpack.c.l.b16 %v1252
    %v2474 = vunpack.c.h.b16 %v1252
    %v2475 = vunpack.c.l.b16 %v1253
    %v2476 = vunpack.c.h.b16 %v1253
    %v2477 = vunpack.c.l.b16 %v1254
    %v2478 = vunpack.c.h.b16 %v1254
    %v2479 = vunpack.c.l.b16 %v1255
    %v2480 = vunpack.c.h.b16 %v1255
    %v2481 = vunpack.c.l.b16 %v1256
    %v2482 = vunpack.c.h.b16 %v1256
    %v2483 = vunpack.c.l.b16 %v1257
    %v2484 = vunpack.c.h.b16 %v1257
    %v2485 = vunpack.c.l.b16 %v1258
    %v2486 = vunpack.c.h.b16 %v1258
    %v2487 = vunpack.c.l.b16 %v1259
    %v2488 = vunpack.c.h.b16 %v1259
    %v2489 = vunpack.c.l.b16 %v1260
    %v2490 = vunpack.c.h.b16 %v1260
    %v2491 = vunpack.c.l.b16 %v1261
    %v2492 = vunpack.c.h.b16 %v1261
    %v2493 = vunpack.c.l.b16 %v1262
    %v2494 = vunpack.c.h.b16 %v1262
    %v2495 = vunpack.c.l.b16 %v1263
    %v2496 = vunpack.c.h.b16 %v1263
    %v2497 = vunpack.c.l.b16 %v1264
    %v2498 = vunpack.c.h.b16 %v1264
    %v2499 = vunpack.c.l.b16 %v1265
    %v2500 = vunpack.c.h.b16 %v1265
    %v2501 = vunpack.c.l.b16 %v1266
    %v2502 = vunpack.c.h.b16 %v1266
    %v2503 = vunpack.c.l.b16 %v1267
    %v2504 = vunpack.c.h.b16 %v1267
    %v2505 = vunpack.c.l.b16 %v1268
    %v2506 = vunpack.c.h.b16 %v1268
    %v2507 = vunpack.c.l.b16 %v1269
    %v2508 = vunpack.c.h.b16 %v1269
    %v2509 = vunpack.c.l.b16 %v1270
    %v2510 = vunpack.c.h.b16 %v1270
    %v2511 = vunpack.c.l.b16 %v1271
    %v2512 = vunpack.c.h.b16 %v1271
    %v2513 = vunpack.c.l.b16 %v1272
    %v2514 = vunpack.c.h.b16 %v1272
    %v2515 = vunpack.c.l.b16 %v1273
    %v2516 = vunpack.c.h.b16 %v1273
    %v2517 = vunpack.c.l.b16 %v1274
    %v2518 = vunpack.c.h.b16 %v1274
    %v2519 = vunpack.c.l.b16 %v1275
    %v2520 = vunpack.c.h.b16 %v1275
    %v2521 = vunpack.c.l.b16 %v1276
    %v2522 = vunpack.c.h.b16 %v1276
    %v2523 = vunpack.c.l.b16 %v1277
    %v2524 = vunpack.c.h.b16 %v1277
    %v2525 = vunpack.c.l.b16 %v1278
    %v2526 = vunpack.c.h.b16 %v1278
    %v2527 = vunpack.c.l.b16 %v1279
    %v2528 = vunpack.c.h.b16 %v1279
    %v2529 = vunpack.c.l.b16 %v1280
    %v2530 = vunpack.c.h.b16 %v1280
    %v2531 = vunpack.c.l.b16 %v1281
    %v2532 = vunpack.c.h.b16 %v1281
    %v2533 = vunpack.c.l.b16 %v1282
    %v2534 = vunpack.c.h.b16 %v1282
    %v2535 = vunpack.c.l.b16 %v1283
    %v2536 = vunpack.c.h.b16 %v1283
    %v2537 = vunpack.c.l.b16 %v1284
    %v2538 = vunpack.c.h.b16 %v1284
    %v2539 = vunpack.c.l.b16 %v1285
    %v2540 = vunpack.c.h.b16 %v1285
    %v2541 = vunpack.c.l.b16 %v1286
    %v2542 = vunpack.c.h.b16 %v1286
    %v2543 = vunpack.c.l.b16 %v1287
    %v2544 = vunpack.c.h.b16 %v1287
    %v2545 = vunpack.c.l.b16 %v1288
    %v2546 = vunpack.c.h.b16 %v1288
    %v2547 = vunpack.c.l.b16 %v1289
    %v2548 = vunpack.c.h.b16 %v1289
    %v2549 = vunpack.c.l.b16 %v1290
    %v2550 = vunpack.c.h.b16 %v1290
    %v2551 = vunpack.c.l.b16 %v1291
    %v2552 = vunpack.c.h.b16 %v1291
    %v2553 = vunpack.c.l.b16 %v1292
    %v2554 = vunpack.c.h.b16 %v1292
    %v2555 = vunpack.c.l.b16 %v1293
    %v2556 = vunpack.c.h.b16 %v1293
    %v2557 = vunpack.c.l.b16 %v1294
    %v2558 = vunpack.c.h.b16 %v1294
    %v2559 = vunpack.c.l.b16 %v1295
    %v2560 = vunpack.c.h.b16 %v1295
    %v2561 = vunpack.c.l.b16 %v1296
    %v2562 = vunpack.c.h.b16 %v1296
    %v2563 = vunpack.c.l.b16 %v1297
    %v2564 = vunpack.c.h.b16 %v1297
    %v2565 = vunpack.c.l.b16 %v1298
    %v2566 = vunpack.c.h.b16 %v1298
    %v2567 = vunpack.c.l.b16 %v1299
    %v2568 = vunpack.c.h.b16 %v1299
    %v2569 = vunpack.c.l.b16 %v1300
    %v2570 = vunpack.c.h.b16 %v1300
    %v2571 = vunpack.c.l.b16 %v1301
    %v2572 = vunpack.c.h.b16 %v1301
    %v2573 = vunpack.c.l.b16 %v1302
    %v2574 = vunpack.c.h.b16 %v1302
    %v2575 = vunpack.c.l.b16 %v1303
    %v2576 = vunpack.c.h.b16 %v1303
    %v2577 = vunpack.c.l.b16 %v1304
    %v2578 = vunpack.c.h.b16 %v1304
    %v2579 = vunpack.c.l.b16 %v1305
    %v2580 = vunpack.c.h.b16 %v1305
    %v2581 = vunpack.c.l.b16 %v1306
    %v2582 = vunpack.c.h.b16 %v1306
    %v2583 = vunpack.c.l.b16 %v1307
    %v2584 = vunpack.c.h.b16 %v1307
    %v2585 = vunpack.c.l.b16 %v1308
    %v2586 = vunpack.c.h.b16 %v1308
    %v2587 = vunpack.c.l.b16 %v1309
    %v2588 = vunpack.c.h.b16 %v1309
    %v2589 = vunpack.c.l.b16 %v1310
    %v2590 = vunpack.c.h.b16 %v1310
    %v2591 = vunpack.c.l.b16 %v1311
    %v2592 = vunpack.c.h.b16 %v1311
    %v2593 = vunpack.c.l.b16 %v1312
    %v2594 = vunpack.c.h.b16 %v1312
    %v2595 = vunpack.c.l.b16 %v1313
    %v2596 = vunpack.c.h.b16 %v1313
    %v2597 = vunpack.c.l.b16 %v1314
    %v2598 = vunpack.c.h.b16 %v1314
    %v2599 = vunpack.c.l.b16 %v1315
    %v2600 = vunpack.c.h.b16 %v1315
    %v2601 = vunpack.c.l.b16 %v1316
    %v2602 = vunpack.c.h.b16 %v1316
    %v2603 = vunpack.c.l.b16 %v1317
    %v2604 = vunpack.c.h.b16 %v1317
    %v2605 = vunpack.c.l.b16 %v1318
    %v2606 = vunpack.c.h.b16 %v1318
    %v2607 = vunpack.c.l.b16 %v1319
    %v2608 = vunpack.c.h.b16 %v1319
    %v2609 = vunpack.c.l.b16 %v1320
    %v2610 = vunpack.c.h.b16 %v1320
    %v2611 = vunpack.c.l.b16 %v1321
    %v2612 = vunpack.c.h.b16 %v1321
    %v2613 = vunpack.c.l.b16 %v1322
    %v2614 = vunpack.c.h.b16 %v1322
    %v2615 = vunpack.c.l.b16 %v1323
    %v2616 = vunpack.c.h.b16 %v1323
    %v2617 = vunpack.c.l.b16 %v1324
    %v2618 = vunpack.c.h.b16 %v1324
    %v2619 = vunpack.c.l.b16 %v1325
    %v2620 = vunpack.c.h.b16 %v1325
    %v2621 = vunpack.c.l.b16 %v1326
    %v2622 = vunpack.c.h.b16 %v1326
    %v2623 = vunpack.c.l.b16 %v1327
    %v2624 = vunpack.c.h.b16 %v1327
    %v2625 = vunpack.c.l.b16 %v1328
    %v2626 = vunpack.c.h.b16 %v1328
    %v2627 = vunpack.c.l.b16 %v1329
    %v2628 = vunpack.c.h.b16 %v1329
    %v2629 = vunpack.c.l.b16 %v1330
    %v2630 = vunpack.c.h.b16 %v1330
    %v2631 = vunpack.c.l.b16 %v1331
    %v2632 = vunpack.c.h.b16 %v1331
    %v2633 = vunpack.c.l.b16 %v1332
    %v2634 = vunpack.c.h.b16 %v1332
    %v2635 = vunpack.c.l.b16 %v1333
    %v2636 = vunpack.c.h.b16 %v1333
    %v2637 = vunpack.c.l.b16 %v1334
    %v2638 = vunpack.c.h.b16 %v1334
    %v2639 = vunpack.c.l.b16 %v1335
    %v2640 = vunpack.c.h.b16 %v1335
    %v2641 = vunpack.c.l.b16 %v1336
    %v2642 = vunpack.c.h.b16 %v1336
    %v2643 = vunpack.c.l.b16 %v1337
    %v2644 = vunpack.c.h.b16 %v1337
    %v2645 = vunpack.c.l.b16 %v1338
    %v2646 = vunpack.c.h.b16 %v1338
    %v2647 = vunpack.c.l.b16 %v1339
    %v2648 = vunpack.c.h.b16 %v1339
    %v2649 = vunpack.c.l.b16 %v1340
    %v2650 = vunpack.c.h.b16 %v1340
    %v2651 = vunpack.c.l.b16 %v1341
    %v2652 = vunpack.c.h.b16 %v1341
    %v2653 = vunpack.c.l.b16 %v1342
    %v2654 = vunpack.c.h.b16 %v1342
    %v2655 = vunpack.c.l.b16 %v1343
    %v2656 = vunpack.c.h.b16 %v1343
    %v2657 = vunpack.c.l.b16 %v1344
    %v2658 = vunpack.c.h.b16 %v1344
    %v2659 = vunpack.c.l.b16 %v1345
    %v2660 = vunpack.c.h.b16 %v1345
    %v2661 = vunpack.c.l.b16 %v1346
    %v2662 = vunpack.c.h.b16 %v1346
    %v2663 = vunpack.c.l.b16 %v1347
    %v2664 = vunpack.c.h.b16 %v1347
    %v2665 = vunpack.c.l.b16 %v1348
    %v2666 = vunpack.c.h.b16 %v1348
    %v2667 = vunpack.c.l.b16 %v1349
    %v2668 = vunpack.c.h.b16 %v1349
    %v2669 = vunpack.c.l.b16 %v1350
    %v2670 = vunpack.c.h.b16 %v1350
    %v2671 = vunpack.c.l.b16 %v1351
    %v2672 = vunpack.c.h.b16 %v1351
    %v2673 = vunpack.c.l.b16 %v1352
    %v2674 = vunpack.c.h.b16 %v1352
    %v2675 = vunpack.c.l.b16 %v1353
    %v2676 = vunpack.c.h.b16 %v1353
    %v2677 = vunpack.c.l.b16 %v1354
    %v2678 = vunpack.c.h.b16 %v1354
    %v2679 = vunpack.c.l.b16 %v1355
    %v2680 = vunpack.c.h.b16 %v1355
    %v2681 = vunpack.c.l.b16 %v1356
    %v2682 = vunpack.c.h.b16 %v1356
    %v2683 = vunpack.c.l.b16 %v1357
    %v2684 = vunpack.c.h.b16 %v1357
    %v2685 = vunpack.c.l.b16 %v1358
    %v2686 = vunpack.c.h.b16 %v1358
    %v2687 = vunpack.c.l.b16 %v1359
    %v2688 = vunpack.c.h.b16 %v1359
    %v2689 = vunpack.c.l.b16 %v1360
    %v2690 = vunpack.c.h.b16 %v1360
    %v2691 = vunpack.c.l.b16 %v1361
    %v2692 = vunpack.c.h.b16 %v1361
    %v2693 = vunpack.c.l.b16 %v1362
    %v2694 = vunpack.c.h.b16 %v1362
    %v2695 = vunpack.c.l.b16 %v1363
    %v2696 = vunpack.c.h.b16 %v1363
    %v2697 = vunpack.c.l.b16 %v1364
    %v2698 = vunpack.c.h.b16 %v1364
    %v2699 = vunpack.c.l.b16 %v1365
    %v2700 = vunpack.c.h.b16 %v1365
    %v2701 = vunpack.c.l.b16 %v1366
    %v2702 = vunpack.c.h.b16 %v1366
    %v2703 = vunpack.c.l.b16 %v1367
    %v2704 = vunpack.c.h.b16 %v1367
    %v2705 = vunpack.c.l.b16 %v1368
    %v2706 = vunpack.c.h.b16 %v1368
    %v2707 = vunpack.c.l.b16 %v1369
    %v2708 = vunpack.c.h.b16 %v1369
    %v2709 = vunpack.c.l.b16 %v1370
    %v2710 = vunpack.c.h.b16 %v1370
    %v2711 = vunpack.c.l.b16 %v1371
    %v2712 = vunpack.c.h.b16 %v1371
    %v2713 = vunpack.c.l.b16 %v1372
    %v2714 = vunpack.c.h.b16 %v1372
    %v2715 = vunpack.c.l.b16 %v1373
    %v2716 = vunpack.c.h.b16 %v1373
    %v2717 = vunpack.c.l.b16 %v1374
    %v2718 = vunpack.c.h.b16 %v1374
    %v2719 = vunpack.c.l.b16 %v1375
    %v2720 = vunpack.c.h.b16 %v1375
    %v2721 = vunpack.c.l.b16 %v1376
    %v2722 = vunpack.c.h.b16 %v1376
    %v2723 = vunpack.c.l.b16 %v1377
    %v2724 = vunpack.c.h.b16 %v1377
    %v2725 = vunpack.c.l.b16 %v1378
    %v2726 = vunpack.c.h.b16 %v1378
    %v2727 = vunpack.c.l.b16 %v1379
    %v2728 = vunpack.c.h.b16 %v1379
    %v2729 = vunpack.c.l.b16 %v1380
    %v2730 = vunpack.c.h.b16 %v1380
    %v2731 = vunpack.c.l.b16 %v1381
    %v2732 = vunpack.c.h.b16 %v1381
    %v2733 = vunpack.c.l.b16 %v1382
    %v2734 = vunpack.c.h.b16 %v1382
    %v2735 = vunpack.c.l.b16 %v1383
    %v2736 = vunpack.c.h.b16 %v1383
    %v2737 = vunpack.c.l.b16 %v1384
    %v2738 = vunpack.c.h.b16 %v1384
    %v2739 = vunpack.c.l.b16 %v1385
    %v2740 = vunpack.c.h.b16 %v1385
    %v2741 = vunpack.c.l.b16 %v1386
    %v2742 = vunpack.c.h.b16 %v1386
    %v2743 = vunpack.c.l.b16 %v1387
    %v2744 = vunpack.c.h.b16 %v1387
    %v2745 = vunpack.c.l.b16 %v1388
    %v2746 = vunpack.c.h.b16 %v1388
    %v2747 = vunpack.c.l.b16 %v1389
    %v2748 = vunpack.c.h.b16 %v1389
    %v2749 = vunpack.c.l.b16 %v1390
    %v2750 = vunpack.c.h.b16 %v1390
    %v2751 = vunpack.c.l.b16 %v1391
    %v2752 = vunpack.c.h.b16 %v1391
    %v2753 = vunpack.c.l.b16 %v1392
    %v2754 = vunpack.c.h.b16 %v1392
    %v2755 = vunpack.c.l.b16 %v1393
    %v2756 = vunpack.c.h.b16 %v1393
    %v2757 = vunpack.c.l.b16 %v1394
    %v2758 = vunpack.c.h.b16 %v1394
    %v2759 = vunpack.c.l.b16 %v1395
    %v2760 = vunpack.c.h.b16 %v1395
    %v2761 = vunpack.c.l.b16 %v1396
    %v2762 = vunpack.c.h.b16 %v1396
    %v2763 = vunpack.c.l.b16 %v1397
    %v2764 = vunpack.c.h.b16 %v1397
    %v2765 = vunpack.c.l.b16 %v1398
    %v2766 = vunpack.c.h.b16 %v1398
    %v2767 = vunpack.c.l.b16 %v1399
    %v2768 = vunpack.c.h.b16 %v1399
    %v2769 = vunpack.c.l.b16 %v1400
    %v2770 = vunpack.c.h.b16 %v1400
    %v2771 = vunpack.c.l.b16 %v1401
    %v2772 = vunpack.c.h.b16 %v1401
    %v2773 = vunpack.c.l.b16 %v1402
    %v2774 = vunpack.c.h.b16 %v1402
    %v2775 = vunpack.c.l.b16 %v1403
    %v2776 = vunpack.c.h.b16 %v1403
    %v2777 = vunpack.c.l.b16 %v1404
    %v2778 = vunpack.c.h.b16 %v1404
    %v2779 = vunpack.c.l.b16 %v1405
    %v2780 = vunpack.c.h.b16 %v1405
    %v2781 = vunpack.c.l.b16 %v1406
    %v2782 = vunpack.c.h.b16 %v1406
    %v2783 = vunpack.c.l.b16 %v1407
    %v2784 = vunpack.c.h.b16 %v1407
    %v2785 = vunpack.c.l.b16 %v1408
    %v2786 = vunpack.c.h.b16 %v1408
    %v2787 = vunpack.c.l.b16 %v1409
    %v2788 = vunpack.c.h.b16 %v1409
    %v2789 = vunpack.c.l.b16 %v1410
    %v2790 = vunpack.c.h.b16 %v1410
    %v2791 = vunpack.c.l.b16 %v1411
    %v2792 = vunpack.c.h.b16 %v1411
    %v2793 = vunpack.c.l.b16 %v1412
    %v2794 = vunpack.c.h.b16 %v1412
    %v2795 = vunpack.c.l.b16 %v1413
    %v2796 = vunpack.c.h.b16 %v1413
    %v2797 = vunpack.c.l.b16 %v1414
    %v2798 = vunpack.c.h.b16 %v1414
    %v2799 = vunpack.c.l.b16 %v1415
    %v2800 = vunpack.c.h.b16 %v1415
    %v2801 = vunpack.c.l.b16 %v1416
    %v2802 = vunpack.c.h.b16 %v1416
    %v2803 = vunpack.c.l.b16 %v1417
    %v2804 = vunpack.c.h.b16 %v1417
    %v2805 = vunpack.c.l.b16 %v1418
    %v2806 = vunpack.c.h.b16 %v1418
    %v2807 = vunpack.c.l.b16 %v1419
    %v2808 = vunpack.c.h.b16 %v1419
    %v2809 = vunpack.c.l.b16 %v1420
    %v2810 = vunpack.c.h.b16 %v1420
    %v2811 = vunpack.c.l.b16 %v1421
    %v2812 = vunpack.c.h.b16 %v1421
    %v2813 = vunpack.c.l.b16 %v1422
    %v2814 = vunpack.c.h.b16 %v1422
    %v2815 = vunpack.c.l.b16 %v1423
    %v2816 = vunpack.c.h.b16 %v1423
    %v2817 = vunpack.c.l.b16 %v1424
    %v2818 = vunpack.c.h.b16 %v1424
    %v2819 = vunpack.c.l.b16 %v1425
    %v2820 = vunpack.c.h.b16 %v1425
    %v2821 = vunpack.c.l.b16 %v1426
    %v2822 = vunpack.c.h.b16 %v1426
    %v2823 = vunpack.c.l.b16 %v1427
    %v2824 = vunpack.c.h.b16 %v1427
    %v2825 = vunpack.c.l.b16 %v1428
    %v2826 = vunpack.c.h.b16 %v1428
    %v2827 = vunpack.c.l.b16 %v1429
    %v2828 = vunpack.c.h.b16 %v1429
    %v2829 = vunpack.c.l.b16 %v1430
    %v2830 = vunpack.c.h.b16 %v1430
    %v2831 = vunpack.c.l.b16 %v1431
    %v2832 = vunpack.c.h.b16 %v1431
    %v2833 = vunpack.c.l.b16 %v1432
    %v2834 = vunpack.c.h.b16 %v1432
    %v2835 = vunpack.c.l.b16 %v1433
    %v2836 = vunpack.c.h.b16 %v1433
    %v2837 = vunpack.c.l.b16 %v1434
    %v2838 = vunpack.c.h.b16 %v1434
    %v2839 = vunpack.c.l.b16 %v1435
    %v2840 = vunpack.c.h.b16 %v1435
    %v2841 = vunpack.c.l.b16 %v1436
    %v2842 = vunpack.c.h.b16 %v1436
    %v2843 = vunpack.c.l.b16 %v1437
    %v2844 = vunpack.c.h.b16 %v1437
    %v2845 = vunpack.c.l.b16 %v1438
    %v2846 = vunpack.c.h.b16 %v1438
    %v2847 = vunpack.c.l.b16 %v1439
    %v2848 = vunpack.c.h.b16 %v1439
    %v2849 = vunpack.c.l.b16 %v1440
    %v2850 = vunpack.c.h.b16 %v1440
    %v2851 = vunpack.c.l.b16 %v1441
    %v2852 = vunpack.c.h.b16 %v1441
    %v2853 = vunpack.c.l.b16 %v1442
    %v2854 = vunpack.c.h.b16 %v1442
    %v2855 = vunpack.c.l.b16 %v1443
    %v2856 = vunpack.c.h.b16 %v1443
    %v2857 = vunpack.c.l.b16 %v1444
    %v2858 = vunpack.c.h.b16 %v1444
    %v2859 = vunpack.c.l.b16 %v1445
    %v2860 = vunpack.c.h.b16 %v1445
    %v2861 = vunpack.c.l.b16 %v1446
    %v2862 = vunpack.c.h.b16 %v1446
    %v2863 = vunpack.c.l.b16 %v1447
    %v2864 = vunpack.c.h.b16 %v1447
    %v2865 = vunpack.c.l.b16 %v1448
    %v2866 = vunpack.c.h.b16 %v1448
    %v2867 = vunpack.c.l.b16 %v1449
    %v2868 = vunpack.c.h.b16 %v1449
    %v2869 = vunpack.c.l.b16 %v1450
    %v2870 = vunpack.c.h.b16 %v1450
    %v2871 = vunpack.c.l.b16 %v1451
    %v2872 = vunpack.c.h.b16 %v1451
    %v2873 = vunpack.c.l.b16 %v1452
    %v2874 = vunpack.c.h.b16 %v1452
    %v2875 = vunpack.c.l.b16 %v1453
    %v2876 = vunpack.c.h.b16 %v1453
    %v2877 = vunpack.c.l.b16 %v1454
    %v2878 = vunpack.c.h.b16 %v1454
    %v2879 = vunpack.c.l.b16 %v1455
    %v2880 = vunpack.c.h.b16 %v1455
    %v2881 = vunpack.c.l.b16 %v1456
    %v2882 = vunpack.c.h.b16 %v1456
    %v2883 = vunpack.c.l.b16 %v1457
    %v2884 = vunpack.c.h.b16 %v1457
    %v2885 = vunpack.c.l.b16 %v1458
    %v2886 = vunpack.c.h.b16 %v1458
    %v2887 = vunpack.c.l.b16 %v1459
    %v2888 = vunpack.c.h.b16 %v1459
    %v2889 = vunpack.c.l.b16 %v1460
    %v2890 = vunpack.c.h.b16 %v1460
    %v2891 = vunpack.c.l.b16 %v1461
    %v2892 = vunpack.c.h.b16 %v1461
    %v2893 = vunpack.c.l.b16 %v1462
    %v2894 = vunpack.c.h.b16 %v1462
    %v2895 = vunpack.c.l.b16 %v1463
    %v2896 = vunpack.c.h.b16 %v1463
    %v2897 = vunpack.c.l.b16 %v1464
    %v2898 = vunpack.c.h.b16 %v1464
    %v2899 = vunpack.c.l.b16 %v1465
    %v2900 = vunpack.c.h.b16 %v1465
    %v2901 = vunpack.c.l.b16 %v1466
    %v2902 = vunpack.c.h.b16 %v1466
    %v2903 = vunpack.c.l.b16 %v1467
    %v2904 = vunpack.c.h.b16 %v1467
    %v2905 = vunpack.c.l.b16 %v1468
    %v2906 = vunpack.c.h.b16 %v1468
    %v2907 = vunpack.c.l.b16 %v1469
    %v2908 = vunpack.c.h.b16 %v1469
    %v2909 = vunpack.c.l.b16 %v1470
    %v2910 = vunpack.c.h.b16 %v1470
    %v2911 = vunpack.c.l.b16 %v1471
    %v2912 = vunpack.c.h.b16 %v1471
    %v2913 = vunpack.c.l.b16 %v1472
    %v2914 = vunpack.c.h.b16 %v1472
    %v2915 = vunpack.c.l.b16 %v1473
    %v2916 = vunpack.c.h.b16 %v1473
    %v2917 = vunpack.c.l.b16 %v1474
    %v2918 = vunpack.c.h.b16 %v1474
    %v2919 = vunpack.c.l.b16 %v1475
    %v2920 = vunpack.c.h.b16 %v1475
    %v2921 = vunpack.c.l.b16 %v1476
    %v2922 = vunpack.c.h.b16 %v1476
    %v2923 = vunpack.c.l.b16 %v1477
    %v2924 = vunpack.c.h.b16 %v1477
    %v2925 = vunpack.c.l.b16 %v1478
    %v2926 = vunpack.c.h.b16 %v1478
    %v2927 = vunpack.c.l.b16 %v1479
    %v2928 = vunpack.c.h.b16 %v1479
    %v2929 = vunpack.c.l.b16 %v1480
    %v2930 = vunpack.c.h.b16 %v1480
    %v2931 = vunpack.c.l.b16 %v1481
    %v2932 = vunpack.c.h.b16 %v1481
    %v2933 = vunpack.c.l.b16 %v1482
    %v2934 = vunpack.c.h.b16 %v1482
    %v2935 = vunpack.c.l.b16 %v1483
    %v2936 = vunpack.c.h.b16 %v1483
    %v2937 = vunpack.c.l.b16 %v1484
    %v2938 = vunpack.c.h.b16 %v1484
    %v2939 = vunpack.c.l.b16 %v1485
    %v2940 = vunpack.c.h.b16 %v1485
    %v2941 = vunpack.c.l.b16 %v1486
    %v2942 = vunpack.c.h.b16 %v1486
    %v2943 = vunpack.c.l.b16 %v1487
    %v2944 = vunpack.c.h.b16 %v1487
    %v2945 = vunpack.c.l.b16 %v1488
    %v2946 = vunpack.c.h.b16 %v1488
    %v2947 = vunpack.c.l.b16 %v1489
    %v2948 = vunpack.c.h.b16 %v1489
    %v2949 = vunpack.c.l.b16 %v1490
    %v2950 = vunpack.c.h.b16 %v1490
    %v2951 = vunpack.c.l.b16 %v1491
    %v2952 = vunpack.c.h.b16 %v1491
    %v2953 = vunpack.c.l.b16 %v1492
    %v2954 = vunpack.c.h.b16 %v1492
    %v2955 = vunpack.c.l.b16 %v1493
    %v2956 = vunpack.c.h.b16 %v1493
    %v2957 = vunpack.c.l.b16 %v1494
    %v2958 = vunpack.c.h.b16 %v1494
    %v2959 = vunpack.c.l.b16 %v1495
    %v2960 = vunpack.c.h.b16 %v1495
    %v2961 = vunpack.c.l.b16 %v1496
    %v2962 = vunpack.c.h.b16 %v1496
    %v2963 = vunpack.c.l.b16 %v1497
    %v2964 = vunpack.c.h.b16 %v1497
    %v2965 = vunpack.c.l.b16 %v1498
    %v2966 = vunpack.c.h.b16 %v1498
    %v2967 = vunpack.c.l.b16 %v1499
    %v2968 = vunpack.c.h.b16 %v1499
    %v2969 = vunpack.c.l.b16 %v1500
    %v2970 = vunpack.c.h.b16 %v1500
    %v2971 = vunpack.c.l.b16 %v1501
    %v2972 = vunpack.c.h.b16 %v1501
    %v2973 = vunpack.c.l.b16 %v1502
    %v2974 = vunpack.c.h.b16 %v1502
    %v2975 = vunpack.c.l.b16 %v1503
    %v2976 = vunpack.c.h.b16 %v1503
    %v2977 = vunpack.c.l.b16 %v1504
    %v2978 = vunpack.c.h.b16 %v1504
    %v2979 = vunpack.c.l.b16 %v1505
    %v2980 = vunpack.c.h.b16 %v1505
    %v2981 = vunpack.c.l.b16 %v1506
    %v2982 = vunpack.c.h.b16 %v1506
    %v2983 = vunpack.c.l.b16 %v1507
    %v2984 = vunpack.c.h.b16 %v1507
    %v2985 = vunpack.c.l.b16 %v1508
    %v2986 = vunpack.c.h.b16 %v1508
    %v2987 = vunpack.c.l.b16 %v1509
    %v2988 = vunpack.c.h.b16 %v1509
    %v2989 = vunpack.c.l.b16 %v1510
    %v2990 = vunpack.c.h.b16 %v1510
    %v2991 = vunpack.c.l.b16 %v1511
    %v2992 = vunpack.c.h.b16 %v1511
    %v2993 = vunpack.c.l.b16 %v1512
    %v2994 = vunpack.c.h.b16 %v1512
    %v2995 = vunpack.c.l.b16 %v1513
    %v2996 = vunpack.c.h.b16 %v1513
    %v2997 = vunpack.c.l.b16 %v1514
    %v2998 = vunpack.c.h.b16 %v1514
    %v2999 = vunpack.c.l.b16 %v1515
    %v3000 = vunpack.c.h.b16 %v1515
    %v3001 = vunpack.c.l.b16 %v1516
    %v3002 = vunpack.c.h.b16 %v1516
    %v3003 = vunpack.c.l.b16 %v1517
    %v3004 = vunpack.c.h.b16 %v1517
    %v3005 = vunpack.c.l.b16 %v1518
    %v3006 = vunpack.c.h.b16 %v1518
    %v3007 = vunpack.c.l.b16 %v1519
    %v3008 = vunpack.c.h.b16 %v1519
    %v3009 = vunpack.c.l.b16 %v1520
    %v3010 = vunpack.c.h.b16 %v1520
    %v3011 = vunpack.c.l.b16 %v1521
    %v3012 = vunpack.c.h.b16 %v1521
    %v3013 = vunpack.c.l.b16 %v1522
    %v3014 = vunpack.c.h.b16 %v1522
    %v3015 = vunpack.c.l.b16 %v1523
    %v3016 = vunpack.c.h.b16 %v1523
    %v3017 = vunpack.c.l.b16 %v1524
    %v3018 = vunpack.c.h.b16 %v1524
    %v3019 = vunpack.c.l.b16 %v1525
    %v3020 = vunpack.c.h.b16 %v1525
    %v3021 = vunpack.c.l.b16 %v1526
    %v3022 = vunpack.c.h.b16 %v1526
    %v3023 = vunpack.c.l.b16 %v1527
    %v3024 = vunpack.c.h.b16 %v1527
    %v3025 = vunpack.c.l.b16 %v1528
    %v3026 = vunpack.c.h.b16 %v1528
    %v3027 = vunpack.c.l.b16 %v1529
    %v3028 = vunpack.c.h.b16 %v1529
    %v3029 = vunpack.c.l.b16 %v1530
    %v3030 = vunpack.c.h.b16 %v1530
    %v3031 = vunpack.c.l.b16 %v1531
    %v3032 = vunpack.c.h.b16 %v1531
    %v3033 = vunpack.c.l.b16 %v1532
    %v3034 = vunpack.c.h.b16 %v1532
    %v3035 = vunpack.c.l.b16 %v1533
    %v3036 = vunpack.c.h.b16 %v1533
    %v3037 = vunpack.c.l.b16 %v1534
    %v3038 = vunpack.c.h.b16 %v1534
    %v3039 = vunpack.c.l.b16 %v1535
    %v3040 = vunpack.c.h.b16 %v1535
    %v3041 = vunpack.c.l.b16 %v1536
    %v3042 = vunpack.c.h.b16 %v1536
    %v3043 = vunpack.c.l.b16 %v1537
    %v3044 = vunpack.c.h.b16 %v1537
    %v3045 = vunpack.c.l.b16 %v1538
    %v3046 = vunpack.c.h.b16 %v1538
    %v3047 = vunpack.c.l.b16 %v1539
    %v3048 = vunpack.c.h.b16 %v1539
    %v3049 = vunpack.c.l.b16 %v1540
    %v3050 = vunpack.c.h.b16 %v1540
    %v3051 = vunpack.c.l.b16 %v1541
    %v3052 = vunpack.c.h.b16 %v1541
    %v3053 = vunpack.c.l.b16 %v1542
    %v3054 = vunpack.c.h.b16 %v1542
    %v3055 = vunpack.c.l.b16 %v1543
    %v3056 = vunpack.c.h.b16 %v1543
    %v3057 = vunpack.c.l.b16 %v1544
    %v3058 = vunpack.c.h.b16 %v1544
    %v3059 = vunpack.c.l.b16 %v1545
    %v3060 = vunpack.c.h.b16 %v1545
    %v3061 = vunpack.c.l.b16 %v1546
    %v3062 = vunpack.c.h.b16 %v1546
    %v3063 = vunpack.c.l.b16 %v1547
    %v3064 = vunpack.c.h.b16 %v1547
    %v3065 = vunpack.c.l.b16 %v1548
    %v3066 = vunpack.c.h.b16 %v1548
    %v3067 = vunpack.c.l.b16 %v1549
    %v3068 = vunpack.c.h.b16 %v1549
    %v3069 = vunpack.c.l.b16 %v1550
    %v3070 = vunpack.c.h.b16 %v1550
    %v3071 = vunpack.c.l.b16 %v1551
    %v3072 = vunpack.c.h.b16 %v1551
    %v3073 = vunpack.c.l.b16 %v1552
    %v3074 = vunpack.c.h.b16 %v1552
    %v3075 = vunpack.c.l.b16 %v1553
    %v3076 = vunpack.c.h.b16 %v1553
    %v3077 = vunpack.c.l.b16 %v1554
    %v3078 = vunpack.c.h.b16 %v1554
    %v3079 = vunpack.c.l.b16 %v1555
    %v3080 = vunpack.c.h.b16 %v1555
    %v3081 = vunpack.c.l.b16 %v1556
    %v3082 = vunpack.c.h.b16 %v1556
    %v3083 = vunpack.c.l.b16 %v1557
    %v3084 = vunpack.c.h.b16 %v1557
    %v3085 = vunpack.c.l.b16 %v1558
    %v3086 = vunpack.c.h.b16 %v1558
    %v3087 = vunpack.c.l.b16 %v1559
    %v3088 = vunpack.c.h.b16 %v1559
    %v3089 = vunpack.c.l.b16 %v1560
    %v3090 = vunpack.c.h.b16 %v1560
    %v3091 = vunpack.c.l.b16 %v1561
    %v3092 = vunpack.c.h.b16 %v1561
    %v3093 = vunpack.c.l.b16 %v1562
    %v3094 = vunpack.c.h.b16 %v1562
    %v3095 = vunpack.c.l.b16 %v1563
    %v3096 = vunpack.c.h.b16 %v1563
    %v3097 = vunpack.c.l.b16 %v1564
    %v3098 = vunpack.c.h.b16 %v1564
    %v3099 = vunpack.c.l.b16 %v1565
    %v3100 = vunpack.c.h.b16 %v1565
    %v3101 = vunpack.c.l.b16 %v1566
    %v3102 = vunpack.c.h.b16 %v1566
    %v3103 = vpack.c.b16 %v2087, %v2079
    %v3104 = vpack.c.b16 %v2088, %v2080
    %v3105 = vpack.c.b16 %v2089, %v2081
    %v3106 = vpack.c.b16 %v2090, %v2082
    %v3107 = vpack.c.b16 %v2091, %v2083
    %v3108 = vpack.c.b16 %v2092, %v2084
    %v3109 = vpack.c.b16 %v2093, %v2085
    %v3110 = vpack.c.b16 %v2094, %v2086
    %v3111 = vpack.c.b16 %v2103, %v2095
    %v3112 = vpack.c.b16 %v2104, %v2096
    %v3113 = vpack.c.b16 %v2105, %v2097
    %v3114 = vpack.c.b16 %v2106, %v2098
    %v3115 = vpack.c.b16 %v2107, %v2099
    %v3116 = vpack.c.b16 %v2108, %v2100
    %v3117 = vpack.c.b16 %v2109, %v2101
    %v3118 = vpack.c.b16 %v2110, %v2102
    %v3119 = vpack.c.b16 %v2119, %v2111
    %v3120 = vpack.c.b16 %v2120, %v2112
    %v3121 = vpack.c.b16 %v2121, %v2113
    %v3122 = vpack.c.b16 %v2122, %v2114
    %v3123 = vpack.c.b16 %v2123, %v2115
    %v3124 = vpack.c.b16 %v2124, %v2116
    %v3125 = vpack.c.b16 %v2125, %v2117
    %v3126 = vpack.c.b16 %v2126, %v2118
    %v3127 = vpack.c.b16 %v2135, %v2127
    %v3128 = vpack.c.b16 %v2136, %v2128
    %v3129 = vpack.c.b16 %v2137, %v2129
    %v3130 = vpack.c.b16 %v2138, %v2130
    %v3131 = vpack.c.b16 %v2139, %v2131
    %v3132 = vpack.c.b16 %v2140, %v2132
    %v3133 = vpack.c.b16 %v2141, %v2133
    %v3134 = vpack.c.b16 %v2142, %v2134
    %v3135 = vpack.c.b16 %v2151, %v2143
    %v3136 = vpack.c.b16 %v2152, %v2144
    %v3137 = vpack.c.b16 %v2153, %v2145
    %v3138 = vpack.c.b16 %v2154, %v2146
    %v3139 = vpack.c.b16 %v2155, %v2147
    %v3140 = vpack.c.b16 %v2156, %v2148
    %v3141 = vpack.c.b16 %v2157, %v2149
    %v3142 = vpack.c.b16 %v2158, %v2150
    %v3143 = vpack.c.b16 %v2167, %v2159
    %v3144 = vpack.c.b16 %v2168, %v2160
    %v3145 = vpack.c.b16 %v2169, %v2161
    %v3146 = vpack.c.b16 %v2170, %v2162
    %v3147 = vpack.c.b16 %v2171, %v2163
    %v3148 = vpack.c.b16 %v2172, %v2164
    %v3149 = vpack.c.b16 %v2173, %v2165
    %v3150 = vpack.c.b16 %v2174, %v2166
    %v3151 = vpack.c.b16 %v2183, %v2175
    %v3152 = vpack.c.b16 %v2184, %v2176
    %v3153 = vpack.c.b16 %v2185, %v2177
    %v3154 = vpack.c.b16 %v2186, %v2178
    %v3155 = vpack.c.b16 %v2187, %v2179
    %v3156 = vpack.c.b16 %v2188, %v2180
    %v3157 = vpack.c.b16 %v2189, %v2181
    %v3158 = vpack.c.b16 %v2190, %v2182
    %v3159 = vpack.c.b16 %v2199, %v2191
    %v3160 = vpack.c.b16 %v2200, %v2192
    %v3161 = vpack.c.b16 %v2201, %v2193
    %v3162 = vpack.c.b16 %v2202, %v2194
    %v3163 = vpack.c.b16 %v2203, %v2195
    %v3164 = vpack.c.b16 %v2204, %v2196
    %v3165 = vpack.c.b16 %v2205, %v2197
    %v3166 = vpack.c.b16 %v2206, %v2198
    %v3167 = vpack.c.b16 %v2215, %v2207
    %v3168 = vpack.c.b16 %v2216, %v2208
    %v3169 = vpack.c.b16 %v2217, %v2209
    %v3170 = vpack.c.b16 %v2218, %v2210
    %v3171 = vpack.c.b16 %v2219, %v2211
    %v3172 = vpack.c.b16 %v2220, %v2212
    %v3173 = vpack.c.b16 %v2221, %v2213
    %v3174 = vpack.c.b16 %v2222, %v2214
    %v3175 = vpack.c.b16 %v2231, %v2223
    %v3176 = vpack.c.b16 %v2232, %v2224
    %v3177 = vpack.c.b16 %v2233, %v2225
    %v3178 = vpack.c.b16 %v2234, %v2226
    %v3179 = vpack.c.b16 %v2235, %v2227
    %v3180 = vpack.c.b16 %v2236, %v2228
    %v3181 = vpack.c.b16 %v2237, %v2229
    %v3182 = vpack.c.b16 %v2238, %v2230
    %v3183 = vpack.c.b16 %v2247, %v2239
    %v3184 = vpack.c.b16 %v2248, %v2240
    %v3185 = vpack.c.b16 %v2249, %v2241
    %v3186 = vpack.c.b16 %v2250, %v2242
    %v3187 = vpack.c.b16 %v2251, %v2243
    %v3188 = vpack.c.b16 %v2252, %v2244
    %v3189 = vpack.c.b16 %v2253, %v2245
    %v3190 = vpack.c.b16 %v2254, %v2246
    %v3191 = vpack.c.b16 %v2263, %v2255
    %v3192 = vpack.c.b16 %v2264, %v2256
    %v3193 = vpack.c.b16 %v2265, %v2257
    %v3194 = vpack.c.b16 %v2266, %v2258
    %v3195 = vpack.c.b16 %v2267, %v2259
    %v3196 = vpack.c.b16 %v2268, %v2260
    %v3197 = vpack.c.b16 %v2269, %v2261
    %v3198 = vpack.c.b16 %v2270, %v2262
    %v3199 = vpack.c.b16 %v2279, %v2271
    %v3200 = vpack.c.b16 %v2280, %v2272
    %v3201 = vpack.c.b16 %v2281, %v2273
    %v3202 = vpack.c.b16 %v2282, %v2274
    %v3203 = vpack.c.b16 %v2283, %v2275
    %v3204 = vpack.c.b16 %v2284, %v2276
    %v3205 = vpack.c.b16 %v2285, %v2277
    %v3206 = vpack.c.b16 %v2286, %v2278
    %v3207 = vpack.c.b16 %v2295, %v2287
    %v3208 = vpack.c.b16 %v2296, %v2288
    %v3209 = vpack.c.b16 %v2297, %v2289
    %v3210 = vpack.c.b16 %v2298, %v2290
    %v3211 = vpack.c.b16 %v2299, %v2291
    %v3212 = vpack.c.b16 %v2300, %v2292
    %v3213 = vpack.c.b16 %v2301, %v2293
    %v3214 = vpack.c.b16 %v2302, %v2294
    %v3215 = vpack.c.b16 %v2311, %v2303
    %v3216 = vpack.c.b16 %v2312, %v2304
    %v3217 = vpack.c.b16 %v2313, %v2305
    %v3218 = vpack.c.b16 %v2314, %v2306
    %v3219 = vpack.c.b16 %v2315, %v2307
    %v3220 = vpack.c.b16 %v2316, %v2308
    %v3221 = vpack.c.b16 %v2317, %v2309
    %v3222 = vpack.c.b16 %v2318, %v2310
    %v3223 = vpack.c.b16 %v2327, %v2319
    %v3224 = vpack.c.b16 %v2328, %v2320
    %v3225 = vpack.c.b16 %v2329, %v2321
    %v3226 = vpack.c.b16 %v2330, %v2322
    %v3227 = vpack.c.b16 %v2331, %v2323
    %v3228 = vpack.c.b16 %v2332, %v2324
    %v3229 = vpack.c.b16 %v2333, %v2325
    %v3230 = vpack.c.b16 %v2334, %v2326
    %v3231 = vpack.c.b16 %v2343, %v2335
    %v3232 = vpack.c.b16 %v2344, %v2336
    %v3233 = vpack.c.b16 %v2345, %v2337
    %v3234 = vpack.c.b16 %v2346, %v2338
    %v3235 = vpack.c.b16 %v2347, %v2339
    %v3236 = vpack.c.b16 %v2348, %v2340
    %v3237 = vpack.c.b16 %v2349, %v2341
    %v3238 = vpack.c.b16 %v2350, %v2342
    %v3239 = vpack.c.b16 %v2359, %v2351
    %v3240 = vpack.c.b16 %v2360, %v2352
    %v3241 = vpack.c.b16 %v2361, %v2353
    %v3242 = vpack.c.b16 %v2362, %v2354
    %v3243 = vpack.c.b16 %v2363, %v2355
    %v3244 = vpack.c.b16 %v2364, %v2356
    %v3245 = vpack.c.b16 %v2365, %v2357
    %v3246 = vpack.c.b16 %v2366, %v2358
    %v3247 = vpack.c.b16 %v2375, %v2367
    %v3248 = vpack.c.b16 %v2376, %v2368
    %v3249 = vpack.c.b16 %v2377, %v2369
    %v3250 = vpack.c.b16 %v2378, %v2370
    %v3251 = vpack.c.b16 %v2379, %v2371
    %v3252 = vpack.c.b16 %v2380, %v2372
    %v3253 = vpack.c.b16 %v2381, %v2373
    %v3254 = vpack.c.b16 %v2382, %v2374
    %v3255 = vpack.c.b16 %v2391, %v2383
    %v3256 = vpack.c.b16 %v2392, %v2384
    %v3257 = vpack.c.b16 %v2393, %v2385
    %v3258 = vpack.c.b16 %v2394, %v2386
    %v3259 = vpack.c.b16 %v2395, %v2387
    %v3260 = vpack.c.b16 %v2396, %v2388
    %v3261 = vpack.c.b16 %v2397, %v2389
    %v3262 = vpack.c.b16 %v2398, %v2390
    %v3263 = vpack.c.b16 %v2407, %v2399
    %v3264 = vpack.c.b16 %v2408, %v2400
    %v3265 = vpack.c.b16 %v2409, %v2401
    %v3266 = vpack.c.b16 %v2410, %v2402
    %v3267 = vpack.c.b16 %v2411, %v2403
    %v3268 = vpack.c.b16 %v2412, %v2404
    %v3269 = vpack.c.b16 %v2413, %v2405
    %v3270 = vpack.c.b16 %v2414, %v2406
    %v3271 = vpack.c.b16 %v2423, %v2415
    %v3272 = vpack.c.b16 %v2424, %v2416
    %v3273 = vpack.c.b16 %v2425, %v2417
    %v3274 = vpack.c.b16 %v2426, %v2418
    %v3275 = vpack.c.b16 %v2427, %v2419
    %v3276 = vpack.c.b16 %v2428, %v2420
    %v3277 = vpack.c.b16 %v2429, %v2421
    %v3278 = vpack.c.b16 %v2430, %v2422
    %v3279 = vpack.c.b16 %v2439, %v2431
    %v3280 = vpack.c.b16 %v2440, %v2432
    %v3281 = vpack.c.b16 %v2441, %v2433
    %v3282 = vpack.c.b16 %v2442, %v2434
    %v3283 = vpack.c.b16 %v2443, %v2435
    %v3284 = vpack.c.b16 %v2444, %v2436
    %v3285 = vpack.c.b16 %v2445, %v2437
    %v3286 = vpack.c.b16 %v2446, %v2438
    %v3287 = vpack.c.b16 %v2455, %v2447
    %v3288 = vpack.c.b16 %v2456, %v2448
    %v3289 = vpack.c.b16 %v2457, %v2449
    %v3290 = vpack.c.b16 %v2458, %v2450
    %v3291 = vpack.c.b16 %v2459, %v2451
    %v3292 = vpack.c.b16 %v2460, %v2452
    %v3293 = vpack.c.b16 %v2461, %v2453
    %v3294 = vpack.c.b16 %v2462, %v2454
    %v3295 = vpack.c.b16 %v2471, %v2463
    %v3296 = vpack.c.b16 %v2472, %v2464
    %v3297 = vpack.c.b16 %v2473, %v2465
    %v3298 = vpack.c.b16 %v2474, %v2466
    %v3299 = vpack.c.b16 %v2475, %v2467
    %v3300 = vpack.c.b16 %v2476, %v2468
    %v3301 = vpack.c.b16 %v2477, %v2469
    %v3302 = vpack.c.b16 %v2478, %v2470
    %v3303 = vpack.c.b16 %v2487, %v2479
    %v3304 = vpack.c.b16 %v2488, %v2480
    %v3305 = vpack.c.b16 %v2489, %v2481
    %v3306 = vpack.c.b16 %v2490, %v2482
    %v3307 = vpack.c.b16 %v2491, %v2483
    %v3308 = vpack.c.b16 %v2492, %v2484
    %v3309 = vpack.c.b16 %v2493, %v2485
    %v3310 = vpack.c.b16 %v2494, %v2486
    %v3311 = vpack.c.b16 %v2503, %v2495
    %v3312 = vpack.c.b16 %v2504, %v2496
    %v3313 = vpack.c.b16 %v2505, %v2497
    %v3314 = vpack.c.b16 %v2506, %v2498
    %v3315 = vpack.c.b16 %v2507, %v2499
    %v3316 = vpack.c.b16 %v2508, %v2500
    %v3317 = vpack.c.b16 %v2509, %v2501
    %v3318 = vpack.c.b16 %v2510, %v2502
    %v3319 = vpack.c.b16 %v2519, %v2511
    %v3320 = vpack.c.b16 %v2520, %v2512
    %v3321 = vpack.c.b16 %v2521, %v2513
    %v3322 = vpack.c.b16 %v2522, %v2514
    %v3323 = vpack.c.b16 %v2523, %v2515
    %v3324 = vpack.c.b16 %v2524, %v2516
    %v3325 = vpack.c.b16 %v2525, %v2517
    %v3326 = vpack.c.b16 %v2526, %v2518
    %v3327 = vpack.c.b16 %v2535, %v2527
    %v3328 = vpack.c.b16 %v2536, %v2528
    %v3329 = vpack.c.b16 %v2537, %v2529
    %v3330 = vpack.c.b16 %v2538, %v2530
    %v3331 = vpack.c.b16 %v2539, %v2531
    %v3332 = vpack.c.b16 %v2540, %v2532
    %v3333 = vpack.c.b16 %v2541, %v2533
    %v3334 = vpack.c.b16 %v2542, %v2534
    %v3335 = vpack.c.b16 %v2551, %v2543
    %v3336 = vpack.c.b16 %v2552, %v2544
    %v3337 = vpack.c.b16 %v2553, %v2545
    %v3338 = vpack.c.b16 %v2554, %v2546
    %v3339 = vpack.c.b16 %v2555, %v2547
    %v3340 = vpack.c.b16 %v2556, %v2548
    %v3341 = vpack.c.b16 %v2557, %v2549
    %v3342 = vpack.c.b16 %v2558, %v2550
    %v3343 = vpack.c.b16 %v2567, %v2559
    %v3344 = vpack.c.b16 %v2568, %v2560
    %v3345 = vpack.c.b16 %v2569, %v2561
    %v3346 = vpack.c.b16 %v2570, %v2562
    %v3347 = vpack.c.b16 %v2571, %v2563
    %v3348 = vpack.c.b16 %v2572, %v2564
    %v3349 = vpack.c.b16 %v2573, %v2565
    %v3350 = vpack.c.b16 %v2574, %v2566
    %v3351 = vpack.c.b16 %v2583, %v2575
    %v3352 = vpack.c.b16 %v2584, %v2576
    %v3353 = vpack.c.b16 %v2585, %v2577
    %v3354 = vpack.c.b16 %v2586, %v2578
    %v3355 = vpack.c.b16 %v2587, %v2579
    %v3356 = vpack.c.b16 %v2588, %v2580
    %v3357 = vpack.c.b16 %v2589, %v2581
    %v3358 = vpack.c.b16 %v2590, %v2582
    %v3359 = vpack.c.b16 %v2599, %v2591
    %v3360 = vpack.c.b16 %v2600, %v2592
    %v3361 = vpack.c.b16 %v2601, %v2593
    %v3362 = vpack.c.b16 %v2602, %v2594
    %v3363 = vpack.c.b16 %v2603, %v2595
    %v3364 = vpack.c.b16 %v2604, %v2596
    %v3365 = vpack.c.b16 %v2605, %v2597
    %v3366 = vpack.c.b16 %v2606, %v2598
    %v3367 = vpack.c.b16 %v2615, %v2607
    %v3368 = vpack.c.b16 %v2616, %v2608
    %v3369 = vpack.c.b16 %v2617, %v2609
    %v3370 = vpack.c.b16 %v2618, %v2610
    %v3371 = vpack.c.b16 %v2619, %v2611
    %v3372 = vpack.c.b16 %v2620, %v2612
    %v3373 = vpack.c.b16 %v2621, %v2613
    %v3374 = vpack.c.b16 %v2622, %v2614
    %v3375 = vpack.c.b16 %v2631, %v2623
    %v3376 = vpack.c.b16 %v2632, %v2624
    %v3377 = vpack.c.b16 %v2633, %v2625
    %v3378 = vpack.c.b16 %v2634, %v2626
    %v3379 = vpack.c.b16 %v2635, %v2627
    %v3380 = vpack.c.b16 %v2636, %v2628
    %v3381 = vpack.c.b16 %v2637, %v2629
    %v3382 = vpack.c.b16 %v2638, %v2630
    %v3383 = vpack.c.b16 %v2647, %v2639
    %v3384 = vpack.c.b16 %v2648, %v2640
    %v3385 = vpack.c.b16 %v2649, %v2641
    %v3386 = vpack.c.b16 %v2650, %v2642
    %v3387 = vpack.c.b16 %v2651, %v2643
    %v3388 = vpack.c.b16 %v2652, %v2644
    %v3389 = vpack.c.b16 %v2653, %v2645
    %v3390 = vpack.c.b16 %v2654, %v2646
    %v3391 = vpack.c.b16 %v2663, %v2655
    %v3392 = vpack.c.b16 %v2664, %v2656
    %v3393 = vpack.c.b16 %v2665, %v2657
    %v3394 = vpack.c.b16 %v2666, %v2658
    %v3395 = vpack.c.b16 %v2667, %v2659
    %v3396 = vpack.c.b16 %v2668, %v2660
    %v3397 = vpack.c.b16 %v2669, %v2661
    %v3398 = vpack.c.b16 %v2670, %v2662
    %v3399 = vpack.c.b16 %v2679, %v2671
    %v3400 = vpack.c.b16 %v2680, %v2672
    %v3401 = vpack.c.b16 %v2681, %v2673
    %v3402 = vpack.c.b16 %v2682, %v2674
    %v3403 = vpack.c.b16 %v2683, %v2675
    %v3404 = vpack.c.b16 %v2684, %v2676
    %v3405 = vpack.c.b16 %v2685, %v2677
    %v3406 = vpack.c.b16 %v2686, %v2678
    %v3407 = vpack.c.b16 %v2695, %v2687
    %v3408 = vpack.c.b16 %v2696, %v2688
    %v3409 = vpack.c.b16 %v2697, %v2689
    %v3410 = vpack.c.b16 %v2698, %v2690
    %v3411 = vpack.c.b16 %v2699, %v2691
    %v3412 = vpack.c.b16 %v2700, %v2692
    %v3413 = vpack.c.b16 %v2701, %v2693
    %v3414 = vpack.c.b16 %v2702, %v2694
    %v3415 = vpack.c.b16 %v2711, %v2703
    %v3416 = vpack.c.b16 %v2712, %v2704
    %v3417 = vpack.c.b16 %v2713, %v2705
    %v3418 = vpack.c.b16 %v2714, %v2706
    %v3419 = vpack.c.b16 %v2715, %v2707
    %v3420 = vpack.c.b16 %v2716, %v2708
    %v3421 = vpack.c.b16 %v2717, %v2709
    %v3422 = vpack.c.b16 %v2718, %v2710
    %v3423 = vpack.c.b16 %v2727, %v2719
    %v3424 = vpack.c.b16 %v2728, %v2720
    %v3425 = vpack.c.b16 %v2729, %v2721
    %v3426 = vpack.c.b16 %v2730, %v2722
    %v3427 = vpack.c.b16 %v2731, %v2723
    %v3428 = vpack.c.b16 %v2732, %v2724
    %v3429 = vpack.c.b16 %v2733, %v2725
    %v3430 = vpack.c.b16 %v2734, %v2726
    %v3431 = vpack.c.b16 %v2743, %v2735
    %v3432 = vpack.c.b16 %v2744, %v2736
    %v3433 = vpack.c.b16 %v2745, %v2737
    %v3434 = vpack.c.b16 %v2746, %v2738
    %v3435 = vpack.c.b16 %v2747, %v2739
    %v3436 = vpack.c.b16 %v2748, %v2740
    %v3437 = vpack.c.b16 %v2749, %v2741
    %v3438 = vpack.c.b16 %v2750, %v2742
    %v3439 = vpack.c.b16 %v2759, %v2751
    %v3440 = vpack.c.b16 %v2760, %v2752
    %v3441 = vpack.c.b16 %v2761, %v2753
    %v3442 = vpack.c.b16 %v2762, %v2754
    %v3443 = vpack.c.b16 %v2763, %v2755
    %v3444 = vpack.c.b16 %v2764, %v2756
    %v3445 = vpack.c.b16 %v2765, %v2757
    %v3446 = vpack.c.b16 %v2766, %v2758
    %v3447 = vpack.c.b16 %v2775, %v2767
    %v3448 = vpack.c.b16 %v2776, %v2768
    %v3449 = vpack.c.b16 %v2777, %v2769
    %v3450 = vpack.c.b16 %v2778, %v2770
    %v3451 = vpack.c.b16 %v2779, %v2771
    %v3452 = vpack.c.b16 %v2780, %v2772
    %v3453 = vpack.c.b16 %v2781, %v2773
    %v3454 = vpack.c.b16 %v2782, %v2774
    %v3455 = vpack.c.b16 %v2791, %v2783
    %v3456 = vpack.c.b16 %v2792, %v2784
    %v3457 = vpack.c.b16 %v2793, %v2785
    %v3458 = vpack.c.b16 %v2794, %v2786
    %v3459 = vpack.c.b16 %v2795, %v2787
    %v3460 = vpack.c.b16 %v2796, %v2788
    %v3461 = vpack.c.b16 %v2797, %v2789
    %v3462 = vpack.c.b16 %v2798, %v2790
    %v3463 = vpack.c.b16 %v2807, %v2799
    %v3464 = vpack.c.b16 %v2808, %v2800
    %v3465 = vpack.c.b16 %v2809, %v2801
    %v3466 = vpack.c.b16 %v2810, %v2802
    %v3467 = vpack.c.b16 %v2811, %v2803
    %v3468 = vpack.c.b16 %v2812, %v2804
    %v3469 = vpack.c.b16 %v2813, %v2805
    %v3470 = vpack.c.b16 %v2814, %v2806
    %v3471 = vpack.c.b16 %v2823, %v2815
    %v3472 = vpack.c.b16 %v2824, %v2816
    %v3473 = vpack.c.b16 %v2825, %v2817
    %v3474 = vpack.c.b16 %v2826, %v2818
    %v3475 = vpack.c.b16 %v2827, %v2819
    %v3476 = vpack.c.b16 %v2828, %v2820
    %v3477 = vpack.c.b16 %v2829, %v2821
    %v3478 = vpack.c.b16 %v2830, %v2822
    %v3479 = vpack.c.b16 %v2839, %v2831
    %v3480 = vpack.c.b16 %v2840, %v2832
    %v3481 = vpack.c.b16 %v2841, %v2833
    %v3482 = vpack.c.b16 %v2842, %v2834
    %v3483 = vpack.c.b16 %v2843, %v2835
    %v3484 = vpack.c.b16 %v2844, %v2836
    %v3485 = vpack.c.b16 %v2845, %v2837
    %v3486 = vpack.c.b16 %v2846, %v2838
    %v3487 = vpack.c.b16 %v2855, %v2847
    %v3488 = vpack.c.b16 %v2856, %v2848
    %v3489 = vpack.c.b16 %v2857, %v2849
    %v3490 = vpack.c.b16 %v2858, %v2850
    %v3491 = vpack.c.b16 %v2859, %v2851
    %v3492 = vpack.c.b16 %v2860, %v2852
    %v3493 = vpack.c.b16 %v2861, %v2853
    %v3494 = vpack.c.b16 %v2862, %v2854
    %v3495 = vpack.c.b16 %v2871, %v2863
    %v3496 = vpack.c.b16 %v2872, %v2864
    %v3497 = vpack.c.b16 %v2873, %v2865
    %v3498 = vpack.c.b16 %v2874, %v2866
    %v3499 = vpack.c.b16 %v2875, %v2867
    %v3500 = vpack.c.b16 %v2876, %v2868
    %v3501 = vpack.c.b16 %v2877, %v2869
    %v3502 = vpack.c.b16 %v2878, %v2870
    %v3503 = vpack.c.b16 %v2887, %v2879
    %v3504 = vpack.c.b16 %v2888, %v2880
    %v3505 = vpack.c.b16 %v2889, %v2881
    %v3506 = vpack.c.b16 %v2890, %v2882
    %v3507 = vpack.c.b16 %v2891, %v2883
    %v3508 = vpack.c.b16 %v2892, %v2884
    %v3509 = vpack.c.b16 %v2893, %v2885
    %v3510 = vpack.c.b16 %v2894, %v2886
    %v3511 = vpack.c.b16 %v2903, %v2895
    %v3512 = vpack.c.b16 %v2904, %v2896
    %v3513 = vpack.c.b16 %v2905, %v2897
    %v3514 = vpack.c.b16 %v2906, %v2898
    %v3515 = vpack.c.b16 %v2907, %v2899
    %v3516 = vpack.c.b16 %v2908, %v2900
    %v3517 = vpack.c.b16 %v2909, %v2901
    %v3518 = vpack.c.b16 %v2910, %v2902
    %v3519 = vpack.c.b16 %v2919, %v2911
    %v3520 = vpack.c.b16 %v2920, %v2912
    %v3521 = vpack.c.b16 %v2921, %v2913
    %v3522 = vpack.c.b16 %v2922, %v2914
    %v3523 = vpack.c.b16 %v2923, %v2915
    %v3524 = vpack.c.b16 %v2924, %v2916
    %v3525 = vpack.c.b16 %v2925, %v2917
    %v3526 = vpack.c.b16 %v2926, %v2918
    %v3527 = vpack.c.b16 %v2935, %v2927
    %v3528 = vpack.c.b16 %v2936, %v2928
    %v3529 = vpack.c.b16 %v2937, %v2929
    %v3530 = vpack.c.b16 %v2938, %v2930
    %v3531 = vpack.c.b16 %v2939, %v2931
    %v3532 = vpack.c.b16 %v2940, %v2932
    %v3533 = vpack.c.b16 %v2941, %v2933
    %v3534 = vpack.c.b16 %v2942, %v2934
    %v3535 = vpack.c.b16 %v2951, %v2943
    %v3536 = vpack.c.b16 %v2952, %v2944
    %v3537 = vpack.c.b16 %v2953, %v2945
    %v3538 = vpack.c.b16 %v2954, %v2946
    %v3539 = vpack.c.b16 %v2955, %v2947
    %v3540 = vpack.c.b16 %v2956, %v2948
    %v3541 = vpack.c.b16 %v2957, %v2949
    %v3542 = vpack.c.b16 %v2958, %v2950
    %v3543 = vpack.c.b16 %v2967, %v2959
    %v3544 = vpack.c.b16 %v2968, %v2960
    %v3545 = vpack.c.b16 %v2969, %v2961
    %v3546 = vpack.c.b16 %v2970, %v2962
    %v3547 = vpack.c.b16 %v2971, %v2963
    %v3548 = vpack.c.b16 %v2972, %v2964
    %v3549 = vpack.c.b16 %v2973, %v2965
    %v3550 = vpack.c.b16 %v2974, %v2966
    %v3551 = vpack.c.b16 %v2983, %v2975
    %v3552 = vpack.c.b16 %v2984, %v2976
    %v3553 = vpack.c.b16 %v2985, %v2977
    %v3554 = vpack.c.b16 %v2986, %v2978
    %v3555 = vpack.c.b16 %v2987, %v2979
    %v3556 = vpack.c.b16 %v2988, %v2980
    %v3557 = vpack.c.b16 %v2989, %v2981
    %v3558 = vpack.c.b16 %v2990, %v2982
    %v3559 = vpack.c.b16 %v2999, %v2991
    %v3560 = vpack.c.b16 %v3000, %v2992
    %v3561 = vpack.c.b16 %v3001, %v2993
    %v3562 = vpack.c.b16 %v3002, %v2994
    %v3563 = vpack.c.b16 %v3003, %v2995
    %v3564 = vpack.c.b16 %v3004, %v2996
    %v3565 = vpack.c.b16 %v3005, %v2997
    %v3566 = vpack.c.b16 %v3006, %v2998
    %v3567 = vpack.c.b16 %v3015, %v3007
    %v3568 = vpack.c.b16 %v3016, %v3008
    %v3569 = vpack.c.b16 %v3017, %v3009
    %v3570 = vpack.c.b16 %v3018, %v3010
    %v3571 = vpack.c.b16 %v3019, %v3011
    %v3572 = vpack.c.b16 %v3020, %v3012
    %v3573 = vpack.c.b16 %v3021, %v3013
    %v3574 = vpack.c.b16 %v3022, %v3014
    %v3575 = vpack.c.b16 %v3031, %v3023
    %v3576 = vpack.c.b16 %v3032, %v3024
    %v3577 = vpack.c.b16 %v3033, %v3025
    %v3578 = vpack.c.b16 %v3034, %v3026
    %v3579 = vpack.c.b16 %v3035, %v3027
    %v3580 = vpack.c.b16 %v3036, %v3028
    %v3581 = vpack.c.b16 %v3037, %v3029
    %v3582 = vpack.c.b16 %v3038, %v3030
    %v3583 = vpack.c.b16 %v3047, %v3039
    %v3584 = vpack.c.b16 %v3048, %v3040
    %v3585 = vpack.c.b16 %v3049, %v3041
    %v3586 = vpack.c.b16 %v3050, %v3042
    %v3587 = vpack.c.b16 %v3051, %v3043
    %v3588 = vpack.c.b16 %v3052, %v3044
    %v3589 = vpack.c.b16 %v3053, %v3045
    %v3590 = vpack.c.b16 %v3054, %v3046
    %v3591 = vpack.c.b16 %v3063, %v3055
    %v3592 = vpack.c.b16 %v3064, %v3056
    %v3593 = vpack.c.b16 %v3065, %v3057
    %v3594 = vpack.c.b16 %v3066, %v3058
    %v3595 = vpack.c.b16 %v3067, %v3059
    %v3596 = vpack.c.b16 %v3068, %v3060
    %v3597 = vpack.c.b16 %v3069, %v3061
    %v3598 = vpack.c.b16 %v3070, %v3062
    %v3599 = vpack.c.b16 %v3079, %v3071
    %v3600 = vpack.c.b16 %v3080, %v3072
    %v3601 = vpack.c.b16 %v3081, %v3073
    %v3602 = vpack.c.b16 %v3082, %v3074
    %v3603 = vpack.c.b16 %v3083, %v3075
    %v3604 = vpack.c.b16 %v3084, %v3076
    %v3605 = vpack.c.b16 %v3085, %v3077
    %v3606 = vpack.c.b16 %v3086, %v3078
    %v3607 = vpack.c.b16 %v3095, %v3087
    %v3608 = vpack.c.b16 %v3096, %v3088
    %v3609 = vpack.c.b16 %v3097, %v3089
    %v3610 = vpack.c.b16 %v3098, %v3090
    %v3611 = vpack.c.b16 %v3099, %v3091
    %v3612 = vpack.c.b16 %v3100, %v3092
    %v3613 = vpack.c.b16 %v3101, %v3093
    %v3614 = vpack.c.b16 %v3102, %v3094
    %4127 = vmatprep.subr.bf16.mxu0 %v3104
    %4128 = vmatpush1.bf16.msra.mxu0 %v3103
    %4129 = vmatprep.subr.bf16.mxu0 %v3112
    %4130 = vmatpush1.bf16.msra.mxu0 %v3111
    %4131 = vmatprep.subr.bf16.mxu0 %v3120
    %4132 = vmatpush1.bf16.msra.mxu0 %v3119
    %4133 = vmatprep.subr.bf16.mxu0 %v3128
    %4134 = vmatpush1.bf16.msra.mxu0 %v3127
    %4135 = vmatprep.subr.bf16.mxu0 %v3136
    %4136 = vmatpush1.bf16.msra.mxu0 %v3135
    %4137 = vmatprep.subr.bf16.mxu0 %v3144
    %4138 = vmatpush1.bf16.msra.mxu0 %v3143
    %4139 = vmatprep.subr.bf16.mxu0 %v3152
    %4140 = vmatpush1.bf16.msra.mxu0 %v3151
    %4141 = vmatprep.subr.bf16.mxu0 %v3160
    %4142 = vmatpush1.bf16.msra.mxu0 %v3159
    %4143 = vmatprep.subr.bf16.mxu0 %v3168
    %4144 = vmatpush1.bf16.msra.mxu0 %v3167
    %4145 = vmatprep.subr.bf16.mxu0 %v3176
    %4146 = vmatpush1.bf16.msra.mxu0 %v3175
    %4147 = vmatprep.subr.bf16.mxu0 %v3184
    %4148 = vmatpush1.bf16.msra.mxu0 %v3183
    %4149 = vmatprep.subr.bf16.mxu0 %v3192
    %4150 = vmatpush1.bf16.msra.mxu0 %v3191
    %4151 = vmatprep.subr.bf16.mxu0 %v3200
    %4152 = vmatpush1.bf16.msra.mxu0 %v3199
    %4153 = vmatprep.subr.bf16.mxu0 %v3208
    %4154 = vmatpush1.bf16.msra.mxu0 %v3207
    %4155 = vmatprep.subr.bf16.mxu0 %v3216
    %4156 = vmatpush1.bf16.msra.mxu0 %v3215
    %4157 = vmatprep.subr.bf16.mxu0 %v3224
    %4158 = vmatpush1.bf16.msra.mxu0 %v3223
    %4159 = vmatprep.mubr.bf16.mxu0 %v520
    %4160 = vmatmul.mubr.bf16.gmra.mrb[0].mxu0 %v519
    %v4161 = vpop.f32.mrb[0].mxu0
    %v4162 = vadd.f32 0.0, %v4161
    %v4163 = vpop.f32.mrb[0].mxu0
    %v4164 = vadd.f32 0.0, %v4163
    %v4165 = vpop.f32.mrb[0].mxu0
    %v4166 = vpop.f32.mrb[0].mxu0
    %4167 = vdwg.mxu0
    %4168 = vmatprep.subr.bf16.mxu0 %v3232
    %4169 = vmatpush1.bf16.msra.mxu0 %v3231
    %4170 = vmatprep.subr.bf16.mxu0 %v3240
    %4171 = vmatpush1.bf16.msra.mxu0 %v3239
    %4172 = vmatprep.subr.bf16.mxu0 %v3248
    %4173 = vmatpush1.bf16.msra.mxu0 %v3247
    %4174 = vmatprep.subr.bf16.mxu0 %v3256
    %4175 = vmatpush1.bf16.msra.mxu0 %v3255
    %4176 = vmatprep.subr.bf16.mxu0 %v3264
    %4177 = vmatpush1.bf16.msra.mxu0 %v3263
    %4178 = vmatprep.subr.bf16.mxu0 %v3272
    %4179 = vmatpush1.bf16.msra.mxu0 %v3271
    %4180 = vmatprep.subr.bf16.mxu0 %v3280
    %4181 = vmatpush1.bf16.msra.mxu0 %v3279
    %4182 = vmatprep.subr.bf16.mxu0 %v3288
    %4183 = vmatpush1.bf16.msra.mxu0 %v3287
    %4184 = vmatprep.subr.bf16.mxu0 %v3296
    %4185 = vmatpush1.bf16.msra.mxu0 %v3295
    %4186 = vmatprep.subr.bf16.mxu0 %v3304
    %4187 = vmatpush1.bf16.msra.mxu0 %v3303
    %4188 = vmatprep.subr.bf16.mxu0 %v3312
    %4189 = vmatpush1.bf16.msra.mxu0 %v3311
    %4190 = vmatprep.subr.bf16.mxu0 %v3320
    %4191 = vmatpush1.bf16.msra.mxu0 %v3319
    %4192 = vmatprep.subr.bf16.mxu0 %v3328
    %4193 = vmatpush1.bf16.msra.mxu0 %v3327
    %4194 = vmatprep.subr.bf16.mxu0 %v3336
    %4195 = vmatpush1.bf16.msra.mxu0 %v3335
    %4196 = vmatprep.subr.bf16.mxu0 %v3344
    %4197 = vmatpush1.bf16.msra.mxu0 %v3343
    %4198 = vmatprep.subr.bf16.mxu0 %v3352
    %4199 = vmatpush1.bf16.msra.mxu0 %v3351
    %4200 = vmatprep.mubr.bf16.mxu0 %v522
    %4201 = vmatmul.mubr.bf16.gmra.mrb[0].mxu0 %v521
    %v4202 = vpop.f32.mrb[0].mxu0
    %v4203 = vadd.f32 %v4162, %v4202
    %v4204 = vpop.f32.mrb[0].mxu0
    %v4205 = vadd.f32 %v4164, %v4204
    %v4206 = vpop.f32.mrb[0].mxu0
    %v4207 = vpop.f32.mrb[0].mxu0
    %4208 = vdwg.mxu0
    %4209 = vmatprep.subr.bf16.mxu0 %v3360
    %4210 = vmatpush1.bf16.msra.mxu0 %v3359
    %4211 = vmatprep.subr.bf16.mxu0 %v3368
    %4212 = vmatpush1.bf16.msra.mxu0 %v3367
    %4213 = vmatprep.subr.bf16.mxu0 %v3376
    %4214 = vmatpush1.bf16.msra.mxu0 %v3375
    %4215 = vmatprep.subr.bf16.mxu0 %v3384
    %4216 = vmatpush1.bf16.msra.mxu0 %v3383
    %4217 = vmatprep.subr.bf16.mxu0 %v3392
    %4218 = vmatpush1.bf16.msra.mxu0 %v3391
    %4219 = vmatprep.subr.bf16.mxu0 %v3400
    %4220 = vmatpush1.bf16.msra.mxu0 %v3399
    %4221 = vmatprep.subr.bf16.mxu0 %v3408
    %4222 = vmatpush1.bf16.msra.mxu0 %v3407
    %4223 = vmatprep.subr.bf16.mxu0 %v3416
    %4224 = vmatpush1.bf16.msra.mxu0 %v3415
    %4225 = vmatprep.subr.bf16.mxu0 %v3424
    %4226 = vmatpush1.bf16.msra.mxu0 %v3423
    %4227 = vmatprep.subr.bf16.mxu0 %v3432
    %4228 = vmatpush1.bf16.msra.mxu0 %v3431
    %4229 = vmatprep.subr.bf16.mxu0 %v3440
    %4230 = vmatpush1.bf16.msra.mxu0 %v3439
    %4231 = vmatprep.subr.bf16.mxu0 %v3448
    %4232 = vmatpush1.bf16.msra.mxu0 %v3447
    %4233 = vmatprep.subr.bf16.mxu0 %v3456
    %4234 = vmatpush1.bf16.msra.mxu0 %v3455
    %4235 = vmatprep.subr.bf16.mxu0 %v3464
    %4236 = vmatpush1.bf16.msra.mxu0 %v3463
    %4237 = vmatprep.subr.bf16.mxu0 %v3472
    %4238 = vmatpush1.bf16.msra.mxu0 %v3471
    %4239 = vmatprep.subr.bf16.mxu0 %v3480
    %4240 = vmatpush1.bf16.msra.mxu0 %v3479
    %4241 = vmatprep.mubr.bf16.mxu0 %v524
    %4242 = vmatmul.mubr.bf16.gmra.mrb[0].mxu0 %v523
    %v4243 = vpop.f32.mrb[0].mxu0
    %v4244 = vadd.f32 %v4203, %v4243
    %v4245 = vpop.f32.mrb[0].mxu0
    %v4246 = vadd.f32 %v4205, %v4245
    %v4247 = vpop.f32.mrb[0].mxu0
    %v4248 = vpop.f32.mrb[0].mxu0
    %4249 = vdwg.mxu0
    %4250 = vmatprep.subr.bf16.mxu0 %v3488
    %4251 = vmatpush1.bf16.msra.mxu0 %v3487
    %4252 = vmatprep.subr.bf16.mxu0 %v3496
    %4253 = vmatpush1.bf16.msra.mxu0 %v3495
    %4254 = vmatprep.subr.bf16.mxu0 %v3504
    %4255 = vmatpush1.bf16.msra.mxu0 %v3503
    %4256 = vmatprep.subr.bf16.mxu0 %v3512
    %4257 = vmatpush1.bf16.msra.mxu0 %v3511
    %4258 = vmatprep.subr.bf16.mxu0 %v3520
    %4259 = vmatpush1.bf16.msra.mxu0 %v3519
    %4260 = vmatprep.subr.bf16.mxu0 %v3528
    %4261 = vmatpush1.bf16.msra.mxu0 %v3527
    %4262 = vmatprep.subr.bf16.mxu0 %v3536
    %4263 = vmatpush1.bf16.msra.mxu0 %v3535
    %4264 = vmatprep.subr.bf16.mxu0 %v3544
    %4265 = vmatpush1.bf16.msra.mxu0 %v3543
    %4266 = vmatprep.subr.bf16.mxu0 %v3552
    %4267 = vmatpush1.bf16.msra.mxu0 %v3551
    %4268 = vmatprep.subr.bf16.mxu0 %v3560
    %4269 = vmatpush1.bf16.msra.mxu0 %v3559
    %4270 = vmatprep.subr.bf16.mxu0 %v3568
    %4271 = vmatpush1.bf16.msra.mxu0 %v3567
    %4272 = vmatprep.subr.bf16.mxu0 %v3576
    %4273 = vmatpush1.bf16.msra.mxu0 %v3575
    %4274 = vmatprep.subr.bf16.mxu0 %v3584
    %4275 = vmatpush1.bf16.msra.mxu0 %v3583
    %4276 = vmatprep.subr.bf16.mxu0 %v3592
    %4277 = vmatpush1.bf16.msra.mxu0 %v3591
    %4278 = vmatprep.subr.bf16.mxu0 %v3600
    %4279 = vmatpush1.bf16.msra.mxu0 %v3599
    %4280 = vmatprep.subr.bf16.mxu0 %v3608
    %4281 = vmatpush1.bf16.msra.mxu0 %v3607
    %4282 = vmatprep.mubr.bf16.mxu0 %v526
    %4283 = vmatmul.mubr.bf16.gmra.mrb[0].mxu0 %v525
    %v4284 = vpop.f32.mrb[0].mxu0
    %v4285 = vadd.f32 %v4244, %v4284
    %v4286 = vpop.f32.mrb[0].mxu0
    %v4287 = vadd.f32 %v4246, %v4286
    %v4288 = vpop.f32.mrb[0].mxu0
    %v4289 = vpop.f32.mrb[0].mxu0
    %4290 = vdwg.mxu0
    %4291 = vmatprep.subr.bf16.mxu0 %v3106
    %4292 = vmatpush1.bf16.msra.mxu0 %v3105
    %4293 = vmatprep.subr.bf16.mxu0 %v3114
    %4294 = vmatpush1.bf16.msra.mxu0 %v3113
    %4295 = vmatprep.subr.bf16.mxu0 %v3122
    %4296 = vmatpush1.bf16.msra.mxu0 %v3121
    %4297 = vmatprep.subr.bf16.mxu0 %v3130
    %4298 = vmatpush1.bf16.msra.mxu0 %v3129
    %4299 = vmatprep.subr.bf16.mxu0 %v3138
    %4300 = vmatpush1.bf16.msra.mxu0 %v3137
    %4301 = vmatprep.subr.bf16.mxu0 %v3146
    %4302 = vmatpush1.bf16.msra.mxu0 %v3145
    %4303 = vmatprep.subr.bf16.mxu0 %v3154
    %4304 = vmatpush1.bf16.msra.mxu0 %v3153
    %4305 = vmatprep.subr.bf16.mxu0 %v3162
    %4306 = vmatpush1.bf16.msra.mxu0 %v3161
    %4307 = vmatprep.subr.bf16.mxu0 %v3170
    %4308 = vmatpush1.bf16.msra.mxu0 %v3169
    %4309 = vmatprep.subr.bf16.mxu0 %v3178
    %4310 = vmatpush1.bf16.msra.mxu0 %v3177
    %4311 = vmatprep.subr.bf16.mxu0 %v3186
    %4312 = vmatpush1.bf16.msra.mxu0 %v3185
    %4313 = vmatprep.subr.bf16.mxu0 %v3194
    %4314 = vmatpush1.bf16.msra.mxu0 %v3193
    %4315 = vmatprep.subr.bf16.mxu0 %v3202
    %4316 = vmatpush1.bf16.msra.mxu0 %v3201
    %4317 = vmatprep.subr.bf16.mxu0 %v3210
    %4318 = vmatpush1.bf16.msra.mxu0 %v3209
    %4319 = vmatprep.subr.bf16.mxu0 %v3218
    %4320 = vmatpush1.bf16.msra.mxu0 %v3217
    %4321 = vmatprep.subr.bf16.mxu0 %v3226
    %4322 = vmatpush1.bf16.msra.mxu0 %v3225
    %4323 = vmatprep.mubr.bf16.mxu0 %v520
    %4324 = vmatmul.mubr.bf16.gmra.mrb[0].mxu0 %v519
    %v4325 = vpop.f32.mrb[0].mxu0
    %v4326 = vadd.f32 0.0, %v4325
    %v4327 = vpop.f32.mrb[0].mxu0
    %v4328 = vadd.f32 0.0, %v4327
    %v4329 = vpop.f32.mrb[0].mxu0
    %v4330 = vpop.f32.mrb[0].mxu0
    %4331 = vdwg.mxu0
    %4332 = vmatprep.subr.bf16.mxu0 %v3234
    %4333 = vmatpush1.bf16.msra.mxu0 %v3233
    %4334 = vmatprep.subr.bf16.mxu0 %v3242
    %4335 = vmatpush1.bf16.msra.mxu0 %v3241
    %4336 = vmatprep.subr.bf16.mxu0 %v3250
    %4337 = vmatpush1.bf16.msra.mxu0 %v3249
    %4338 = vmatprep.subr.bf16.mxu0 %v3258
    %4339 = vmatpush1.bf16.msra.mxu0 %v3257
    %4340 = vmatprep.subr.bf16.mxu0 %v3266
    %4341 = vmatpush1.bf16.msra.mxu0 %v3265
    %4342 = vmatprep.subr.bf16.mxu0 %v3274
    %4343 = vmatpush1.bf16.msra.mxu0 %v3273
    %4344 = vmatprep.subr.bf16.mxu0 %v3282
    %4345 = vmatpush1.bf16.msra.mxu0 %v3281
    %4346 = vmatprep.subr.bf16.mxu0 %v3290
    %4347 = vmatpush1.bf16.msra.mxu0 %v3289
    %4348 = vmatprep.subr.bf16.mxu0 %v3298
    %4349 = vmatpush1.bf16.msra.mxu0 %v3297
    %4350 = vmatprep.subr.bf16.mxu0 %v3306
    %4351 = vmatpush1.bf16.msra.mxu0 %v3305
    %4352 = vmatprep.subr.bf16.mxu0 %v3314
    %4353 = vmatpush1.bf16.msra.mxu0 %v3313
    %4354 = vmatprep.subr.bf16.mxu0 %v3322
    %4355 = vmatpush1.bf16.msra.mxu0 %v3321
    %4356 = vmatprep.subr.bf16.mxu0 %v3330
    %4357 = vmatpush1.bf16.msra.mxu0 %v3329
    %4358 = vmatprep.subr.bf16.mxu0 %v3338
    %4359 = vmatpush1.bf16.msra.mxu0 %v3337
    %4360 = vmatprep.subr.bf16.mxu0 %v3346
    %4361 = vmatpush1.bf16.msra.mxu0 %v3345
    %4362 = vmatprep.subr.bf16.mxu0 %v3354
    %4363 = vmatpush1.bf16.msra.mxu0 %v3353
    %4364 = vmatprep.mubr.bf16.mxu0 %v522
    %4365 = vmatmul.mubr.bf16.gmra.mrb[0].mxu0 %v521
    %v4366 = vpop.f32.mrb[0].mxu0
    %v4367 = vadd.f32 %v4326, %v4366
    %v4368 = vpop.f32.mrb[0].mxu0
    %v4369 = vadd.f32 %v4328, %v4368
    %v4370 = vpop.f32.mrb[0].mxu0
    %v4371 = vpop.f32.mrb[0].mxu0
    %4372 = vdwg.mxu0
    %4373 = vmatprep.subr.bf16.mxu0 %v3362
    %4374 = vmatpush1.bf16.msra.mxu0 %v3361
    %4375 = vmatprep.subr.bf16.mxu0 %v3370
    %4376 = vmatpush1.bf16.msra.mxu0 %v3369
    %4377 = vmatprep.subr.bf16.mxu0 %v3378
    %4378 = vmatpush1.bf16.msra.mxu0 %v3377
    %4379 = vmatprep.subr.bf16.mxu0 %v3386
    %4380 = vmatpush1.bf16.msra.mxu0 %v3385
    %4381 = vmatprep.subr.bf16.mxu0 %v3394
    %4382 = vmatpush1.bf16.msra.mxu0 %v3393
    %4383 = vmatprep.subr.bf16.mxu0 %v3402
    %4384 = vmatpush1.bf16.msra.mxu0 %v3401
    %4385 = vmatprep.subr.bf16.mxu0 %v3410
    %4386 = vmatpush1.bf16.msra.mxu0 %v3409
    %4387 = vmatprep.subr.bf16.mxu0 %v3418
    %4388 = vmatpush1.bf16.msra.mxu0 %v3417
    %4389 = vmatprep.subr.bf16.mxu0 %v3426
    %4390 = vmatpush1.bf16.msra.mxu0 %v3425
    %4391 = vmatprep.subr.bf16.mxu0 %v3434
    %4392 = vmatpush1.bf16.msra.mxu0 %v3433
    %4393 = vmatprep.subr.bf16.mxu0 %v3442
    %4394 = vmatpush1.bf16.msra.mxu0 %v3441
    %4395 = vmatprep.subr.bf16.mxu0 %v3450
    %4396 = vmatpush1.bf16.msra.mxu0 %v3449
    %4397 = vmatprep.subr.bf16.mxu0 %v3458
    %4398 = vmatpush1.bf16.msra.mxu0 %v3457
    %4399 = vmatprep.subr.bf16.mxu0 %v3466
    %4400 = vmatpush1.bf16.msra.mxu0 %v3465
    %4401 = vmatprep.subr.bf16.mxu0 %v3474
    %4402 = vmatpush1.bf16.msra.mxu0 %v3473
    %4403 = vmatprep.subr.bf16.mxu0 %v3482
    %4404 = vmatpush1.bf16.msra.mxu0 %v3481
    %4405 = vmatprep.mubr.bf16.mxu0 %v524
    %4406 = vmatmul.mubr.bf16.gmra.mrb[0].mxu0 %v523
    %v4407 = vpop.f32.mrb[0].mxu0
    %v4408 = vadd.f32 %v4367, %v4407
    %v4409 = vpop.f32.mrb[0].mxu0
    %v4410 = vadd.f32 %v4369, %v4409
    %v4411 = vpop.f32.mrb[0].mxu0
    %v4412 = vpop.f32.mrb[0].mxu0
    %4413 = vdwg.mxu0
    %4414 = vmatprep.subr.bf16.mxu0 %v3490
    %4415 = vmatpush1.bf16.msra.mxu0 %v3489
    %4416 = vmatprep.subr.bf16.mxu0 %v3498
    %4417 = vmatpush1.bf16.msra.mxu0 %v3497
    %4418 = vmatprep.subr.bf16.mxu0 %v3506
    %4419 = vmatpush1.bf16.msra.mxu0 %v3505
    %4420 = vmatprep.subr.bf16.mxu0 %v3514
    %4421 = vmatpush1.bf16.msra.mxu0 %v3513
    %4422 = vmatprep.subr.bf16.mxu0 %v3522
    %4423 = vmatpush1.bf16.msra.mxu0 %v3521
    %4424 = vmatprep.subr.bf16.mxu0 %v3530
    %4425 = vmatpush1.bf16.msra.mxu0 %v3529
    %4426 = vmatprep.subr.bf16.mxu0 %v3538
    %4427 = vmatpush1.bf16.msra.mxu0 %v3537
    %4428 = vmatprep.subr.bf16.mxu0 %v3546
    %4429 = vmatpush1.bf16.msra.mxu0 %v3545
    %4430 = vmatprep.subr.bf16.mxu0 %v3554
    %4431 = vmatpush1.bf16.msra.mxu0 %v3553
    %4432 = vmatprep.subr.bf16.mxu0 %v3562
    %4433 = vmatpush1.bf16.msra.mxu0 %v3561
    %4434 = vmatprep.subr.bf16.mxu0 %v3570
    %4435 = vmatpush1.bf16.msra.mxu0 %v3569
    %4436 = vmatprep.subr.bf16.mxu0 %v3578
    %4437 = vmatpush1.bf16.msra.mxu0 %v3577
    %4438 = vmatprep.subr.bf16.mxu0 %v3586
    %4439 = vmatpush1.bf16.msra.mxu0 %v3585
    %4440 = vmatprep.subr.bf16.mxu0 %v3594
    %4441 = vmatpush1.bf16.msra.mxu0 %v3593
    %4442 = vmatprep.subr.bf16.mxu0 %v3602
    %4443 = vmatpush1.bf16.msra.mxu0 %v3601
    %4444 = vmatprep.subr.bf16.mxu0 %v3610
    %4445 = vmatpush1.bf16.msra.mxu0 %v3609
    %4446 = vmatprep.mubr.bf16.mxu0 %v526
    %4447 = vmatmul.mubr.bf16.gmra.mrb[0].mxu0 %v525
    %v4448 = vpop.f32.mrb[0].mxu0
    %v4449 = vadd.f32 %v4408, %v4448
    %v4450 = vpop.f32.mrb[0].mxu0
    %v4451 = vadd.f32 %v4410, %v4450
    %v4452 = vpop.f32.mrb[0].mxu0
    %v4453 = vpop.f32.mrb[0].mxu0
    %4454 = vdwg.mxu0
    %4455 = vmatprep.subr.bf16.mxu0 %v3108
    %4456 = vmatpush1.bf16.msra.mxu0 %v3107
    %4457 = vmatprep.subr.bf16.mxu0 %v3116
    %4458 = vmatpush1.bf16.msra.mxu0 %v3115
    %4459 = vmatprep.subr.bf16.mxu0 %v3124
    %4460 = vmatpush1.bf16.msra.mxu0 %v3123
    %4461 = vmatprep.subr.bf16.mxu0 %v3132
    %4462 = vmatpush1.bf16.msra.mxu0 %v3131
    %4463 = vmatprep.subr.bf16.mxu0 %v3140
    %4464 = vmatpush1.bf16.msra.mxu0 %v3139
    %4465 = vmatprep.subr.bf16.mxu0 %v3148
    %4466 = vmatpush1.bf16.msra.mxu0 %v3147
    %4467 = vmatprep.subr.bf16.mxu0 %v3156
    %4468 = vmatpush1.bf16.msra.mxu0 %v3155
    %4469 = vmatprep.subr.bf16.mxu0 %v3164
    %4470 = vmatpush1.bf16.msra.mxu0 %v3163
    %4471 = vmatprep.subr.bf16.mxu0 %v3172
    %4472 = vmatpush1.bf16.msra.mxu0 %v3171
    %4473 = vmatprep.subr.bf16.mxu0 %v3180
    %4474 = vmatpush1.bf16.msra.mxu0 %v3179
    %4475 = vmatprep.subr.bf16.mxu0 %v3188
    %4476 = vmatpush1.bf16.msra.mxu0 %v3187
    %4477 = vmatprep.subr.bf16.mxu0 %v3196
    %4478 = vmatpush1.bf16.msra.mxu0 %v3195
    %4479 = vmatprep.subr.bf16.mxu0 %v3204
    %4480 = vmatpush1.bf16.msra.mxu0 %v3203
    %4481 = vmatprep.subr.bf16.mxu0 %v3212
    %4482 = vmatpush1.bf16.msra.mxu0 %v3211
    %4483 = vmatprep.subr.bf16.mxu0 %v3220
    %4484 = vmatpush1.bf16.msra.mxu0 %v3219
    %4485 = vmatprep.subr.bf16.mxu0 %v3228
    %4486 = vmatpush1.bf16.msra.mxu0 %v3227
    %4487 = vmatprep.mubr.bf16.mxu0 %v520
    %4488 = vmatmul.mubr.bf16.gmra.mrb[0].mxu0 %v519
    %v4489 = vpop.f32.mrb[0].mxu0
    %v4490 = vadd.f32 0.0, %v4489
    %v4491 = vpop.f32.mrb[0].mxu0
    %v4492 = vadd.f32 0.0, %v4491
    %v4493 = vpop.f32.mrb[0].mxu0
    %v4494 = vpop.f32.mrb[0].mxu0
    %4495 = vdwg.mxu0
    %4496 = vmatprep.subr.bf16.mxu0 %v3236
    %4497 = vmatpush1.bf16.msra.mxu0 %v3235
    %4498 = vmatprep.subr.bf16.mxu0 %v3244
    %4499 = vmatpush1.bf16.msra.mxu0 %v3243
    %4500 = vmatprep.subr.bf16.mxu0 %v3252
    %4501 = vmatpush1.bf16.msra.mxu0 %v3251
    %4502 = vmatprep.subr.bf16.mxu0 %v3260
    %4503 = vmatpush1.bf16.msra.mxu0 %v3259
    %4504 = vmatprep.subr.bf16.mxu0 %v3268
    %4505 = vmatpush1.bf16.msra.mxu0 %v3267
    %4506 = vmatprep.subr.bf16.mxu0 %v3276
    %4507 = vmatpush1.bf16.msra.mxu0 %v3275
    %4508 = vmatprep.subr.bf16.mxu0 %v3284
    %4509 = vmatpush1.bf16.msra.mxu0 %v3283
    %4510 = vmatprep.subr.bf16.mxu0 %v3292
    %4511 = vmatpush1.bf16.msra.mxu0 %v3291
    %4512 = vmatprep.subr.bf16.mxu0 %v3300
    %4513 = vmatpush1.bf16.msra.mxu0 %v3299
    %4514 = vmatprep.subr.bf16.mxu0 %v3308
    %4515 = vmatpush1.bf16.msra.mxu0 %v3307
    %4516 = vmatprep.subr.bf16.mxu0 %v3316
    %4517 = vmatpush1.bf16.msra.mxu0 %v3315
    %4518 = vmatprep.subr.bf16.mxu0 %v3324
    %4519 = vmatpush1.bf16.msra.mxu0 %v3323
    %4520 = vmatprep.subr.bf16.mxu0 %v3332
    %4521 = vmatpush1.bf16.msra.mxu0 %v3331
    %4522 = vmatprep.subr.bf16.mxu0 %v3340
    %4523 = vmatpush1.bf16.msra.mxu0 %v3339
    %4524 = vmatprep.subr.bf16.mxu0 %v3348
    %4525 = vmatpush1.bf16.msra.mxu0 %v3347
    %4526 = vmatprep.subr.bf16.mxu0 %v3356
    %4527 = vmatpush1.bf16.msra.mxu0 %v3355
    %4528 = vmatprep.mubr.bf16.mxu0 %v522
    %4529 = vmatmul.mubr.bf16.gmra.mrb[0].mxu0 %v521
    %v4530 = vpop.f32.mrb[0].mxu0
    %v4531 = vadd.f32 %v4490, %v4530
    %v4532 = vpop.f32.mrb[0].mxu0
    %v4533 = vadd.f32 %v4492, %v4532
    %v4534 = vpop.f32.mrb[0].mxu0
    %v4535 = vpop.f32.mrb[0].mxu0
    %4536 = vdwg.mxu0
    %4537 = vmatprep.subr.bf16.mxu0 %v3364
    %4538 = vmatpush1.bf16.msra.mxu0 %v3363
    %4539 = vmatprep.subr.bf16.mxu0 %v3372
    %4540 = vmatpush1.bf16.msra.mxu0 %v3371
    %4541 = vmatprep.subr.bf16.mxu0 %v3380
    %4542 = vmatpush1.bf16.msra.mxu0 %v3379
    %4543 = vmatprep.subr.bf16.mxu0 %v3388
    %4544 = vmatpush1.bf16.msra.mxu0 %v3387
    %4545 = vmatprep.subr.bf16.mxu0 %v3396
    %4546 = vmatpush1.bf16.msra.mxu0 %v3395
    %4547 = vmatprep.subr.bf16.mxu0 %v3404
    %4548 = vmatpush1.bf16.msra.mxu0 %v3403
    %4549 = vmatprep.subr.bf16.mxu0 %v3412
    %4550 = vmatpush1.bf16.msra.mxu0 %v3411
    %4551 = vmatprep.subr.bf16.mxu0 %v3420
    %4552 = vmatpush1.bf16.msra.mxu0 %v3419
    %4553 = vmatprep.subr.bf16.mxu0 %v3428
    %4554 = vmatpush1.bf16.msra.mxu0 %v3427
    %4555 = vmatprep.subr.bf16.mxu0 %v3436
    %4556 = vmatpush1.bf16.msra.mxu0 %v3435
    %4557 = vmatprep.subr.bf16.mxu0 %v3444
    %4558 = vmatpush1.bf16.msra.mxu0 %v3443
    %4559 = vmatprep.subr.bf16.mxu0 %v3452
    %4560 = vmatpush1.bf16.msra.mxu0 %v3451
    %4561 = vmatprep.subr.bf16.mxu0 %v3460
    %4562 = vmatpush1.bf16.msra.mxu0 %v3459
    %4563 = vmatprep.subr.bf16.mxu0 %v3468
    %4564 = vmatpush1.bf16.msra.mxu0 %v3467
    %4565 = vmatprep.subr.bf16.mxu0 %v3476
    %4566 = vmatpush1.bf16.msra.mxu0 %v3475
    %4567 = vmatprep.subr.bf16.mxu0 %v3484
    %4568 = vmatpush1.bf16.msra.mxu0 %v3483
    %4569 = vmatprep.mubr.bf16.mxu0 %v524
    %4570 = vmatmul.mubr.bf16.gmra.mrb[0].mxu0 %v523
    %v4571 = vpop.f32.mrb[0].mxu0
    %v4572 = vadd.f32 %v4531, %v4571
    %v4573 = vpop.f32.mrb[0].mxu0
    %v4574 = vadd.f32 %v4533, %v4573
    %v4575 = vpop.f32.mrb[0].mxu0
    %v4576 = vpop.f32.mrb[0].mxu0
    %4577 = vdwg.mxu0
    %4578 = vmatprep.subr.bf16.mxu0 %v3492
    %4579 = vmatpush1.bf16.msra.mxu0 %v3491
    %4580 = vmatprep.subr.bf16.mxu0 %v3500
    %4581 = vmatpush1.bf16.msra.mxu0 %v3499
    %4582 = vmatprep.subr.bf16.mxu0 %v3508
    %4583 = vmatpush1.bf16.msra.mxu0 %v3507
    %4584 = vmatprep.subr.bf16.mxu0 %v3516
    %4585 = vmatpush1.bf16.msra.mxu0 %v3515
    %4586 = vmatprep.subr.bf16.mxu0 %v3524
    %4587 = vmatpush1.bf16.msra.mxu0 %v3523
    %4588 = vmatprep.subr.bf16.mxu0 %v3532
    %4589 = vmatpush1.bf16.msra.mxu0 %v3531
    %4590 = vmatprep.subr.bf16.mxu0 %v3540
    %4591 = vmatpush1.bf16.msra.mxu0 %v3539
    %4592 = vmatprep.subr.bf16.mxu0 %v3548
    %4593 = vmatpush1.bf16.msra.mxu0 %v3547
    %4594 = vmatprep.subr.bf16.mxu0 %v3556
    %4595 = vmatpush1.bf16.msra.mxu0 %v3555
    %4596 = vmatprep.subr.bf16.mxu0 %v3564
    %4597 = vmatpush1.bf16.msra.mxu0 %v3563
    %4598 = vmatprep.subr.bf16.mxu0 %v3572
    %4599 = vmatpush1.bf16.msra.mxu0 %v3571
    %4600 = vmatprep.subr.bf16.mxu0 %v3580
    %4601 = vmatpush1.bf16.msra.mxu0 %v3579
    %4602 = vmatprep.subr.bf16.mxu0 %v3588
    %4603 = vmatpush1.bf16.msra.mxu0 %v3587
    %4604 = vmatprep.subr.bf16.mxu0 %v3596
    %4605 = vmatpush1.bf16.msra.mxu0 %v3595
    %4606 = vmatprep.subr.bf16.mxu0 %v3604
    %4607 = vmatpush1.bf16.msra.mxu0 %v3603
    %4608 = vmatprep.subr.bf16.mxu0 %v3612
    %4609 = vmatpush1.bf16.msra.mxu0 %v3611
    %4610 = vmatprep.mubr.bf16.mxu0 %v526
    %4611 = vmatmul.mubr.bf16.gmra.mrb[0].mxu0 %v525
    %v4612 = vpop.f32.mrb[0].mxu0
    %v4613 = vadd.f32 %v4572, %v4612
    %v4614 = vpop.f32.mrb[0].mxu0
    %v4615 = vadd.f32 %v4574, %v4614
    %v4616 = vpop.f32.mrb[0].mxu0
    %v4617 = vpop.f32.mrb[0].mxu0
    %4618 = vdwg.mxu0
    %4619 = vmatprep.subr.bf16.mxu0 %v3110
    %4620 = vmatpush1.bf16.msra.mxu0 %v3109
    %4621 = vmatprep.subr.bf16.mxu0 %v3118
    %4622 = vmatpush1.bf16.msra.mxu0 %v3117
    %4623 = vmatprep.subr.bf16.mxu0 %v3126
    %4624 = vmatpush1.bf16.msra.mxu0 %v3125
    %4625 = vmatprep.subr.bf16.mxu0 %v3134
    %4626 = vmatpush1.bf16.msra.mxu0 %v3133
    %4627 = vmatprep.subr.bf16.mxu0 %v3142
    %4628 = vmatpush1.bf16.msra.mxu0 %v3141
    %4629 = vmatprep.subr.bf16.mxu0 %v3150
    %4630 = vmatpush1.bf16.msra.mxu0 %v3149
    %4631 = vmatprep.subr.bf16.mxu0 %v3158
    %4632 = vmatpush1.bf16.msra.mxu0 %v3157
    %4633 = vmatprep.subr.bf16.mxu0 %v3166
    %4634 = vmatpush1.bf16.msra.mxu0 %v3165
    %4635 = vmatprep.subr.bf16.mxu0 %v3174
    %4636 = vmatpush1.bf16.msra.mxu0 %v3173
    %4637 = vmatprep.subr.bf16.mxu0 %v3182
    %4638 = vmatpush1.bf16.msra.mxu0 %v3181
    %4639 = vmatprep.subr.bf16.mxu0 %v3190
    %4640 = vmatpush1.bf16.msra.mxu0 %v3189
    %4641 = vmatprep.subr.bf16.mxu0 %v3198
    %4642 = vmatpush1.bf16.msra.mxu0 %v3197
    %4643 = vmatprep.subr.bf16.mxu0 %v3206
    %4644 = vmatpush1.bf16.msra.mxu0 %v3205
    %4645 = vmatprep.subr.bf16.mxu0 %v3214
    %4646 = vmatpush1.bf16.msra.mxu0 %v3213
    %4647 = vmatprep.subr.bf16.mxu0 %v3222
    %4648 = vmatpush1.bf16.msra.mxu0 %v3221
    %4649 = vmatprep.subr.bf16.mxu0 %v3230
    %4650 = vmatpush1.bf16.msra.mxu0 %v3229
    %4651 = vmatprep.mubr.bf16.mxu0 %v520
    %4652 = vmatmul.mubr.bf16.gmra.mrb[0].mxu0 %v519
    %v4653 = vpop.f32.mrb[0].mxu0
    %v4654 = vadd.f32 0.0, %v4653
    %v4655 = vpop.f32.mrb[0].mxu0
    %v4656 = vadd.f32 0.0, %v4655
    %v4657 = vpop.f32.mrb[0].mxu0
    %v4658 = vpop.f32.mrb[0].mxu0
    %4659 = vdwg.mxu0
    %4660 = vmatprep.subr.bf16.mxu0 %v3238
    %4661 = vmatpush1.bf16.msra.mxu0 %v3237
    %4662 = vmatprep.subr.bf16.mxu0 %v3246
    %4663 = vmatpush1.bf16.msra.mxu0 %v3245
    %4664 = vmatprep.subr.bf16.mxu0 %v3254
    %4665 = vmatpush1.bf16.msra.mxu0 %v3253
    %4666 = vmatprep.subr.bf16.mxu0 %v3262
    %4667 = vmatpush1.bf16.msra.mxu0 %v3261
    %4668 = vmatprep.subr.bf16.mxu0 %v3270
    %4669 = vmatpush1.bf16.msra.mxu0 %v3269
    %4670 = vmatprep.subr.bf16.mxu0 %v3278
    %4671 = vmatpush1.bf16.msra.mxu0 %v3277
    %4672 = vmatprep.subr.bf16.mxu0 %v3286
    %4673 = vmatpush1.bf16.msra.mxu0 %v3285
    %4674 = vmatprep.subr.bf16.mxu0 %v3294
    %4675 = vmatpush1.bf16.msra.mxu0 %v3293
    %4676 = vmatprep.subr.bf16.mxu0 %v3302
    %4677 = vmatpush1.bf16.msra.mxu0 %v3301
    %4678 = vmatprep.subr.bf16.mxu0 %v3310
    %4679 = vmatpush1.bf16.msra.mxu0 %v3309
    %4680 = vmatprep.subr.bf16.mxu0 %v3318
    %4681 = vmatpush1.bf16.msra.mxu0 %v3317
    %4682 = vmatprep.subr.bf16.mxu0 %v3326
    %4683 = vmatpush1.bf16.msra.mxu0 %v3325
    %4684 = vmatprep.subr.bf16.mxu0 %v3334
    %4685 = vmatpush1.bf16.msra.mxu0 %v3333
    %4686 = vmatprep.subr.bf16.mxu0 %v3342
    %4687 = vmatpush1.bf16.msra.mxu0 %v3341
    %4688 = vmatprep.subr.bf16.mxu0 %v3350
    %4689 = vmatpush1.bf16.msra.mxu0 %v3349
    %4690 = vmatprep.subr.bf16.mxu0 %v3358
    %4691 = vmatpush1.bf16.msra.mxu0 %v3357
    %4692 = vmatprep.mubr.bf16.mxu0 %v522
    %4693 = vmatmul.mubr.bf16.gmra.mrb[0].mxu0 %v521
    %v4694 = vpop.f32.mrb[0].mxu0
    %v4695 = vadd.f32 %v4654, %v4694
    %v4696 = vpop.f32.mrb[0].mxu0
    %v4697 = vadd.f32 %v4656, %v4696
    %v4698 = vpop.f32.mrb[0].mxu0
    %v4699 = vpop.f32.mrb[0].mxu0
    %4700 = vdwg.mxu0
    %4701 = vmatprep.subr.bf16.mxu0 %v3366
    %4702 = vmatpush1.bf16.msra.mxu0 %v3365
    %4703 = vmatprep.subr.bf16.mxu0 %v3374
    %4704 = vmatpush1.bf16.msra.mxu0 %v3373
    %4705 = vmatprep.subr.bf16.mxu0 %v3382
    %4706 = vmatpush1.bf16.msra.mxu0 %v3381
    %4707 = vmatprep.subr.bf16.mxu0 %v3390
    %4708 = vmatpush1.bf16.msra.mxu0 %v3389
    %4709 = vmatprep.subr.bf16.mxu0 %v3398
    %4710 = vmatpush1.bf16.msra.mxu0 %v3397
    %4711 = vmatprep.subr.bf16.mxu0 %v3406
    %4712 = vmatpush1.bf16.msra.mxu0 %v3405
    %4713 = vmatprep.subr.bf16.mxu0 %v3414
    %4714 = vmatpush1.bf16.msra.mxu0 %v3413
    %4715 = vmatprep.subr.bf16.mxu0 %v3422
    %4716 = vmatpush1.bf16.msra.mxu0 %v3421
    %4717 = vmatprep.subr.bf16.mxu0 %v3430
    %4718 = vmatpush1.bf16.msra.mxu0 %v3429
    %4719 = vmatprep.subr.bf16.mxu0 %v3438
    %4720 = vmatpush1.bf16.msra.mxu0 %v3437
    %4721 = vmatprep.subr.bf16.mxu0 %v3446
    %4722 = vmatpush1.bf16.msra.mxu0 %v3445
    %4723 = vmatprep.subr.bf16.mxu0 %v3454
    %4724 = vmatpush1.bf16.msra.mxu0 %v3453
    %4725 = vmatprep.subr.bf16.mxu0 %v3462
    %4726 = vmatpush1.bf16.msra.mxu0 %v3461
    %4727 = vmatprep.subr.bf16.mxu0 %v3470
    %4728 = vmatpush1.bf16.msra.mxu0 %v3469
    %4729 = vmatprep.subr.bf16.mxu0 %v3478
    %4730 = vmatpush1.bf16.msra.mxu0 %v3477
    %4731 = vmatprep.subr.bf16.mxu0 %v3486
    %4732 = vmatpush1.bf16.msra.mxu0 %v3485
    %4733 = vmatprep.mubr.bf16.mxu0 %v524
    %4734 = vmatmul.mubr.bf16.gmra.mrb[0].mxu0 %v523
    %v4735 = vpop.f32.mrb[0].mxu0
    %v4736 = vadd.f32 %v4695, %v4735
    %v4737 = vpop.f32.mrb[0].mxu0
    %v4738 = vadd.f32 %v4697, %v4737
    %v4739 = vpop.f32.mrb[0].mxu0
    %v4740 = vpop.f32.mrb[0].mxu0
    %4741 = vdwg.mxu0
    %4742 = vmatprep.subr.bf16.mxu0 %v3494
    %4743 = vmatpush1.bf16.msra.mxu0 %v3493
    %4744 = vmatprep.subr.bf16.mxu0 %v3502
    %4745 = vmatpush1.bf16.msra.mxu0 %v3501
    %4746 = vmatprep.subr.bf16.mxu0 %v3510
    %4747 = vmatpush1.bf16.msra.mxu0 %v3509
    %4748 = vmatprep.subr.bf16.mxu0 %v3518
    %4749 = vmatpush1.bf16.msra.mxu0 %v3517
    %4750 = vmatprep.subr.bf16.mxu0 %v3526
    %4751 = vmatpush1.bf16.msra.mxu0 %v3525
    %4752 = vmatprep.subr.bf16.mxu0 %v3534
    %4753 = vmatpush1.bf16.msra.mxu0 %v3533
    %4754 = vmatprep.subr.bf16.mxu0 %v3542
    %4755 = vmatpush1.bf16.msra.mxu0 %v3541
    %4756 = vmatprep.subr.bf16.mxu0 %v3550
    %4757 = vmatpush1.bf16.msra.mxu0 %v3549
    %4758 = vmatprep.subr.bf16.mxu0 %v3558
    %4759 = vmatpush1.bf16.msra.mxu0 %v3557
    %4760 = vmatprep.subr.bf16.mxu0 %v3566
    %4761 = vmatpush1.bf16.msra.mxu0 %v3565
    %4762 = vmatprep.subr.bf16.mxu0 %v3574
    %4763 = vmatpush1.bf16.msra.mxu0 %v3573
    %4764 = vmatprep.subr.bf16.mxu0 %v3582
    %4765 = vmatpush1.bf16.msra.mxu0 %v3581
    %4766 = vmatprep.subr.bf16.mxu0 %v3590
    %4767 = vmatpush1.bf16.msra.mxu0 %v3589
    %4768 = vmatprep.subr.bf16.mxu0 %v3598
    %4769 = vmatpush1.bf16.msra.mxu0 %v3597
    %4770 = vmatprep.subr.bf16.mxu0 %v3606
    %4771 = vmatpush1.bf16.msra.mxu0 %v3605
    %4772 = vmatprep.subr.bf16.mxu0 %v3614
    %4773 = vmatpush1.bf16.msra.mxu0 %v3613
    %4774 = vmatprep.mubr.bf16.mxu0 %v526
    %4775 = vmatmul.mubr.bf16.gmra.mrb[0].mxu0 %v525
    %v4776 = vpop.f32.mrb[0].mxu0
    %v4777 = vadd.f32 %v4736, %v4776
    %v4778 = vpop.f32.mrb[0].mxu0
    %v4779 = vadd.f32 %v4738, %v4778
    %v4780 = vpop.f32.mrb[0].mxu0
    %v4781 = vpop.f32.mrb[0].mxu0
    %4782 = vdwg.mxu0
    %v5295 = vunpack.c.l.b16 %v543
    %v5296 = vunpack.c.h.b16 %v543
    %v5297 = vunpack.c.l.b16 %v544
    %v5298 = vunpack.c.h.b16 %v544
    %v5299 = vunpack.c.l.b16 %v545
    %v5300 = vunpack.c.h.b16 %v545
    %v5301 = vunpack.c.l.b16 %v546
    %v5302 = vunpack.c.h.b16 %v546
    %v5303 = vunpack.c.l.b16 %v547
    %v5304 = vunpack.c.h.b16 %v547
    %v5305 = vunpack.c.l.b16 %v548
    %v5306 = vunpack.c.h.b16 %v548
    %v5307 = vunpack.c.l.b16 %v549
    %v5308 = vunpack.c.h.b16 %v549
    %v5309 = vunpack.c.l.b16 %v550
    %v5310 = vunpack.c.h.b16 %v550
    %v5311 = vunpack.c.l.b16 %v551
    %v5312 = vunpack.c.h.b16 %v551
    %v5313 = vunpack.c.l.b16 %v552
    %v5314 = vunpack.c.h.b16 %v552
    %v5315 = vunpack.c.l.b16 %v553
    %v5316 = vunpack.c.h.b16 %v553
    %v5317 = vunpack.c.l.b16 %v554
    %v5318 = vunpack.c.h.b16 %v554
    %v5319 = vunpack.c.l.b16 %v555
    %v5320 = vunpack.c.h.b16 %v555
    %v5321 = vunpack.c.l.b16 %v556
    %v5322 = vunpack.c.h.b16 %v556
    %v5323 = vunpack.c.l.b16 %v557
    %v5324 = vunpack.c.h.b16 %v557
    %v5325 = vunpack.c.l.b16 %v558
    %v5326 = vunpack.c.h.b16 %v558
    %v5327 = vunpack.c.l.b16 %v559
    %v5328 = vunpack.c.h.b16 %v559
    %v5329 = vunpack.c.l.b16 %v560
    %v5330 = vunpack.c.h.b16 %v560
    %v5331 = vunpack.c.l.b16 %v561
    %v5332 = vunpack.c.h.b16 %v561
    %v5333 = vunpack.c.l.b16 %v562
    %v5334 = vunpack.c.h.b16 %v562
    %v5335 = vunpack.c.l.b16 %v563
    %v5336 = vunpack.c.h.b16 %v563
    %v5337 = vunpack.c.l.b16 %v564
    %v5338 = vunpack.c.h.b16 %v564
    %v5339 = vunpack.c.l.b16 %v565
    %v5340 = vunpack.c.h.b16 %v565
    %v5341 = vunpack.c.l.b16 %v566
    %v5342 = vunpack.c.h.b16 %v566
    %v5343 = vunpack.c.l.b16 %v567
    %v5344 = vunpack.c.h.b16 %v567
    %v5345 = vunpack.c.l.b16 %v568
    %v5346 = vunpack.c.h.b16 %v568
    %v5347 = vunpack.c.l.b16 %v569
    %v5348 = vunpack.c.h.b16 %v569
    %v5349 = vunpack.c.l.b16 %v570
    %v5350 = vunpack.c.h.b16 %v570
    %v5351 = vunpack.c.l.b16 %v571
    %v5352 = vunpack.c.h.b16 %v571
    %v5353 = vunpack.c.l.b16 %v572
    %v5354 = vunpack.c.h.b16 %v572
    %v5355 = vunpack.c.l.b16 %v573
    %v5356 = vunpack.c.h.b16 %v573
    %v5357 = vunpack.c.l.b16 %v574
    %v5358 = vunpack.c.h.b16 %v574
    %v5359 = vunpack.c.l.b16 %v575
    %v5360 = vunpack.c.h.b16 %v575
    %v5361 = vunpack.c.l.b16 %v576
    %v5362 = vunpack.c.h.b16 %v576
    %v5363 = vunpack.c.l.b16 %v577
    %v5364 = vunpack.c.h.b16 %v577
    %v5365 = vunpack.c.l.b16 %v578
    %v5366 = vunpack.c.h.b16 %v578
    %v5367 = vunpack.c.l.b16 %v579
    %v5368 = vunpack.c.h.b16 %v579
    %v5369 = vunpack.c.l.b16 %v580
    %v5370 = vunpack.c.h.b16 %v580
    %v5371 = vunpack.c.l.b16 %v581
    %v5372 = vunpack.c.h.b16 %v581
    %v5373 = vunpack.c.l.b16 %v582
    %v5374 = vunpack.c.h.b16 %v582
    %v5375 = vunpack.c.l.b16 %v583
    %v5376 = vunpack.c.h.b16 %v583
    %v5377 = vunpack.c.l.b16 %v584
    %v5378 = vunpack.c.h.b16 %v584
    %v5379 = vunpack.c.l.b16 %v585
    %v5380 = vunpack.c.h.b16 %v585
    %v5381 = vunpack.c.l.b16 %v586
    %v5382 = vunpack.c.h.b16 %v586
    %v5383 = vunpack.c.l.b16 %v587
    %v5384 = vunpack.c.h.b16 %v587
    %v5385 = vunpack.c.l.b16 %v588
    %v5386 = vunpack.c.h.b16 %v588
    %v5387 = vunpack.c.l.b16 %v589
    %v5388 = vunpack.c.h.b16 %v589
    %v5389 = vunpack.c.l.b16 %v590
    %v5390 = vunpack.c.h.b16 %v590
    %v5391 = vunpack.c.l.b16 %v591
    %v5392 = vunpack.c.h.b16 %v591
    %v5393 = vunpack.c.l.b16 %v592
    %v5394 = vunpack.c.h.b16 %v592
    %v5395 = vunpack.c.l.b16 %v593
    %v5396 = vunpack.c.h.b16 %v593
    %v5397 = vunpack.c.l.b16 %v594
    %v5398 = vunpack.c.h.b16 %v594
    %v5399 = vunpack.c.l.b16 %v595
    %v5400 = vunpack.c.h.b16 %v595
    %v5401 = vunpack.c.l.b16 %v596
    %v5402 = vunpack.c.h.b16 %v596
    %v5403 = vunpack.c.l.b16 %v597
    %v5404 = vunpack.c.h.b16 %v597
    %v5405 = vunpack.c.l.b16 %v598
    %v5406 = vunpack.c.h.b16 %v598
    %v5407 = vunpack.c.l.b16 %v599
    %v5408 = vunpack.c.h.b16 %v599
    %v5409 = vunpack.c.l.b16 %v600
    %v5410 = vunpack.c.h.b16 %v600
    %v5411 = vunpack.c.l.b16 %v601
    %v5412 = vunpack.c.h.b16 %v601
    %v5413 = vunpack.c.l.b16 %v602
    %v5414 = vunpack.c.h.b16 %v602
    %v5415 = vunpack.c.l.b16 %v603
    %v5416 = vunpack.c.h.b16 %v603
    %v5417 = vunpack.c.l.b16 %v604
    %v5418 = vunpack.c.h.b16 %v604
    %v5419 = vunpack.c.l.b16 %v605
    %v5420 = vunpack.c.h.b16 %v605
    %v5421 = vunpack.c.l.b16 %v606
    %v5422 = vunpack.c.h.b16 %v606
    %v5423 = vunpack.c.l.b16 %v607
    %v5424 = vunpack.c.h.b16 %v607
    %v5425 = vunpack.c.l.b16 %v608
    %v5426 = vunpack.c.h.b16 %v608
    %v5427 = vunpack.c.l.b16 %v609
    %v5428 = vunpack.c.h.b16 %v609
    %v5429 = vunpack.c.l.b16 %v610
    %v5430 = vunpack.c.h.b16 %v610
    %v5431 = vunpack.c.l.b16 %v611
    %v5432 = vunpack.c.h.b16 %v611
    %v5433 = vunpack.c.l.b16 %v612
    %v5434 = vunpack.c.h.b16 %v612
    %v5435 = vunpack.c.l.b16 %v613
    %v5436 = vunpack.c.h.b16 %v613
    %v5437 = vunpack.c.l.b16 %v614
    %v5438 = vunpack.c.h.b16 %v614
    %v5439 = vunpack.c.l.b16 %v615
    %v5440 = vunpack.c.h.b16 %v615
    %v5441 = vunpack.c.l.b16 %v616
    %v5442 = vunpack.c.h.b16 %v616
    %v5443 = vunpack.c.l.b16 %v617
    %v5444 = vunpack.c.h.b16 %v617
    %v5445 = vunpack.c.l.b16 %v618
    %v5446 = vunpack.c.h.b16 %v618
    %v5447 = vunpack.c.l.b16 %v619
    %v5448 = vunpack.c.h.b16 %v619
    %v5449 = vunpack.c.l.b16 %v620
    %v5450 = vunpack.c.h.b16 %v620
    %v5451 = vunpack.c.l.b16 %v621
    %v5452 = vunpack.c.h.b16 %v621
    %v5453 = vunpack.c.l.b16 %v622
    %v5454 = vunpack.c.h.b16 %v622
    %v5455 = vunpack.c.l.b16 %v623
    %v5456 = vunpack.c.h.b16 %v623
    %v5457 = vunpack.c.l.b16 %v624
    %v5458 = vunpack.c.h.b16 %v624
    %v5459 = vunpack.c.l.b16 %v625
    %v5460 = vunpack.c.h.b16 %v625
    %v5461 = vunpack.c.l.b16 %v626
    %v5462 = vunpack.c.h.b16 %v626
    %v5463 = vunpack.c.l.b16 %v627
    %v5464 = vunpack.c.h.b16 %v627
    %v5465 = vunpack.c.l.b16 %v628
    %v5466 = vunpack.c.h.b16 %v628
    %v5467 = vunpack.c.l.b16 %v629
    %v5468 = vunpack.c.h.b16 %v629
    %v5469 = vunpack.c.l.b16 %v630
    %v5470 = vunpack.c.h.b16 %v630
    %v5471 = vunpack.c.l.b16 %v631
    %v5472 = vunpack.c.h.b16 %v631
    %v5473 = vunpack.c.l.b16 %v632
    %v5474 = vunpack.c.h.b16 %v632
    %v5475 = vunpack.c.l.b16 %v633
    %v5476 = vunpack.c.h.b16 %v633
    %v5477 = vunpack.c.l.b16 %v634
    %v5478 = vunpack.c.h.b16 %v634
    %v5479 = vunpack.c.l.b16 %v635
    %v5480 = vunpack.c.h.b16 %v635
    %v5481 = vunpack.c.l.b16 %v636
    %v5482 = vunpack.c.h.b16 %v636
    %v5483 = vunpack.c.l.b16 %v637
    %v5484 = vunpack.c.h.b16 %v637
    %v5485 = vunpack.c.l.b16 %v638
    %v5486 = vunpack.c.h.b16 %v638
    %v5487 = vunpack.c.l.b16 %v639
    %v5488 = vunpack.c.h.b16 %v639
    %v5489 = vunpack.c.l.b16 %v640
    %v5490 = vunpack.c.h.b16 %v640
    %v5491 = vunpack.c.l.b16 %v641
    %v5492 = vunpack.c.h.b16 %v641
    %v5493 = vunpack.c.l.b16 %v642
    %v5494 = vunpack.c.h.b16 %v642
    %v5495 = vunpack.c.l.b16 %v643
    %v5496 = vunpack.c.h.b16 %v643
    %v5497 = vunpack.c.l.b16 %v644
    %v5498 = vunpack.c.h.b16 %v644
    %v5499 = vunpack.c.l.b16 %v645
    %v5500 = vunpack.c.h.b16 %v645
    %v5501 = vunpack.c.l.b16 %v646
    %v5502 = vunpack.c.h.b16 %v646
    %v5503 = vunpack.c.l.b16 %v647
    %v5504 = vunpack.c.h.b16 %v647
    %v5505 = vunpack.c.l.b16 %v648
    %v5506 = vunpack.c.h.b16 %v648
    %v5507 = vunpack.c.l.b16 %v649
    %v5508 = vunpack.c.h.b16 %v649
    %v5509 = vunpack.c.l.b16 %v650
    %v5510 = vunpack.c.h.b16 %v650
    %v5511 = vunpack.c.l.b16 %v651
    %v5512 = vunpack.c.h.b16 %v651
    %v5513 = vunpack.c.l.b16 %v652
    %v5514 = vunpack.c.h.b16 %v652
    %v5515 = vunpack.c.l.b16 %v653
    %v5516 = vunpack.c.h.b16 %v653
    %v5517 = vunpack.c.l.b16 %v654
    %v5518 = vunpack.c.h.b16 %v654
    %v5519 = vunpack.c.l.b16 %v655
    %v5520 = vunpack.c.h.b16 %v655
    %v5521 = vunpack.c.l.b16 %v656
    %v5522 = vunpack.c.h.b16 %v656
    %v5523 = vunpack.c.l.b16 %v657
    %v5524 = vunpack.c.h.b16 %v657
    %v5525 = vunpack.c.l.b16 %v658
    %v5526 = vunpack.c.h.b16 %v658
    %v5527 = vunpack.c.l.b16 %v659
    %v5528 = vunpack.c.h.b16 %v659
    %v5529 = vunpack.c.l.b16 %v660
    %v5530 = vunpack.c.h.b16 %v660
    %v5531 = vunpack.c.l.b16 %v661
    %v5532 = vunpack.c.h.b16 %v661
    %v5533 = vunpack.c.l.b16 %v662
    %v5534 = vunpack.c.h.b16 %v662
    %v5535 = vunpack.c.l.b16 %v663
    %v5536 = vunpack.c.h.b16 %v663
    %v5537 = vunpack.c.l.b16 %v664
    %v5538 = vunpack.c.h.b16 %v664
    %v5539 = vunpack.c.l.b16 %v665
    %v5540 = vunpack.c.h.b16 %v665
    %v5541 = vunpack.c.l.b16 %v666
    %v5542 = vunpack.c.h.b16 %v666
    %v5543 = vunpack.c.l.b16 %v667
    %v5544 = vunpack.c.h.b16 %v667
    %v5545 = vunpack.c.l.b16 %v668
    %v5546 = vunpack.c.h.b16 %v668
    %v5547 = vunpack.c.l.b16 %v669
    %v5548 = vunpack.c.h.b16 %v669
    %v5549 = vunpack.c.l.b16 %v670
    %v5550 = vunpack.c.h.b16 %v670
    %v5551 = vunpack.c.l.b16 %v671
    %v5552 = vunpack.c.h.b16 %v671
    %v5553 = vunpack.c.l.b16 %v672
    %v5554 = vunpack.c.h.b16 %v672
    %v5555 = vunpack.c.l.b16 %v673
    %v5556 = vunpack.c.h.b16 %v673
    %v5557 = vunpack.c.l.b16 %v674
    %v5558 = vunpack.c.h.b16 %v674
    %v5559 = vunpack.c.l.b16 %v675
    %v5560 = vunpack.c.h.b16 %v675
    %v5561 = vunpack.c.l.b16 %v676
    %v5562 = vunpack.c.h.b16 %v676
    %v5563 = vunpack.c.l.b16 %v677
    %v5564 = vunpack.c.h.b16 %v677
    %v5565 = vunpack.c.l.b16 %v678
    %v5566 = vunpack.c.h.b16 %v678
    %v5567 = vunpack.c.l.b16 %v679
    %v5568 = vunpack.c.h.b16 %v679
    %v5569 = vunpack.c.l.b16 %v680
    %v5570 = vunpack.c.h.b16 %v680
    %v5571 = vunpack.c.l.b16 %v681
    %v5572 = vunpack.c.h.b16 %v681
    %v5573 = vunpack.c.l.b16 %v682
    %v5574 = vunpack.c.h.b16 %v682
    %v5575 = vunpack.c.l.b16 %v683
    %v5576 = vunpack.c.h.b16 %v683
    %v5577 = vunpack.c.l.b16 %v684
    %v5578 = vunpack.c.h.b16 %v684
    %v5579 = vunpack.c.l.b16 %v685
    %v5580 = vunpack.c.h.b16 %v685
    %v5581 = vunpack.c.l.b16 %v686
    %v5582 = vunpack.c.h.b16 %v686
    %v5583 = vunpack.c.l.b16 %v687
    %v5584 = vunpack.c.h.b16 %v687
    %v5585 = vunpack.c.l.b16 %v688
    %v5586 = vunpack.c.h.b16 %v688
    %v5587 = vunpack.c.l.b16 %v689
    %v5588 = vunpack.c.h.b16 %v689
    %v5589 = vunpack.c.l.b16 %v690
    %v5590 = vunpack.c.h.b16 %v690
    %v5591 = vunpack.c.l.b16 %v691
    %v5592 = vunpack.c.h.b16 %v691
    %v5593 = vunpack.c.l.b16 %v692
    %v5594 = vunpack.c.h.b16 %v692
    %v5595 = vunpack.c.l.b16 %v693
    %v5596 = vunpack.c.h.b16 %v693
    %v5597 = vunpack.c.l.b16 %v694
    %v5598 = vunpack.c.h.b16 %v694
    %v5599 = vunpack.c.l.b16 %v695
    %v5600 = vunpack.c.h.b16 %v695
    %v5601 = vunpack.c.l.b16 %v696
    %v5602 = vunpack.c.h.b16 %v696
    %v5603 = vunpack.c.l.b16 %v697
    %v5604 = vunpack.c.h.b16 %v697
    %v5605 = vunpack.c.l.b16 %v698
    %v5606 = vunpack.c.h.b16 %v698
    %v5607 = vunpack.c.l.b16 %v699
    %v5608 = vunpack.c.h.b16 %v699
    %v5609 = vunpack.c.l.b16 %v700
    %v5610 = vunpack.c.h.b16 %v700
    %v5611 = vunpack.c.l.b16 %v701
    %v5612 = vunpack.c.h.b16 %v701
    %v5613 = vunpack.c.l.b16 %v702
    %v5614 = vunpack.c.h.b16 %v702
    %v5615 = vunpack.c.l.b16 %v703
    %v5616 = vunpack.c.h.b16 %v703
    %v5617 = vunpack.c.l.b16 %v704
    %v5618 = vunpack.c.h.b16 %v704
    %v5619 = vunpack.c.l.b16 %v705
    %v5620 = vunpack.c.h.b16 %v705
    %v5621 = vunpack.c.l.b16 %v706
    %v5622 = vunpack.c.h.b16 %v706
    %v5623 = vunpack.c.l.b16 %v707
    %v5624 = vunpack.c.h.b16 %v707
    %v5625 = vunpack.c.l.b16 %v708
    %v5626 = vunpack.c.h.b16 %v708
    %v5627 = vunpack.c.l.b16 %v709
    %v5628 = vunpack.c.h.b16 %v709
    %v5629 = vunpack.c.l.b16 %v710
    %v5630 = vunpack.c.h.b16 %v710
    %v5631 = vunpack.c.l.b16 %v711
    %v5632 = vunpack.c.h.b16 %v711
    %v5633 = vunpack.c.l.b16 %v712
    %v5634 = vunpack.c.h.b16 %v712
    %v5635 = vunpack.c.l.b16 %v713
    %v5636 = vunpack.c.h.b16 %v713
    %v5637 = vunpack.c.l.b16 %v714
    %v5638 = vunpack.c.h.b16 %v714
    %v5639 = vunpack.c.l.b16 %v715
    %v5640 = vunpack.c.h.b16 %v715
    %v5641 = vunpack.c.l.b16 %v716
    %v5642 = vunpack.c.h.b16 %v716
    %v5643 = vunpack.c.l.b16 %v717
    %v5644 = vunpack.c.h.b16 %v717
    %v5645 = vunpack.c.l.b16 %v718
    %v5646 = vunpack.c.h.b16 %v718
    %v5647 = vunpack.c.l.b16 %v719
    %v5648 = vunpack.c.h.b16 %v719
    %v5649 = vunpack.c.l.b16 %v720
    %v5650 = vunpack.c.h.b16 %v720
    %v5651 = vunpack.c.l.b16 %v721
    %v5652 = vunpack.c.h.b16 %v721
    %v5653 = vunpack.c.l.b16 %v722
    %v5654 = vunpack.c.h.b16 %v722
    %v5655 = vunpack.c.l.b16 %v723
    %v5656 = vunpack.c.h.b16 %v723
    %v5657 = vunpack.c.l.b16 %v724
    %v5658 = vunpack.c.h.b16 %v724
    %v5659 = vunpack.c.l.b16 %v725
    %v5660 = vunpack.c.h.b16 %v725
    %v5661 = vunpack.c.l.b16 %v726
    %v5662 = vunpack.c.h.b16 %v726
    %v5663 = vunpack.c.l.b16 %v727
    %v5664 = vunpack.c.h.b16 %v727
    %v5665 = vunpack.c.l.b16 %v728
    %v5666 = vunpack.c.h.b16 %v728
    %v5667 = vunpack.c.l.b16 %v729
    %v5668 = vunpack.c.h.b16 %v729
    %v5669 = vunpack.c.l.b16 %v730
    %v5670 = vunpack.c.h.b16 %v730
    %v5671 = vunpack.c.l.b16 %v731
    %v5672 = vunpack.c.h.b16 %v731
    %v5673 = vunpack.c.l.b16 %v732
    %v5674 = vunpack.c.h.b16 %v732
    %v5675 = vunpack.c.l.b16 %v733
    %v5676 = vunpack.c.h.b16 %v733
    %v5677 = vunpack.c.l.b16 %v734
    %v5678 = vunpack.c.h.b16 %v734
    %v5679 = vunpack.c.l.b16 %v735
    %v5680 = vunpack.c.h.b16 %v735
    %v5681 = vunpack.c.l.b16 %v736
    %v5682 = vunpack.c.h.b16 %v736
    %v5683 = vunpack.c.l.b16 %v737
    %v5684 = vunpack.c.h.b16 %v737
    %v5685 = vunpack.c.l.b16 %v738
    %v5686 = vunpack.c.h.b16 %v738
    %v5687 = vunpack.c.l.b16 %v739
    %v5688 = vunpack.c.h.b16 %v739
    %v5689 = vunpack.c.l.b16 %v740
    %v5690 = vunpack.c.h.b16 %v740
    %v5691 = vunpack.c.l.b16 %v741
    %v5692 = vunpack.c.h.b16 %v741
    %v5693 = vunpack.c.l.b16 %v742
    %v5694 = vunpack.c.h.b16 %v742
    %v5695 = vunpack.c.l.b16 %v743
    %v5696 = vunpack.c.h.b16 %v743
    %v5697 = vunpack.c.l.b16 %v744
    %v5698 = vunpack.c.h.b16 %v744
    %v5699 = vunpack.c.l.b16 %v745
    %v5700 = vunpack.c.h.b16 %v745
    %v5701 = vunpack.c.l.b16 %v746
    %v5702 = vunpack.c.h.b16 %v746
    %v5703 = vunpack.c.l.b16 %v747
    %v5704 = vunpack.c.h.b16 %v747
    %v5705 = vunpack.c.l.b16 %v748
    %v5706 = vunpack.c.h.b16 %v748
    %v5707 = vunpack.c.l.b16 %v749
    %v5708 = vunpack.c.h.b16 %v749
    %v5709 = vunpack.c.l.b16 %v750
    %v5710 = vunpack.c.h.b16 %v750
    %v5711 = vunpack.c.l.b16 %v751
    %v5712 = vunpack.c.h.b16 %v751
    %v5713 = vunpack.c.l.b16 %v752
    %v5714 = vunpack.c.h.b16 %v752
    %v5715 = vunpack.c.l.b16 %v753
    %v5716 = vunpack.c.h.b16 %v753
    %v5717 = vunpack.c.l.b16 %v754
    %v5718 = vunpack.c.h.b16 %v754
    %v5719 = vunpack.c.l.b16 %v755
    %v5720 = vunpack.c.h.b16 %v755
    %v5721 = vunpack.c.l.b16 %v756
    %v5722 = vunpack.c.h.b16 %v756
    %v5723 = vunpack.c.l.b16 %v757
    %v5724 = vunpack.c.h.b16 %v757
    %v5725 = vunpack.c.l.b16 %v758
    %v5726 = vunpack.c.h.b16 %v758
    %v5727 = vunpack.c.l.b16 %v759
    %v5728 = vunpack.c.h.b16 %v759
    %v5729 = vunpack.c.l.b16 %v760
    %v5730 = vunpack.c.h.b16 %v760
    %v5731 = vunpack.c.l.b16 %v761
    %v5732 = vunpack.c.h.b16 %v761
    %v5733 = vunpack.c.l.b16 %v762
    %v5734 = vunpack.c.h.b16 %v762
    %v5735 = vunpack.c.l.b16 %v763
    %v5736 = vunpack.c.h.b16 %v763
    %v5737 = vunpack.c.l.b16 %v764
    %v5738 = vunpack.c.h.b16 %v764
    %v5739 = vunpack.c.l.b16 %v765
    %v5740 = vunpack.c.h.b16 %v765
    %v5741 = vunpack.c.l.b16 %v766
    %v5742 = vunpack.c.h.b16 %v766
    %v5743 = vunpack.c.l.b16 %v767
    %v5744 = vunpack.c.h.b16 %v767
    %v5745 = vunpack.c.l.b16 %v768
    %v5746 = vunpack.c.h.b16 %v768
    %v5747 = vunpack.c.l.b16 %v769
    %v5748 = vunpack.c.h.b16 %v769
    %v5749 = vunpack.c.l.b16 %v770
    %v5750 = vunpack.c.h.b16 %v770
    %v5751 = vunpack.c.l.b16 %v771
    %v5752 = vunpack.c.h.b16 %v771
    %v5753 = vunpack.c.l.b16 %v772
    %v5754 = vunpack.c.h.b16 %v772
    %v5755 = vunpack.c.l.b16 %v773
    %v5756 = vunpack.c.h.b16 %v773
    %v5757 = vunpack.c.l.b16 %v774
    %v5758 = vunpack.c.h.b16 %v774
    %v5759 = vunpack.c.l.b16 %v775
    %v5760 = vunpack.c.h.b16 %v775
    %v5761 = vunpack.c.l.b16 %v776
    %v5762 = vunpack.c.h.b16 %v776
    %v5763 = vunpack.c.l.b16 %v777
    %v5764 = vunpack.c.h.b16 %v777
    %v5765 = vunpack.c.l.b16 %v778
    %v5766 = vunpack.c.h.b16 %v778
    %v5767 = vunpack.c.l.b16 %v779
    %v5768 = vunpack.c.h.b16 %v779
    %v5769 = vunpack.c.l.b16 %v780
    %v5770 = vunpack.c.h.b16 %v780
    %v5771 = vunpack.c.l.b16 %v781
    %v5772 = vunpack.c.h.b16 %v781
    %v5773 = vunpack.c.l.b16 %v782
    %v5774 = vunpack.c.h.b16 %v782
    %v5775 = vunpack.c.l.b16 %v783
    %v5776 = vunpack.c.h.b16 %v783
    %v5777 = vunpack.c.l.b16 %v784
    %v5778 = vunpack.c.h.b16 %v784
    %v5779 = vunpack.c.l.b16 %v785
    %v5780 = vunpack.c.h.b16 %v785
    %v5781 = vunpack.c.l.b16 %v786
    %v5782 = vunpack.c.h.b16 %v786
    %v5783 = vunpack.c.l.b16 %v787
    %v5784 = vunpack.c.h.b16 %v787
    %v5785 = vunpack.c.l.b16 %v788
    %v5786 = vunpack.c.h.b16 %v788
    %v5787 = vunpack.c.l.b16 %v789
    %v5788 = vunpack.c.h.b16 %v789
    %v5789 = vunpack.c.l.b16 %v790
    %v5790 = vunpack.c.h.b16 %v790
    %v5791 = vunpack.c.l.b16 %v791
    %v5792 = vunpack.c.h.b16 %v791
    %v5793 = vunpack.c.l.b16 %v792
    %v5794 = vunpack.c.h.b16 %v792
    %v5795 = vunpack.c.l.b16 %v793
    %v5796 = vunpack.c.h.b16 %v793
    %v5797 = vunpack.c.l.b16 %v794
    %v5798 = vunpack.c.h.b16 %v794
    %v5799 = vunpack.c.l.b16 %v795
    %v5800 = vunpack.c.h.b16 %v795
    %v5801 = vunpack.c.l.b16 %v796
    %v5802 = vunpack.c.h.b16 %v796
    %v5803 = vunpack.c.l.b16 %v797
    %v5804 = vunpack.c.h.b16 %v797
    %v5805 = vunpack.c.l.b16 %v798
    %v5806 = vunpack.c.h.b16 %v798
    %v5807 = vunpack.c.l.b16 %v799
    %v5808 = vunpack.c.h.b16 %v799
    %v5809 = vunpack.c.l.b16 %v800
    %v5810 = vunpack.c.h.b16 %v800
    %v5811 = vunpack.c.l.b16 %v801
    %v5812 = vunpack.c.h.b16 %v801
    %v5813 = vunpack.c.l.b16 %v802
    %v5814 = vunpack.c.h.b16 %v802
    %v5815 = vunpack.c.l.b16 %v803
    %v5816 = vunpack.c.h.b16 %v803
    %v5817 = vunpack.c.l.b16 %v804
    %v5818 = vunpack.c.h.b16 %v804
    %v5819 = vunpack.c.l.b16 %v805
    %v5820 = vunpack.c.h.b16 %v805
    %v5821 = vunpack.c.l.b16 %v806
    %v5822 = vunpack.c.h.b16 %v806
    %v5823 = vunpack.c.l.b16 %v807
    %v5824 = vunpack.c.h.b16 %v807
    %v5825 = vunpack.c.l.b16 %v808
    %v5826 = vunpack.c.h.b16 %v808
    %v5827 = vunpack.c.l.b16 %v809
    %v5828 = vunpack.c.h.b16 %v809
    %v5829 = vunpack.c.l.b16 %v810
    %v5830 = vunpack.c.h.b16 %v810
    %v5831 = vunpack.c.l.b16 %v811
    %v5832 = vunpack.c.h.b16 %v811
    %v5833 = vunpack.c.l.b16 %v812
    %v5834 = vunpack.c.h.b16 %v812
    %v5835 = vunpack.c.l.b16 %v813
    %v5836 = vunpack.c.h.b16 %v813
    %v5837 = vunpack.c.l.b16 %v814
    %v5838 = vunpack.c.h.b16 %v814
    %v5839 = vunpack.c.l.b16 %v815
    %v5840 = vunpack.c.h.b16 %v815
    %v5841 = vunpack.c.l.b16 %v816
    %v5842 = vunpack.c.h.b16 %v816
    %v5843 = vunpack.c.l.b16 %v817
    %v5844 = vunpack.c.h.b16 %v817
    %v5845 = vunpack.c.l.b16 %v818
    %v5846 = vunpack.c.h.b16 %v818
    %v5847 = vunpack.c.l.b16 %v819
    %v5848 = vunpack.c.h.b16 %v819
    %v5849 = vunpack.c.l.b16 %v820
    %v5850 = vunpack.c.h.b16 %v820
    %v5851 = vunpack.c.l.b16 %v821
    %v5852 = vunpack.c.h.b16 %v821
    %v5853 = vunpack.c.l.b16 %v822
    %v5854 = vunpack.c.h.b16 %v822
    %v5855 = vunpack.c.l.b16 %v823
    %v5856 = vunpack.c.h.b16 %v823
    %v5857 = vunpack.c.l.b16 %v824
    %v5858 = vunpack.c.h.b16 %v824
    %v5859 = vunpack.c.l.b16 %v825
    %v5860 = vunpack.c.h.b16 %v825
    %v5861 = vunpack.c.l.b16 %v826
    %v5862 = vunpack.c.h.b16 %v826
    %v5863 = vunpack.c.l.b16 %v827
    %v5864 = vunpack.c.h.b16 %v827
    %v5865 = vunpack.c.l.b16 %v828
    %v5866 = vunpack.c.h.b16 %v828
    %v5867 = vunpack.c.l.b16 %v829
    %v5868 = vunpack.c.h.b16 %v829
    %v5869 = vunpack.c.l.b16 %v830
    %v5870 = vunpack.c.h.b16 %v830
    %v5871 = vunpack.c.l.b16 %v831
    %v5872 = vunpack.c.h.b16 %v831
    %v5873 = vunpack.c.l.b16 %v832
    %v5874 = vunpack.c.h.b16 %v832
    %v5875 = vunpack.c.l.b16 %v833
    %v5876 = vunpack.c.h.b16 %v833
    %v5877 = vunpack.c.l.b16 %v834
    %v5878 = vunpack.c.h.b16 %v834
    %v5879 = vunpack.c.l.b16 %v835
    %v5880 = vunpack.c.h.b16 %v835
    %v5881 = vunpack.c.l.b16 %v836
    %v5882 = vunpack.c.h.b16 %v836
    %v5883 = vunpack.c.l.b16 %v837
    %v5884 = vunpack.c.h.b16 %v837
    %v5885 = vunpack.c.l.b16 %v838
    %v5886 = vunpack.c.h.b16 %v838
    %v5887 = vunpack.c.l.b16 %v839
    %v5888 = vunpack.c.h.b16 %v839
    %v5889 = vunpack.c.l.b16 %v840
    %v5890 = vunpack.c.h.b16 %v840
    %v5891 = vunpack.c.l.b16 %v841
    %v5892 = vunpack.c.h.b16 %v841
    %v5893 = vunpack.c.l.b16 %v842
    %v5894 = vunpack.c.h.b16 %v842
    %v5895 = vunpack.c.l.b16 %v843
    %v5896 = vunpack.c.h.b16 %v843
    %v5897 = vunpack.c.l.b16 %v844
    %v5898 = vunpack.c.h.b16 %v844
    %v5899 = vunpack.c.l.b16 %v845
    %v5900 = vunpack.c.h.b16 %v845
    %v5901 = vunpack.c.l.b16 %v846
    %v5902 = vunpack.c.h.b16 %v846
    %v5903 = vunpack.c.l.b16 %v847
    %v5904 = vunpack.c.h.b16 %v847
    %v5905 = vunpack.c.l.b16 %v848
    %v5906 = vunpack.c.h.b16 %v848
    %v5907 = vunpack.c.l.b16 %v849
    %v5908 = vunpack.c.h.b16 %v849
    %v5909 = vunpack.c.l.b16 %v850
    %v5910 = vunpack.c.h.b16 %v850
    %v5911 = vunpack.c.l.b16 %v851
    %v5912 = vunpack.c.h.b16 %v851
    %v5913 = vunpack.c.l.b16 %v852
    %v5914 = vunpack.c.h.b16 %v852
    %v5915 = vunpack.c.l.b16 %v853
    %v5916 = vunpack.c.h.b16 %v853
    %v5917 = vunpack.c.l.b16 %v854
    %v5918 = vunpack.c.h.b16 %v854
    %v5919 = vunpack.c.l.b16 %v855
    %v5920 = vunpack.c.h.b16 %v855
    %v5921 = vunpack.c.l.b16 %v856
    %v5922 = vunpack.c.h.b16 %v856
    %v5923 = vunpack.c.l.b16 %v857
    %v5924 = vunpack.c.h.b16 %v857
    %v5925 = vunpack.c.l.b16 %v858
    %v5926 = vunpack.c.h.b16 %v858
    %v5927 = vunpack.c.l.b16 %v859
    %v5928 = vunpack.c.h.b16 %v859
    %v5929 = vunpack.c.l.b16 %v860
    %v5930 = vunpack.c.h.b16 %v860
    %v5931 = vunpack.c.l.b16 %v861
    %v5932 = vunpack.c.h.b16 %v861
    %v5933 = vunpack.c.l.b16 %v862
    %v5934 = vunpack.c.h.b16 %v862
    %v5935 = vunpack.c.l.b16 %v863
    %v5936 = vunpack.c.h.b16 %v863
    %v5937 = vunpack.c.l.b16 %v864
    %v5938 = vunpack.c.h.b16 %v864
    %v5939 = vunpack.c.l.b16 %v865
    %v5940 = vunpack.c.h.b16 %v865
    %v5941 = vunpack.c.l.b16 %v866
    %v5942 = vunpack.c.h.b16 %v866
    %v5943 = vunpack.c.l.b16 %v867
    %v5944 = vunpack.c.h.b16 %v867
    %v5945 = vunpack.c.l.b16 %v868
    %v5946 = vunpack.c.h.b16 %v868
    %v5947 = vunpack.c.l.b16 %v869
    %v5948 = vunpack.c.h.b16 %v869
    %v5949 = vunpack.c.l.b16 %v870
    %v5950 = vunpack.c.h.b16 %v870
    %v5951 = vunpack.c.l.b16 %v871
    %v5952 = vunpack.c.h.b16 %v871
    %v5953 = vunpack.c.l.b16 %v872
    %v5954 = vunpack.c.h.b16 %v872
    %v5955 = vunpack.c.l.b16 %v873
    %v5956 = vunpack.c.h.b16 %v873
    %v5957 = vunpack.c.l.b16 %v874
    %v5958 = vunpack.c.h.b16 %v874
    %v5959 = vunpack.c.l.b16 %v875
    %v5960 = vunpack.c.h.b16 %v875
    %v5961 = vunpack.c.l.b16 %v876
    %v5962 = vunpack.c.h.b16 %v876
    %v5963 = vunpack.c.l.b16 %v877
    %v5964 = vunpack.c.h.b16 %v877
    %v5965 = vunpack.c.l.b16 %v878
    %v5966 = vunpack.c.h.b16 %v878
    %v5967 = vunpack.c.l.b16 %v879
    %v5968 = vunpack.c.h.b16 %v879
    %v5969 = vunpack.c.l.b16 %v880
    %v5970 = vunpack.c.h.b16 %v880
    %v5971 = vunpack.c.l.b16 %v881
    %v5972 = vunpack.c.h.b16 %v881
    %v5973 = vunpack.c.l.b16 %v882
    %v5974 = vunpack.c.h.b16 %v882
    %v5975 = vunpack.c.l.b16 %v883
    %v5976 = vunpack.c.h.b16 %v883
    %v5977 = vunpack.c.l.b16 %v884
    %v5978 = vunpack.c.h.b16 %v884
    %v5979 = vunpack.c.l.b16 %v885
    %v5980 = vunpack.c.h.b16 %v885
    %v5981 = vunpack.c.l.b16 %v886
    %v5982 = vunpack.c.h.b16 %v886
    %v5983 = vunpack.c.l.b16 %v887
    %v5984 = vunpack.c.h.b16 %v887
    %v5985 = vunpack.c.l.b16 %v888
    %v5986 = vunpack.c.h.b16 %v888
    %v5987 = vunpack.c.l.b16 %v889
    %v5988 = vunpack.c.h.b16 %v889
    %v5989 = vunpack.c.l.b16 %v890
    %v5990 = vunpack.c.h.b16 %v890
    %v5991 = vunpack.c.l.b16 %v891
    %v5992 = vunpack.c.h.b16 %v891
    %v5993 = vunpack.c.l.b16 %v892
    %v5994 = vunpack.c.h.b16 %v892
    %v5995 = vunpack.c.l.b16 %v893
    %v5996 = vunpack.c.h.b16 %v893
    %v5997 = vunpack.c.l.b16 %v894
    %v5998 = vunpack.c.h.b16 %v894
    %v5999 = vunpack.c.l.b16 %v895
    %v6000 = vunpack.c.h.b16 %v895
    %v6001 = vunpack.c.l.b16 %v896
    %v6002 = vunpack.c.h.b16 %v896
    %v6003 = vunpack.c.l.b16 %v897
    %v6004 = vunpack.c.h.b16 %v897
    %v6005 = vunpack.c.l.b16 %v898
    %v6006 = vunpack.c.h.b16 %v898
    %v6007 = vunpack.c.l.b16 %v899
    %v6008 = vunpack.c.h.b16 %v899
    %v6009 = vunpack.c.l.b16 %v900
    %v6010 = vunpack.c.h.b16 %v900
    %v6011 = vunpack.c.l.b16 %v901
    %v6012 = vunpack.c.h.b16 %v901
    %v6013 = vunpack.c.l.b16 %v902
    %v6014 = vunpack.c.h.b16 %v902
    %v6015 = vunpack.c.l.b16 %v903
    %v6016 = vunpack.c.h.b16 %v903
    %v6017 = vunpack.c.l.b16 %v904
    %v6018 = vunpack.c.h.b16 %v904
    %v6019 = vunpack.c.l.b16 %v905
    %v6020 = vunpack.c.h.b16 %v905
    %v6021 = vunpack.c.l.b16 %v906
    %v6022 = vunpack.c.h.b16 %v906
    %v6023 = vunpack.c.l.b16 %v907
    %v6024 = vunpack.c.h.b16 %v907
    %v6025 = vunpack.c.l.b16 %v908
    %v6026 = vunpack.c.h.b16 %v908
    %v6027 = vunpack.c.l.b16 %v909
    %v6028 = vunpack.c.h.b16 %v909
    %v6029 = vunpack.c.l.b16 %v910
    %v6030 = vunpack.c.h.b16 %v910
    %v6031 = vunpack.c.l.b16 %v911
    %v6032 = vunpack.c.h.b16 %v911
    %v6033 = vunpack.c.l.b16 %v912
    %v6034 = vunpack.c.h.b16 %v912
    %v6035 = vunpack.c.l.b16 %v913
    %v6036 = vunpack.c.h.b16 %v913
    %v6037 = vunpack.c.l.b16 %v914
    %v6038 = vunpack.c.h.b16 %v914
    %v6039 = vunpack.c.l.b16 %v915
    %v6040 = vunpack.c.h.b16 %v915
    %v6041 = vunpack.c.l.b16 %v916
    %v6042 = vunpack.c.h.b16 %v916
    %v6043 = vunpack.c.l.b16 %v917
    %v6044 = vunpack.c.h.b16 %v917
    %v6045 = vunpack.c.l.b16 %v918
    %v6046 = vunpack.c.h.b16 %v918
    %v6047 = vunpack.c.l.b16 %v919
    %v6048 = vunpack.c.h.b16 %v919
    %v6049 = vunpack.c.l.b16 %v920
    %v6050 = vunpack.c.h.b16 %v920
    %v6051 = vunpack.c.l.b16 %v921
    %v6052 = vunpack.c.h.b16 %v921
    %v6053 = vunpack.c.l.b16 %v922
    %v6054 = vunpack.c.h.b16 %v922
    %v6055 = vunpack.c.l.b16 %v923
    %v6056 = vunpack.c.h.b16 %v923
    %v6057 = vunpack.c.l.b16 %v924
    %v6058 = vunpack.c.h.b16 %v924
    %v6059 = vunpack.c.l.b16 %v925
    %v6060 = vunpack.c.h.b16 %v925
    %v6061 = vunpack.c.l.b16 %v926
    %v6062 = vunpack.c.h.b16 %v926
    %v6063 = vunpack.c.l.b16 %v927
    %v6064 = vunpack.c.h.b16 %v927
    %v6065 = vunpack.c.l.b16 %v928
    %v6066 = vunpack.c.h.b16 %v928
    %v6067 = vunpack.c.l.b16 %v929
    %v6068 = vunpack.c.h.b16 %v929
    %v6069 = vunpack.c.l.b16 %v930
    %v6070 = vunpack.c.h.b16 %v930
    %v6071 = vunpack.c.l.b16 %v931
    %v6072 = vunpack.c.h.b16 %v931
    %v6073 = vunpack.c.l.b16 %v932
    %v6074 = vunpack.c.h.b16 %v932
    %v6075 = vunpack.c.l.b16 %v933
    %v6076 = vunpack.c.h.b16 %v933
    %v6077 = vunpack.c.l.b16 %v934
    %v6078 = vunpack.c.h.b16 %v934
    %v6079 = vunpack.c.l.b16 %v935
    %v6080 = vunpack.c.h.b16 %v935
    %v6081 = vunpack.c.l.b16 %v936
    %v6082 = vunpack.c.h.b16 %v936
    %v6083 = vunpack.c.l.b16 %v937
    %v6084 = vunpack.c.h.b16 %v937
    %v6085 = vunpack.c.l.b16 %v938
    %v6086 = vunpack.c.h.b16 %v938
    %v6087 = vunpack.c.l.b16 %v939
    %v6088 = vunpack.c.h.b16 %v939
    %v6089 = vunpack.c.l.b16 %v940
    %v6090 = vunpack.c.h.b16 %v940
    %v6091 = vunpack.c.l.b16 %v941
    %v6092 = vunpack.c.h.b16 %v941
    %v6093 = vunpack.c.l.b16 %v942
    %v6094 = vunpack.c.h.b16 %v942
    %v6095 = vunpack.c.l.b16 %v943
    %v6096 = vunpack.c.h.b16 %v943
    %v6097 = vunpack.c.l.b16 %v944
    %v6098 = vunpack.c.h.b16 %v944
    %v6099 = vunpack.c.l.b16 %v945
    %v6100 = vunpack.c.h.b16 %v945
    %v6101 = vunpack.c.l.b16 %v946
    %v6102 = vunpack.c.h.b16 %v946
    %v6103 = vunpack.c.l.b16 %v947
    %v6104 = vunpack.c.h.b16 %v947
    %v6105 = vunpack.c.l.b16 %v948
    %v6106 = vunpack.c.h.b16 %v948
    %v6107 = vunpack.c.l.b16 %v949
    %v6108 = vunpack.c.h.b16 %v949
    %v6109 = vunpack.c.l.b16 %v950
    %v6110 = vunpack.c.h.b16 %v950
    %v6111 = vunpack.c.l.b16 %v951
    %v6112 = vunpack.c.h.b16 %v951
    %v6113 = vunpack.c.l.b16 %v952
    %v6114 = vunpack.c.h.b16 %v952
    %v6115 = vunpack.c.l.b16 %v953
    %v6116 = vunpack.c.h.b16 %v953
    %v6117 = vunpack.c.l.b16 %v954
    %v6118 = vunpack.c.h.b16 %v954
    %v6119 = vunpack.c.l.b16 %v955
    %v6120 = vunpack.c.h.b16 %v955
    %v6121 = vunpack.c.l.b16 %v956
    %v6122 = vunpack.c.h.b16 %v956
    %v6123 = vunpack.c.l.b16 %v957
    %v6124 = vunpack.c.h.b16 %v957
    %v6125 = vunpack.c.l.b16 %v958
    %v6126 = vunpack.c.h.b16 %v958
    %v6127 = vunpack.c.l.b16 %v959
    %v6128 = vunpack.c.h.b16 %v959
    %v6129 = vunpack.c.l.b16 %v960
    %v6130 = vunpack.c.h.b16 %v960
    %v6131 = vunpack.c.l.b16 %v961
    %v6132 = vunpack.c.h.b16 %v961
    %v6133 = vunpack.c.l.b16 %v962
    %v6134 = vunpack.c.h.b16 %v962
    %v6135 = vunpack.c.l.b16 %v963
    %v6136 = vunpack.c.h.b16 %v963
    %v6137 = vunpack.c.l.b16 %v964
    %v6138 = vunpack.c.h.b16 %v964
    %v6139 = vunpack.c.l.b16 %v965
    %v6140 = vunpack.c.h.b16 %v965
    %v6141 = vunpack.c.l.b16 %v966
    %v6142 = vunpack.c.h.b16 %v966
    %v6143 = vunpack.c.l.b16 %v967
    %v6144 = vunpack.c.h.b16 %v967
    %v6145 = vunpack.c.l.b16 %v968
    %v6146 = vunpack.c.h.b16 %v968
    %v6147 = vunpack.c.l.b16 %v969
    %v6148 = vunpack.c.h.b16 %v969
    %v6149 = vunpack.c.l.b16 %v970
    %v6150 = vunpack.c.h.b16 %v970
    %v6151 = vunpack.c.l.b16 %v971
    %v6152 = vunpack.c.h.b16 %v971
    %v6153 = vunpack.c.l.b16 %v972
    %v6154 = vunpack.c.h.b16 %v972
    %v6155 = vunpack.c.l.b16 %v973
    %v6156 = vunpack.c.h.b16 %v973
    %v6157 = vunpack.c.l.b16 %v974
    %v6158 = vunpack.c.h.b16 %v974
    %v6159 = vunpack.c.l.b16 %v975
    %v6160 = vunpack.c.h.b16 %v975
    %v6161 = vunpack.c.l.b16 %v976
    %v6162 = vunpack.c.h.b16 %v976
    %v6163 = vunpack.c.l.b16 %v977
    %v6164 = vunpack.c.h.b16 %v977
    %v6165 = vunpack.c.l.b16 %v978
    %v6166 = vunpack.c.h.b16 %v978
    %v6167 = vunpack.c.l.b16 %v979
    %v6168 = vunpack.c.h.b16 %v979
    %v6169 = vunpack.c.l.b16 %v980
    %v6170 = vunpack.c.h.b16 %v980
    %v6171 = vunpack.c.l.b16 %v981
    %v6172 = vunpack.c.h.b16 %v981
    %v6173 = vunpack.c.l.b16 %v982
    %v6174 = vunpack.c.h.b16 %v982
    %v6175 = vunpack.c.l.b16 %v983
    %v6176 = vunpack.c.h.b16 %v983
    %v6177 = vunpack.c.l.b16 %v984
    %v6178 = vunpack.c.h.b16 %v984
    %v6179 = vunpack.c.l.b16 %v985
    %v6180 = vunpack.c.h.b16 %v985
    %v6181 = vunpack.c.l.b16 %v986
    %v6182 = vunpack.c.h.b16 %v986
    %v6183 = vunpack.c.l.b16 %v987
    %v6184 = vunpack.c.h.b16 %v987
    %v6185 = vunpack.c.l.b16 %v988
    %v6186 = vunpack.c.h.b16 %v988
    %v6187 = vunpack.c.l.b16 %v989
    %v6188 = vunpack.c.h.b16 %v989
    %v6189 = vunpack.c.l.b16 %v990
    %v6190 = vunpack.c.h.b16 %v990
    %v6191 = vunpack.c.l.b16 %v991
    %v6192 = vunpack.c.h.b16 %v991
    %v6193 = vunpack.c.l.b16 %v992
    %v6194 = vunpack.c.h.b16 %v992
    %v6195 = vunpack.c.l.b16 %v993
    %v6196 = vunpack.c.h.b16 %v993
    %v6197 = vunpack.c.l.b16 %v994
    %v6198 = vunpack.c.h.b16 %v994
    %v6199 = vunpack.c.l.b16 %v995
    %v6200 = vunpack.c.h.b16 %v995
    %v6201 = vunpack.c.l.b16 %v996
    %v6202 = vunpack.c.h.b16 %v996
    %v6203 = vunpack.c.l.b16 %v997
    %v6204 = vunpack.c.h.b16 %v997
    %v6205 = vunpack.c.l.b16 %v998
    %v6206 = vunpack.c.h.b16 %v998
    %v6207 = vunpack.c.l.b16 %v999
    %v6208 = vunpack.c.h.b16 %v999
    %v6209 = vunpack.c.l.b16 %v1000
    %v6210 = vunpack.c.h.b16 %v1000
    %v6211 = vunpack.c.l.b16 %v1001
    %v6212 = vunpack.c.h.b16 %v1001
    %v6213 = vunpack.c.l.b16 %v1002
    %v6214 = vunpack.c.h.b16 %v1002
    %v6215 = vunpack.c.l.b16 %v1003
    %v6216 = vunpack.c.h.b16 %v1003
    %v6217 = vunpack.c.l.b16 %v1004
    %v6218 = vunpack.c.h.b16 %v1004
    %v6219 = vunpack.c.l.b16 %v1005
    %v6220 = vunpack.c.h.b16 %v1005
    %v6221 = vunpack.c.l.b16 %v1006
    %v6222 = vunpack.c.h.b16 %v1006
    %v6223 = vunpack.c.l.b16 %v1007
    %v6224 = vunpack.c.h.b16 %v1007
    %v6225 = vunpack.c.l.b16 %v1008
    %v6226 = vunpack.c.h.b16 %v1008
    %v6227 = vunpack.c.l.b16 %v1009
    %v6228 = vunpack.c.h.b16 %v1009
    %v6229 = vunpack.c.l.b16 %v1010
    %v6230 = vunpack.c.h.b16 %v1010
    %v6231 = vunpack.c.l.b16 %v1011
    %v6232 = vunpack.c.h.b16 %v1011
    %v6233 = vunpack.c.l.b16 %v1012
    %v6234 = vunpack.c.h.b16 %v1012
    %v6235 = vunpack.c.l.b16 %v1013
    %v6236 = vunpack.c.h.b16 %v1013
    %v6237 = vunpack.c.l.b16 %v1014
    %v6238 = vunpack.c.h.b16 %v1014
    %v6239 = vunpack.c.l.b16 %v1015
    %v6240 = vunpack.c.h.b16 %v1015
    %v6241 = vunpack.c.l.b16 %v1016
    %v6242 = vunpack.c.h.b16 %v1016
    %v6243 = vunpack.c.l.b16 %v1017
    %v6244 = vunpack.c.h.b16 %v1017
    %v6245 = vunpack.c.l.b16 %v1018
    %v6246 = vunpack.c.h.b16 %v1018
    %v6247 = vunpack.c.l.b16 %v1019
    %v6248 = vunpack.c.h.b16 %v1019
    %v6249 = vunpack.c.l.b16 %v1020
    %v6250 = vunpack.c.h.b16 %v1020
    %v6251 = vunpack.c.l.b16 %v1021
    %v6252 = vunpack.c.h.b16 %v1021
    %v6253 = vunpack.c.l.b16 %v1022
    %v6254 = vunpack.c.h.b16 %v1022
    %v6255 = vunpack.c.l.b16 %v1023
    %v6256 = vunpack.c.h.b16 %v1023
    %v6257 = vunpack.c.l.b16 %v1024
    %v6258 = vunpack.c.h.b16 %v1024
    %v6259 = vunpack.c.l.b16 %v1025
    %v6260 = vunpack.c.h.b16 %v1025
    %v6261 = vunpack.c.l.b16 %v1026
    %v6262 = vunpack.c.h.b16 %v1026
    %v6263 = vunpack.c.l.b16 %v1027
    %v6264 = vunpack.c.h.b16 %v1027
    %v6265 = vunpack.c.l.b16 %v1028
    %v6266 = vunpack.c.h.b16 %v1028
    %v6267 = vunpack.c.l.b16 %v1029
    %v6268 = vunpack.c.h.b16 %v1029
    %v6269 = vunpack.c.l.b16 %v1030
    %v6270 = vunpack.c.h.b16 %v1030
    %v6271 = vunpack.c.l.b16 %v1031
    %v6272 = vunpack.c.h.b16 %v1031
    %v6273 = vunpack.c.l.b16 %v1032
    %v6274 = vunpack.c.h.b16 %v1032
    %v6275 = vunpack.c.l.b16 %v1033
    %v6276 = vunpack.c.h.b16 %v1033
    %v6277 = vunpack.c.l.b16 %v1034
    %v6278 = vunpack.c.h.b16 %v1034
    %v6279 = vunpack.c.l.b16 %v1035
    %v6280 = vunpack.c.h.b16 %v1035
    %v6281 = vunpack.c.l.b16 %v1036
    %v6282 = vunpack.c.h.b16 %v1036
    %v6283 = vunpack.c.l.b16 %v1037
    %v6284 = vunpack.c.h.b16 %v1037
    %v6285 = vunpack.c.l.b16 %v1038
    %v6286 = vunpack.c.h.b16 %v1038
    %v6287 = vunpack.c.l.b16 %v1039
    %v6288 = vunpack.c.h.b16 %v1039
    %v6289 = vunpack.c.l.b16 %v1040
    %v6290 = vunpack.c.h.b16 %v1040
    %v6291 = vunpack.c.l.b16 %v1041
    %v6292 = vunpack.c.h.b16 %v1041
    %v6293 = vunpack.c.l.b16 %v1042
    %v6294 = vunpack.c.h.b16 %v1042
    %v6295 = vunpack.c.l.b16 %v1043
    %v6296 = vunpack.c.h.b16 %v1043
    %v6297 = vunpack.c.l.b16 %v1044
    %v6298 = vunpack.c.h.b16 %v1044
    %v6299 = vunpack.c.l.b16 %v1045
    %v6300 = vunpack.c.h.b16 %v1045
    %v6301 = vunpack.c.l.b16 %v1046
    %v6302 = vunpack.c.h.b16 %v1046
    %v6303 = vunpack.c.l.b16 %v1047
    %v6304 = vunpack.c.h.b16 %v1047
    %v6305 = vunpack.c.l.b16 %v1048
    %v6306 = vunpack.c.h.b16 %v1048
    %v6307 = vunpack.c.l.b16 %v1049
    %v6308 = vunpack.c.h.b16 %v1049
    %v6309 = vunpack.c.l.b16 %v1050
    %v6310 = vunpack.c.h.b16 %v1050
    %v6311 = vunpack.c.l.b16 %v1051
    %v6312 = vunpack.c.h.b16 %v1051
    %v6313 = vunpack.c.l.b16 %v1052
    %v6314 = vunpack.c.h.b16 %v1052
    %v6315 = vunpack.c.l.b16 %v1053
    %v6316 = vunpack.c.h.b16 %v1053
    %v6317 = vunpack.c.l.b16 %v1054
    %v6318 = vunpack.c.h.b16 %v1054
    %v6319 = vpack.c.b16 %v5303, %v5295
    %v6320 = vpack.c.b16 %v5304, %v5296
    %v6321 = vpack.c.b16 %v5305, %v5297
    %v6322 = vpack.c.b16 %v5306, %v5298
    %v6323 = vpack.c.b16 %v5307, %v5299
    %v6324 = vpack.c.b16 %v5308, %v5300
    %v6325 = vpack.c.b16 %v5309, %v5301
    %v6326 = vpack.c.b16 %v5310, %v5302
    %v6327 = vpack.c.b16 %v5319, %v5311
    %v6328 = vpack.c.b16 %v5320, %v5312
    %v6329 = vpack.c.b16 %v5321, %v5313
    %v6330 = vpack.c.b16 %v5322, %v5314
    %v6331 = vpack.c.b16 %v5323, %v5315
    %v6332 = vpack.c.b16 %v5324, %v5316
    %v6333 = vpack.c.b16 %v5325, %v5317
    %v6334 = vpack.c.b16 %v5326, %v5318
    %v6335 = vpack.c.b16 %v5335, %v5327
    %v6336 = vpack.c.b16 %v5336, %v5328
    %v6337 = vpack.c.b16 %v5337, %v5329
    %v6338 = vpack.c.b16 %v5338, %v5330
    %v6339 = vpack.c.b16 %v5339, %v5331
    %v6340 = vpack.c.b16 %v5340, %v5332
    %v6341 = vpack.c.b16 %v5341, %v5333
    %v6342 = vpack.c.b16 %v5342, %v5334
    %v6343 = vpack.c.b16 %v5351, %v5343
    %v6344 = vpack.c.b16 %v5352, %v5344
    %v6345 = vpack.c.b16 %v5353, %v5345
    %v6346 = vpack.c.b16 %v5354, %v5346
    %v6347 = vpack.c.b16 %v5355, %v5347
    %v6348 = vpack.c.b16 %v5356, %v5348
    %v6349 = vpack.c.b16 %v5357, %v5349
    %v6350 = vpack.c.b16 %v5358, %v5350
    %v6351 = vpack.c.b16 %v5367, %v5359
    %v6352 = vpack.c.b16 %v5368, %v5360
    %v6353 = vpack.c.b16 %v5369, %v5361
    %v6354 = vpack.c.b16 %v5370, %v5362
    %v6355 = vpack.c.b16 %v5371, %v5363
    %v6356 = vpack.c.b16 %v5372, %v5364
    %v6357 = vpack.c.b16 %v5373, %v5365
    %v6358 = vpack.c.b16 %v5374, %v5366
    %v6359 = vpack.c.b16 %v5383, %v5375
    %v6360 = vpack.c.b16 %v5384, %v5376
    %v6361 = vpack.c.b16 %v5385, %v5377
    %v6362 = vpack.c.b16 %v5386, %v5378
    %v6363 = vpack.c.b16 %v5387, %v5379
    %v6364 = vpack.c.b16 %v5388, %v5380
    %v6365 = vpack.c.b16 %v5389, %v5381
    %v6366 = vpack.c.b16 %v5390, %v5382
    %v6367 = vpack.c.b16 %v5399, %v5391
    %v6368 = vpack.c.b16 %v5400, %v5392
    %v6369 = vpack.c.b16 %v5401, %v5393
    %v6370 = vpack.c.b16 %v5402, %v5394
    %v6371 = vpack.c.b16 %v5403, %v5395
    %v6372 = vpack.c.b16 %v5404, %v5396
    %v6373 = vpack.c.b16 %v5405, %v5397
    %v6374 = vpack.c.b16 %v5406, %v5398
    %v6375 = vpack.c.b16 %v5415, %v5407
    %v6376 = vpack.c.b16 %v5416, %v5408
    %v6377 = vpack.c.b16 %v5417, %v5409
    %v6378 = vpack.c.b16 %v5418, %v5410
    %v6379 = vpack.c.b16 %v5419, %v5411
    %v6380 = vpack.c.b16 %v5420, %v5412
    %v6381 = vpack.c.b16 %v5421, %v5413
    %v6382 = vpack.c.b16 %v5422, %v5414
    %v6383 = vpack.c.b16 %v5431, %v5423
    %v6384 = vpack.c.b16 %v5432, %v5424
    %v6385 = vpack.c.b16 %v5433, %v5425
    %v6386 = vpack.c.b16 %v5434, %v5426
    %v6387 = vpack.c.b16 %v5435, %v5427
    %v6388 = vpack.c.b16 %v5436, %v5428
    %v6389 = vpack.c.b16 %v5437, %v5429
    %v6390 = vpack.c.b16 %v5438, %v5430
    %v6391 = vpack.c.b16 %v5447, %v5439
    %v6392 = vpack.c.b16 %v5448, %v5440
    %v6393 = vpack.c.b16 %v5449, %v5441
    %v6394 = vpack.c.b16 %v5450, %v5442
    %v6395 = vpack.c.b16 %v5451, %v5443
    %v6396 = vpack.c.b16 %v5452, %v5444
    %v6397 = vpack.c.b16 %v5453, %v5445
    %v6398 = vpack.c.b16 %v5454, %v5446
    %v6399 = vpack.c.b16 %v5463, %v5455
    %v6400 = vpack.c.b16 %v5464, %v5456
    %v6401 = vpack.c.b16 %v5465, %v5457
    %v6402 = vpack.c.b16 %v5466, %v5458
    %v6403 = vpack.c.b16 %v5467, %v5459
    %v6404 = vpack.c.b16 %v5468, %v5460
    %v6405 = vpack.c.b16 %v5469, %v5461
    %v6406 = vpack.c.b16 %v5470, %v5462
    %v6407 = vpack.c.b16 %v5479, %v5471
    %v6408 = vpack.c.b16 %v5480, %v5472
    %v6409 = vpack.c.b16 %v5481, %v5473
    %v6410 = vpack.c.b16 %v5482, %v5474
    %v6411 = vpack.c.b16 %v5483, %v5475
    %v6412 = vpack.c.b16 %v5484, %v5476
    %v6413 = vpack.c.b16 %v5485, %v5477
    %v6414 = vpack.c.b16 %v5486, %v5478
    %v6415 = vpack.c.b16 %v5495, %v5487
    %v6416 = vpack.c.b16 %v5496, %v5488
    %v6417 = vpack.c.b16 %v5497, %v5489
    %v6418 = vpack.c.b16 %v5498, %v5490
    %v6419 = vpack.c.b16 %v5499, %v5491
    %v6420 = vpack.c.b16 %v5500, %v5492
    %v6421 = vpack.c.b16 %v5501, %v5493
    %v6422 = vpack.c.b16 %v5502, %v5494
    %v6423 = vpack.c.b16 %v5511, %v5503
    %v6424 = vpack.c.b16 %v5512, %v5504
    %v6425 = vpack.c.b16 %v5513, %v5505
    %v6426 = vpack.c.b16 %v5514, %v5506
    %v6427 = vpack.c.b16 %v5515, %v5507
    %v6428 = vpack.c.b16 %v5516, %v5508
    %v6429 = vpack.c.b16 %v5517, %v5509
    %v6430 = vpack.c.b16 %v5518, %v5510
    %v6431 = vpack.c.b16 %v5527, %v5519
    %v6432 = vpack.c.b16 %v5528, %v5520
    %v6433 = vpack.c.b16 %v5529, %v5521
    %v6434 = vpack.c.b16 %v5530, %v5522
    %v6435 = vpack.c.b16 %v5531, %v5523
    %v6436 = vpack.c.b16 %v5532, %v5524
    %v6437 = vpack.c.b16 %v5533, %v5525
    %v6438 = vpack.c.b16 %v5534, %v5526
    %v6439 = vpack.c.b16 %v5543, %v5535
    %v6440 = vpack.c.b16 %v5544, %v5536
    %v6441 = vpack.c.b16 %v5545, %v5537
    %v6442 = vpack.c.b16 %v5546, %v5538
    %v6443 = vpack.c.b16 %v5547, %v5539
    %v6444 = vpack.c.b16 %v5548, %v5540
    %v6445 = vpack.c.b16 %v5549, %v5541
    %v6446 = vpack.c.b16 %v5550, %v5542
    %v6447 = vpack.c.b16 %v5559, %v5551
    %v6448 = vpack.c.b16 %v5560, %v5552
    %v6449 = vpack.c.b16 %v5561, %v5553
    %v6450 = vpack.c.b16 %v5562, %v5554
    %v6451 = vpack.c.b16 %v5563, %v5555
    %v6452 = vpack.c.b16 %v5564, %v5556
    %v6453 = vpack.c.b16 %v5565, %v5557
    %v6454 = vpack.c.b16 %v5566, %v5558
    %v6455 = vpack.c.b16 %v5575, %v5567
    %v6456 = vpack.c.b16 %v5576, %v5568
    %v6457 = vpack.c.b16 %v5577, %v5569
    %v6458 = vpack.c.b16 %v5578, %v5570
    %v6459 = vpack.c.b16 %v5579, %v5571
    %v6460 = vpack.c.b16 %v5580, %v5572
    %v6461 = vpack.c.b16 %v5581, %v5573
    %v6462 = vpack.c.b16 %v5582, %v5574
    %v6463 = vpack.c.b16 %v5591, %v5583
    %v6464 = vpack.c.b16 %v5592, %v5584
    %v6465 = vpack.c.b16 %v5593, %v5585
    %v6466 = vpack.c.b16 %v5594, %v5586
    %v6467 = vpack.c.b16 %v5595, %v5587
    %v6468 = vpack.c.b16 %v5596, %v5588
    %v6469 = vpack.c.b16 %v5597, %v5589
    %v6470 = vpack.c.b16 %v5598, %v5590
    %v6471 = vpack.c.b16 %v5607, %v5599
    %v6472 = vpack.c.b16 %v5608, %v5600
    %v6473 = vpack.c.b16 %v5609, %v5601
    %v6474 = vpack.c.b16 %v5610, %v5602
    %v6475 = vpack.c.b16 %v5611, %v5603
    %v6476 = vpack.c.b16 %v5612, %v5604
    %v6477 = vpack.c.b16 %v5613, %v5605
    %v6478 = vpack.c.b16 %v5614, %v5606
    %v6479 = vpack.c.b16 %v5623, %v5615
    %v6480 = vpack.c.b16 %v5624, %v5616
    %v6481 = vpack.c.b16 %v5625, %v5617
    %v6482 = vpack.c.b16 %v5626, %v5618
    %v6483 = vpack.c.b16 %v5627, %v5619
    %v6484 = vpack.c.b16 %v5628, %v5620
    %v6485 = vpack.c.b16 %v5629, %v5621
    %v6486 = vpack.c.b16 %v5630, %v5622
    %v6487 = vpack.c.b16 %v5639, %v5631
    %v6488 = vpack.c.b16 %v5640, %v5632
    %v6489 = vpack.c.b16 %v5641, %v5633
    %v6490 = vpack.c.b16 %v5642, %v5634
    %v6491 = vpack.c.b16 %v5643, %v5635
    %v6492 = vpack.c.b16 %v5644, %v5636
    %v6493 = vpack.c.b16 %v5645, %v5637
    %v6494 = vpack.c.b16 %v5646, %v5638
    %v6495 = vpack.c.b16 %v5655, %v5647
    %v6496 = vpack.c.b16 %v5656, %v5648
    %v6497 = vpack.c.b16 %v5657, %v5649
    %v6498 = vpack.c.b16 %v5658, %v5650
    %v6499 = vpack.c.b16 %v5659, %v5651
    %v6500 = vpack.c.b16 %v5660, %v5652
    %v6501 = vpack.c.b16 %v5661, %v5653
    %v6502 = vpack.c.b16 %v5662, %v5654
    %v6503 = vpack.c.b16 %v5671, %v5663
    %v6504 = vpack.c.b16 %v5672, %v5664
    %v6505 = vpack.c.b16 %v5673, %v5665
    %v6506 = vpack.c.b16 %v5674, %v5666
    %v6507 = vpack.c.b16 %v5675, %v5667
    %v6508 = vpack.c.b16 %v5676, %v5668
    %v6509 = vpack.c.b16 %v5677, %v5669
    %v6510 = vpack.c.b16 %v5678, %v5670
    %v6511 = vpack.c.b16 %v5687, %v5679
    %v6512 = vpack.c.b16 %v5688, %v5680
    %v6513 = vpack.c.b16 %v5689, %v5681
    %v6514 = vpack.c.b16 %v5690, %v5682
    %v6515 = vpack.c.b16 %v5691, %v5683
    %v6516 = vpack.c.b16 %v5692, %v5684
    %v6517 = vpack.c.b16 %v5693, %v5685
    %v6518 = vpack.c.b16 %v5694, %v5686
    %v6519 = vpack.c.b16 %v5703, %v5695
    %v6520 = vpack.c.b16 %v5704, %v5696
    %v6521 = vpack.c.b16 %v5705, %v5697
    %v6522 = vpack.c.b16 %v5706, %v5698
    %v6523 = vpack.c.b16 %v5707, %v5699
    %v6524 = vpack.c.b16 %v5708, %v5700
    %v6525 = vpack.c.b16 %v5709, %v5701
    %v6526 = vpack.c.b16 %v5710, %v5702
    %v6527 = vpack.c.b16 %v5719, %v5711
    %v6528 = vpack.c.b16 %v5720, %v5712
    %v6529 = vpack.c.b16 %v5721, %v5713
    %v6530 = vpack.c.b16 %v5722, %v5714
    %v6531 = vpack.c.b16 %v5723, %v5715
    %v6532 = vpack.c.b16 %v5724, %v5716
    %v6533 = vpack.c.b16 %v5725, %v5717
    %v6534 = vpack.c.b16 %v5726, %v5718
    %v6535 = vpack.c.b16 %v5735, %v5727
    %v6536 = vpack.c.b16 %v5736, %v5728
    %v6537 = vpack.c.b16 %v5737, %v5729
    %v6538 = vpack.c.b16 %v5738, %v5730
    %v6539 = vpack.c.b16 %v5739, %v5731
    %v6540 = vpack.c.b16 %v5740, %v5732
    %v6541 = vpack.c.b16 %v5741, %v5733
    %v6542 = vpack.c.b16 %v5742, %v5734
    %v6543 = vpack.c.b16 %v5751, %v5743
    %v6544 = vpack.c.b16 %v5752, %v5744
    %v6545 = vpack.c.b16 %v5753, %v5745
    %v6546 = vpack.c.b16 %v5754, %v5746
    %v6547 = vpack.c.b16 %v5755, %v5747
    %v6548 = vpack.c.b16 %v5756, %v5748
    %v6549 = vpack.c.b16 %v5757, %v5749
    %v6550 = vpack.c.b16 %v5758, %v5750
    %v6551 = vpack.c.b16 %v5767, %v5759
    %v6552 = vpack.c.b16 %v5768, %v5760
    %v6553 = vpack.c.b16 %v5769, %v5761
    %v6554 = vpack.c.b16 %v5770, %v5762
    %v6555 = vpack.c.b16 %v5771, %v5763
    %v6556 = vpack.c.b16 %v5772, %v5764
    %v6557 = vpack.c.b16 %v5773, %v5765
    %v6558 = vpack.c.b16 %v5774, %v5766
    %v6559 = vpack.c.b16 %v5783, %v5775
    %v6560 = vpack.c.b16 %v5784, %v5776
    %v6561 = vpack.c.b16 %v5785, %v5777
    %v6562 = vpack.c.b16 %v5786, %v5778
    %v6563 = vpack.c.b16 %v5787, %v5779
    %v6564 = vpack.c.b16 %v5788, %v5780
    %v6565 = vpack.c.b16 %v5789, %v5781
    %v6566 = vpack.c.b16 %v5790, %v5782
    %v6567 = vpack.c.b16 %v5799, %v5791
    %v6568 = vpack.c.b16 %v5800, %v5792
    %v6569 = vpack.c.b16 %v5801, %v5793
    %v6570 = vpack.c.b16 %v5802, %v5794
    %v6571 = vpack.c.b16 %v5803, %v5795
    %v6572 = vpack.c.b16 %v5804, %v5796
    %v6573 = vpack.c.b16 %v5805, %v5797
    %v6574 = vpack.c.b16 %v5806, %v5798
    %v6575 = vpack.c.b16 %v5815, %v5807
    %v6576 = vpack.c.b16 %v5816, %v5808
    %v6577 = vpack.c.b16 %v5817, %v5809
    %v6578 = vpack.c.b16 %v5818, %v5810
    %v6579 = vpack.c.b16 %v5819, %v5811
    %v6580 = vpack.c.b16 %v5820, %v5812
    %v6581 = vpack.c.b16 %v5821, %v5813
    %v6582 = vpack.c.b16 %v5822, %v5814
    %v6583 = vpack.c.b16 %v5831, %v5823
    %v6584 = vpack.c.b16 %v5832, %v5824
    %v6585 = vpack.c.b16 %v5833, %v5825
    %v6586 = vpack.c.b16 %v5834, %v5826
    %v6587 = vpack.c.b16 %v5835, %v5827
    %v6588 = vpack.c.b16 %v5836, %v5828
    %v6589 = vpack.c.b16 %v5837, %v5829
    %v6590 = vpack.c.b16 %v5838, %v5830
    %v6591 = vpack.c.b16 %v5847, %v5839
    %v6592 = vpack.c.b16 %v5848, %v5840
    %v6593 = vpack.c.b16 %v5849, %v5841
    %v6594 = vpack.c.b16 %v5850, %v5842
    %v6595 = vpack.c.b16 %v5851, %v5843
    %v6596 = vpack.c.b16 %v5852, %v5844
    %v6597 = vpack.c.b16 %v5853, %v5845
    %v6598 = vpack.c.b16 %v5854, %v5846
    %v6599 = vpack.c.b16 %v5863, %v5855
    %v6600 = vpack.c.b16 %v5864, %v5856
    %v6601 = vpack.c.b16 %v5865, %v5857
    %v6602 = vpack.c.b16 %v5866, %v5858
    %v6603 = vpack.c.b16 %v5867, %v5859
    %v6604 = vpack.c.b16 %v5868, %v5860
    %v6605 = vpack.c.b16 %v5869, %v5861
    %v6606 = vpack.c.b16 %v5870, %v5862
    %v6607 = vpack.c.b16 %v5879, %v5871
    %v6608 = vpack.c.b16 %v5880, %v5872
    %v6609 = vpack.c.b16 %v5881, %v5873
    %v6610 = vpack.c.b16 %v5882, %v5874
    %v6611 = vpack.c.b16 %v5883, %v5875
    %v6612 = vpack.c.b16 %v5884, %v5876
    %v6613 = vpack.c.b16 %v5885, %v5877
    %v6614 = vpack.c.b16 %v5886, %v5878
    %v6615 = vpack.c.b16 %v5895, %v5887
    %v6616 = vpack.c.b16 %v5896, %v5888
    %v6617 = vpack.c.b16 %v5897, %v5889
    %v6618 = vpack.c.b16 %v5898, %v5890
    %v6619 = vpack.c.b16 %v5899, %v5891
    %v6620 = vpack.c.b16 %v5900, %v5892
    %v6621 = vpack.c.b16 %v5901, %v5893
    %v6622 = vpack.c.b16 %v5902, %v5894
    %v6623 = vpack.c.b16 %v5911, %v5903
    %v6624 = vpack.c.b16 %v5912, %v5904
    %v6625 = vpack.c.b16 %v5913, %v5905
    %v6626 = vpack.c.b16 %v5914, %v5906
    %v6627 = vpack.c.b16 %v5915, %v5907
    %v6628 = vpack.c.b16 %v5916, %v5908
    %v6629 = vpack.c.b16 %v5917, %v5909
    %v6630 = vpack.c.b16 %v5918, %v5910
    %v6631 = vpack.c.b16 %v5927, %v5919
    %v6632 = vpack.c.b16 %v5928, %v5920
    %v6633 = vpack.c.b16 %v5929, %v5921
    %v6634 = vpack.c.b16 %v5930, %v5922
    %v6635 = vpack.c.b16 %v5931, %v5923
    %v6636 = vpack.c.b16 %v5932, %v5924
    %v6637 = vpack.c.b16 %v5933, %v5925
    %v6638 = vpack.c.b16 %v5934, %v5926
    %v6639 = vpack.c.b16 %v5943, %v5935
    %v6640 = vpack.c.b16 %v5944, %v5936
    %v6641 = vpack.c.b16 %v5945, %v5937
    %v6642 = vpack.c.b16 %v5946, %v5938
    %v6643 = vpack.c.b16 %v5947, %v5939
    %v6644 = vpack.c.b16 %v5948, %v5940
    %v6645 = vpack.c.b16 %v5949, %v5941
    %v6646 = vpack.c.b16 %v5950, %v5942
    %v6647 = vpack.c.b16 %v5959, %v5951
    %v6648 = vpack.c.b16 %v5960, %v5952
    %v6649 = vpack.c.b16 %v5961, %v5953
    %v6650 = vpack.c.b16 %v5962, %v5954
    %v6651 = vpack.c.b16 %v5963, %v5955
    %v6652 = vpack.c.b16 %v5964, %v5956
    %v6653 = vpack.c.b16 %v5965, %v5957
    %v6654 = vpack.c.b16 %v5966, %v5958
    %v6655 = vpack.c.b16 %v5975, %v5967
    %v6656 = vpack.c.b16 %v5976, %v5968
    %v6657 = vpack.c.b16 %v5977, %v5969
    %v6658 = vpack.c.b16 %v5978, %v5970
    %v6659 = vpack.c.b16 %v5979, %v5971
    %v6660 = vpack.c.b16 %v5980, %v5972
    %v6661 = vpack.c.b16 %v5981, %v5973
    %v6662 = vpack.c.b16 %v5982, %v5974
    %v6663 = vpack.c.b16 %v5991, %v5983
    %v6664 = vpack.c.b16 %v5992, %v5984
    %v6665 = vpack.c.b16 %v5993, %v5985
    %v6666 = vpack.c.b16 %v5994, %v5986
    %v6667 = vpack.c.b16 %v5995, %v5987
    %v6668 = vpack.c.b16 %v5996, %v5988
    %v6669 = vpack.c.b16 %v5997, %v5989
    %v6670 = vpack.c.b16 %v5998, %v5990
    %v6671 = vpack.c.b16 %v6007, %v5999
    %v6672 = vpack.c.b16 %v6008, %v6000
    %v6673 = vpack.c.b16 %v6009, %v6001
    %v6674 = vpack.c.b16 %v6010, %v6002
    %v6675 = vpack.c.b16 %v6011, %v6003
    %v6676 = vpack.c.b16 %v6012, %v6004
    %v6677 = vpack.c.b16 %v6013, %v6005
    %v6678 = vpack.c.b16 %v6014, %v6006
    %v6679 = vpack.c.b16 %v6023, %v6015
    %v6680 = vpack.c.b16 %v6024, %v6016
    %v6681 = vpack.c.b16 %v6025, %v6017
    %v6682 = vpack.c.b16 %v6026, %v6018
    %v6683 = vpack.c.b16 %v6027, %v6019
    %v6684 = vpack.c.b16 %v6028, %v6020
    %v6685 = vpack.c.b16 %v6029, %v6021
    %v6686 = vpack.c.b16 %v6030, %v6022
    %v6687 = vpack.c.b16 %v6039, %v6031
    %v6688 = vpack.c.b16 %v6040, %v6032
    %v6689 = vpack.c.b16 %v6041, %v6033
    %v6690 = vpack.c.b16 %v6042, %v6034
    %v6691 = vpack.c.b16 %v6043, %v6035
    %v6692 = vpack.c.b16 %v6044, %v6036
    %v6693 = vpack.c.b16 %v6045, %v6037
    %v6694 = vpack.c.b16 %v6046, %v6038
    %v6695 = vpack.c.b16 %v6055, %v6047
    %v6696 = vpack.c.b16 %v6056, %v6048
    %v6697 = vpack.c.b16 %v6057, %v6049
    %v6698 = vpack.c.b16 %v6058, %v6050
    %v6699 = vpack.c.b16 %v6059, %v6051
    %v6700 = vpack.c.b16 %v6060, %v6052
    %v6701 = vpack.c.b16 %v6061, %v6053
    %v6702 = vpack.c.b16 %v6062, %v6054
    %v6703 = vpack.c.b16 %v6071, %v6063
    %v6704 = vpack.c.b16 %v6072, %v6064
    %v6705 = vpack.c.b16 %v6073, %v6065
    %v6706 = vpack.c.b16 %v6074, %v6066
    %v6707 = vpack.c.b16 %v6075, %v6067
    %v6708 = vpack.c.b16 %v6076, %v6068
    %v6709 = vpack.c.b16 %v6077, %v6069
    %v6710 = vpack.c.b16 %v6078, %v6070
    %v6711 = vpack.c.b16 %v6087, %v6079
    %v6712 = vpack.c.b16 %v6088, %v6080
    %v6713 = vpack.c.b16 %v6089, %v6081
    %v6714 = vpack.c.b16 %v6090, %v6082
    %v6715 = vpack.c.b16 %v6091, %v6083
    %v6716 = vpack.c.b16 %v6092, %v6084
    %v6717 = vpack.c.b16 %v6093, %v6085
    %v6718 = vpack.c.b16 %v6094, %v6086
    %v6719 = vpack.c.b16 %v6103, %v6095
    %v6720 = vpack.c.b16 %v6104, %v6096
    %v6721 = vpack.c.b16 %v6105, %v6097
    %v6722 = vpack.c.b16 %v6106, %v6098
    %v6723 = vpack.c.b16 %v6107, %v6099
    %v6724 = vpack.c.b16 %v6108, %v6100
    %v6725 = vpack.c.b16 %v6109, %v6101
    %v6726 = vpack.c.b16 %v6110, %v6102
    %v6727 = vpack.c.b16 %v6119, %v6111
    %v6728 = vpack.c.b16 %v6120, %v6112
    %v6729 = vpack.c.b16 %v6121, %v6113
    %v6730 = vpack.c.b16 %v6122, %v6114
    %v6731 = vpack.c.b16 %v6123, %v6115
    %v6732 = vpack.c.b16 %v6124, %v6116
    %v6733 = vpack.c.b16 %v6125, %v6117
    %v6734 = vpack.c.b16 %v6126, %v6118
    %v6735 = vpack.c.b16 %v6135, %v6127
    %v6736 = vpack.c.b16 %v6136, %v6128
    %v6737 = vpack.c.b16 %v6137, %v6129
    %v6738 = vpack.c.b16 %v6138, %v6130
    %v6739 = vpack.c.b16 %v6139, %v6131
    %v6740 = vpack.c.b16 %v6140, %v6132
    %v6741 = vpack.c.b16 %v6141, %v6133
    %v6742 = vpack.c.b16 %v6142, %v6134
    %v6743 = vpack.c.b16 %v6151, %v6143
    %v6744 = vpack.c.b16 %v6152, %v6144
    %v6745 = vpack.c.b16 %v6153, %v6145
    %v6746 = vpack.c.b16 %v6154, %v6146
    %v6747 = vpack.c.b16 %v6155, %v6147
    %v6748 = vpack.c.b16 %v6156, %v6148
    %v6749 = vpack.c.b16 %v6157, %v6149
    %v6750 = vpack.c.b16 %v6158, %v6150
    %v6751 = vpack.c.b16 %v6167, %v6159
    %v6752 = vpack.c.b16 %v6168, %v6160
    %v6753 = vpack.c.b16 %v6169, %v6161
    %v6754 = vpack.c.b16 %v6170, %v6162
    %v6755 = vpack.c.b16 %v6171, %v6163
    %v6756 = vpack.c.b16 %v6172, %v6164
    %v6757 = vpack.c.b16 %v6173, %v6165
    %v6758 = vpack.c.b16 %v6174, %v6166
    %v6759 = vpack.c.b16 %v6183, %v6175
    %v6760 = vpack.c.b16 %v6184, %v6176
    %v6761 = vpack.c.b16 %v6185, %v6177
    %v6762 = vpack.c.b16 %v6186, %v6178
    %v6763 = vpack.c.b16 %v6187, %v6179
    %v6764 = vpack.c.b16 %v6188, %v6180
    %v6765 = vpack.c.b16 %v6189, %v6181
    %v6766 = vpack.c.b16 %v6190, %v6182
    %v6767 = vpack.c.b16 %v6199, %v6191
    %v6768 = vpack.c.b16 %v6200, %v6192
    %v6769 = vpack.c.b16 %v6201, %v6193
    %v6770 = vpack.c.b16 %v6202, %v6194
    %v6771 = vpack.c.b16 %v6203, %v6195
    %v6772 = vpack.c.b16 %v6204, %v6196
    %v6773 = vpack.c.b16 %v6205, %v6197
    %v6774 = vpack.c.b16 %v6206, %v6198
    %v6775 = vpack.c.b16 %v6215, %v6207
    %v6776 = vpack.c.b16 %v6216, %v6208
    %v6777 = vpack.c.b16 %v6217, %v6209
    %v6778 = vpack.c.b16 %v6218, %v6210
    %v6779 = vpack.c.b16 %v6219, %v6211
    %v6780 = vpack.c.b16 %v6220, %v6212
    %v6781 = vpack.c.b16 %v6221, %v6213
    %v6782 = vpack.c.b16 %v6222, %v6214
    %v6783 = vpack.c.b16 %v6231, %v6223
    %v6784 = vpack.c.b16 %v6232, %v6224
    %v6785 = vpack.c.b16 %v6233, %v6225
    %v6786 = vpack.c.b16 %v6234, %v6226
    %v6787 = vpack.c.b16 %v6235, %v6227
    %v6788 = vpack.c.b16 %v6236, %v6228
    %v6789 = vpack.c.b16 %v6237, %v6229
    %v6790 = vpack.c.b16 %v6238, %v6230
    %v6791 = vpack.c.b16 %v6247, %v6239
    %v6792 = vpack.c.b16 %v6248, %v6240
    %v6793 = vpack.c.b16 %v6249, %v6241
    %v6794 = vpack.c.b16 %v6250, %v6242
    %v6795 = vpack.c.b16 %v6251, %v6243
    %v6796 = vpack.c.b16 %v6252, %v6244
    %v6797 = vpack.c.b16 %v6253, %v6245
    %v6798 = vpack.c.b16 %v6254, %v6246
    %v6799 = vpack.c.b16 %v6263, %v6255
    %v6800 = vpack.c.b16 %v6264, %v6256
    %v6801 = vpack.c.b16 %v6265, %v6257
    %v6802 = vpack.c.b16 %v6266, %v6258
    %v6803 = vpack.c.b16 %v6267, %v6259
    %v6804 = vpack.c.b16 %v6268, %v6260
    %v6805 = vpack.c.b16 %v6269, %v6261
    %v6806 = vpack.c.b16 %v6270, %v6262
    %v6807 = vpack.c.b16 %v6279, %v6271
    %v6808 = vpack.c.b16 %v6280, %v6272
    %v6809 = vpack.c.b16 %v6281, %v6273
    %v6810 = vpack.c.b16 %v6282, %v6274
    %v6811 = vpack.c.b16 %v6283, %v6275
    %v6812 = vpack.c.b16 %v6284, %v6276
    %v6813 = vpack.c.b16 %v6285, %v6277
    %v6814 = vpack.c.b16 %v6286, %v6278
    %v6815 = vpack.c.b16 %v6295, %v6287
    %v6816 = vpack.c.b16 %v6296, %v6288
    %v6817 = vpack.c.b16 %v6297, %v6289
    %v6818 = vpack.c.b16 %v6298, %v6290
    %v6819 = vpack.c.b16 %v6299, %v6291
    %v6820 = vpack.c.b16 %v6300, %v6292
    %v6821 = vpack.c.b16 %v6301, %v6293
    %v6822 = vpack.c.b16 %v6302, %v6294
    %v6823 = vpack.c.b16 %v6311, %v6303
    %v6824 = vpack.c.b16 %v6312, %v6304
    %v6825 = vpack.c.b16 %v6313, %v6305
    %v6826 = vpack.c.b16 %v6314, %v6306
    %v6827 = vpack.c.b16 %v6315, %v6307
    %v6828 = vpack.c.b16 %v6316, %v6308
    %v6829 = vpack.c.b16 %v6317, %v6309
    %v6830 = vpack.c.b16 %v6318, %v6310
    %7343 = vmatprep.subr.bf16.mxu0 %v6320
    %7344 = vmatpush1.bf16.msra.mxu0 %v6319
    %7345 = vmatprep.subr.bf16.mxu0 %v6328
    %7346 = vmatpush1.bf16.msra.mxu0 %v6327
    %7347 = vmatprep.subr.bf16.mxu0 %v6336
    %7348 = vmatpush1.bf16.msra.mxu0 %v6335
    %7349 = vmatprep.subr.bf16.mxu0 %v6344
    %7350 = vmatpush1.bf16.msra.mxu0 %v6343
    %7351 = vmatprep.subr.bf16.mxu0 %v6352
    %7352 = vmatpush1.bf16.msra.mxu0 %v6351
    %7353 = vmatprep.subr.bf16.mxu0 %v6360
    %7354 = vmatpush1.bf16.msra.mxu0 %v6359
    %7355 = vmatprep.subr.bf16.mxu0 %v6368
    %7356 = vmatpush1.bf16.msra.mxu0 %v6367
    %7357 = vmatprep.subr.bf16.mxu0 %v6376
    %7358 = vmatpush1.bf16.msra.mxu0 %v6375
    %7359 = vmatprep.subr.bf16.mxu0 %v6384
    %7360 = vmatpush1.bf16.msra.mxu0 %v6383
    %7361 = vmatprep.subr.bf16.mxu0 %v6392
    %7362 = vmatpush1.bf16.msra.mxu0 %v6391
    %7363 = vmatprep.subr.bf16.mxu0 %v6400
    %7364 = vmatpush1.bf16.msra.mxu0 %v6399
    %7365 = vmatprep.subr.bf16.mxu0 %v6408
    %7366 = vmatpush1.bf16.msra.mxu0 %v6407
    %7367 = vmatprep.subr.bf16.mxu0 %v6416
    %7368 = vmatpush1.bf16.msra.mxu0 %v6415
    %7369 = vmatprep.subr.bf16.mxu0 %v6424
    %7370 = vmatpush1.bf16.msra.mxu0 %v6423
    %7371 = vmatprep.subr.bf16.mxu0 %v6432
    %7372 = vmatpush1.bf16.msra.mxu0 %v6431
    %7373 = vmatprep.subr.bf16.mxu0 %v6440
    %7374 = vmatpush1.bf16.msra.mxu0 %v6439
    %7375 = vmatprep.mubr.bf16.mxu0 %v536
    %7376 = vmatmul.mubr.bf16.gmra.mrb[0].mxu0 %v535
    %v7377 = vpop.f32.mrb[0].mxu0
    %v7378 = vadd.f32 %v4285, %v7377
    %v7379 = vpop.f32.mrb[0].mxu0
    %v7380 = vadd.f32 %v4287, %v7379
    %v7381 = vpop.f32.mrb[0].mxu0
    %v7382 = vpop.f32.mrb[0].mxu0
    %7383 = vdwg.mxu0
    %7384 = vmatprep.subr.bf16.mxu0 %v6448
    %7385 = vmatpush1.bf16.msra.mxu0 %v6447
    %7386 = vmatprep.subr.bf16.mxu0 %v6456
    %7387 = vmatpush1.bf16.msra.mxu0 %v6455
    %7388 = vmatprep.subr.bf16.mxu0 %v6464
    %7389 = vmatpush1.bf16.msra.mxu0 %v6463
    %7390 = vmatprep.subr.bf16.mxu0 %v6472
    %7391 = vmatpush1.bf16.msra.mxu0 %v6471
    %7392 = vmatprep.subr.bf16.mxu0 %v6480
    %7393 = vmatpush1.bf16.msra.mxu0 %v6479
    %7394 = vmatprep.subr.bf16.mxu0 %v6488
    %7395 = vmatpush1.bf16.msra.mxu0 %v6487
    %7396 = vmatprep.subr.bf16.mxu0 %v6496
    %7397 = vmatpush1.bf16.msra.mxu0 %v6495
    %7398 = vmatprep.subr.bf16.mxu0 %v6504
    %7399 = vmatpush1.bf16.msra.mxu0 %v6503
    %7400 = vmatprep.subr.bf16.mxu0 %v6512
    %7401 = vmatpush1.bf16.msra.mxu0 %v6511
    %7402 = vmatprep.subr.bf16.mxu0 %v6520
    %7403 = vmatpush1.bf16.msra.mxu0 %v6519
    %7404 = vmatprep.subr.bf16.mxu0 %v6528
    %7405 = vmatpush1.bf16.msra.mxu0 %v6527
    %7406 = vmatprep.subr.bf16.mxu0 %v6536
    %7407 = vmatpush1.bf16.msra.mxu0 %v6535
    %7408 = vmatprep.subr.bf16.mxu0 %v6544
    %7409 = vmatpush1.bf16.msra.mxu0 %v6543
    %7410 = vmatprep.subr.bf16.mxu0 %v6552
    %7411 = vmatpush1.bf16.msra.mxu0 %v6551
    %7412 = vmatprep.subr.bf16.mxu0 %v6560
    %7413 = vmatpush1.bf16.msra.mxu0 %v6559
    %7414 = vmatprep.subr.bf16.mxu0 %v6568
    %7415 = vmatpush1.bf16.msra.mxu0 %v6567
    %7416 = vmatprep.mubr.bf16.mxu0 %v538
    %7417 = vmatmul.mubr.bf16.gmra.mrb[0].mxu0 %v537
    %v7418 = vpop.f32.mrb[0].mxu0
    %v7419 = vadd.f32 %v7378, %v7418
    %v7420 = vpop.f32.mrb[0].mxu0
    %v7421 = vadd.f32 %v7380, %v7420
    %v7422 = vpop.f32.mrb[0].mxu0
    %v7423 = vpop.f32.mrb[0].mxu0
    %7424 = vdwg.mxu0
    %7425 = vmatprep.subr.bf16.mxu0 %v6576
    %7426 = vmatpush1.bf16.msra.mxu0 %v6575
    %7427 = vmatprep.subr.bf16.mxu0 %v6584
    %7428 = vmatpush1.bf16.msra.mxu0 %v6583
    %7429 = vmatprep.subr.bf16.mxu0 %v6592
    %7430 = vmatpush1.bf16.msra.mxu0 %v6591
    %7431 = vmatprep.subr.bf16.mxu0 %v6600
    %7432 = vmatpush1.bf16.msra.mxu0 %v6599
    %7433 = vmatprep.subr.bf16.mxu0 %v6608
    %7434 = vmatpush1.bf16.msra.mxu0 %v6607
    %7435 = vmatprep.subr.bf16.mxu0 %v6616
    %7436 = vmatpush1.bf16.msra.mxu0 %v6615
    %7437 = vmatprep.subr.bf16.mxu0 %v6624
    %7438 = vmatpush1.bf16.msra.mxu0 %v6623
    %7439 = vmatprep.subr.bf16.mxu0 %v6632
    %7440 = vmatpush1.bf16.msra.mxu0 %v6631
    %7441 = vmatprep.subr.bf16.mxu0 %v6640
    %7442 = vmatpush1.bf16.msra.mxu0 %v6639
    %7443 = vmatprep.subr.bf16.mxu0 %v6648
    %7444 = vmatpush1.bf16.msra.mxu0 %v6647
    %7445 = vmatprep.subr.bf16.mxu0 %v6656
    %7446 = vmatpush1.bf16.msra.mxu0 %v6655
    %7447 = vmatprep.subr.bf16.mxu0 %v6664
    %7448 = vmatpush1.bf16.msra.mxu0 %v6663
    %7449 = vmatprep.subr.bf16.mxu0 %v6672
    %7450 = vmatpush1.bf16.msra.mxu0 %v6671
    %7451 = vmatprep.subr.bf16.mxu0 %v6680
    %7452 = vmatpush1.bf16.msra.mxu0 %v6679
    %7453 = vmatprep.subr.bf16.mxu0 %v6688
    %7454 = vmatpush1.bf16.msra.mxu0 %v6687
    %7455 = vmatprep.subr.bf16.mxu0 %v6696
    %7456 = vmatpush1.bf16.msra.mxu0 %v6695
    %7457 = vmatprep.mubr.bf16.mxu0 %v540
    %7458 = vmatmul.mubr.bf16.gmra.mrb[0].mxu0 %v539
    %v7459 = vpop.f32.mrb[0].mxu0
    %v7460 = vadd.f32 %v7419, %v7459
    %v7461 = vpop.f32.mrb[0].mxu0
    %v7462 = vadd.f32 %v7421, %v7461
    %v7463 = vpop.f32.mrb[0].mxu0
    %v7464 = vpop.f32.mrb[0].mxu0
    %7465 = vdwg.mxu0
    %7466 = vmatprep.subr.bf16.mxu0 %v6704
    %7467 = vmatpush1.bf16.msra.mxu0 %v6703
    %7468 = vmatprep.subr.bf16.mxu0 %v6712
    %7469 = vmatpush1.bf16.msra.mxu0 %v6711
    %7470 = vmatprep.subr.bf16.mxu0 %v6720
    %7471 = vmatpush1.bf16.msra.mxu0 %v6719
    %7472 = vmatprep.subr.bf16.mxu0 %v6728
    %7473 = vmatpush1.bf16.msra.mxu0 %v6727
    %7474 = vmatprep.subr.bf16.mxu0 %v6736
    %7475 = vmatpush1.bf16.msra.mxu0 %v6735
    %7476 = vmatprep.subr.bf16.mxu0 %v6744
    %7477 = vmatpush1.bf16.msra.mxu0 %v6743
    %7478 = vmatprep.subr.bf16.mxu0 %v6752
    %7479 = vmatpush1.bf16.msra.mxu0 %v6751
    %7480 = vmatprep.subr.bf16.mxu0 %v6760
    %7481 = vmatpush1.bf16.msra.mxu0 %v6759
    %7482 = vmatprep.subr.bf16.mxu0 %v6768
    %7483 = vmatpush1.bf16.msra.mxu0 %v6767
    %7484 = vmatprep.subr.bf16.mxu0 %v6776
    %7485 = vmatpush1.bf16.msra.mxu0 %v6775
    %7486 = vmatprep.subr.bf16.mxu0 %v6784
    %7487 = vmatpush1.bf16.msra.mxu0 %v6783
    %7488 = vmatprep.subr.bf16.mxu0 %v6792
    %7489 = vmatpush1.bf16.msra.mxu0 %v6791
    %7490 = vmatprep.subr.bf16.mxu0 %v6800
    %7491 = vmatpush1.bf16.msra.mxu0 %v6799
    %7492 = vmatprep.subr.bf16.mxu0 %v6808
    %7493 = vmatpush1.bf16.msra.mxu0 %v6807
    %7494 = vmatprep.subr.bf16.mxu0 %v6816
    %7495 = vmatpush1.bf16.msra.mxu0 %v6815
    %7496 = vmatprep.subr.bf16.mxu0 %v6824
    %7497 = vmatpush1.bf16.msra.mxu0 %v6823
    %7498 = vmatprep.mubr.bf16.mxu0 %v542
    %7499 = vmatmul.mubr.bf16.gmra.mrb[0].mxu0 %v541
    %v7500 = vpop.f32.mrb[0].mxu0
    %v7501 = vadd.f32 %v7460, %v7500
    %v7502 = vpop.f32.mrb[0].mxu0
    %v7503 = vadd.f32 %v7462, %v7502
    %v7504 = vpop.f32.mrb[0].mxu0
    %v7505 = vpop.f32.mrb[0].mxu0
    %7506 = vdwg.mxu0
    %7507 = vmatprep.subr.bf16.mxu0 %v6322
    %7508 = vmatpush1.bf16.msra.mxu0 %v6321
    %7509 = vmatprep.subr.bf16.mxu0 %v6330
    %7510 = vmatpush1.bf16.msra.mxu0 %v6329
    %7511 = vmatprep.subr.bf16.mxu0 %v6338
    %7512 = vmatpush1.bf16.msra.mxu0 %v6337
    %7513 = vmatprep.subr.bf16.mxu0 %v6346
    %7514 = vmatpush1.bf16.msra.mxu0 %v6345
    %7515 = vmatprep.subr.bf16.mxu0 %v6354
    %7516 = vmatpush1.bf16.msra.mxu0 %v6353
    %7517 = vmatprep.subr.bf16.mxu0 %v6362
    %7518 = vmatpush1.bf16.msra.mxu0 %v6361
    %7519 = vmatprep.subr.bf16.mxu0 %v6370
    %7520 = vmatpush1.bf16.msra.mxu0 %v6369
    %7521 = vmatprep.subr.bf16.mxu0 %v6378
    %7522 = vmatpush1.bf16.msra.mxu0 %v6377
    %7523 = vmatprep.subr.bf16.mxu0 %v6386
    %7524 = vmatpush1.bf16.msra.mxu0 %v6385
    %7525 = vmatprep.subr.bf16.mxu0 %v6394
    %7526 = vmatpush1.bf16.msra.mxu0 %v6393
    %7527 = vmatprep.subr.bf16.mxu0 %v6402
    %7528 = vmatpush1.bf16.msra.mxu0 %v6401
    %7529 = vmatprep.subr.bf16.mxu0 %v6410
    %7530 = vmatpush1.bf16.msra.mxu0 %v6409
    %7531 = vmatprep.subr.bf16.mxu0 %v6418
    %7532 = vmatpush1.bf16.msra.mxu0 %v6417
    %7533 = vmatprep.subr.bf16.mxu0 %v6426
    %7534 = vmatpush1.bf16.msra.mxu0 %v6425
    %7535 = vmatprep.subr.bf16.mxu0 %v6434
    %7536 = vmatpush1.bf16.msra.mxu0 %v6433
    %7537 = vmatprep.subr.bf16.mxu0 %v6442
    %7538 = vmatpush1.bf16.msra.mxu0 %v6441
    %7539 = vmatprep.mubr.bf16.mxu0 %v536
    %7540 = vmatmul.mubr.bf16.gmra.mrb[0].mxu0 %v535
    %v7541 = vpop.f32.mrb[0].mxu0
    %v7542 = vadd.f32 %v4449, %v7541
    %v7543 = vpop.f32.mrb[0].mxu0
    %v7544 = vadd.f32 %v4451, %v7543
    %v7545 = vpop.f32.mrb[0].mxu0
    %v7546 = vpop.f32.mrb[0].mxu0
    %7547 = vdwg.mxu0
    %7548 = vmatprep.subr.bf16.mxu0 %v6450
    %7549 = vmatpush1.bf16.msra.mxu0 %v6449
    %7550 = vmatprep.subr.bf16.mxu0 %v6458
    %7551 = vmatpush1.bf16.msra.mxu0 %v6457
    %7552 = vmatprep.subr.bf16.mxu0 %v6466
    %7553 = vmatpush1.bf16.msra.mxu0 %v6465
    %7554 = vmatprep.subr.bf16.mxu0 %v6474
    %7555 = vmatpush1.bf16.msra.mxu0 %v6473
    %7556 = vmatprep.subr.bf16.mxu0 %v6482
    %7557 = vmatpush1.bf16.msra.mxu0 %v6481
    %7558 = vmatprep.subr.bf16.mxu0 %v6490
    %7559 = vmatpush1.bf16.msra.mxu0 %v6489
    %7560 = vmatprep.subr.bf16.mxu0 %v6498
    %7561 = vmatpush1.bf16.msra.mxu0 %v6497
    %7562 = vmatprep.subr.bf16.mxu0 %v6506
    %7563 = vmatpush1.bf16.msra.mxu0 %v6505
    %7564 = vmatprep.subr.bf16.mxu0 %v6514
    %7565 = vmatpush1.bf16.msra.mxu0 %v6513
    %7566 = vmatprep.subr.bf16.mxu0 %v6522
    %7567 = vmatpush1.bf16.msra.mxu0 %v6521
    %7568 = vmatprep.subr.bf16.mxu0 %v6530
    %7569 = vmatpush1.bf16.msra.mxu0 %v6529
    %7570 = vmatprep.subr.bf16.mxu0 %v6538
    %7571 = vmatpush1.bf16.msra.mxu0 %v6537
    %7572 = vmatprep.subr.bf16.mxu0 %v6546
    %7573 = vmatpush1.bf16.msra.mxu0 %v6545
    %7574 = vmatprep.subr.bf16.mxu0 %v6554
    %7575 = vmatpush1.bf16.msra.mxu0 %v6553
    %7576 = vmatprep.subr.bf16.mxu0 %v6562
    %7577 = vmatpush1.bf16.msra.mxu0 %v6561
    %7578 = vmatprep.subr.bf16.mxu0 %v6570
    %7579 = vmatpush1.bf16.msra.mxu0 %v6569
    %7580 = vmatprep.mubr.bf16.mxu0 %v538
    %7581 = vmatmul.mubr.bf16.gmra.mrb[0].mxu0 %v537
    %v7582 = vpop.f32.mrb[0].mxu0
    %v7583 = vadd.f32 %v7542, %v7582
    %v7584 = vpop.f32.mrb[0].mxu0
    %v7585 = vadd.f32 %v7544, %v7584
    %v7586 = vpop.f32.mrb[0].mxu0
    %v7587 = vpop.f32.mrb[0].mxu0
    %7588 = vdwg.mxu0
    %7589 = vmatprep.subr.bf16.mxu0 %v6578
    %7590 = vmatpush1.bf16.msra.mxu0 %v6577
    %7591 = vmatprep.subr.bf16.mxu0 %v6586
    %7592 = vmatpush1.bf16.msra.mxu0 %v6585
    %7593 = vmatprep.subr.bf16.mxu0 %v6594
    %7594 = vmatpush1.bf16.msra.mxu0 %v6593
    %7595 = vmatprep.subr.bf16.mxu0 %v6602
    %7596 = vmatpush1.bf16.msra.mxu0 %v6601
    %7597 = vmatprep.subr.bf16.mxu0 %v6610
    %7598 = vmatpush1.bf16.msra.mxu0 %v6609
    %7599 = vmatprep.subr.bf16.mxu0 %v6618
    %7600 = vmatpush1.bf16.msra.mxu0 %v6617
    %7601 = vmatprep.subr.bf16.mxu0 %v6626
    %7602 = vmatpush1.bf16.msra.mxu0 %v6625
    %7603 = vmatprep.subr.bf16.mxu0 %v6634
    %7604 = vmatpush1.bf16.msra.mxu0 %v6633
    %7605 = vmatprep.subr.bf16.mxu0 %v6642
    %7606 = vmatpush1.bf16.msra.mxu0 %v6641
    %7607 = vmatprep.subr.bf16.mxu0 %v6650
    %7608 = vmatpush1.bf16.msra.mxu0 %v6649
    %7609 = vmatprep.subr.bf16.mxu0 %v6658
    %7610 = vmatpush1.bf16.msra.mxu0 %v6657
    %7611 = vmatprep.subr.bf16.mxu0 %v6666
    %7612 = vmatpush1.bf16.msra.mxu0 %v6665
    %7613 = vmatprep.subr.bf16.mxu0 %v6674
    %7614 = vmatpush1.bf16.msra.mxu0 %v6673
    %7615 = vmatprep.subr.bf16.mxu0 %v6682
    %7616 = vmatpush1.bf16.msra.mxu0 %v6681
    %7617 = vmatprep.subr.bf16.mxu0 %v6690
    %7618 = vmatpush1.bf16.msra.mxu0 %v6689
    %7619 = vmatprep.subr.bf16.mxu0 %v6698
    %7620 = vmatpush1.bf16.msra.mxu0 %v6697
    %7621 = vmatprep.mubr.bf16.mxu0 %v540
    %7622 = vmatmul.mubr.bf16.gmra.mrb[0].mxu0 %v539
    %v7623 = vpop.f32.mrb[0].mxu0
    %v7624 = vadd.f32 %v7583, %v7623
    %v7625 = vpop.f32.mrb[0].mxu0
    %v7626 = vadd.f32 %v7585, %v7625
    %v7627 = vpop.f32.mrb[0].mxu0
    %v7628 = vpop.f32.mrb[0].mxu0
    %7629 = vdwg.mxu0
    %7630 = vmatprep.subr.bf16.mxu0 %v6706
    %7631 = vmatpush1.bf16.msra.mxu0 %v6705
    %7632 = vmatprep.subr.bf16.mxu0 %v6714
    %7633 = vmatpush1.bf16.msra.mxu0 %v6713
    %7634 = vmatprep.subr.bf16.mxu0 %v6722
    %7635 = vmatpush1.bf16.msra.mxu0 %v6721
    %7636 = vmatprep.subr.bf16.mxu0 %v6730
    %7637 = vmatpush1.bf16.msra.mxu0 %v6729
    %7638 = vmatprep.subr.bf16.mxu0 %v6738
    %7639 = vmatpush1.bf16.msra.mxu0 %v6737
    %7640 = vmatprep.subr.bf16.mxu0 %v6746
    %7641 = vmatpush1.bf16.msra.mxu0 %v6745
    %7642 = vmatprep.subr.bf16.mxu0 %v6754
    %7643 = vmatpush1.bf16.msra.mxu0 %v6753
    %7644 = vmatprep.subr.bf16.mxu0 %v6762
    %7645 = vmatpush1.bf16.msra.mxu0 %v6761
    %7646 = vmatprep.subr.bf16.mxu0 %v6770
    %7647 = vmatpush1.bf16.msra.mxu0 %v6769
    %7648 = vmatprep.subr.bf16.mxu0 %v6778
    %7649 = vmatpush1.bf16.msra.mxu0 %v6777
    %7650 = vmatprep.subr.bf16.mxu0 %v6786
    %7651 = vmatpush1.bf16.msra.mxu0 %v6785
    %7652 = vmatprep.subr.bf16.mxu0 %v6794
    %7653 = vmatpush1.bf16.msra.mxu0 %v6793
    %7654 = vmatprep.subr.bf16.mxu0 %v6802
    %7655 = vmatpush1.bf16.msra.mxu0 %v6801
    %7656 = vmatprep.subr.bf16.mxu0 %v6810
    %7657 = vmatpush1.bf16.msra.mxu0 %v6809
    %7658 = vmatprep.subr.bf16.mxu0 %v6818
    %7659 = vmatpush1.bf16.msra.mxu0 %v6817
    %7660 = vmatprep.subr.bf16.mxu0 %v6826
    %7661 = vmatpush1.bf16.msra.mxu0 %v6825
    %7662 = vmatprep.mubr.bf16.mxu0 %v542
    %7663 = vmatmul.mubr.bf16.gmra.mrb[0].mxu0 %v541
    %v7664 = vpop.f32.mrb[0].mxu0
    %v7665 = vadd.f32 %v7624, %v7664
    %v7666 = vpop.f32.mrb[0].mxu0
    %v7667 = vadd.f32 %v7626, %v7666
    %v7668 = vpop.f32.mrb[0].mxu0
    %v7669 = vpop.f32.mrb[0].mxu0
    %7670 = vdwg.mxu0
    %7671 = vmatprep.subr.bf16.mxu0 %v6324
    %7672 = vmatpush1.bf16.msra.mxu0 %v6323
    %7673 = vmatprep.subr.bf16.mxu0 %v6332
    %7674 = vmatpush1.bf16.msra.mxu0 %v6331
    %7675 = vmatprep.subr.bf16.mxu0 %v6340
    %7676 = vmatpush1.bf16.msra.mxu0 %v6339
    %7677 = vmatprep.subr.bf16.mxu0 %v6348
    %7678 = vmatpush1.bf16.msra.mxu0 %v6347
    %7679 = vmatprep.subr.bf16.mxu0 %v6356
    %7680 = vmatpush1.bf16.msra.mxu0 %v6355
    %7681 = vmatprep.subr.bf16.mxu0 %v6364
    %7682 = vmatpush1.bf16.msra.mxu0 %v6363
    %7683 = vmatprep.subr.bf16.mxu0 %v6372
    %7684 = vmatpush1.bf16.msra.mxu0 %v6371
    %7685 = vmatprep.subr.bf16.mxu0 %v6380
    %7686 = vmatpush1.bf16.msra.mxu0 %v6379
    %7687 = vmatprep.subr.bf16.mxu0 %v6388
    %7688 = vmatpush1.bf16.msra.mxu0 %v6387
    %7689 = vmatprep.subr.bf16.mxu0 %v6396
    %7690 = vmatpush1.bf16.msra.mxu0 %v6395
    %7691 = vmatprep.subr.bf16.mxu0 %v6404
    %7692 = vmatpush1.bf16.msra.mxu0 %v6403
    %7693 = vmatprep.subr.bf16.mxu0 %v6412
    %7694 = vmatpush1.bf16.msra.mxu0 %v6411
    %7695 = vmatprep.subr.bf16.mxu0 %v6420
    %7696 = vmatpush1.bf16.msra.mxu0 %v6419
    %7697 = vmatprep.subr.bf16.mxu0 %v6428
    %7698 = vmatpush1.bf16.msra.mxu0 %v6427
    %7699 = vmatprep.subr.bf16.mxu0 %v6436
    %7700 = vmatpush1.bf16.msra.mxu0 %v6435
    %7701 = vmatprep.subr.bf16.mxu0 %v6444
    %7702 = vmatpush1.bf16.msra.mxu0 %v6443
    %7703 = vmatprep.mubr.bf16.mxu0 %v536
    %7704 = vmatmul.mubr.bf16.gmra.mrb[0].mxu0 %v535
    %v7705 = vpop.f32.mrb[0].mxu0
    %v7706 = vadd.f32 %v4613, %v7705
    %v7707 = vpop.f32.mrb[0].mxu0
    %v7708 = vadd.f32 %v4615, %v7707
    %v7709 = vpop.f32.mrb[0].mxu0
    %v7710 = vpop.f32.mrb[0].mxu0
    %7711 = vdwg.mxu0
    %7712 = vmatprep.subr.bf16.mxu0 %v6452
    %7713 = vmatpush1.bf16.msra.mxu0 %v6451
    %7714 = vmatprep.subr.bf16.mxu0 %v6460
    %7715 = vmatpush1.bf16.msra.mxu0 %v6459
    %7716 = vmatprep.subr.bf16.mxu0 %v6468
    %7717 = vmatpush1.bf16.msra.mxu0 %v6467
    %7718 = vmatprep.subr.bf16.mxu0 %v6476
    %7719 = vmatpush1.bf16.msra.mxu0 %v6475
    %7720 = vmatprep.subr.bf16.mxu0 %v6484
    %7721 = vmatpush1.bf16.msra.mxu0 %v6483
    %7722 = vmatprep.subr.bf16.mxu0 %v6492
    %7723 = vmatpush1.bf16.msra.mxu0 %v6491
    %7724 = vmatprep.subr.bf16.mxu0 %v6500
    %7725 = vmatpush1.bf16.msra.mxu0 %v6499
    %7726 = vmatprep.subr.bf16.mxu0 %v6508
    %7727 = vmatpush1.bf16.msra.mxu0 %v6507
    %7728 = vmatprep.subr.bf16.mxu0 %v6516
    %7729 = vmatpush1.bf16.msra.mxu0 %v6515
    %7730 = vmatprep.subr.bf16.mxu0 %v6524
    %7731 = vmatpush1.bf16.msra.mxu0 %v6523
    %7732 = vmatprep.subr.bf16.mxu0 %v6532
    %7733 = vmatpush1.bf16.msra.mxu0 %v6531
    %7734 = vmatprep.subr.bf16.mxu0 %v6540
    %7735 = vmatpush1.bf16.msra.mxu0 %v6539
    %7736 = vmatprep.subr.bf16.mxu0 %v6548
    %7737 = vmatpush1.bf16.msra.mxu0 %v6547
    %7738 = vmatprep.subr.bf16.mxu0 %v6556
    %7739 = vmatpush1.bf16.msra.mxu0 %v6555
    %7740 = vmatprep.subr.bf16.mxu0 %v6564
    %7741 = vmatpush1.bf16.msra.mxu0 %v6563
    %7742 = vmatprep.subr.bf16.mxu0 %v6572
    %7743 = vmatpush1.bf16.msra.mxu0 %v6571
    %7744 = vmatprep.mubr.bf16.mxu0 %v538
    %7745 = vmatmul.mubr.bf16.gmra.mrb[0].mxu0 %v537
    %v7746 = vpop.f32.mrb[0].mxu0
    %v7747 = vadd.f32 %v7706, %v7746
    %v7748 = vpop.f32.mrb[0].mxu0
    %v7749 = vadd.f32 %v7708, %v7748
    %v7750 = vpop.f32.mrb[0].mxu0
    %v7751 = vpop.f32.mrb[0].mxu0
    %7752 = vdwg.mxu0
    %7753 = vmatprep.subr.bf16.mxu0 %v6580
    %7754 = vmatpush1.bf16.msra.mxu0 %v6579
    %7755 = vmatprep.subr.bf16.mxu0 %v6588
    %7756 = vmatpush1.bf16.msra.mxu0 %v6587
    %7757 = vmatprep.subr.bf16.mxu0 %v6596
    %7758 = vmatpush1.bf16.msra.mxu0 %v6595
    %7759 = vmatprep.subr.bf16.mxu0 %v6604
    %7760 = vmatpush1.bf16.msra.mxu0 %v6603
    %7761 = vmatprep.subr.bf16.mxu0 %v6612
    %7762 = vmatpush1.bf16.msra.mxu0 %v6611
    %7763 = vmatprep.subr.bf16.mxu0 %v6620
    %7764 = vmatpush1.bf16.msra.mxu0 %v6619
    %7765 = vmatprep.subr.bf16.mxu0 %v6628
    %7766 = vmatpush1.bf16.msra.mxu0 %v6627
    %7767 = vmatprep.subr.bf16.mxu0 %v6636
    %7768 = vmatpush1.bf16.msra.mxu0 %v6635
    %7769 = vmatprep.subr.bf16.mxu0 %v6644
    %7770 = vmatpush1.bf16.msra.mxu0 %v6643
    %7771 = vmatprep.subr.bf16.mxu0 %v6652
    %7772 = vmatpush1.bf16.msra.mxu0 %v6651
    %7773 = vmatprep.subr.bf16.mxu0 %v6660
    %7774 = vmatpush1.bf16.msra.mxu0 %v6659
    %7775 = vmatprep.subr.bf16.mxu0 %v6668
    %7776 = vmatpush1.bf16.msra.mxu0 %v6667
    %7777 = vmatprep.subr.bf16.mxu0 %v6676
    %7778 = vmatpush1.bf16.msra.mxu0 %v6675
    %7779 = vmatprep.subr.bf16.mxu0 %v6684
    %7780 = vmatpush1.bf16.msra.mxu0 %v6683
    %7781 = vmatprep.subr.bf16.mxu0 %v6692
    %7782 = vmatpush1.bf16.msra.mxu0 %v6691
    %7783 = vmatprep.subr.bf16.mxu0 %v6700
    %7784 = vmatpush1.bf16.msra.mxu0 %v6699
    %7785 = vmatprep.mubr.bf16.mxu0 %v540
    %7786 = vmatmul.mubr.bf16.gmra.mrb[0].mxu0 %v539
    %v7787 = vpop.f32.mrb[0].mxu0
    %v7788 = vadd.f32 %v7747, %v7787
    %v7789 = vpop.f32.mrb[0].mxu0
    %v7790 = vadd.f32 %v7749, %v7789
    %v7791 = vpop.f32.mrb[0].mxu0
    %v7792 = vpop.f32.mrb[0].mxu0
    %7793 = vdwg.mxu0
    %7794 = vmatprep.subr.bf16.mxu0 %v6708
    %7795 = vmatpush1.bf16.msra.mxu0 %v6707
    %7796 = vmatprep.subr.bf16.mxu0 %v6716
    %7797 = vmatpush1.bf16.msra.mxu0 %v6715
    %7798 = vmatprep.subr.bf16.mxu0 %v6724
    %7799 = vmatpush1.bf16.msra.mxu0 %v6723
    %7800 = vmatprep.subr.bf16.mxu0 %v6732
    %7801 = vmatpush1.bf16.msra.mxu0 %v6731
    %7802 = vmatprep.subr.bf16.mxu0 %v6740
    %7803 = vmatpush1.bf16.msra.mxu0 %v6739
    %7804 = vmatprep.subr.bf16.mxu0 %v6748
    %7805 = vmatpush1.bf16.msra.mxu0 %v6747
    %7806 = vmatprep.subr.bf16.mxu0 %v6756
    %7807 = vmatpush1.bf16.msra.mxu0 %v6755
    %7808 = vmatprep.subr.bf16.mxu0 %v6764
    %7809 = vmatpush1.bf16.msra.mxu0 %v6763
    %7810 = vmatprep.subr.bf16.mxu0 %v6772
    %7811 = vmatpush1.bf16.msra.mxu0 %v6771
    %7812 = vmatprep.subr.bf16.mxu0 %v6780
    %7813 = vmatpush1.bf16.msra.mxu0 %v6779
    %7814 = vmatprep.subr.bf16.mxu0 %v6788
    %7815 = vmatpush1.bf16.msra.mxu0 %v6787
    %7816 = vmatprep.subr.bf16.mxu0 %v6796
    %7817 = vmatpush1.bf16.msra.mxu0 %v6795
    %7818 = vmatprep.subr.bf16.mxu0 %v6804
    %7819 = vmatpush1.bf16.msra.mxu0 %v6803
    %7820 = vmatprep.subr.bf16.mxu0 %v6812
    %7821 = vmatpush1.bf16.msra.mxu0 %v6811
    %7822 = vmatprep.subr.bf16.mxu0 %v6820
    %7823 = vmatpush1.bf16.msra.mxu0 %v6819
    %7824 = vmatprep.subr.bf16.mxu0 %v6828
    %7825 = vmatpush1.bf16.msra.mxu0 %v6827
    %7826 = vmatprep.mubr.bf16.mxu0 %v542
    %7827 = vmatmul.mubr.bf16.gmra.mrb[0].mxu0 %v541
    %v7828 = vpop.f32.mrb[0].mxu0
    %v7829 = vadd.f32 %v7788, %v7828
    %v7830 = vpop.f32.mrb[0].mxu0
    %v7831 = vadd.f32 %v7790, %v7830
    %v7832 = vpop.f32.mrb[0].mxu0
    %v7833 = vpop.f32.mrb[0].mxu0
    %7834 = vdwg.mxu0
    %7835 = vmatprep.subr.bf16.mxu0 %v6326
    %7836 = vmatpush1.bf16.msra.mxu0 %v6325
    %7837 = vmatprep.subr.bf16.mxu0 %v6334
    %7838 = vmatpush1.bf16.msra.mxu0 %v6333
    %7839 = vmatprep.subr.bf16.mxu0 %v6342
    %7840 = vmatpush1.bf16.msra.mxu0 %v6341
    %7841 = vmatprep.subr.bf16.mxu0 %v6350
    %7842 = vmatpush1.bf16.msra.mxu0 %v6349
    %7843 = vmatprep.subr.bf16.mxu0 %v6358
    %7844 = vmatpush1.bf16.msra.mxu0 %v6357
    %7845 = vmatprep.subr.bf16.mxu0 %v6366
    %7846 = vmatpush1.bf16.msra.mxu0 %v6365
    %7847 = vmatprep.subr.bf16.mxu0 %v6374
    %7848 = vmatpush1.bf16.msra.mxu0 %v6373
    %7849 = vmatprep.subr.bf16.mxu0 %v6382
    %7850 = vmatpush1.bf16.msra.mxu0 %v6381
    %7851 = vmatprep.subr.bf16.mxu0 %v6390
    %7852 = vmatpush1.bf16.msra.mxu0 %v6389
    %7853 = vmatprep.subr.bf16.mxu0 %v6398
    %7854 = vmatpush1.bf16.msra.mxu0 %v6397
    %7855 = vmatprep.subr.bf16.mxu0 %v6406
    %7856 = vmatpush1.bf16.msra.mxu0 %v6405
    %7857 = vmatprep.subr.bf16.mxu0 %v6414
    %7858 = vmatpush1.bf16.msra.mxu0 %v6413
    %7859 = vmatprep.subr.bf16.mxu0 %v6422
    %7860 = vmatpush1.bf16.msra.mxu0 %v6421
    %7861 = vmatprep.subr.bf16.mxu0 %v6430
    %7862 = vmatpush1.bf16.msra.mxu0 %v6429
    %7863 = vmatprep.subr.bf16.mxu0 %v6438
    %7864 = vmatpush1.bf16.msra.mxu0 %v6437
    %7865 = vmatprep.subr.bf16.mxu0 %v6446
    %7866 = vmatpush1.bf16.msra.mxu0 %v6445
    %7867 = vmatprep.mubr.bf16.mxu0 %v536
    %7868 = vmatmul.mubr.bf16.gmra.mrb[0].mxu0 %v535
    %v7869 = vpop.f32.mrb[0].mxu0
    %v7870 = vadd.f32 %v4777, %v7869
    %v7871 = vpop.f32.mrb[0].mxu0
    %v7872 = vadd.f32 %v4779, %v7871
    %v7873 = vpop.f32.mrb[0].mxu0
    %v7874 = vpop.f32.mrb[0].mxu0
    %7875 = vdwg.mxu0
    %7876 = vmatprep.subr.bf16.mxu0 %v6454
    %7877 = vmatpush1.bf16.msra.mxu0 %v6453
    %7878 = vmatprep.subr.bf16.mxu0 %v6462
    %7879 = vmatpush1.bf16.msra.mxu0 %v6461
    %7880 = vmatprep.subr.bf16.mxu0 %v6470
    %7881 = vmatpush1.bf16.msra.mxu0 %v6469
    %7882 = vmatprep.subr.bf16.mxu0 %v6478
    %7883 = vmatpush1.bf16.msra.mxu0 %v6477
    %7884 = vmatprep.subr.bf16.mxu0 %v6486
    %7885 = vmatpush1.bf16.msra.mxu0 %v6485
    %7886 = vmatprep.subr.bf16.mxu0 %v6494
    %7887 = vmatpush1.bf16.msra.mxu0 %v6493
    %7888 = vmatprep.subr.bf16.mxu0 %v6502
    %7889 = vmatpush1.bf16.msra.mxu0 %v6501
    %7890 = vmatprep.subr.bf16.mxu0 %v6510
    %7891 = vmatpush1.bf16.msra.mxu0 %v6509
    %7892 = vmatprep.subr.bf16.mxu0 %v6518
    %7893 = vmatpush1.bf16.msra.mxu0 %v6517
    %7894 = vmatprep.subr.bf16.mxu0 %v6526
    %7895 = vmatpush1.bf16.msra.mxu0 %v6525
    %7896 = vmatprep.subr.bf16.mxu0 %v6534
    %7897 = vmatpush1.bf16.msra.mxu0 %v6533
    %7898 = vmatprep.subr.bf16.mxu0 %v6542
    %7899 = vmatpush1.bf16.msra.mxu0 %v6541
    %7900 = vmatprep.subr.bf16.mxu0 %v6550
    %7901 = vmatpush1.bf16.msra.mxu0 %v6549
    %7902 = vmatprep.subr.bf16.mxu0 %v6558
    %7903 = vmatpush1.bf16.msra.mxu0 %v6557
    %7904 = vmatprep.subr.bf16.mxu0 %v6566
    %7905 = vmatpush1.bf16.msra.mxu0 %v6565
    %7906 = vmatprep.subr.bf16.mxu0 %v6574
    %7907 = vmatpush1.bf16.msra.mxu0 %v6573
    %7908 = vmatprep.mubr.bf16.mxu0 %v538
    %7909 = vmatmul.mubr.bf16.gmra.mrb[0].mxu0 %v537
    %v7910 = vpop.f32.mrb[0].mxu0
    %v7911 = vadd.f32 %v7870, %v7910
    %v7912 = vpop.f32.mrb[0].mxu0
    %v7913 = vadd.f32 %v7872, %v7912
    %v7914 = vpop.f32.mrb[0].mxu0
    %v7915 = vpop.f32.mrb[0].mxu0
    %7916 = vdwg.mxu0
    %7917 = vmatprep.subr.bf16.mxu0 %v6582
    %7918 = vmatpush1.bf16.msra.mxu0 %v6581
    %7919 = vmatprep.subr.bf16.mxu0 %v6590
    %7920 = vmatpush1.bf16.msra.mxu0 %v6589
    %7921 = vmatprep.subr.bf16.mxu0 %v6598
    %7922 = vmatpush1.bf16.msra.mxu0 %v6597
    %7923 = vmatprep.subr.bf16.mxu0 %v6606
    %7924 = vmatpush1.bf16.msra.mxu0 %v6605
    %7925 = vmatprep.subr.bf16.mxu0 %v6614
    %7926 = vmatpush1.bf16.msra.mxu0 %v6613
    %7927 = vmatprep.subr.bf16.mxu0 %v6622
    %7928 = vmatpush1.bf16.msra.mxu0 %v6621
    %7929 = vmatprep.subr.bf16.mxu0 %v6630
    %7930 = vmatpush1.bf16.msra.mxu0 %v6629
    %7931 = vmatprep.subr.bf16.mxu0 %v6638
    %7932 = vmatpush1.bf16.msra.mxu0 %v6637
    %7933 = vmatprep.subr.bf16.mxu0 %v6646
    %7934 = vmatpush1.bf16.msra.mxu0 %v6645
    %7935 = vmatprep.subr.bf16.mxu0 %v6654
    %7936 = vmatpush1.bf16.msra.mxu0 %v6653
    %7937 = vmatprep.subr.bf16.mxu0 %v6662
    %7938 = vmatpush1.bf16.msra.mxu0 %v6661
    %7939 = vmatprep.subr.bf16.mxu0 %v6670
    %7940 = vmatpush1.bf16.msra.mxu0 %v6669
    %7941 = vmatprep.subr.bf16.mxu0 %v6678
    %7942 = vmatpush1.bf16.msra.mxu0 %v6677
    %7943 = vmatprep.subr.bf16.mxu0 %v6686
    %7944 = vmatpush1.bf16.msra.mxu0 %v6685
    %7945 = vmatprep.subr.bf16.mxu0 %v6694
    %7946 = vmatpush1.bf16.msra.mxu0 %v6693
    %7947 = vmatprep.subr.bf16.mxu0 %v6702
    %7948 = vmatpush1.bf16.msra.mxu0 %v6701
    %7949 = vmatprep.mubr.bf16.mxu0 %v540
    %7950 = vmatmul.mubr.bf16.gmra.mrb[0].mxu0 %v539
    %v7951 = vpop.f32.mrb[0].mxu0
    %v7952 = vadd.f32 %v7911, %v7951
    %v7953 = vpop.f32.mrb[0].mxu0
    %v7954 = vadd.f32 %v7913, %v7953
    %v7955 = vpop.f32.mrb[0].mxu0
    %v7956 = vpop.f32.mrb[0].mxu0
    %7957 = vdwg.mxu0
    %7958 = vmatprep.subr.bf16.mxu0 %v6710
    %7959 = vmatpush1.bf16.msra.mxu0 %v6709
    %7960 = vmatprep.subr.bf16.mxu0 %v6718
    %7961 = vmatpush1.bf16.msra.mxu0 %v6717
    %7962 = vmatprep.subr.bf16.mxu0 %v6726
    %7963 = vmatpush1.bf16.msra.mxu0 %v6725
    %7964 = vmatprep.subr.bf16.mxu0 %v6734
    %7965 = vmatpush1.bf16.msra.mxu0 %v6733
    %7966 = vmatprep.subr.bf16.mxu0 %v6742
    %7967 = vmatpush1.bf16.msra.mxu0 %v6741
    %7968 = vmatprep.subr.bf16.mxu0 %v6750
    %7969 = vmatpush1.bf16.msra.mxu0 %v6749
    %7970 = vmatprep.subr.bf16.mxu0 %v6758
    %7971 = vmatpush1.bf16.msra.mxu0 %v6757
    %7972 = vmatprep.subr.bf16.mxu0 %v6766
    %7973 = vmatpush1.bf16.msra.mxu0 %v6765
    %7974 = vmatprep.subr.bf16.mxu0 %v6774
    %7975 = vmatpush1.bf16.msra.mxu0 %v6773
    %7976 = vmatprep.subr.bf16.mxu0 %v6782
    %7977 = vmatpush1.bf16.msra.mxu0 %v6781
    %7978 = vmatprep.subr.bf16.mxu0 %v6790
    %7979 = vmatpush1.bf16.msra.mxu0 %v6789
    %7980 = vmatprep.subr.bf16.mxu0 %v6798
    %7981 = vmatpush1.bf16.msra.mxu0 %v6797
    %7982 = vmatprep.subr.bf16.mxu0 %v6806
    %7983 = vmatpush1.bf16.msra.mxu0 %v6805
    %7984 = vmatprep.subr.bf16.mxu0 %v6814
    %7985 = vmatpush1.bf16.msra.mxu0 %v6813
    %7986 = vmatprep.subr.bf16.mxu0 %v6822
    %7987 = vmatpush1.bf16.msra.mxu0 %v6821
    %7988 = vmatprep.subr.bf16.mxu0 %v6830
    %7989 = vmatpush1.bf16.msra.mxu0 %v6829
    %7990 = vmatprep.mubr.bf16.mxu0 %v542
    %7991 = vmatmul.mubr.bf16.gmra.mrb[0].mxu0 %v541
    %v7992 = vpop.f32.mrb[0].mxu0
    %v7993 = vadd.f32 %v7952, %v7992
    %v7994 = vpop.f32.mrb[0].mxu0
    %v7995 = vadd.f32 %v7954, %v7994
    %v7996 = vpop.f32.mrb[0].mxu0
    %v7997 = vpop.f32.mrb[0].mxu0
    %7998 = vdwg.mxu0
    %v7999 = vld [vmem:[%s5] sm:$0xff]
    %v8001 = vlaneseq
    %v8002 = vshrl.u32 %v8001, 7
    %v8003 = vsub.s32 0, %v8002
    %v8004 = vrot.slane %v7999, %v8003
    %v8005 = vlaneseq
    %v8006 = vshrl.u32 %v8005, 7
    %v8007 = vsub.s32 1, %v8006
    %v8008 = vrot.slane %v7999, %v8007
    %v8009 = vlaneseq
    %v8010 = vshrl.u32 %v8009, 7
    %v8011 = vsub.s32 2, %v8010
    %v8012 = vrot.slane %v7999, %v8011
    %v8013 = vlaneseq
    %v8014 = vshrl.u32 %v8013, 7
    %v8015 = vsub.s32 3, %v8014
    %v8016 = vrot.slane %v7999, %v8015
    %v8017 = vlaneseq
    %v8018 = vshrl.u32 %v8017, 7
    %v8019 = vsub.s32 4, %v8018
    %v8020 = vrot.slane %v7999, %v8019
    %v8021 = vlaneseq
    %v8022 = vshrl.u32 %v8021, 7
    %v8023 = vsub.s32 5, %v8022
    %v8024 = vrot.slane %v7999, %v8023
    %v8025 = vlaneseq
    %v8026 = vshrl.u32 %v8025, 7
    %v8027 = vsub.s32 6, %v8026
    %v8028 = vrot.slane %v7999, %v8027
    %v8029 = vlaneseq
    %v8030 = vshrl.u32 %v8029, 7
    %v8031 = vsub.s32 7, %v8030
    %v8032 = vrot.slane %v7999, %v8031
    %v8041 = vadd.f32 %v7501, %v8004
    %v8042 = vadd.f32 %v7503, %v8008
    %v8043 = vadd.f32 %v7665, %v8012
    %v8044 = vadd.f32 %v7667, %v8016
    %v8045 = vadd.f32 %v7829, %v8020
    %v8046 = vadd.f32 %v7831, %v8024
    %v8047 = vadd.f32 %v7993, %v8028
    %v8048 = vadd.f32 %v7995, %v8032
    %v8049 = vpack.c.bf16 %v8041, %v8041
    %v8050 = vpack.c.bf16 %v8042, %v8042
    %v8051 = vpack.c.bf16 %v8043, %v8043
    %v8052 = vpack.c.bf16 %v8044, %v8044
    %v8053 = vpack.c.bf16 %v8045, %v8045
    %v8054 = vpack.c.bf16 %v8046, %v8046
    %v8055 = vpack.c.bf16 %v8047, %v8047
    %v8056 = vpack.c.bf16 %v8048, %v8048
    %v8065 = vunpack.c.l.b16 %v8049
    %v8066 = vunpack.c.l.b16 %v8050
    %v8067 = vunpack.c.l.b16 %v8051
    %v8068 = vunpack.c.l.b16 %v8052
    %v8069 = vunpack.c.l.b16 %v8053
    %v8070 = vunpack.c.l.b16 %v8054
    %v8071 = vunpack.c.l.b16 %v8055
    %v8072 = vunpack.c.l.b16 %v8056
    %v8073 = vpack.c.b16 %v8066, %v8065
    %v8074 = vpack.c.b16 %v8068, %v8067
    %v8075 = vpack.c.b16 %v8070, %v8069
    %v8076 = vpack.c.b16 %v8072, %v8071
    %8081 = vst [vmem:[%s8] sm:$0xff] %v8073
    %8082 = vst [vmem:[%s8 + $0x8] sm:$0xff] %v8074
    %8083 = vst [vmem:[%s8 + $0x10] sm:$0xff] %v8075
    %8084 = vst [vmem:[%s8 + $0x18] sm:$0xff] %v8076
    %v8085 = vsel %vm37, 1, 0
    %vm8086 = vcmp.eq.s32.totalorder %v8085, 1
    %v8087 = vsel %vm8086, %v8041, 0.0
    %v8088 = vsel %vm8086, %v8042, 0.0
    %v8089 = vsel %vm8086, %v8043, 0.0
    %v8090 = vsel %vm8086, %v8044, 0.0
    %v8091 = vsel %vm8086, %v8045, 0.0
    %v8092 = vsel %vm8086, %v8046, 0.0
    %v8093 = vsel %vm8086, %v8047, 0.0
    %v8094 = vsel %vm8086, %v8048, 0.0
    %v8095 = vrot.slane %v8087, 4
    %v8096 = vadd.f32 %v8087, %v8095
    %v8097 = vrot.slane %v8096, 2
    %v8098 = vadd.f32 %v8096, %v8097
    %v8099 = vrot.slane %v8098, 1
    %v8100 = vadd.f32 %v8098, %v8099
    %v8101 = vrot.slane %v8088, 4
    %v8102 = vadd.f32 %v8088, %v8101
    %v8103 = vrot.slane %v8102, 2
    %v8104 = vadd.f32 %v8102, %v8103
    %v8105 = vrot.slane %v8104, 1
    %v8106 = vadd.f32 %v8104, %v8105
    %v8107 = vrot.slane %v8089, 4
    %v8108 = vadd.f32 %v8089, %v8107
    %v8109 = vrot.slane %v8108, 2
    %v8110 = vadd.f32 %v8108, %v8109
    %v8111 = vrot.slane %v8110, 1
    %v8112 = vadd.f32 %v8110, %v8111
    %v8113 = vrot.slane %v8090, 4
    %v8114 = vadd.f32 %v8090, %v8113
    %v8115 = vrot.slane %v8114, 2
    %v8116 = vadd.f32 %v8114, %v8115
    %v8117 = vrot.slane %v8116, 1
    %v8118 = vadd.f32 %v8116, %v8117
    %v8119 = vrot.slane %v8091, 4
    %v8120 = vadd.f32 %v8091, %v8119
    %v8121 = vrot.slane %v8120, 2
    %v8122 = vadd.f32 %v8120, %v8121
    %v8123 = vrot.slane %v8122, 1
    %v8124 = vadd.f32 %v8122, %v8123
    %v8125 = vrot.slane %v8092, 4
    %v8126 = vadd.f32 %v8092, %v8125
    %v8127 = vrot.slane %v8126, 2
    %v8128 = vadd.f32 %v8126, %v8127
    %v8129 = vrot.slane %v8128, 1
    %v8130 = vadd.f32 %v8128, %v8129
    %v8131 = vrot.slane %v8093, 4
    %v8132 = vadd.f32 %v8093, %v8131
    %v8133 = vrot.slane %v8132, 2
    %v8134 = vadd.f32 %v8132, %v8133
    %v8135 = vrot.slane %v8134, 1
    %v8136 = vadd.f32 %v8134, %v8135
    %v8137 = vrot.slane %v8094, 4
    %v8138 = vadd.f32 %v8094, %v8137
    %v8139 = vrot.slane %v8138, 2
    %v8140 = vadd.f32 %v8138, %v8139
    %v8141 = vrot.slane %v8140, 1
    %v8142 = vadd.f32 %v8140, %v8141
    %v8143 = vmul.f32 %v8087, %v8087
    %v8144 = vmul.f32 %v8088, %v8088
    %v8145 = vmul.f32 %v8089, %v8089
    %v8146 = vmul.f32 %v8090, %v8090
    %v8147 = vmul.f32 %v8091, %v8091
    %v8148 = vmul.f32 %v8092, %v8092
    %v8149 = vmul.f32 %v8093, %v8093
    %v8150 = vmul.f32 %v8094, %v8094
    %v8151 = vrot.slane %v8143, 4
    %v8152 = vadd.f32 %v8143, %v8151
    %v8153 = vrot.slane %v8152, 2
    %v8154 = vadd.f32 %v8152, %v8153
    %v8155 = vrot.slane %v8154, 1
    %v8156 = vadd.f32 %v8154, %v8155
    %v8157 = vrot.slane %v8144, 4
    %v8158 = vadd.f32 %v8144, %v8157
    %v8159 = vrot.slane %v8158, 2
    %v8160 = vadd.f32 %v8158, %v8159
    %v8161 = vrot.slane %v8160, 1
    %v8162 = vadd.f32 %v8160, %v8161
    %v8163 = vrot.slane %v8145, 4
    %v8164 = vadd.f32 %v8145, %v8163
    %v8165 = vrot.slane %v8164, 2
    %v8166 = vadd.f32 %v8164, %v8165
    %v8167 = vrot.slane %v8166, 1
    %v8168 = vadd.f32 %v8166, %v8167
    %v8169 = vrot.slane %v8146, 4
    %v8170 = vadd.f32 %v8146, %v8169
    %v8171 = vrot.slane %v8170, 2
    %v8172 = vadd.f32 %v8170, %v8171
    %v8173 = vrot.slane %v8172, 1
    %v8174 = vadd.f32 %v8172, %v8173
    %v8175 = vrot.slane %v8147, 4
    %v8176 = vadd.f32 %v8147, %v8175
    %v8177 = vrot.slane %v8176, 2
    %v8178 = vadd.f32 %v8176, %v8177
    %v8179 = vrot.slane %v8178, 1
    %v8180 = vadd.f32 %v8178, %v8179
    %v8181 = vrot.slane %v8148, 4
    %v8182 = vadd.f32 %v8148, %v8181
    %v8183 = vrot.slane %v8182, 2
    %v8184 = vadd.f32 %v8182, %v8183
    %v8185 = vrot.slane %v8184, 1
    %v8186 = vadd.f32 %v8184, %v8185
    %v8187 = vrot.slane %v8149, 4
    %v8188 = vadd.f32 %v8149, %v8187
    %v8189 = vrot.slane %v8188, 2
    %v8190 = vadd.f32 %v8188, %v8189
    %v8191 = vrot.slane %v8190, 1
    %v8192 = vadd.f32 %v8190, %v8191
    %v8193 = vrot.slane %v8150, 4
    %v8194 = vadd.f32 %v8150, %v8193
    %v8195 = vrot.slane %v8194, 2
    %v8196 = vadd.f32 %v8194, %v8195
    %v8197 = vrot.slane %v8196, 1
    %v8198 = vadd.f32 %v8196, %v8197
    %vm8199 = vcmask 1040384
    %v8200 = vsel %vm8199, %v8100, %v8156
    %v8201 = vsel %vm8199, %v8106, %v8162
    %v8202 = vsel %vm8199, %v8112, %v8168
    %v8203 = vsel %vm8199, %v8118, %v8174
    %v8204 = vsel %vm8199, %v8124, %v8180
    %v8205 = vsel %vm8199, %v8130, %v8186
    %v8206 = vsel %vm8199, %v8136, %v8192
    %v8207 = vsel %vm8199, %v8142, %v8198
    %v8216 = vcombine.low %v8200, %v8201
    %v8217 = vcombine.low %v8202, %v8203
    %v8219 = vunpack.c.l.s4 1983009808
    %v8220 = vunpack.c.0.s8 %v8219
    %v8221 = vlaneseq
    %v8222 = vshrl.u32 %v8221, 7
    %v8223 = vsub.s32 %v8220, %v8222
    %v8224 = vrot.slane %v8216, %v8223
    %v8226 = vunpack.c.l.s4 1983009808
    %v8227 = vunpack.c.0.s8 %v8226
    %v8228 = vlaneseq
    %v8229 = vshrl.u32 %v8228, 7
    %v8230 = vsub.s32 %v8227, %v8229
    %v8231 = vrot.slane %v8217, %v8230
    %v8232 = vcombine.low %v8224, %v8231
    %v8233 = vcombine.low %v8204, %v8205
    %v8234 = vcombine.low %v8206, %v8207
    %v8236 = vunpack.c.l.s4 1983009808
    %v8237 = vunpack.c.0.s8 %v8236
    %v8238 = vlaneseq
    %v8239 = vshrl.u32 %v8238, 7
    %v8240 = vsub.s32 %v8237, %v8239
    %v8241 = vrot.slane %v8233, %v8240
    %v8243 = vunpack.c.l.s4 1983009808
    %v8244 = vunpack.c.0.s8 %v8243
    %v8245 = vlaneseq
    %v8246 = vshrl.u32 %v8245, 7
    %v8247 = vsub.s32 %v8244, %v8246
    %v8248 = vrot.slane %v8234, %v8247
    %v8249 = vcombine.low %v8241, %v8248
    %8252 = vst [vmem:[%s9] sm:$0xff] %v8232
    %8253 = vst [vmem:[%s9 + $0x8] sm:$0xff] %v8249
  $region41: #{hogcn_forward.4} parent=0 // pred_fallthru
    _
  // Predicated region
  $region42: #{hogcn_forward.4} parent=0 // pred_check
    _
  $region43: #{hogcn_forward.4} parent=0 // pred_check_branch
    %8255 = sbr.rel (0) target = $region45
  $region44: #{hogcn_forward.4} parent=0 // pred_region
    _
  $region45: #{hogcn_forward.4} parent=0 // pred_fallthru
    _
  // Predicated region
  $region46: #{hogcn_forward.4} parent=0 // pred_check
    _
  $region47: #{hogcn_forward.4} parent=0 // pred_check_branch
    %8257 = sbr.rel (0) target = $region49
  $region48: #{hogcn_forward.4} parent=0 // pred_region
    _
  $region49: #{hogcn_forward.4} parent=0 // pred_fallthru
    _
  // Predicated region
  $region50: #{hogcn_forward.4} parent=0 // pred_check
    _
  $region51: #{hogcn_forward.4} parent=0 // pred_check_branch
    %8259 = sbr.rel (0) target = $region53
  $region52: #{hogcn_forward.4} parent=0 // pred_region
    _
  $region53: #{hogcn_forward.4} parent=0 // pred_fallthru
    _
  // Predicated region
  $region54: #{hogcn_forward.4} parent=0 // pred_check
    _
  $region55: #{hogcn_forward.4} parent=0 // pred_check_branch
    %8261 = sbr.rel (0) target = $region57
  $region56: #{hogcn_forward.4} parent=0 // pred_region
    _
  $region57: #{hogcn_forward.4} parent=0 // pred_fallthru
    _

</llo_original>
